<compile_context>
chip_gen: v7x
topology: tpu7x:2x2x1
jax: 0.10.0
libtpu: 0.0.40
codegen_flags: <defaults>
</compile_context>

<pallas_src>
import functools
import numpy as np

import jax
import jax.numpy as jnp
from jax.experimental import pallas as pl
from jax.experimental.pallas import tpu as pltpu


# ----------------------------------------------------------------------------
# Host-side constants (depend only on static shapes; baked into the program)
# ----------------------------------------------------------------------------
def _pool_matrix(n_in, n_out):
    """Row-stochastic 1-D adaptive-average-pool matrix (PyTorch binning)."""
    P = np.zeros((n_out, n_in), np.float32)
    for i in range(n_out):
        s = (i * n_in) // n_out
        e = -((-(i + 1) * n_in) // n_out)          # ceil((i+1)*n_in / n_out)
        P[i, s:e] = 1.0 / (e - s)
    return P


def _kron_pool(d, h, w, od, oh, ow):
    """(D*H*W, Od*Oh*Ow) matrix so that pooled = x_flat @ P  (one matmul, no transposes)."""
    Pd, Ph, Pw = _pool_matrix(d, od), _pool_matrix(h, oh), _pool_matrix(w, ow)
    return np.kron(np.kron(Pd, Ph), Pw).T.astype(np.float32)


def _conv3_select(od, oh, ow):
    """27 shift-selection matrices: (x @ S[off])[c, m_out] = x[c, neighbor(m_out, off)] or 0."""
    m2 = od * oh * ow
    S = np.zeros((27, m2, m2), np.float32)
    off = 0
    for kd in range(3):
        for kh in range(3):
            for kw in range(3):
                for d in range(od):
                    for h in range(oh):
                        for w in range(ow):
                            di, hi, wi = d + kd - 1, h + kh - 1, w + kw - 1
                            if 0 <= di < od and 0 <= hi < oh and 0 <= wi < ow:
                                mo = (d * oh + h) * ow + w
                                mi = (di * oh + hi) * ow + wi
                                S[off, mi, mo] = 1.0
                off += 1
    return S


def _group_matrix(c, n_groups):
    """(C, C) matrix averaging channels within each GroupNorm group (entries 1/cg)."""
    cg = c // n_groups
    G = np.zeros((c, c), np.float32)
    for i in range(c):
        g = i // cg
        G[i, g * cg:(g + 1) * cg] = 1.0 / cg
    return G


# ----------------------------------------------------------------------------
# Fused Pallas kernel: one grid step == one chunk, everything stays in VMEM
# ----------------------------------------------------------------------------
def _gn_relu(x, gmat, gamma, beta, *, eps, inv_n, cg):
    """PyTorch GroupNorm (biased var) + affine + ReLU on a (C, S) slab."""
    f32 = jnp.float32
    if cg == 1:
        # groups == channels (default config): pure lane reductions, no matmul.
        mean = jnp.sum(x, axis=1, keepdims=True) * inv_n
        msq = jnp.sum(x * x, axis=1, keepdims=True) * inv_n
    else:
        # general case: tiny K=C group-averaging dot, then lane reduction.
        mean = jnp.sum(jnp.dot(gmat, x, preferred_element_type=f32),
                       axis=1, keepdims=True) * inv_n
        msq = jnp.sum(jnp.dot(gmat, x * x, preferred_element_type=f32),
                      axis=1, keepdims=True) * inv_n
    var = msq - mean * mean
    inv = jax.lax.rsqrt(var + eps)
    y = (x - mean) * inv * gamma + beta
    return jnp.maximum(y, 0.0)


def _fused_chunk_kernel(patches_ref, w1_ref, b1_ref, g1_ref, be1_ref,
                        gmat_ref, pool_ref,
                        w2_ref, b2_ref,
                        w3o_ref, ssel_ref, b3_ref, g3_ref, be3_ref,
                        w4_ref, b4_ref,
                        out_ref, *, eps, inv_m1, inv_m2, cg):
    f32 = jnp.float32
    gmat = gmat_ref[...]

    # conv1 (3x3x3, pad 1) via pre-built im2col patches: (mid, K1p) @ (K1p, M) -> (mid, M)
    h = jnp.dot(w1_ref[...], patches_ref[0], preferred_element_type=f32) + b1_ref[...]

    # gn1 + relu1 (fused)
    h = _gn_relu(h, gmat, g1_ref[...], be1_ref[...], eps=eps, inv_n=inv_m1, cg=cg)

    # adaptive_avg_pool3d -> (5,6,4): one matmul with Kron(Pd,Ph,Pw)   (mid, M2)
    p = jnp.dot(h, pool_ref[...], preferred_element_type=f32)
    res = p

    # conv2 (1x1x1)
    h2 = jnp.dot(w2_ref[...], p, preferred_element_type=f32) + b2_ref[...]

    # conv3 (3x3x3, pad 1) on the (5,6,4) grid: in-VMEM im2col via 27 shift-selections
    acc = res + b3_ref[...]
    for off in range(27):
        shifted = jnp.dot(h2, ssel_ref[off], preferred_element_type=f32)     # (mid, M2)
        acc = acc + jnp.dot(w3o_ref[off], shifted, preferred_element_type=f32)

    # residual already folded into acc; gn3 + relu3 (fused)
    h3 = _gn_relu(acc, gmat, g3_ref[...], be3_ref[...], eps=eps, inv_n=inv_m2, cg=cg)

    # conv4 (1x1x1).  Final adaptive pool (5,6,4)->(5,6,4) is the identity: skipped.
    out_ref[0] = jnp.dot(w4_ref[...], h3, preferred_element_type=f32) + b4_ref[...]


# ----------------------------------------------------------------------------
# mini_backbone parameters + forward
# ----------------------------------------------------------------------------
def init_params(key, in_channels=1, out_dim=1):
    mid = in_channels * 4
    ks = jax.random.split(key, 8)
    rnd = lambda k, shape: 0.1 * jax.random.normal(k, shape, jnp.float32)
    return dict(
        w1=rnd(ks[0], (mid, in_channels, 3, 3, 3)), b1=rnd(ks[1], (mid,)),
        g1=jnp.ones((mid,), jnp.float32), be1=jnp.zeros((mid,), jnp.float32),
        w2=rnd(ks[2], (mid, mid, 1, 1, 1)), b2=rnd(ks[3], (mid,)),
        # gn2 / relu2 exist in the PyTorch __init__ but are never used in forward().
        w3=rnd(ks[4], (mid, mid, 3, 3, 3)), b3=rnd(ks[5], (mid,)),
        g3=jnp.ones((mid,), jnp.float32), be3=jnp.zeros((mid,), jnp.float32),
        w4=rnd(ks[6], (out_dim, mid, 1, 1, 1)), b4=rnd(ks[7], (out_dim,)),
    )


def mini_backbone_forward(params, x, n_groups=4, eps=1e-5):
    """x: (1, 4*in_channels, D, H, W) float32 (NCDHW, batch must be 1)."""
    N, C4, D, H, W = x.shape
    assert N == 1, "PyTorch forward's squeeze/unsqueeze requires batch == 1"
    assert C4 % 4 == 0, "input channels must split into 4 chunks"
    Cin = C4 // 4
    mid = params["w1"].shape[0]
    out_dim = params["w4"].shape[0]
    assert params["w1"].shape[1] == Cin
    assert mid % n_groups == 0, "GroupNorm channels must divide by n_groups"
    cg = mid // n_groups

    M = D * H * W
    Od, Oh, Ow = 5, 6, 4
    M2 = Od * Oh * Ow

    # --- shape-only constants ---
    pool = jnp.asarray(_kron_pool(D, H, W, Od, Oh, Ow))        # (M, M2)
    ssel = jnp.asarray(_conv3_select(Od, Oh, Ow))              # (27, M2, M2)
    gmat = jnp.asarray(_group_matrix(mid, n_groups))           # (mid, mid)

    # --- conv1 im2col for all 4 chunks at once (single XLA fusion) ---
    xc = x[0].reshape(4, Cin, D, H, W)                         # == torch.chunk(x, 4, dim=1)
    xp = jnp.pad(xc, ((0, 0), (0, 0), (1, 1), (1, 1), (1, 1)))
    pats = [xp[:, :, kd:kd + D, kh:kh + H, kw:kw + W]
            for kd in range(3) for kh in range(3) for kw in range(3)]
    patches = jnp.stack(pats, axis=2).reshape(4, Cin * 27, M)  # row = c*27 + (kd*9+kh*3+kw)
    K1 = Cin * 27
    K1p = ((K1 + 7) // 8) * 8                                  # sublane-align K (27 -> 32)
    patches = jnp.pad(patches, ((0, 0), (0, K1p - K1), (0, 0)))

    # --- weight repacking to lane-dense (Cout, K) layouts ---
    w1m = jnp.pad(params["w1"].reshape(mid, K1), ((0, 0), (0, K1p - K1)))
    w2m = params["w2"].reshape(mid, mid)
    w3o = jnp.transpose(params["w3"].reshape(mid, mid, 27), (2, 0, 1))   # (27, Cout, Cin)
    w4m = params["w4"].reshape(out_dim, mid)
    col = lambda v: v.reshape(-1, 1)

    kern = functools.partial(_fused_chunk_kernel, eps=eps,
                             inv_m1=1.0 / float(M), inv_m2=1.0 / float(M2), cg=cg)

    full2 = lambda i: (0, 0)
    full3 = lambda i: (0, 0, 0)
    out = pl.pallas_call(
        kern,
        grid=(4,),                                             # one grid step per chunk
        in_specs=[
            pl.BlockSpec((1, K1p, M), lambda i: (i, 0, 0)),    # im2col patches (per chunk)
            pl.BlockSpec((mid, K1p), full2),                   # w1
            pl.BlockSpec((mid, 1), full2),                     # b1
            pl.BlockSpec((mid, 1), full2),                     # gamma1
            pl.BlockSpec((mid, 1), full2),                     # beta1
            pl.BlockSpec((mid, mid), full2),                   # group-average matrix
            pl.BlockSpec((M, M2), full2),                      # Kron pooling matrix
            pl.BlockSpec((mid, mid), full2),                   # w2
            pl.BlockSpec((mid, 1), full2),                     # b2
            pl.BlockSpec((27, mid, mid), full3),               # w3 per offset
            pl.BlockSpec((27, M2, M2), full3),                 # conv3 shift selections
            pl.BlockSpec((mid, 1), full2),                     # b3
            pl.BlockSpec((mid, 1), full2),                     # gamma3
            pl.BlockSpec((mid, 1), full2),                     # beta3
            pl.BlockSpec((out_dim, mid), full2),               # w4
            pl.BlockSpec((out_dim, 1), full2),                 # b4
        ],
        out_specs=pl.BlockSpec((1, out_dim, M2), lambda i: (i, 0, 0)),
        out_shape=jax.ShapeDtypeStruct((4, out_dim, M2), jnp.float32),
        compiler_params=pltpu.CompilerParams(
            dimension_semantics=("parallel",)),                # chunks split across TCs on v7x
    )(patches, w1m, col(params["b1"]), col(params["g1"]), col(params["be1"]),
      gmat, pool, w2m, col(params["b2"]), w3o, ssel, col(params["b3"]),
      col(params["g3"]), col(params["be3"]), w4m, col(params["b4"]))

    # (4, out_dim, 120) -> list of 4 masks (out_dim, 5, 6, 4), matching PyTorch (1,5,6,4)
    return [out[i].reshape(out_dim, Od, Oh, Ow) for i in range(4)]


if __name__ == "__main__":
    key = jax.random.PRNGKey(0)
    kx, kp = jax.random.split(key)
    # (N=1, C=4*in_channels=4, D=10, H=12, W=8)
    x = jax.random.normal(kx, (1, 4, 10, 12, 8), jnp.float32)
    params = init_params(kp, in_channels=1, out_dim=1)

    fwd = jax.jit(mini_backbone_forward)
    outs = jax.block_until_ready(fwd(params, x))

    assert len(outs) == 4
    for o in outs:
        assert o.shape == (1, 5, 6, 4), o.shape
        assert o.dtype == jnp.float32
        assert bool(jnp.all(jnp.isfinite(o)))
    print("KERNEL_OK")
</pallas_src>

<mosaic_0001>
module attributes {stable_mosaic.version = 11 : i64} {
  func.func @_fused_chunk_kernel(%arg0: i32, %arg1: memref<1x32x960xf32, #tpu.memory_space<vmem>>, %arg2: memref<4x32xf32, #tpu.memory_space<vmem>>, %arg3: memref<4x1xf32, #tpu.memory_space<vmem>>, %arg4: memref<4x1xf32, #tpu.memory_space<vmem>>, %arg5: memref<4x1xf32, #tpu.memory_space<vmem>>, %arg6: memref<4x4xf32, #tpu.memory_space<vmem>>, %arg7: memref<960x120xf32, #tpu.memory_space<vmem>>, %arg8: memref<4x4xf32, #tpu.memory_space<vmem>>, %arg9: memref<4x1xf32, #tpu.memory_space<vmem>>, %arg10: memref<27x4x4xf32, #tpu.memory_space<vmem>>, %arg11: memref<27x120x120xf32, #tpu.memory_space<vmem>>, %arg12: memref<4x1xf32, #tpu.memory_space<vmem>>, %arg13: memref<4x1xf32, #tpu.memory_space<vmem>>, %arg14: memref<4x1xf32, #tpu.memory_space<vmem>>, %arg15: memref<1x4xf32, #tpu.memory_space<vmem>>, %arg16: memref<1x1xf32, #tpu.memory_space<vmem>>, %arg17: memref<1x1x120xf32, #tpu.memory_space<vmem>>) attributes {dimension_semantics = [#tpu.dimension_semantics<parallel>], iteration_bounds = array<i64: 4>, scalar_prefetch = 0 : i64, scratch_operands = 0 : i64, tpu.core_type = #tpu.core_type<tc>, window_params = [{transform_indices = @transform_0, window_bounds = array<i64: 1, 32, 960>}, {pipeline_mode = #tpu.pipeline_mode<synchronous>, transform_indices = @transform_1, window_bounds = array<i64: 4, 32>}, {pipeline_mode = #tpu.pipeline_mode<synchronous>, transform_indices = @transform_2, window_bounds = array<i64: 4, 1>}, {pipeline_mode = #tpu.pipeline_mode<synchronous>, transform_indices = @transform_3, window_bounds = array<i64: 4, 1>}, {pipeline_mode = #tpu.pipeline_mode<synchronous>, transform_indices = @transform_4, window_bounds = array<i64: 4, 1>}, {pipeline_mode = #tpu.pipeline_mode<synchronous>, transform_indices = @transform_5, window_bounds = array<i64: 4, 4>}, {pipeline_mode = #tpu.pipeline_mode<synchronous>, transform_indices = @transform_6, window_bounds = array<i64: 960, 120>}, {pipeline_mode = #tpu.pipeline_mode<synchronous>, transform_indices = @transform_7, window_bounds = array<i64: 4, 4>}, {pipeline_mode = #tpu.pipeline_mode<synchronous>, transform_indices = @transform_8, window_bounds = array<i64: 4, 1>}, {pipeline_mode = #tpu.pipeline_mode<synchronous>, transform_indices = @transform_9, window_bounds = array<i64: 27, 4, 4>}, {pipeline_mode = #tpu.pipeline_mode<synchronous>, transform_indices = @transform_10, window_bounds = array<i64: 27, 120, 120>}, {pipeline_mode = #tpu.pipeline_mode<synchronous>, transform_indices = @transform_11, window_bounds = array<i64: 4, 1>}, {pipeline_mode = #tpu.pipeline_mode<synchronous>, transform_indices = @transform_12, window_bounds = array<i64: 4, 1>}, {pipeline_mode = #tpu.pipeline_mode<synchronous>, transform_indices = @transform_13, window_bounds = array<i64: 4, 1>}, {pipeline_mode = #tpu.pipeline_mode<synchronous>, transform_indices = @transform_14, window_bounds = array<i64: 1, 4>}, {pipeline_mode = #tpu.pipeline_mode<synchronous>, transform_indices = @transform_15, window_bounds = array<i64: 1, 1>}, {transform_indices = @transform_16, window_bounds = array<i64: 1, 1, 120>}]} {
    %c0 = arith.constant 0 : index
    %c0_0 = arith.constant 0 : index
    %0 = vector.load %arg2[%c0, %c0_0] : memref<4x32xf32, #tpu.memory_space<vmem>>, vector<4x32xf32>
    %c0_1 = arith.constant 0 : index
    %c0_2 = arith.constant 0 : index
    %c0_3 = arith.constant 0 : index
    %1 = vector.load %arg1[%c0_1, %c0_2, %c0_3] : memref<1x32x960xf32, #tpu.memory_space<vmem>>, vector<1x32x960xf32>
    %2 = vector.shape_cast %1 : vector<1x32x960xf32> to vector<32x960xf32>
    %cst = arith.constant dense<0.000000e+00> : vector<4x960xf32>
    %3 = tpu.matmul %0, %2, %cst {dimension_numbers = #tpu.dot_dimension_numbers<[1], [0], [0], [1], [0, 0, 1, 1], [], []>} : vector<4x32xf32>, vector<32x960xf32>, vector<4x960xf32> -> vector<4x960xf32>
    %c0_4 = arith.constant 0 : index
    %c0_5 = arith.constant 0 : index
    %4 = vector.load %arg3[%c0_4, %c0_5] : memref<4x1xf32, #tpu.memory_space<vmem>>, vector<4x1xf32>
    %5 = vector.broadcast %4 : vector<4x1xf32> to vector<4x960xf32>
    %6 = arith.addf %3, %5 : vector<4x960xf32>
    %c0_6 = arith.constant 0 : index
    %c0_7 = arith.constant 0 : index
    %7 = vector.load %arg4[%c0_6, %c0_7] : memref<4x1xf32, #tpu.memory_space<vmem>>, vector<4x1xf32>
    %c0_8 = arith.constant 0 : index
    %c0_9 = arith.constant 0 : index
    %8 = vector.load %arg5[%c0_8, %c0_9] : memref<4x1xf32, #tpu.memory_space<vmem>>, vector<4x1xf32>
    %cst_10 = arith.constant dense<0.000000e+00> : vector<4xf32>
    %9 = vector.multi_reduction <add>, %6, %cst_10 [1] : vector<4x960xf32> to vector<4xf32>
    %10 = vector.shape_cast %9 : vector<4xf32> to vector<4x1xf32>
    %cst_11 = arith.constant 0.00104166672 : f32
    %11 = vector.broadcast %cst_11 : f32 to vector<4x1xf32>
    %12 = arith.mulf %10, %11 : vector<4x1xf32>
    %13 = arith.mulf %6, %6 : vector<4x960xf32>
    %cst_12 = arith.constant dense<0.000000e+00> : vector<4xf32>
    %14 = vector.multi_reduction <add>, %13, %cst_12 [1] : vector<4x960xf32> to vector<4xf32>
    %15 = vector.shape_cast %14 : vector<4xf32> to vector<4x1xf32>
    %cst_13 = arith.constant 0.00104166672 : f32
    %16 = vector.broadcast %cst_13 : f32 to vector<4x1xf32>
    %17 = arith.mulf %15, %16 : vector<4x1xf32>
    %18 = arith.mulf %12, %12 : vector<4x1xf32>
    %19 = arith.subf %17, %18 : vector<4x1xf32>
    %cst_14 = arith.constant 9.99999974E-6 : f32
    %20 = vector.broadcast %cst_14 : f32 to vector<4x1xf32>
    %21 = arith.addf %19, %20 : vector<4x1xf32>
    %22 = math.rsqrt %21 : vector<4x1xf32>
    %23 = vector.broadcast %12 : vector<4x1xf32> to vector<4x960xf32>
    %24 = arith.subf %6, %23 : vector<4x960xf32>
    %25 = vector.broadcast %22 : vector<4x1xf32> to vector<4x960xf32>
    %26 = arith.mulf %24, %25 : vector<4x960xf32>
    %27 = vector.broadcast %7 : vector<4x1xf32> to vector<4x960xf32>
    %28 = arith.mulf %26, %27 : vector<4x960xf32>
    %29 = vector.broadcast %8 : vector<4x1xf32> to vector<4x960xf32>
    %30 = arith.addf %28, %29 : vector<4x960xf32>
    %cst_15 = arith.constant 0.000000e+00 : f32
    %31 = vector.broadcast %cst_15 : f32 to vector<4x960xf32>
    %32 = arith.maximumf %30, %31 : vector<4x960xf32>
    %c0_16 = arith.constant 0 : index
    %c0_17 = arith.constant 0 : index
    %33 = vector.load %arg7[%c0_16, %c0_17] : memref<960x120xf32, #tpu.memory_space<vmem>>, vector<960x120xf32>
    %cst_18 = arith.constant dense<0.000000e+00> : vector<4x120xf32>
    %34 = tpu.matmul %32, %33, %cst_18 {dimension_numbers = #tpu.dot_dimension_numbers<[1], [0], [0], [1], [0, 0, 1, 1], [], []>} : vector<4x960xf32>, vector<960x120xf32>, vector<4x120xf32> -> vector<4x120xf32>
    %c0_19 = arith.constant 0 : index
    %c0_20 = arith.constant 0 : index
    %35 = vector.load %arg8[%c0_19, %c0_20] : memref<4x4xf32, #tpu.memory_space<vmem>>, vector<4x4xf32>
    %cst_21 = arith.constant dense<0.000000e+00> : vector<4x120xf32>
    %36 = tpu.matmul %35, %34, %cst_21 {dimension_numbers = #tpu.dot_dimension_numbers<[1], [0], [0], [1], [0, 0, 1, 1], [], []>} : vector<4x4xf32>, vector<4x120xf32>, vector<4x120xf32> -> vector<4x120xf32>
    %c0_22 = arith.constant 0 : index
    %c0_23 = arith.constant 0 : index
    %37 = vector.load %arg9[%c0_22, %c0_23] : memref<4x1xf32, #tpu.memory_space<vmem>>, vector<4x1xf32>
    %38 = vector.broadcast %37 : vector<4x1xf32> to vector<4x120xf32>
    %39 = arith.addf %36, %38 : vector<4x120xf32>
    %c0_24 = arith.constant 0 : index
    %c0_25 = arith.constant 0 : index
    %40 = vector.load %arg12[%c0_24, %c0_25] : memref<4x1xf32, #tpu.memory_space<vmem>>, vector<4x1xf32>
    %41 = vector.broadcast %40 : vector<4x1xf32> to vector<4x120xf32>
    %42 = arith.addf %34, %41 : vector<4x120xf32>
    %c0_26 = arith.constant 0 : index
    %c0_27 = arith.constant 0 : index
    %c0_28 = arith.constant 0 : index
    %43 = vector.load %arg11[%c0_26, %c0_27, %c0_28] : memref<27x120x120xf32, #tpu.memory_space<vmem>>, vector<1x120x120xf32>
    %44 = vector.shape_cast %43 : vector<1x120x120xf32> to vector<120x120xf32>
    %cst_29 = arith.constant dense<0.000000e+00> : vector<4x120xf32>
    %45 = tpu.matmul %39, %44, %cst_29 {dimension_numbers = #tpu.dot_dimension_numbers<[1], [0], [0], [1], [0, 0, 1, 1], [], []>} : vector<4x120xf32>, vector<120x120xf32>, vector<4x120xf32> -> vector<4x120xf32>
    %c0_30 = arith.constant 0 : index
    %c0_31 = arith.constant 0 : index
    %c0_32 = arith.constant 0 : index
    %46 = vector.load %arg10[%c0_30, %c0_31, %c0_32] : memref<27x4x4xf32, #tpu.memory_space<vmem>>, vector<1x4x4xf32>
    %47 = vector.shape_cast %46 : vector<1x4x4xf32> to vector<4x4xf32>
    %cst_33 = arith.constant dense<0.000000e+00> : vector<4x120xf32>
    %48 = tpu.matmul %47, %45, %cst_33 {dimension_numbers = #tpu.dot_dimension_numbers<[1], [0], [0], [1], [0, 0, 1, 1], [], []>} : vector<4x4xf32>, vector<4x120xf32>, vector<4x120xf32> -> vector<4x120xf32>
    %49 = arith.addf %42, %48 : vector<4x120xf32>
    %c1 = arith.constant 1 : index
    %c0_34 = arith.constant 0 : index
    %c0_35 = arith.constant 0 : index
    %50 = vector.load %arg11[%c1, %c0_34, %c0_35] : memref<27x120x120xf32, #tpu.memory_space<vmem>>, vector<1x120x120xf32>
    %51 = vector.shape_cast %50 : vector<1x120x120xf32> to vector<120x120xf32>
    %cst_36 = arith.constant dense<0.000000e+00> : vector<4x120xf32>
    %52 = tpu.matmul %39, %51, %cst_36 {dimension_numbers = #tpu.dot_dimension_numbers<[1], [0], [0], [1], [0, 0, 1, 1], [], []>} : vector<4x120xf32>, vector<120x120xf32>, vector<4x120xf32> -> vector<4x120xf32>
    %c1_37 = arith.constant 1 : index
    %c0_38 = arith.constant 0 : index
    %c0_39 = arith.constant 0 : index
    %53 = vector.load %arg10[%c1_37, %c0_38, %c0_39] : memref<27x4x4xf32, #tpu.memory_space<vmem>>, vector<1x4x4xf32>
    %54 = vector.shape_cast %53 : vector<1x4x4xf32> to vector<4x4xf32>
    %cst_40 = arith.constant dense<0.000000e+00> : vector<4x120xf32>
    %55 = tpu.matmul %54, %52, %cst_40 {dimension_numbers = #tpu.dot_dimension_numbers<[1], [0], [0], [1], [0, 0, 1, 1], [], []>} : vector<4x4xf32>, vector<4x120xf32>, vector<4x120xf32> -> vector<4x120xf32>
    %56 = arith.addf %49, %55 : vector<4x120xf32>
    %c2 = arith.constant 2 : index
    %c0_41 = arith.constant 0 : index
    %c0_42 = arith.constant 0 : index
    %57 = vector.load %arg11[%c2, %c0_41, %c0_42] : memref<27x120x120xf32, #tpu.memory_space<vmem>>, vector<1x120x120xf32>
    %58 = vector.shape_cast %57 : vector<1x120x120xf32> to vector<120x120xf32>
    %cst_43 = arith.constant dense<0.000000e+00> : vector<4x120xf32>
    %59 = tpu.matmul %39, %58, %cst_43 {dimension_numbers = #tpu.dot_dimension_numbers<[1], [0], [0], [1], [0, 0, 1, 1], [], []>} : vector<4x120xf32>, vector<120x120xf32>, vector<4x120xf32> -> vector<4x120xf32>
    %c2_44 = arith.constant 2 : index
    %c0_45 = arith.constant 0 : index
    %c0_46 = arith.constant 0 : index
    %60 = vector.load %arg10[%c2_44, %c0_45, %c0_46] : memref<27x4x4xf32, #tpu.memory_space<vmem>>, vector<1x4x4xf32>
    %61 = vector.shape_cast %60 : vector<1x4x4xf32> to vector<4x4xf32>
    %cst_47 = arith.constant dense<0.000000e+00> : vector<4x120xf32>
    %62 = tpu.matmul %61, %59, %cst_47 {dimension_numbers = #tpu.dot_dimension_numbers<[1], [0], [0], [1], [0, 0, 1, 1], [], []>} : vector<4x4xf32>, vector<4x120xf32>, vector<4x120xf32> -> vector<4x120xf32>
    %63 = arith.addf %56, %62 : vector<4x120xf32>
    %c3 = arith.constant 3 : index
    %c0_48 = arith.constant 0 : index
    %c0_49 = arith.constant 0 : index
    %64 = vector.load %arg11[%c3, %c0_48, %c0_49] : memref<27x120x120xf32, #tpu.memory_space<vmem>>, vector<1x120x120xf32>
    %65 = vector.shape_cast %64 : vector<1x120x120xf32> to vector<120x120xf32>
    %cst_50 = arith.constant dense<0.000000e+00> : vector<4x120xf32>
    %66 = tpu.matmul %39, %65, %cst_50 {dimension_numbers = #tpu.dot_dimension_numbers<[1], [0], [0], [1], [0, 0, 1, 1], [], []>} : vector<4x120xf32>, vector<120x120xf32>, vector<4x120xf32> -> vector<4x120xf32>
    %c3_51 = arith.constant 3 : index
    %c0_52 = arith.constant 0 : index
    %c0_53 = arith.constant 0 : index
    %67 = vector.load %arg10[%c3_51, %c0_52, %c0_53] : memref<27x4x4xf32, #tpu.memory_space<vmem>>, vector<1x4x4xf32>
    %68 = vector.shape_cast %67 : vector<1x4x4xf32> to vector<4x4xf32>
    %cst_54 = arith.constant dense<0.000000e+00> : vector<4x120xf32>
    %69 = tpu.matmul %68, %66, %cst_54 {dimension_numbers = #tpu.dot_dimension_numbers<[1], [0], [0], [1], [0, 0, 1, 1], [], []>} : vector<4x4xf32>, vector<4x120xf32>, vector<4x120xf32> -> vector<4x120xf32>
    %70 = arith.addf %63, %69 : vector<4x120xf32>
    %c4 = arith.constant 4 : index
    %c0_55 = arith.constant 0 : index
    %c0_56 = arith.constant 0 : index
    %71 = vector.load %arg11[%c4, %c0_55, %c0_56] : memref<27x120x120xf32, #tpu.memory_space<vmem>>, vector<1x120x120xf32>
    %72 = vector.shape_cast %71 : vector<1x120x120xf32> to vector<120x120xf32>
    %cst_57 = arith.constant dense<0.000000e+00> : vector<4x120xf32>
    %73 = tpu.matmul %39, %72, %cst_57 {dimension_numbers = #tpu.dot_dimension_numbers<[1], [0], [0], [1], [0, 0, 1, 1], [], []>} : vector<4x120xf32>, vector<120x120xf32>, vector<4x120xf32> -> vector<4x120xf32>
    %c4_58 = arith.constant 4 : index
    %c0_59 = arith.constant 0 : index
    %c0_60 = arith.constant 0 : index
    %74 = vector.load %arg10[%c4_58, %c0_59, %c0_60] : memref<27x4x4xf32, #tpu.memory_space<vmem>>, vector<1x4x4xf32>
    %75 = vector.shape_cast %74 : vector<1x4x4xf32> to vector<4x4xf32>
    %cst_61 = arith.constant dense<0.000000e+00> : vector<4x120xf32>
    %76 = tpu.matmul %75, %73, %cst_61 {dimension_numbers = #tpu.dot_dimension_numbers<[1], [0], [0], [1], [0, 0, 1, 1], [], []>} : vector<4x4xf32>, vector<4x120xf32>, vector<4x120xf32> -> vector<4x120xf32>
    %77 = arith.addf %70, %76 : vector<4x120xf32>
    %c5 = arith.constant 5 : index
    %c0_62 = arith.constant 0 : index
    %c0_63 = arith.constant 0 : index
    %78 = vector.load %arg11[%c5, %c0_62, %c0_63] : memref<27x120x120xf32, #tpu.memory_space<vmem>>, vector<1x120x120xf32>
    %79 = vector.shape_cast %78 : vector<1x120x120xf32> to vector<120x120xf32>
    %cst_64 = arith.constant dense<0.000000e+00> : vector<4x120xf32>
    %80 = tpu.matmul %39, %79, %cst_64 {dimension_numbers = #tpu.dot_dimension_numbers<[1], [0], [0], [1], [0, 0, 1, 1], [], []>} : vector<4x120xf32>, vector<120x120xf32>, vector<4x120xf32> -> vector<4x120xf32>
    %c5_65 = arith.constant 5 : index
    %c0_66 = arith.constant 0 : index
    %c0_67 = arith.constant 0 : index
    %81 = vector.load %arg10[%c5_65, %c0_66, %c0_67] : memref<27x4x4xf32, #tpu.memory_space<vmem>>, vector<1x4x4xf32>
    %82 = vector.shape_cast %81 : vector<1x4x4xf32> to vector<4x4xf32>
    %cst_68 = arith.constant dense<0.000000e+00> : vector<4x120xf32>
    %83 = tpu.matmul %82, %80, %cst_68 {dimension_numbers = #tpu.dot_dimension_numbers<[1], [0], [0], [1], [0, 0, 1, 1], [], []>} : vector<4x4xf32>, vector<4x120xf32>, vector<4x120xf32> -> vector<4x120xf32>
    %84 = arith.addf %77, %83 : vector<4x120xf32>
    %c6 = arith.constant 6 : index
    %c0_69 = arith.constant 0 : index
    %c0_70 = arith.constant 0 : index
    %85 = vector.load %arg11[%c6, %c0_69, %c0_70] : memref<27x120x120xf32, #tpu.memory_space<vmem>>, vector<1x120x120xf32>
    %86 = vector.shape_cast %85 : vector<1x120x120xf32> to vector<120x120xf32>
    %cst_71 = arith.constant dense<0.000000e+00> : vector<4x120xf32>
    %87 = tpu.matmul %39, %86, %cst_71 {dimension_numbers = #tpu.dot_dimension_numbers<[1], [0], [0], [1], [0, 0, 1, 1], [], []>} : vector<4x120xf32>, vector<120x120xf32>, vector<4x120xf32> -> vector<4x120xf32>
    %c6_72 = arith.constant 6 : index
    %c0_73 = arith.constant 0 : index
    %c0_74 = arith.constant 0 : index
    %88 = vector.load %arg10[%c6_72, %c0_73, %c0_74] : memref<27x4x4xf32, #tpu.memory_space<vmem>>, vector<1x4x4xf32>
    %89 = vector.shape_cast %88 : vector<1x4x4xf32> to vector<4x4xf32>
    %cst_75 = arith.constant dense<0.000000e+00> : vector<4x120xf32>
    %90 = tpu.matmul %89, %87, %cst_75 {dimension_numbers = #tpu.dot_dimension_numbers<[1], [0], [0], [1], [0, 0, 1, 1], [], []>} : vector<4x4xf32>, vector<4x120xf32>, vector<4x120xf32> -> vector<4x120xf32>
    %91 = arith.addf %84, %90 : vector<4x120xf32>
    %c7 = arith.constant 7 : index
    %c0_76 = arith.constant 0 : index
    %c0_77 = arith.constant 0 : index
    %92 = vector.load %arg11[%c7, %c0_76, %c0_77] : memref<27x120x120xf32, #tpu.memory_space<vmem>>, vector<1x120x120xf32>
    %93 = vector.shape_cast %92 : vector<1x120x120xf32> to vector<120x120xf32>
    %cst_78 = arith.constant dense<0.000000e+00> : vector<4x120xf32>
    %94 = tpu.matmul %39, %93, %cst_78 {dimension_numbers = #tpu.dot_dimension_numbers<[1], [0], [0], [1], [0, 0, 1, 1], [], []>} : vector<4x120xf32>, vector<120x120xf32>, vector<4x120xf32> -> vector<4x120xf32>
    %c7_79 = arith.constant 7 : index
    %c0_80 = arith.constant 0 : index
    %c0_81 = arith.constant 0 : index
    %95 = vector.load %arg10[%c7_79, %c0_80, %c0_81] : memref<27x4x4xf32, #tpu.memory_space<vmem>>, vector<1x4x4xf32>
    %96 = vector.shape_cast %95 : vector<1x4x4xf32> to vector<4x4xf32>
    %cst_82 = arith.constant dense<0.000000e+00> : vector<4x120xf32>
    %97 = tpu.matmul %96, %94, %cst_82 {dimension_numbers = #tpu.dot_dimension_numbers<[1], [0], [0], [1], [0, 0, 1, 1], [], []>} : vector<4x4xf32>, vector<4x120xf32>, vector<4x120xf32> -> vector<4x120xf32>
    %98 = arith.addf %91, %97 : vector<4x120xf32>
    %c8 = arith.constant 8 : index
    %c0_83 = arith.constant 0 : index
    %c0_84 = arith.constant 0 : index
    %99 = vector.load %arg11[%c8, %c0_83, %c0_84] : memref<27x120x120xf32, #tpu.memory_space<vmem>>, vector<1x120x120xf32>
    %100 = vector.shape_cast %99 : vector<1x120x120xf32> to vector<120x120xf32>
    %cst_85 = arith.constant dense<0.000000e+00> : vector<4x120xf32>
    %101 = tpu.matmul %39, %100, %cst_85 {dimension_numbers = #tpu.dot_dimension_numbers<[1], [0], [0], [1], [0, 0, 1, 1], [], []>} : vector<4x120xf32>, vector<120x120xf32>, vector<4x120xf32> -> vector<4x120xf32>
    %c8_86 = arith.constant 8 : index
    %c0_87 = arith.constant 0 : index
    %c0_88 = arith.constant 0 : index
    %102 = vector.load %arg10[%c8_86, %c0_87, %c0_88] : memref<27x4x4xf32, #tpu.memory_space<vmem>>, vector<1x4x4xf32>
    %103 = vector.shape_cast %102 : vector<1x4x4xf32> to vector<4x4xf32>
    %cst_89 = arith.constant dense<0.000000e+00> : vector<4x120xf32>
    %104 = tpu.matmul %103, %101, %cst_89 {dimension_numbers = #tpu.dot_dimension_numbers<[1], [0], [0], [1], [0, 0, 1, 1], [], []>} : vector<4x4xf32>, vector<4x120xf32>, vector<4x120xf32> -> vector<4x120xf32>
    %105 = arith.addf %98, %104 : vector<4x120xf32>
    %c9 = arith.constant 9 : index
    %c0_90 = arith.constant 0 : index
    %c0_91 = arith.constant 0 : index
    %106 = vector.load %arg11[%c9, %c0_90, %c0_91] : memref<27x120x120xf32, #tpu.memory_space<vmem>>, vector<1x120x120xf32>
    %107 = vector.shape_cast %106 : vector<1x120x120xf32> to vector<120x120xf32>
    %cst_92 = arith.constant dense<0.000000e+00> : vector<4x120xf32>
    %108 = tpu.matmul %39, %107, %cst_92 {dimension_numbers = #tpu.dot_dimension_numbers<[1], [0], [0], [1], [0, 0, 1, 1], [], []>} : vector<4x120xf32>, vector<120x120xf32>, vector<4x120xf32> -> vector<4x120xf32>
    %c9_93 = arith.constant 9 : index
    %c0_94 = arith.constant 0 : index
    %c0_95 = arith.constant 0 : index
    %109 = vector.load %arg10[%c9_93, %c0_94, %c0_95] : memref<27x4x4xf32, #tpu.memory_space<vmem>>, vector<1x4x4xf32>
    %110 = vector.shape_cast %109 : vector<1x4x4xf32> to vector<4x4xf32>
    %cst_96 = arith.constant dense<0.000000e+00> : vector<4x120xf32>
    %111 = tpu.matmul %110, %108, %cst_96 {dimension_numbers = #tpu.dot_dimension_numbers<[1], [0], [0], [1], [0, 0, 1, 1], [], []>} : vector<4x4xf32>, vector<4x120xf32>, vector<4x120xf32> -> vector<4x120xf32>
    %112 = arith.addf %105, %111 : vector<4x120xf32>
    %c10 = arith.constant 10 : index
    %c0_97 = arith.constant 0 : index
    %c0_98 = arith.constant 0 : index
    %113 = vector.load %arg11[%c10, %c0_97, %c0_98] : memref<27x120x120xf32, #tpu.memory_space<vmem>>, vector<1x120x120xf32>
    %114 = vector.shape_cast %113 : vector<1x120x120xf32> to vector<120x120xf32>
    %cst_99 = arith.constant dense<0.000000e+00> : vector<4x120xf32>
    %115 = tpu.matmul %39, %114, %cst_99 {dimension_numbers = #tpu.dot_dimension_numbers<[1], [0], [0], [1], [0, 0, 1, 1], [], []>} : vector<4x120xf32>, vector<120x120xf32>, vector<4x120xf32> -> vector<4x120xf32>
    %c10_100 = arith.constant 10 : index
    %c0_101 = arith.constant 0 : index
    %c0_102 = arith.constant 0 : index
    %116 = vector.load %arg10[%c10_100, %c0_101, %c0_102] : memref<27x4x4xf32, #tpu.memory_space<vmem>>, vector<1x4x4xf32>
    %117 = vector.shape_cast %116 : vector<1x4x4xf32> to vector<4x4xf32>
    %cst_103 = arith.constant dense<0.000000e+00> : vector<4x120xf32>
    %118 = tpu.matmul %117, %115, %cst_103 {dimension_numbers = #tpu.dot_dimension_numbers<[1], [0], [0], [1], [0, 0, 1, 1], [], []>} : vector<4x4xf32>, vector<4x120xf32>, vector<4x120xf32> -> vector<4x120xf32>
    %119 = arith.addf %112, %118 : vector<4x120xf32>
    %c11 = arith.constant 11 : index
    %c0_104 = arith.constant 0 : index
    %c0_105 = arith.constant 0 : index
    %120 = vector.load %arg11[%c11, %c0_104, %c0_105] : memref<27x120x120xf32, #tpu.memory_space<vmem>>, vector<1x120x120xf32>
    %121 = vector.shape_cast %120 : vector<1x120x120xf32> to vector<120x120xf32>
    %cst_106 = arith.constant dense<0.000000e+00> : vector<4x120xf32>
    %122 = tpu.matmul %39, %121, %cst_106 {dimension_numbers = #tpu.dot_dimension_numbers<[1], [0], [0], [1], [0, 0, 1, 1], [], []>} : vector<4x120xf32>, vector<120x120xf32>, vector<4x120xf32> -> vector<4x120xf32>
    %c11_107 = arith.constant 11 : index
    %c0_108 = arith.constant 0 : index
    %c0_109 = arith.constant 0 : index
    %123 = vector.load %arg10[%c11_107, %c0_108, %c0_109] : memref<27x4x4xf32, #tpu.memory_space<vmem>>, vector<1x4x4xf32>
    %124 = vector.shape_cast %123 : vector<1x4x4xf32> to vector<4x4xf32>
    %cst_110 = arith.constant dense<0.000000e+00> : vector<4x120xf32>
    %125 = tpu.matmul %124, %122, %cst_110 {dimension_numbers = #tpu.dot_dimension_numbers<[1], [0], [0], [1], [0, 0, 1, 1], [], []>} : vector<4x4xf32>, vector<4x120xf32>, vector<4x120xf32> -> vector<4x120xf32>
    %126 = arith.addf %119, %125 : vector<4x120xf32>
    %c12 = arith.constant 12 : index
    %c0_111 = arith.constant 0 : index
    %c0_112 = arith.constant 0 : index
    %127 = vector.load %arg11[%c12, %c0_111, %c0_112] : memref<27x120x120xf32, #tpu.memory_space<vmem>>, vector<1x120x120xf32>
    %128 = vector.shape_cast %127 : vector<1x120x120xf32> to vector<120x120xf32>
    %cst_113 = arith.constant dense<0.000000e+00> : vector<4x120xf32>
    %129 = tpu.matmul %39, %128, %cst_113 {dimension_numbers = #tpu.dot_dimension_numbers<[1], [0], [0], [1], [0, 0, 1, 1], [], []>} : vector<4x120xf32>, vector<120x120xf32>, vector<4x120xf32> -> vector<4x120xf32>
    %c12_114 = arith.constant 12 : index
    %c0_115 = arith.constant 0 : index
    %c0_116 = arith.constant 0 : index
    %130 = vector.load %arg10[%c12_114, %c0_115, %c0_116] : memref<27x4x4xf32, #tpu.memory_space<vmem>>, vector<1x4x4xf32>
    %131 = vector.shape_cast %130 : vector<1x4x4xf32> to vector<4x4xf32>
    %cst_117 = arith.constant dense<0.000000e+00> : vector<4x120xf32>
    %132 = tpu.matmul %131, %129, %cst_117 {dimension_numbers = #tpu.dot_dimension_numbers<[1], [0], [0], [1], [0, 0, 1, 1], [], []>} : vector<4x4xf32>, vector<4x120xf32>, vector<4x120xf32> -> vector<4x120xf32>
    %133 = arith.addf %126, %132 : vector<4x120xf32>
    %c13 = arith.constant 13 : index
    %c0_118 = arith.constant 0 : index
    %c0_119 = arith.constant 0 : index
    %134 = vector.load %arg11[%c13, %c0_118, %c0_119] : memref<27x120x120xf32, #tpu.memory_space<vmem>>, vector<1x120x120xf32>
    %135 = vector.shape_cast %134 : vector<1x120x120xf32> to vector<120x120xf32>
    %cst_120 = arith.constant dense<0.000000e+00> : vector<4x120xf32>
    %136 = tpu.matmul %39, %135, %cst_120 {dimension_numbers = #tpu.dot_dimension_numbers<[1], [0], [0], [1], [0, 0, 1, 1], [], []>} : vector<4x120xf32>, vector<120x120xf32>, vector<4x120xf32> -> vector<4x120xf32>
    %c13_121 = arith.constant 13 : index
    %c0_122 = arith.constant 0 : index
    %c0_123 = arith.constant 0 : index
    %137 = vector.load %arg10[%c13_121, %c0_122, %c0_123] : memref<27x4x4xf32, #tpu.memory_space<vmem>>, vector<1x4x4xf32>
    %138 = vector.shape_cast %137 : vector<1x4x4xf32> to vector<4x4xf32>
    %cst_124 = arith.constant dense<0.000000e+00> : vector<4x120xf32>
    %139 = tpu.matmul %138, %136, %cst_124 {dimension_numbers = #tpu.dot_dimension_numbers<[1], [0], [0], [1], [0, 0, 1, 1], [], []>} : vector<4x4xf32>, vector<4x120xf32>, vector<4x120xf32> -> vector<4x120xf32>
    %140 = arith.addf %133, %139 : vector<4x120xf32>
    %c14 = arith.constant 14 : index
    %c0_125 = arith.constant 0 : index
    %c0_126 = arith.constant 0 : index
    %141 = vector.load %arg11[%c14, %c0_125, %c0_126] : memref<27x120x120xf32, #tpu.memory_space<vmem>>, vector<1x120x120xf32>
    %142 = vector.shape_cast %141 : vector<1x120x120xf32> to vector<120x120xf32>
    %cst_127 = arith.constant dense<0.000000e+00> : vector<4x120xf32>
    %143 = tpu.matmul %39, %142, %cst_127 {dimension_numbers = #tpu.dot_dimension_numbers<[1], [0], [0], [1], [0, 0, 1, 1], [], []>} : vector<4x120xf32>, vector<120x120xf32>, vector<4x120xf32> -> vector<4x120xf32>
    %c14_128 = arith.constant 14 : index
    %c0_129 = arith.constant 0 : index
    %c0_130 = arith.constant 0 : index
    %144 = vector.load %arg10[%c14_128, %c0_129, %c0_130] : memref<27x4x4xf32, #tpu.memory_space<vmem>>, vector<1x4x4xf32>
    %145 = vector.shape_cast %144 : vector<1x4x4xf32> to vector<4x4xf32>
    %cst_131 = arith.constant dense<0.000000e+00> : vector<4x120xf32>
    %146 = tpu.matmul %145, %143, %cst_131 {dimension_numbers = #tpu.dot_dimension_numbers<[1], [0], [0], [1], [0, 0, 1, 1], [], []>} : vector<4x4xf32>, vector<4x120xf32>, vector<4x120xf32> -> vector<4x120xf32>
    %147 = arith.addf %140, %146 : vector<4x120xf32>
    %c15 = arith.constant 15 : index
    %c0_132 = arith.constant 0 : index
    %c0_133 = arith.constant 0 : index
    %148 = vector.load %arg11[%c15, %c0_132, %c0_133] : memref<27x120x120xf32, #tpu.memory_space<vmem>>, vector<1x120x120xf32>
    %149 = vector.shape_cast %148 : vector<1x120x120xf32> to vector<120x120xf32>
    %cst_134 = arith.constant dense<0.000000e+00> : vector<4x120xf32>
    %150 = tpu.matmul %39, %149, %cst_134 {dimension_numbers = #tpu.dot_dimension_numbers<[1], [0], [0], [1], [0, 0, 1, 1], [], []>} : vector<4x120xf32>, vector<120x120xf32>, vector<4x120xf32> -> vector<4x120xf32>
    %c15_135 = arith.constant 15 : index
    %c0_136 = arith.constant 0 : index
    %c0_137 = arith.constant 0 : index
    %151 = vector.load %arg10[%c15_135, %c0_136, %c0_137] : memref<27x4x4xf32, #tpu.memory_space<vmem>>, vector<1x4x4xf32>
    %152 = vector.shape_cast %151 : vector<1x4x4xf32> to vector<4x4xf32>
    %cst_138 = arith.constant dense<0.000000e+00> : vector<4x120xf32>
    %153 = tpu.matmul %152, %150, %cst_138 {dimension_numbers = #tpu.dot_dimension_numbers<[1], [0], [0], [1], [0, 0, 1, 1], [], []>} : vector<4x4xf32>, vector<4x120xf32>, vector<4x120xf32> -> vector<4x120xf32>
    %154 = arith.addf %147, %153 : vector<4x120xf32>
    %c16 = arith.constant 16 : index
    %c0_139 = arith.constant 0 : index
    %c0_140 = arith.constant 0 : index
    %155 = vector.load %arg11[%c16, %c0_139, %c0_140] : memref<27x120x120xf32, #tpu.memory_space<vmem>>, vector<1x120x120xf32>
    %156 = vector.shape_cast %155 : vector<1x120x120xf32> to vector<120x120xf32>
    %cst_141 = arith.constant dense<0.000000e+00> : vector<4x120xf32>
    %157 = tpu.matmul %39, %156, %cst_141 {dimension_numbers = #tpu.dot_dimension_numbers<[1], [0], [0], [1], [0, 0, 1, 1], [], []>} : vector<4x120xf32>, vector<120x120xf32>, vector<4x120xf32> -> vector<4x120xf32>
    %c16_142 = arith.constant 16 : index
    %c0_143 = arith.constant 0 : index
    %c0_144 = arith.constant 0 : index
    %158 = vector.load %arg10[%c16_142, %c0_143, %c0_144] : memref<27x4x4xf32, #tpu.memory_space<vmem>>, vector<1x4x4xf32>
    %159 = vector.shape_cast %158 : vector<1x4x4xf32> to vector<4x4xf32>
    %cst_145 = arith.constant dense<0.000000e+00> : vector<4x120xf32>
    %160 = tpu.matmul %159, %157, %cst_145 {dimension_numbers = #tpu.dot_dimension_numbers<[1], [0], [0], [1], [0, 0, 1, 1], [], []>} : vector<4x4xf32>, vector<4x120xf32>, vector<4x120xf32> -> vector<4x120xf32>
    %161 = arith.addf %154, %160 : vector<4x120xf32>
    %c17 = arith.constant 17 : index
    %c0_146 = arith.constant 0 : index
    %c0_147 = arith.constant 0 : index
    %162 = vector.load %arg11[%c17, %c0_146, %c0_147] : memref<27x120x120xf32, #tpu.memory_space<vmem>>, vector<1x120x120xf32>
    %163 = vector.shape_cast %162 : vector<1x120x120xf32> to vector<120x120xf32>
    %cst_148 = arith.constant dense<0.000000e+00> : vector<4x120xf32>
    %164 = tpu.matmul %39, %163, %cst_148 {dimension_numbers = #tpu.dot_dimension_numbers<[1], [0], [0], [1], [0, 0, 1, 1], [], []>} : vector<4x120xf32>, vector<120x120xf32>, vector<4x120xf32> -> vector<4x120xf32>
    %c17_149 = arith.constant 17 : index
    %c0_150 = arith.constant 0 : index
    %c0_151 = arith.constant 0 : index
    %165 = vector.load %arg10[%c17_149, %c0_150, %c0_151] : memref<27x4x4xf32, #tpu.memory_space<vmem>>, vector<1x4x4xf32>
    %166 = vector.shape_cast %165 : vector<1x4x4xf32> to vector<4x4xf32>
    %cst_152 = arith.constant dense<0.000000e+00> : vector<4x120xf32>
    %167 = tpu.matmul %166, %164, %cst_152 {dimension_numbers = #tpu.dot_dimension_numbers<[1], [0], [0], [1], [0, 0, 1, 1], [], []>} : vector<4x4xf32>, vector<4x120xf32>, vector<4x120xf32> -> vector<4x120xf32>
    %168 = arith.addf %161, %167 : vector<4x120xf32>
    %c18 = arith.constant 18 : index
    %c0_153 = arith.constant 0 : index
    %c0_154 = arith.constant 0 : index
    %169 = vector.load %arg11[%c18, %c0_153, %c0_154] : memref<27x120x120xf32, #tpu.memory_space<vmem>>, vector<1x120x120xf32>
    %170 = vector.shape_cast %169 : vector<1x120x120xf32> to vector<120x120xf32>
    %cst_155 = arith.constant dense<0.000000e+00> : vector<4x120xf32>
    %171 = tpu.matmul %39, %170, %cst_155 {dimension_numbers = #tpu.dot_dimension_numbers<[1], [0], [0], [1], [0, 0, 1, 1], [], []>} : vector<4x120xf32>, vector<120x120xf32>, vector<4x120xf32> -> vector<4x120xf32>
    %c18_156 = arith.constant 18 : index
    %c0_157 = arith.constant 0 : index
    %c0_158 = arith.constant 0 : index
    %172 = vector.load %arg10[%c18_156, %c0_157, %c0_158] : memref<27x4x4xf32, #tpu.memory_space<vmem>>, vector<1x4x4xf32>
    %173 = vector.shape_cast %172 : vector<1x4x4xf32> to vector<4x4xf32>
    %cst_159 = arith.constant dense<0.000000e+00> : vector<4x120xf32>
    %174 = tpu.matmul %173, %171, %cst_159 {dimension_numbers = #tpu.dot_dimension_numbers<[1], [0], [0], [1], [0, 0, 1, 1], [], []>} : vector<4x4xf32>, vector<4x120xf32>, vector<4x120xf32> -> vector<4x120xf32>
    %175 = arith.addf %168, %174 : vector<4x120xf32>
    %c19 = arith.constant 19 : index
    %c0_160 = arith.constant 0 : index
    %c0_161 = arith.constant 0 : index
    %176 = vector.load %arg11[%c19, %c0_160, %c0_161] : memref<27x120x120xf32, #tpu.memory_space<vmem>>, vector<1x120x120xf32>
    %177 = vector.shape_cast %176 : vector<1x120x120xf32> to vector<120x120xf32>
    %cst_162 = arith.constant dense<0.000000e+00> : vector<4x120xf32>
    %178 = tpu.matmul %39, %177, %cst_162 {dimension_numbers = #tpu.dot_dimension_numbers<[1], [0], [0], [1], [0, 0, 1, 1], [], []>} : vector<4x120xf32>, vector<120x120xf32>, vector<4x120xf32> -> vector<4x120xf32>
    %c19_163 = arith.constant 19 : index
    %c0_164 = arith.constant 0 : index
    %c0_165 = arith.constant 0 : index
    %179 = vector.load %arg10[%c19_163, %c0_164, %c0_165] : memref<27x4x4xf32, #tpu.memory_space<vmem>>, vector<1x4x4xf32>
    %180 = vector.shape_cast %179 : vector<1x4x4xf32> to vector<4x4xf32>
    %cst_166 = arith.constant dense<0.000000e+00> : vector<4x120xf32>
    %181 = tpu.matmul %180, %178, %cst_166 {dimension_numbers = #tpu.dot_dimension_numbers<[1], [0], [0], [1], [0, 0, 1, 1], [], []>} : vector<4x4xf32>, vector<4x120xf32>, vector<4x120xf32> -> vector<4x120xf32>
    %182 = arith.addf %175, %181 : vector<4x120xf32>
    %c20 = arith.constant 20 : index
    %c0_167 = arith.constant 0 : index
    %c0_168 = arith.constant 0 : index
    %183 = vector.load %arg11[%c20, %c0_167, %c0_168] : memref<27x120x120xf32, #tpu.memory_space<vmem>>, vector<1x120x120xf32>
    %184 = vector.shape_cast %183 : vector<1x120x120xf32> to vector<120x120xf32>
    %cst_169 = arith.constant dense<0.000000e+00> : vector<4x120xf32>
    %185 = tpu.matmul %39, %184, %cst_169 {dimension_numbers = #tpu.dot_dimension_numbers<[1], [0], [0], [1], [0, 0, 1, 1], [], []>} : vector<4x120xf32>, vector<120x120xf32>, vector<4x120xf32> -> vector<4x120xf32>
    %c20_170 = arith.constant 20 : index
    %c0_171 = arith.constant 0 : index
    %c0_172 = arith.constant 0 : index
    %186 = vector.load %arg10[%c20_170, %c0_171, %c0_172] : memref<27x4x4xf32, #tpu.memory_space<vmem>>, vector<1x4x4xf32>
    %187 = vector.shape_cast %186 : vector<1x4x4xf32> to vector<4x4xf32>
    %cst_173 = arith.constant dense<0.000000e+00> : vector<4x120xf32>
    %188 = tpu.matmul %187, %185, %cst_173 {dimension_numbers = #tpu.dot_dimension_numbers<[1], [0], [0], [1], [0, 0, 1, 1], [], []>} : vector<4x4xf32>, vector<4x120xf32>, vector<4x120xf32> -> vector<4x120xf32>
    %189 = arith.addf %182, %188 : vector<4x120xf32>
    %c21 = arith.constant 21 : index
    %c0_174 = arith.constant 0 : index
    %c0_175 = arith.constant 0 : index
    %190 = vector.load %arg11[%c21, %c0_174, %c0_175] : memref<27x120x120xf32, #tpu.memory_space<vmem>>, vector<1x120x120xf32>
    %191 = vector.shape_cast %190 : vector<1x120x120xf32> to vector<120x120xf32>
    %cst_176 = arith.constant dense<0.000000e+00> : vector<4x120xf32>
    %192 = tpu.matmul %39, %191, %cst_176 {dimension_numbers = #tpu.dot_dimension_numbers<[1], [0], [0], [1], [0, 0, 1, 1], [], []>} : vector<4x120xf32>, vector<120x120xf32>, vector<4x120xf32> -> vector<4x120xf32>
    %c21_177 = arith.constant 21 : index
    %c0_178 = arith.constant 0 : index
    %c0_179 = arith.constant 0 : index
    %193 = vector.load %arg10[%c21_177, %c0_178, %c0_179] : memref<27x4x4xf32, #tpu.memory_space<vmem>>, vector<1x4x4xf32>
    %194 = vector.shape_cast %193 : vector<1x4x4xf32> to vector<4x4xf32>
    %cst_180 = arith.constant dense<0.000000e+00> : vector<4x120xf32>
    %195 = tpu.matmul %194, %192, %cst_180 {dimension_numbers = #tpu.dot_dimension_numbers<[1], [0], [0], [1], [0, 0, 1, 1], [], []>} : vector<4x4xf32>, vector<4x120xf32>, vector<4x120xf32> -> vector<4x120xf32>
    %196 = arith.addf %189, %195 : vector<4x120xf32>
    %c22 = arith.constant 22 : index
    %c0_181 = arith.constant 0 : index
    %c0_182 = arith.constant 0 : index
    %197 = vector.load %arg11[%c22, %c0_181, %c0_182] : memref<27x120x120xf32, #tpu.memory_space<vmem>>, vector<1x120x120xf32>
    %198 = vector.shape_cast %197 : vector<1x120x120xf32> to vector<120x120xf32>
    %cst_183 = arith.constant dense<0.000000e+00> : vector<4x120xf32>
    %199 = tpu.matmul %39, %198, %cst_183 {dimension_numbers = #tpu.dot_dimension_numbers<[1], [0], [0], [1], [0, 0, 1, 1], [], []>} : vector<4x120xf32>, vector<120x120xf32>, vector<4x120xf32> -> vector<4x120xf32>
    %c22_184 = arith.constant 22 : index
    %c0_185 = arith.constant 0 : index
    %c0_186 = arith.constant 0 : index
    %200 = vector.load %arg10[%c22_184, %c0_185, %c0_186] : memref<27x4x4xf32, #tpu.memory_space<vmem>>, vector<1x4x4xf32>
    %201 = vector.shape_cast %200 : vector<1x4x4xf32> to vector<4x4xf32>
    %cst_187 = arith.constant dense<0.000000e+00> : vector<4x120xf32>
    %202 = tpu.matmul %201, %199, %cst_187 {dimension_numbers = #tpu.dot_dimension_numbers<[1], [0], [0], [1], [0, 0, 1, 1], [], []>} : vector<4x4xf32>, vector<4x120xf32>, vector<4x120xf32> -> vector<4x120xf32>
    %203 = arith.addf %196, %202 : vector<4x120xf32>
    %c23 = arith.constant 23 : index
    %c0_188 = arith.constant 0 : index
    %c0_189 = arith.constant 0 : index
    %204 = vector.load %arg11[%c23, %c0_188, %c0_189] : memref<27x120x120xf32, #tpu.memory_space<vmem>>, vector<1x120x120xf32>
    %205 = vector.shape_cast %204 : vector<1x120x120xf32> to vector<120x120xf32>
    %cst_190 = arith.constant dense<0.000000e+00> : vector<4x120xf32>
    %206 = tpu.matmul %39, %205, %cst_190 {dimension_numbers = #tpu.dot_dimension_numbers<[1], [0], [0], [1], [0, 0, 1, 1], [], []>} : vector<4x120xf32>, vector<120x120xf32>, vector<4x120xf32> -> vector<4x120xf32>
    %c23_191 = arith.constant 23 : index
    %c0_192 = arith.constant 0 : index
    %c0_193 = arith.constant 0 : index
    %207 = vector.load %arg10[%c23_191, %c0_192, %c0_193] : memref<27x4x4xf32, #tpu.memory_space<vmem>>, vector<1x4x4xf32>
    %208 = vector.shape_cast %207 : vector<1x4x4xf32> to vector<4x4xf32>
    %cst_194 = arith.constant dense<0.000000e+00> : vector<4x120xf32>
    %209 = tpu.matmul %208, %206, %cst_194 {dimension_numbers = #tpu.dot_dimension_numbers<[1], [0], [0], [1], [0, 0, 1, 1], [], []>} : vector<4x4xf32>, vector<4x120xf32>, vector<4x120xf32> -> vector<4x120xf32>
    %210 = arith.addf %203, %209 : vector<4x120xf32>
    %c24 = arith.constant 24 : index
    %c0_195 = arith.constant 0 : index
    %c0_196 = arith.constant 0 : index
    %211 = vector.load %arg11[%c24, %c0_195, %c0_196] : memref<27x120x120xf32, #tpu.memory_space<vmem>>, vector<1x120x120xf32>
    %212 = vector.shape_cast %211 : vector<1x120x120xf32> to vector<120x120xf32>
    %cst_197 = arith.constant dense<0.000000e+00> : vector<4x120xf32>
    %213 = tpu.matmul %39, %212, %cst_197 {dimension_numbers = #tpu.dot_dimension_numbers<[1], [0], [0], [1], [0, 0, 1, 1], [], []>} : vector<4x120xf32>, vector<120x120xf32>, vector<4x120xf32> -> vector<4x120xf32>
    %c24_198 = arith.constant 24 : index
    %c0_199 = arith.constant 0 : index
    %c0_200 = arith.constant 0 : index
    %214 = vector.load %arg10[%c24_198, %c0_199, %c0_200] : memref<27x4x4xf32, #tpu.memory_space<vmem>>, vector<1x4x4xf32>
    %215 = vector.shape_cast %214 : vector<1x4x4xf32> to vector<4x4xf32>
    %cst_201 = arith.constant dense<0.000000e+00> : vector<4x120xf32>
    %216 = tpu.matmul %215, %213, %cst_201 {dimension_numbers = #tpu.dot_dimension_numbers<[1], [0], [0], [1], [0, 0, 1, 1], [], []>} : vector<4x4xf32>, vector<4x120xf32>, vector<4x120xf32> -> vector<4x120xf32>
    %217 = arith.addf %210, %216 : vector<4x120xf32>
    %c25 = arith.constant 25 : index
    %c0_202 = arith.constant 0 : index
    %c0_203 = arith.constant 0 : index
    %218 = vector.load %arg11[%c25, %c0_202, %c0_203] : memref<27x120x120xf32, #tpu.memory_space<vmem>>, vector<1x120x120xf32>
    %219 = vector.shape_cast %218 : vector<1x120x120xf32> to vector<120x120xf32>
    %cst_204 = arith.constant dense<0.000000e+00> : vector<4x120xf32>
    %220 = tpu.matmul %39, %219, %cst_204 {dimension_numbers = #tpu.dot_dimension_numbers<[1], [0], [0], [1], [0, 0, 1, 1], [], []>} : vector<4x120xf32>, vector<120x120xf32>, vector<4x120xf32> -> vector<4x120xf32>
    %c25_205 = arith.constant 25 : index
    %c0_206 = arith.constant 0 : index
    %c0_207 = arith.constant 0 : index
    %221 = vector.load %arg10[%c25_205, %c0_206, %c0_207] : memref<27x4x4xf32, #tpu.memory_space<vmem>>, vector<1x4x4xf32>
    %222 = vector.shape_cast %221 : vector<1x4x4xf32> to vector<4x4xf32>
    %cst_208 = arith.constant dense<0.000000e+00> : vector<4x120xf32>
    %223 = tpu.matmul %222, %220, %cst_208 {dimension_numbers = #tpu.dot_dimension_numbers<[1], [0], [0], [1], [0, 0, 1, 1], [], []>} : vector<4x4xf32>, vector<4x120xf32>, vector<4x120xf32> -> vector<4x120xf32>
    %224 = arith.addf %217, %223 : vector<4x120xf32>
    %c26 = arith.constant 26 : index
    %c0_209 = arith.constant 0 : index
    %c0_210 = arith.constant 0 : index
    %225 = vector.load %arg11[%c26, %c0_209, %c0_210] : memref<27x120x120xf32, #tpu.memory_space<vmem>>, vector<1x120x120xf32>
    %226 = vector.shape_cast %225 : vector<1x120x120xf32> to vector<120x120xf32>
    %cst_211 = arith.constant dense<0.000000e+00> : vector<4x120xf32>
    %227 = tpu.matmul %39, %226, %cst_211 {dimension_numbers = #tpu.dot_dimension_numbers<[1], [0], [0], [1], [0, 0, 1, 1], [], []>} : vector<4x120xf32>, vector<120x120xf32>, vector<4x120xf32> -> vector<4x120xf32>
    %c26_212 = arith.constant 26 : index
    %c0_213 = arith.constant 0 : index
    %c0_214 = arith.constant 0 : index
    %228 = vector.load %arg10[%c26_212, %c0_213, %c0_214] : memref<27x4x4xf32, #tpu.memory_space<vmem>>, vector<1x4x4xf32>
    %229 = vector.shape_cast %228 : vector<1x4x4xf32> to vector<4x4xf32>
    %cst_215 = arith.constant dense<0.000000e+00> : vector<4x120xf32>
    %230 = tpu.matmul %229, %227, %cst_215 {dimension_numbers = #tpu.dot_dimension_numbers<[1], [0], [0], [1], [0, 0, 1, 1], [], []>} : vector<4x4xf32>, vector<4x120xf32>, vector<4x120xf32> -> vector<4x120xf32>
    %231 = arith.addf %224, %230 : vector<4x120xf32>
    %c0_216 = arith.constant 0 : index
    %c0_217 = arith.constant 0 : index
    %232 = vector.load %arg13[%c0_216, %c0_217] : memref<4x1xf32, #tpu.memory_space<vmem>>, vector<4x1xf32>
    %c0_218 = arith.constant 0 : index
    %c0_219 = arith.constant 0 : index
    %233 = vector.load %arg14[%c0_218, %c0_219] : memref<4x1xf32, #tpu.memory_space<vmem>>, vector<4x1xf32>
    %cst_220 = arith.constant dense<0.000000e+00> : vector<4xf32>
    %234 = vector.multi_reduction <add>, %231, %cst_220 [1] : vector<4x120xf32> to vector<4xf32>
    %235 = vector.shape_cast %234 : vector<4xf32> to vector<4x1xf32>
    %cst_221 = arith.constant 0.00833333377 : f32
    %236 = vector.broadcast %cst_221 : f32 to vector<4x1xf32>
    %237 = arith.mulf %235, %236 : vector<4x1xf32>
    %238 = arith.mulf %231, %231 : vector<4x120xf32>
    %cst_222 = arith.constant dense<0.000000e+00> : vector<4xf32>
    %239 = vector.multi_reduction <add>, %238, %cst_222 [1] : vector<4x120xf32> to vector<4xf32>
    %240 = vector.shape_cast %239 : vector<4xf32> to vector<4x1xf32>
    %cst_223 = arith.constant 0.00833333377 : f32
    %241 = vector.broadcast %cst_223 : f32 to vector<4x1xf32>
    %242 = arith.mulf %240, %241 : vector<4x1xf32>
    %243 = arith.mulf %237, %237 : vector<4x1xf32>
    %244 = arith.subf %242, %243 : vector<4x1xf32>
    %cst_224 = arith.constant 9.99999974E-6 : f32
    %245 = vector.broadcast %cst_224 : f32 to vector<4x1xf32>
    %246 = arith.addf %244, %245 : vector<4x1xf32>
    %247 = math.rsqrt %246 : vector<4x1xf32>
    %248 = vector.broadcast %237 : vector<4x1xf32> to vector<4x120xf32>
    %249 = arith.subf %231, %248 : vector<4x120xf32>
    %250 = vector.broadcast %247 : vector<4x1xf32> to vector<4x120xf32>
    %251 = arith.mulf %249, %250 : vector<4x120xf32>
    %252 = vector.broadcast %232 : vector<4x1xf32> to vector<4x120xf32>
    %253 = arith.mulf %251, %252 : vector<4x120xf32>
    %254 = vector.broadcast %233 : vector<4x1xf32> to vector<4x120xf32>
    %255 = arith.addf %253, %254 : vector<4x120xf32>
    %cst_225 = arith.constant 0.000000e+00 : f32
    %256 = vector.broadcast %cst_225 : f32 to vector<4x120xf32>
    %257 = arith.maximumf %255, %256 : vector<4x120xf32>
    %c0_226 = arith.constant 0 : index
    %c0_227 = arith.constant 0 : index
    %258 = vector.load %arg15[%c0_226, %c0_227] : memref<1x4xf32, #tpu.memory_space<vmem>>, vector<1x4xf32>
    %cst_228 = arith.constant dense<0.000000e+00> : vector<1x120xf32>
    %259 = tpu.matmul %258, %257, %cst_228 {dimension_numbers = #tpu.dot_dimension_numbers<[1], [0], [0], [1], [0, 0, 1, 1], [], []>} : vector<1x4xf32>, vector<4x120xf32>, vector<1x120xf32> -> vector<1x120xf32>
    %c0_229 = arith.constant 0 : index
    %c0_230 = arith.constant 0 : index
    %260 = vector.load %arg16[%c0_229, %c0_230] : memref<1x1xf32, #tpu.memory_space<vmem>>, vector<1x1xf32>
    %261 = vector.broadcast %260 : vector<1x1xf32> to vector<1x120xf32>
    %262 = arith.addf %259, %261 : vector<1x120xf32>
    %c0_231 = arith.constant 0 : index
    %c0_232 = arith.constant 0 : index
    %c0_233 = arith.constant 0 : index
    %263 = vector.load %arg17[%c0_231, %c0_232, %c0_233] : memref<1x1x120xf32, #tpu.memory_space<vmem>>, vector<1x1x120xf32>
    %264 = vector.shape_cast %263 : vector<1x1x120xf32> to vector<1x120xf32>
    %265 = vector.shape_cast %262 : vector<1x120xf32> to vector<1x1x120xf32>
    tpu.vector_store %arg17[%c0_231, %c0_232, %c0_233], %265 {strides = array<i32>} : memref<1x1x120xf32, #tpu.memory_space<vmem>>, vector<1x1x120xf32>,
    return
  }
  func.func @transform_0(%arg0: i32) -> (i32, i32, i32) {
    %c0_i32 = arith.constant 0 : i32
    %c0_i32_0 = arith.constant 0 : i32
    %c0_i32_1 = arith.constant 0 : i32
    return %arg0, %c0_i32, %c0_i32_0 : i32, i32, i32
  }
  func.func @transform_1(%arg0: i32) -> (i32, i32) {
    %c0_i32 = arith.constant 0 : i32
    %c0_i32_0 = arith.constant 0 : i32
    %c0_i32_1 = arith.constant 0 : i32
    return %c0_i32, %c0_i32_0 : i32, i32
  }
  func.func @transform_2(%arg0: i32) -> (i32, i32) {
    %c0_i32 = arith.constant 0 : i32
    %c0_i32_0 = arith.constant 0 : i32
    %c0_i32_1 = arith.constant 0 : i32
    return %c0_i32, %c0_i32_0 : i32, i32
  }
  func.func @transform_3(%arg0: i32) -> (i32, i32) {
    %c0_i32 = arith.constant 0 : i32
    %c0_i32_0 = arith.constant 0 : i32
    %c0_i32_1 = arith.constant 0 : i32
    return %c0_i32, %c0_i32_0 : i32, i32
  }
  func.func @transform_4(%arg0: i32) -> (i32, i32) {
    %c0_i32 = arith.constant 0 : i32
    %c0_i32_0 = arith.constant 0 : i32
    %c0_i32_1 = arith.constant 0 : i32
    return %c0_i32, %c0_i32_0 : i32, i32
  }
  func.func @transform_5(%arg0: i32) -> (i32, i32) {
    %c0_i32 = arith.constant 0 : i32
    %c0_i32_0 = arith.constant 0 : i32
    %c0_i32_1 = arith.constant 0 : i32
    return %c0_i32, %c0_i32_0 : i32, i32
  }
  func.func @transform_6(%arg0: i32) -> (i32, i32) {
    %c0_i32 = arith.constant 0 : i32
    %c0_i32_0 = arith.constant 0 : i32
    %c0_i32_1 = arith.constant 0 : i32
    return %c0_i32, %c0_i32_0 : i32, i32
  }
  func.func @transform_7(%arg0: i32) -> (i32, i32) {
    %c0_i32 = arith.constant 0 : i32
    %c0_i32_0 = arith.constant 0 : i32
    %c0_i32_1 = arith.constant 0 : i32
    return %c0_i32, %c0_i32_0 : i32, i32
  }
  func.func @transform_8(%arg0: i32) -> (i32, i32) {
    %c0_i32 = arith.constant 0 : i32
    %c0_i32_0 = arith.constant 0 : i32
    %c0_i32_1 = arith.constant 0 : i32
    return %c0_i32, %c0_i32_0 : i32, i32
  }
  func.func @transform_9(%arg0: i32) -> (i32, i32, i32) {
    %c0_i32 = arith.constant 0 : i32
    %c0_i32_0 = arith.constant 0 : i32
    %c0_i32_1 = arith.constant 0 : i32
    %c0_i32_2 = arith.constant 0 : i32
    return %c0_i32, %c0_i32_0, %c0_i32_1 : i32, i32, i32
  }
  func.func @transform_10(%arg0: i32) -> (i32, i32, i32) {
    %c0_i32 = arith.constant 0 : i32
    %c0_i32_0 = arith.constant 0 : i32
    %c0_i32_1 = arith.constant 0 : i32
    %c0_i32_2 = arith.constant 0 : i32
    return %c0_i32, %c0_i32_0, %c0_i32_1 : i32, i32, i32
  }
  func.func @transform_11(%arg0: i32) -> (i32, i32) {
    %c0_i32 = arith.constant 0 : i32
    %c0_i32_0 = arith.constant 0 : i32
    %c0_i32_1 = arith.constant 0 : i32
    return %c0_i32, %c0_i32_0 : i32, i32
  }
  func.func @transform_12(%arg0: i32) -> (i32, i32) {
    %c0_i32 = arith.constant 0 : i32
    %c0_i32_0 = arith.constant 0 : i32
    %c0_i32_1 = arith.constant 0 : i32
    return %c0_i32, %c0_i32_0 : i32, i32
  }
  func.func @transform_13(%arg0: i32) -> (i32, i32) {
    %c0_i32 = arith.constant 0 : i32
    %c0_i32_0 = arith.constant 0 : i32
    %c0_i32_1 = arith.constant 0 : i32
    return %c0_i32, %c0_i32_0 : i32, i32
  }
  func.func @transform_14(%arg0: i32) -> (i32, i32) {
    %c0_i32 = arith.constant 0 : i32
    %c0_i32_0 = arith.constant 0 : i32
    %c0_i32_1 = arith.constant 0 : i32
    return %c0_i32, %c0_i32_0 : i32, i32
  }
  func.func @transform_15(%arg0: i32) -> (i32, i32) {
    %c0_i32 = arith.constant 0 : i32
    %c0_i32_0 = arith.constant 0 : i32
    %c0_i32_1 = arith.constant 0 : i32
    return %c0_i32, %c0_i32_0 : i32, i32
  }
  func.func @transform_16(%arg0: i32) -> (i32, i32, i32) {
    %c0_i32 = arith.constant 0 : i32
    %c0_i32_0 = arith.constant 0 : i32
    %c0_i32_1 = arith.constant 0 : i32
    return %arg0, %c0_i32, %c0_i32_0 : i32, i32, i32
  }
}

</mosaic_0001>

<llo_original>
// kernel: squeeze.6
$region0: #{squeeze.6}
  %s0 = inlined_call_operand.vmem [shape: f32[120], index: 0, kind: input, shape index: {}]
  %s1 = inlined_call_operand.vmem [shape: f32[1,5,6,4], index: 1, kind: output, shape index: {}]
  $region1: #{squeeze.6} parent=0
    #allocation0 [shape = 'u8[4096]{0}', space=vmem, size = 0x1000, scoped, tag = 'scoped mem for input reshape']
    %s3 = sshllo.u32 0, 1
    %v4 = vld [vmem:[%s0] sm:%s3]
    %5 = vst [vmem:[#allocation0] sm:%s3] %v4
    %v6 = vld [vmem:[#allocation0] sm:$0x1]
    %vm7 = vcmask 31744
    %8 = vst.msk [vmem:[%s1] sm:$0x1] %vm7, %v6
    %v9 = vld [vmem:[#allocation0] sm:$0x1]
    %10 = vrot.lane.b32.xlu0 %v9, 124
    %v11 = vpop.permute.xlu0 %10
    %vm12 = vcmask 31744
    %s13 = scalar_lea.vmem %s1, 1
    %14 = vst.msk [vmem:[%s13] sm:$0x1] %vm12, %v11
    %v15 = vld [vmem:[#allocation0] sm:$0x1]
    %16 = vrot.lane.b32.xlu0 %v15, 120
    %v17 = vpop.permute.xlu0 %16
    %vm18 = vcmask 31744
    %s19 = scalar_lea.vmem %s1, 2
    %20 = vst.msk [vmem:[%s19] sm:$0x1] %vm18, %v17
    %v21 = vld [vmem:[#allocation0] sm:$0x1]
    %22 = vrot.lane.b32.xlu0 %v21, 116
    %v23 = vpop.permute.xlu0 %22
    %vm24 = vcmask 31744
    %s25 = scalar_lea.vmem %s1, 3
    %26 = vst.msk [vmem:[%s25] sm:$0x1] %vm24, %v23
    %v27 = vld [vmem:[#allocation0] sm:$0x1]
    %28 = vrot.lane.b32.xlu0 %v27, 112
    %v29 = vpop.permute.xlu0 %28
    %vm30 = vcmask 31744
    %s31 = scalar_lea.vmem %s1, 4
    %32 = vst.msk [vmem:[%s31] sm:$0x1] %vm30, %v29
    %v33 = vld [vmem:[#allocation0] sm:$0x1]
    %34 = vrot.lane.b32.xlu0 %v33, 108
    %v35 = vpop.permute.xlu0 %34
    %vm36 = vcmask 31744
    %s37 = scalar_lea.vmem %s1, 5
    %38 = vst.msk [vmem:[%s37] sm:$0x1] %vm36, %v35
    %v39 = vld [vmem:[#allocation0] sm:$0x1]
    %40 = vrot.lane.b32.xlu0 %v39, 104
    %v41 = vpop.permute.xlu0 %40
    %vm42 = vcmask 31744
    %s43 = scalar_lea.vmem %s1, 8
    %44 = vst.msk [vmem:[%s43] sm:$0x1] %vm42, %v41
    %v45 = vld [vmem:[#allocation0] sm:$0x1]
    %46 = vrot.lane.b32.xlu0 %v45, 100
    %v47 = vpop.permute.xlu0 %46
    %vm48 = vcmask 31744
    %s49 = scalar_lea.vmem %s1, 9
    %50 = vst.msk [vmem:[%s49] sm:$0x1] %vm48, %v47
    %v51 = vld [vmem:[#allocation0] sm:$0x1]
    %52 = vrot.lane.b32.xlu0 %v51, 96
    %v53 = vpop.permute.xlu0 %52
    %vm54 = vcmask 31744
    %s55 = scalar_lea.vmem %s1, 10
    %56 = vst.msk [vmem:[%s55] sm:$0x1] %vm54, %v53
    %v57 = vld [vmem:[#allocation0] sm:$0x1]
    %58 = vrot.lane.b32.xlu0 %v57, 92
    %v59 = vpop.permute.xlu0 %58
    %vm60 = vcmask 31744
    %s61 = scalar_lea.vmem %s1, 11
    %62 = vst.msk [vmem:[%s61] sm:$0x1] %vm60, %v59
    %v63 = vld [vmem:[#allocation0] sm:$0x1]
    %64 = vrot.lane.b32.xlu0 %v63, 88
    %v65 = vpop.permute.xlu0 %64
    %vm66 = vcmask 31744
    %s67 = scalar_lea.vmem %s1, 12
    %68 = vst.msk [vmem:[%s67] sm:$0x1] %vm66, %v65
    %v69 = vld [vmem:[#allocation0] sm:$0x1]
    %70 = vrot.lane.b32.xlu0 %v69, 84
    %v71 = vpop.permute.xlu0 %70
    %vm72 = vcmask 31744
    %s73 = scalar_lea.vmem %s1, 13
    %74 = vst.msk [vmem:[%s73] sm:$0x1] %vm72, %v71
    %v75 = vld [vmem:[#allocation0] sm:$0x1]
    %76 = vrot.lane.b32.xlu0 %v75, 80
    %v77 = vpop.permute.xlu0 %76
    %vm78 = vcmask 31744
    %s79 = scalar_lea.vmem %s1, 16
    %80 = vst.msk [vmem:[%s79] sm:$0x1] %vm78, %v77
    %v81 = vld [vmem:[#allocation0] sm:$0x1]
    %82 = vrot.lane.b32.xlu0 %v81, 76
    %v83 = vpop.permute.xlu0 %82
    %vm84 = vcmask 31744
    %s85 = scalar_lea.vmem %s1, 17
    %86 = vst.msk [vmem:[%s85] sm:$0x1] %vm84, %v83
    %v87 = vld [vmem:[#allocation0] sm:$0x1]
    %88 = vrot.lane.b32.xlu0 %v87, 72
    %v89 = vpop.permute.xlu0 %88
    %vm90 = vcmask 31744
    %s91 = scalar_lea.vmem %s1, 18
    %92 = vst.msk [vmem:[%s91] sm:$0x1] %vm90, %v89
    %v93 = vld [vmem:[#allocation0] sm:$0x1]
    %94 = vrot.lane.b32.xlu0 %v93, 68
    %v95 = vpop.permute.xlu0 %94
    %vm96 = vcmask 31744
    %s97 = scalar_lea.vmem %s1, 19
    %98 = vst.msk [vmem:[%s97] sm:$0x1] %vm96, %v95
    %v99 = vld [vmem:[#allocation0] sm:$0x1]
    %100 = vrot.lane.b32.xlu0 %v99, 64
    %v101 = vpop.permute.xlu0 %100
    %vm102 = vcmask 31744
    %s103 = scalar_lea.vmem %s1, 20
    %104 = vst.msk [vmem:[%s103] sm:$0x1] %vm102, %v101
    %v105 = vld [vmem:[#allocation0] sm:$0x1]
    %106 = vrot.lane.b32.xlu0 %v105, 60
    %v107 = vpop.permute.xlu0 %106
    %vm108 = vcmask 31744
    %s109 = scalar_lea.vmem %s1, 21
    %110 = vst.msk [vmem:[%s109] sm:$0x1] %vm108, %v107
    %v111 = vld [vmem:[#allocation0] sm:$0x1]
    %112 = vrot.lane.b32.xlu0 %v111, 56
    %v113 = vpop.permute.xlu0 %112
    %vm114 = vcmask 31744
    %s115 = scalar_lea.vmem %s1, 24
    %116 = vst.msk [vmem:[%s115] sm:$0x1] %vm114, %v113
    %v117 = vld [vmem:[#allocation0] sm:$0x1]
    %118 = vrot.lane.b32.xlu0 %v117, 52
    %v119 = vpop.permute.xlu0 %118
    %vm120 = vcmask 31744
    %s121 = scalar_lea.vmem %s1, 25
    %122 = vst.msk [vmem:[%s121] sm:$0x1] %vm120, %v119
    %v123 = vld [vmem:[#allocation0] sm:$0x1]
    %124 = vrot.lane.b32.xlu0 %v123, 48
    %v125 = vpop.permute.xlu0 %124
    %vm126 = vcmask 31744
    %s127 = scalar_lea.vmem %s1, 26
    %128 = vst.msk [vmem:[%s127] sm:$0x1] %vm126, %v125
    %v129 = vld [vmem:[#allocation0] sm:$0x1]
    %130 = vrot.lane.b32.xlu0 %v129, 44
    %v131 = vpop.permute.xlu0 %130
    %vm132 = vcmask 31744
    %s133 = scalar_lea.vmem %s1, 27
    %134 = vst.msk [vmem:[%s133] sm:$0x1] %vm132, %v131
    %v135 = vld [vmem:[#allocation0] sm:$0x1]
    %136 = vrot.lane.b32.xlu0 %v135, 40
    %v137 = vpop.permute.xlu0 %136
    %vm138 = vcmask 31744
    %s139 = scalar_lea.vmem %s1, 28
    %140 = vst.msk [vmem:[%s139] sm:$0x1] %vm138, %v137
    %v141 = vld [vmem:[#allocation0] sm:$0x1]
    %142 = vrot.lane.b32.xlu0 %v141, 36
    %v143 = vpop.permute.xlu0 %142
    %vm144 = vcmask 31744
    %s145 = scalar_lea.vmem %s1, 29
    %146 = vst.msk [vmem:[%s145] sm:$0x1] %vm144, %v143
    %v147 = vld [vmem:[#allocation0] sm:$0x1]
    %148 = vrot.lane.b32.xlu0 %v147, 32
    %v149 = vpop.permute.xlu0 %148
    %vm150 = vcmask 31744
    %s151 = scalar_lea.vmem %s1, 32
    %152 = vst.msk [vmem:[%s151] sm:$0x1] %vm150, %v149
    %v153 = vld [vmem:[#allocation0] sm:$0x1]
    %154 = vrot.lane.b32.xlu0 %v153, 28
    %v155 = vpop.permute.xlu0 %154
    %vm156 = vcmask 31744
    %s157 = scalar_lea.vmem %s1, 33
    %158 = vst.msk [vmem:[%s157] sm:$0x1] %vm156, %v155
    %v159 = vld [vmem:[#allocation0] sm:$0x1]
    %160 = vrot.lane.b32.xlu0 %v159, 24
    %v161 = vpop.permute.xlu0 %160
    %vm162 = vcmask 31744
    %s163 = scalar_lea.vmem %s1, 34
    %164 = vst.msk [vmem:[%s163] sm:$0x1] %vm162, %v161
    %v165 = vld [vmem:[#allocation0] sm:$0x1]
    %166 = vrot.lane.b32.xlu0 %v165, 20
    %v167 = vpop.permute.xlu0 %166
    %vm168 = vcmask 31744
    %s169 = scalar_lea.vmem %s1, 35
    %170 = vst.msk [vmem:[%s169] sm:$0x1] %vm168, %v167
    %v171 = vld [vmem:[#allocation0] sm:$0x1]
    %172 = vrot.lane.b32.xlu0 %v171, 16
    %v173 = vpop.permute.xlu0 %172
    %vm174 = vcmask 31744
    %s175 = scalar_lea.vmem %s1, 36
    %176 = vst.msk [vmem:[%s175] sm:$0x1] %vm174, %v173
    %v177 = vld [vmem:[#allocation0] sm:$0x1]
    %178 = vrot.lane.b32.xlu0 %v177, 12
    %v179 = vpop.permute.xlu0 %178
    %vm180 = vcmask 31744
    %s181 = scalar_lea.vmem %s1, 37
    %182 = vst.msk [vmem:[%s181] sm:$0x1] %vm180, %v179

// kernel: mini_backbone_forward.1
$region0: #{mini_backbone_forward.1}
  #allocation0 [shape = 'u32[]', space=smem, size = 0x4, offset = 0x4, fixed_abs, tag = 'smem constant byte address 0x4 - core index']
  #allocation1 [shape = 'u32[144,128]{1,0:T(1,128)}', space=vmem, size = 0x12000, scoped, tag = 'internal scratch']
  #allocation2 [shape = 'f32[1,1]{1,0:T(1,128)S(1)}', space=vmem, size = 0x200, scoped, tag = 'scoped memory for mini_backbone_forward.1']
  %s0 = inlined_call_operand.vmem [shape: f32[4,32,960], index: 0, kind: input, shape index: {}]
  %s1 = inlined_call_operand.vmem [shape: f32[4,32], index: 1, kind: input, shape index: {}]
  %s2 = inlined_call_operand.vmem [shape: f32[4,1], index: 2, kind: input, shape index: {}]
  %s3 = inlined_call_operand.vmem [shape: f32[4,1], index: 3, kind: input, shape index: {}]
  %s4 = inlined_call_operand.vmem [shape: f32[4,1], index: 4, kind: input, shape index: {}]
  %s5 = inlined_call_operand.vmem [shape: f32[4,4], index: 5, kind: input, shape index: {}]
  %s6 = inlined_call_operand.vmem [shape: f32[960,120], index: 6, kind: input, shape index: {}]
  %s7 = inlined_call_operand.vmem [shape: f32[4,4], index: 7, kind: input, shape index: {}]
  %s8 = inlined_call_operand.vmem [shape: f32[4,1], index: 8, kind: input, shape index: {}]
  %s9 = inlined_call_operand.vmem [shape: f32[27,4,4], index: 9, kind: input, shape index: {}]
  %s10 = inlined_call_operand.vmem [shape: f32[27,120,120], index: 10, kind: input, shape index: {}]
  %s11 = inlined_call_operand.vmem [shape: f32[4,1], index: 11, kind: input, shape index: {}]
  %s12 = inlined_call_operand.vmem [shape: f32[4,1], index: 12, kind: input, shape index: {}]
  %s13 = inlined_call_operand.vmem [shape: f32[4,1], index: 13, kind: input, shape index: {}]
  %s14 = inlined_call_operand.vmem [shape: f32[1,4], index: 14, kind: input, shape index: {}]
  %s15 = inlined_call_operand.<no memory space> [shape: f32[1,1], index: 15, kind: input, shape index: {}]
  %s16 = inlined_call_operand.vmem [shape: f32[4,1,120], index: 16, kind: output, shape index: {}]
  %s17 = sld [smem:[#allocation0]]
  $region97: #{mini_backbone_forward.1} parent=0
    _
  %s19 = ssub.s32 1, %s17
  %s20 = scalar_select 0, %s19, %s17
  %v21 = vstv %s15
  %22 = vst [vmem:[#allocation2] sm:$0x1] %v21
  loop: start=0, step=1, limit=6
  $region2: #{mini_backbone_forward.1} parent=0 // loop_pre_header
    _
  $region3: #{mini_backbone_forward.1} parent=0 // loop_header
    %s24 = sphi 0, %s28
    %p25 = scmp.ge.s32.totalorder %s24, 6
    %s34 = sphi 0, %s36
    %s37 = sphi 0, %s34
    %s38 = sphi 0, %s37
    %s54 = sphi 0, %s38
    %s58 = sphi 0, %s58
    %s60 = sphi 0, %s58
    %s61 = sphi 0, %s60
    %s75 = sphi 0, %s61
    %s79 = sphi 0, %s79
    %s81 = sphi 0, %s79
    %s82 = sphi 0, %s81
    %s96 = sphi 0, %s82
    %s100 = sphi 0, %s100
    %s102 = sphi 0, %s100
    %s103 = sphi 0, %s102
    %s117 = sphi 0, %s103
    %s121 = sphi 0, %s121
    %s123 = sphi 0, %s121
    %s124 = sphi 0, %s123
    %s138 = sphi 0, %s124
    %s142 = sphi 0, %s142
    %s144 = sphi 0, %s142
    %s145 = sphi 0, %s144
    %s159 = sphi 0, %s145
    %s163 = sphi 0, %s163
    %s165 = sphi 0, %s163
    %s166 = sphi 0, %s165
    %s180 = sphi 0, %s166
    %s184 = sphi 0, %s184
    %s186 = sphi 0, %s184
    %s187 = sphi 0, %s186
    %s201 = sphi 0, %s187
    %s205 = sphi 0, %s205
    %s207 = sphi 0, %s205
    %s208 = sphi 0, %s207
    %s222 = sphi 0, %s208
    %s226 = sphi 0, %s226
    %s228 = sphi 0, %s226
    %s229 = sphi 0, %s228
    %s243 = sphi 0, %s229
    %s247 = sphi 0, %s247
    %s249 = sphi 0, %s247
    %s250 = sphi 0, %s249
    %s264 = sphi 0, %s250
    %s268 = sphi 0, %s268
    %s270 = sphi 0, %s268
    %s271 = sphi 0, %s270
    %s285 = sphi 0, %s271
    %s289 = sphi 0, %s289
    %s291 = sphi 0, %s289
    %s292 = sphi 0, %s291
    %s306 = sphi 0, %s292
    %s310 = sphi 0, %s310
    %s312 = sphi 0, %s310
    %s313 = sphi 0, %s312
    %s327 = sphi 0, %s313
    %s331 = sphi 0, %s331
    %s333 = sphi 0, %s331
    %s334 = sphi 0, %s333
    %s348 = sphi 0, %s334
    %s352 = sphi 0, %s352
    %s354 = sphi 0, %s352
    %s355 = sphi 0, %s354
    %s369 = sphi 0, %s355
    %s375 = sphi 0, %s377
    %s378 = sphi 0, %s375
    %s379 = sphi 0, %s378
    %s395 = sphi 0, %s379
  $region4: #{mini_backbone_forward.1} parent=0 // loop_header_branch
    %27 = sbr.rel (%p25) target = $region8
  $region5: #{mini_backbone_forward.1} parent=0 // loop_body
    %s29 = ssub.s32 %s24, 1
    %s30 = ssub.s32 %s24, 2
    %s31 = sadd.s32 %s24, 1
    %s32 = ssub.s32 %s24, %s31
    %p33 = scmp.eq.s32.totalorder %s32, 0
    %s35 = sadd.s32 %s34, 1
    %s36 = scalar_select %p33, %s34, %s35
    %p39 = pneg %p33
    %p40 = scmp.eq.s32.totalorder %s24, 3
    %p41 = por %p39, %p40
    %p42 = scmp.ne.s32.totalorder %s34, %s37
    %p43 = scmp.eq.s32.totalorder %s24, 0
    %p44 = por %p42, %p43
    %p45 = scmp.ne.s32.totalorder %s34, %s37
    %p46 = scmp.eq.s32.totalorder %s29, 3
    %p47 = por %p45, %p46
    %p48 = scmp.ne.s32.totalorder %s37, %s38
    %p49 = scmp.eq.s32.totalorder %s29, 0
    %p50 = por %p48, %p49
    %p51 = scmp.ne.s32.totalorder %s37, %s38
    %p52 = scmp.eq.s32.totalorder %s30, 3
    %p53 = por %p51, %p52
    %p55 = scmp.ne.s32.totalorder %s38, %s54
    %p56 = scmp.eq.s32.totalorder %s30, 0
    %p57 = por %p55, %p56
    %s59 = sadd.s32 %s58, 1
    %p62 = scmp.eq.s32.totalorder %s24, 3
    %p63 = scmp.ne.s32.totalorder %s58, %s60
    %p64 = scmp.eq.s32.totalorder %s24, 0
    %p65 = por %p63, %p64
    %p66 = scmp.ne.s32.totalorder %s58, %s60
    %p67 = scmp.eq.s32.totalorder %s29, 3
    %p68 = por %p66, %p67
    %p69 = scmp.ne.s32.totalorder %s60, %s61
    %p70 = scmp.eq.s32.totalorder %s29, 0
    %p71 = por %p69, %p70
    %p72 = scmp.ne.s32.totalorder %s60, %s61
    %p73 = scmp.eq.s32.totalorder %s30, 3
    %p74 = por %p72, %p73
    %p76 = scmp.ne.s32.totalorder %s61, %s75
    %p77 = scmp.eq.s32.totalorder %s30, 0
    %p78 = por %p76, %p77
    %s80 = sadd.s32 %s79, 1
    %p83 = scmp.eq.s32.totalorder %s24, 3
    %p84 = scmp.ne.s32.totalorder %s79, %s81
    %p85 = scmp.eq.s32.totalorder %s24, 0
    %p86 = por %p84, %p85
    %p87 = scmp.ne.s32.totalorder %s79, %s81
    %p88 = scmp.eq.s32.totalorder %s29, 3
    %p89 = por %p87, %p88
    %p90 = scmp.ne.s32.totalorder %s81, %s82
    %p91 = scmp.eq.s32.totalorder %s29, 0
    %p92 = por %p90, %p91
    %p93 = scmp.ne.s32.totalorder %s81, %s82
    %p94 = scmp.eq.s32.totalorder %s30, 3
    %p95 = por %p93, %p94
    %p97 = scmp.ne.s32.totalorder %s82, %s96
    %p98 = scmp.eq.s32.totalorder %s30, 0
    %p99 = por %p97, %p98
    %s101 = sadd.s32 %s100, 1
    %p104 = scmp.eq.s32.totalorder %s24, 3
    %p105 = scmp.ne.s32.totalorder %s100, %s102
    %p106 = scmp.eq.s32.totalorder %s24, 0
    %p107 = por %p105, %p106
    %p108 = scmp.ne.s32.totalorder %s100, %s102
    %p109 = scmp.eq.s32.totalorder %s29, 3
    %p110 = por %p108, %p109
    %p111 = scmp.ne.s32.totalorder %s102, %s103
    %p112 = scmp.eq.s32.totalorder %s29, 0
    %p113 = por %p111, %p112
    %p114 = scmp.ne.s32.totalorder %s102, %s103
    %p115 = scmp.eq.s32.totalorder %s30, 3
    %p116 = por %p114, %p115
    %p118 = scmp.ne.s32.totalorder %s103, %s117
    %p119 = scmp.eq.s32.totalorder %s30, 0
    %p120 = por %p118, %p119
    %s122 = sadd.s32 %s121, 1
    %p125 = scmp.eq.s32.totalorder %s24, 3
    %p126 = scmp.ne.s32.totalorder %s121, %s123
    %p127 = scmp.eq.s32.totalorder %s24, 0
    %p128 = por %p126, %p127
    %p129 = scmp.ne.s32.totalorder %s121, %s123
    %p130 = scmp.eq.s32.totalorder %s29, 3
    %p131 = por %p129, %p130
    %p132 = scmp.ne.s32.totalorder %s123, %s124
    %p133 = scmp.eq.s32.totalorder %s29, 0
    %p134 = por %p132, %p133
    %p135 = scmp.ne.s32.totalorder %s123, %s124
    %p136 = scmp.eq.s32.totalorder %s30, 3
    %p137 = por %p135, %p136
    %p139 = scmp.ne.s32.totalorder %s124, %s138
    %p140 = scmp.eq.s32.totalorder %s30, 0
    %p141 = por %p139, %p140
    %s143 = sadd.s32 %s142, 1
    %p146 = scmp.eq.s32.totalorder %s24, 3
    %p147 = scmp.ne.s32.totalorder %s142, %s144
    %p148 = scmp.eq.s32.totalorder %s24, 0
    %p149 = por %p147, %p148
    %p150 = scmp.ne.s32.totalorder %s142, %s144
    %p151 = scmp.eq.s32.totalorder %s29, 3
    %p152 = por %p150, %p151
    %p153 = scmp.ne.s32.totalorder %s144, %s145
    %p154 = scmp.eq.s32.totalorder %s29, 0
    %p155 = por %p153, %p154
    %p156 = scmp.ne.s32.totalorder %s144, %s145
    %p157 = scmp.eq.s32.totalorder %s30, 3
    %p158 = por %p156, %p157
    %p160 = scmp.ne.s32.totalorder %s145, %s159
    %p161 = scmp.eq.s32.totalorder %s30, 0
    %p162 = por %p160, %p161
    %s164 = sadd.s32 %s163, 1
    %p167 = scmp.eq.s32.totalorder %s24, 3
    %p168 = scmp.ne.s32.totalorder %s163, %s165
    %p169 = scmp.eq.s32.totalorder %s24, 0
    %p170 = por %p168, %p169
    %p171 = scmp.ne.s32.totalorder %s163, %s165
    %p172 = scmp.eq.s32.totalorder %s29, 3
    %p173 = por %p171, %p172
    %p174 = scmp.ne.s32.totalorder %s165, %s166
    %p175 = scmp.eq.s32.totalorder %s29, 0
    %p176 = por %p174, %p175
    %p177 = scmp.ne.s32.totalorder %s165, %s166
    %p178 = scmp.eq.s32.totalorder %s30, 3
    %p179 = por %p177, %p178
    %p181 = scmp.ne.s32.totalorder %s166, %s180
    %p182 = scmp.eq.s32.totalorder %s30, 0
    %p183 = por %p181, %p182
    %s185 = sadd.s32 %s184, 1
    %p188 = scmp.eq.s32.totalorder %s24, 3
    %p189 = scmp.ne.s32.totalorder %s184, %s186
    %p190 = scmp.eq.s32.totalorder %s24, 0
    %p191 = por %p189, %p190
    %p192 = scmp.ne.s32.totalorder %s184, %s186
    %p193 = scmp.eq.s32.totalorder %s29, 3
    %p194 = por %p192, %p193
    %p195 = scmp.ne.s32.totalorder %s186, %s187
    %p196 = scmp.eq.s32.totalorder %s29, 0
    %p197 = por %p195, %p196
    %p198 = scmp.ne.s32.totalorder %s186, %s187
    %p199 = scmp.eq.s32.totalorder %s30, 3
    %p200 = por %p198, %p199
    %p202 = scmp.ne.s32.totalorder %s187, %s201
    %p203 = scmp.eq.s32.totalorder %s30, 0
    %p204 = por %p202, %p203
    %s206 = sadd.s32 %s205, 1
    %p209 = scmp.eq.s32.totalorder %s24, 3
    %p210 = scmp.ne.s32.totalorder %s205, %s207
    %p211 = scmp.eq.s32.totalorder %s24, 0
    %p212 = por %p210, %p211
    %p213 = scmp.ne.s32.totalorder %s205, %s207
    %p214 = scmp.eq.s32.totalorder %s29, 3
    %p215 = por %p213, %p214
    %p216 = scmp.ne.s32.totalorder %s207, %s208
    %p217 = scmp.eq.s32.totalorder %s29, 0
    %p218 = por %p216, %p217
    %p219 = scmp.ne.s32.totalorder %s207, %s208
    %p220 = scmp.eq.s32.totalorder %s30, 3
    %p221 = por %p219, %p220
    %p223 = scmp.ne.s32.totalorder %s208, %s222
    %p224 = scmp.eq.s32.totalorder %s30, 0
    %p225 = por %p223, %p224
    %s227 = sadd.s32 %s226, 1
    %p230 = scmp.eq.s32.totalorder %s24, 3
    %p231 = scmp.ne.s32.totalorder %s226, %s228
    %p232 = scmp.eq.s32.totalorder %s24, 0
    %p233 = por %p231, %p232
    %p234 = scmp.ne.s32.totalorder %s226, %s228
    %p235 = scmp.eq.s32.totalorder %s29, 3
    %p236 = por %p234, %p235
    %p237 = scmp.ne.s32.totalorder %s228, %s229
    %p238 = scmp.eq.s32.totalorder %s29, 0
    %p239 = por %p237, %p238
    %p240 = scmp.ne.s32.totalorder %s228, %s229
    %p241 = scmp.eq.s32.totalorder %s30, 3
    %p242 = por %p240, %p241
    %p244 = scmp.ne.s32.totalorder %s229, %s243
    %p245 = scmp.eq.s32.totalorder %s30, 0
    %p246 = por %p244, %p245
    %s248 = sadd.s32 %s247, 1
    %p251 = scmp.eq.s32.totalorder %s24, 3
    %p252 = scmp.ne.s32.totalorder %s247, %s249
    %p253 = scmp.eq.s32.totalorder %s24, 0
    %p254 = por %p252, %p253
    %p255 = scmp.ne.s32.totalorder %s247, %s249
    %p256 = scmp.eq.s32.totalorder %s29, 3
    %p257 = por %p255, %p256
    %p258 = scmp.ne.s32.totalorder %s249, %s250
    %p259 = scmp.eq.s32.totalorder %s29, 0
    %p260 = por %p258, %p259
    %p261 = scmp.ne.s32.totalorder %s249, %s250
    %p262 = scmp.eq.s32.totalorder %s30, 3
    %p263 = por %p261, %p262
    %p265 = scmp.ne.s32.totalorder %s250, %s264
    %p266 = scmp.eq.s32.totalorder %s30, 0
    %p267 = por %p265, %p266
    %s269 = sadd.s32 %s268, 1
    %p272 = scmp.eq.s32.totalorder %s24, 3
    %p273 = scmp.ne.s32.totalorder %s268, %s270
    %p274 = scmp.eq.s32.totalorder %s24, 0
    %p275 = por %p273, %p274
    %p276 = scmp.ne.s32.totalorder %s268, %s270
    %p277 = scmp.eq.s32.totalorder %s29, 3
    %p278 = por %p276, %p277
    %p279 = scmp.ne.s32.totalorder %s270, %s271
    %p280 = scmp.eq.s32.totalorder %s29, 0
    %p281 = por %p279, %p280
    %p282 = scmp.ne.s32.totalorder %s270, %s271
    %p283 = scmp.eq.s32.totalorder %s30, 3
    %p284 = por %p282, %p283
    %p286 = scmp.ne.s32.totalorder %s271, %s285
    %p287 = scmp.eq.s32.totalorder %s30, 0
    %p288 = por %p286, %p287
    %s290 = sadd.s32 %s289, 1
    %p293 = scmp.eq.s32.totalorder %s24, 3
    %p294 = scmp.ne.s32.totalorder %s289, %s291
    %p295 = scmp.eq.s32.totalorder %s24, 0
    %p296 = por %p294, %p295
    %p297 = scmp.ne.s32.totalorder %s289, %s291
    %p298 = scmp.eq.s32.totalorder %s29, 3
    %p299 = por %p297, %p298
    %p300 = scmp.ne.s32.totalorder %s291, %s292
    %p301 = scmp.eq.s32.totalorder %s29, 0
    %p302 = por %p300, %p301
    %p303 = scmp.ne.s32.totalorder %s291, %s292
    %p304 = scmp.eq.s32.totalorder %s30, 3
    %p305 = por %p303, %p304
    %p307 = scmp.ne.s32.totalorder %s292, %s306
    %p308 = scmp.eq.s32.totalorder %s30, 0
    %p309 = por %p307, %p308
    %s311 = sadd.s32 %s310, 1
    %p314 = scmp.eq.s32.totalorder %s24, 3
    %p315 = scmp.ne.s32.totalorder %s310, %s312
    %p316 = scmp.eq.s32.totalorder %s24, 0
    %p317 = por %p315, %p316
    %p318 = scmp.ne.s32.totalorder %s310, %s312
    %p319 = scmp.eq.s32.totalorder %s29, 3
    %p320 = por %p318, %p319
    %p321 = scmp.ne.s32.totalorder %s312, %s313
    %p322 = scmp.eq.s32.totalorder %s29, 0
    %p323 = por %p321, %p322
    %p324 = scmp.ne.s32.totalorder %s312, %s313
    %p325 = scmp.eq.s32.totalorder %s30, 3
    %p326 = por %p324, %p325
    %p328 = scmp.ne.s32.totalorder %s313, %s327
    %p329 = scmp.eq.s32.totalorder %s30, 0
    %p330 = por %p328, %p329
    %s332 = sadd.s32 %s331, 1
    %p335 = scmp.eq.s32.totalorder %s24, 3
    %p336 = scmp.ne.s32.totalorder %s331, %s333
    %p337 = scmp.eq.s32.totalorder %s24, 0
    %p338 = por %p336, %p337
    %p339 = scmp.ne.s32.totalorder %s331, %s333
    %p340 = scmp.eq.s32.totalorder %s29, 3
    %p341 = por %p339, %p340
    %p342 = scmp.ne.s32.totalorder %s333, %s334
    %p343 = scmp.eq.s32.totalorder %s29, 0
    %p344 = por %p342, %p343
    %p345 = scmp.ne.s32.totalorder %s333, %s334
    %p346 = scmp.eq.s32.totalorder %s30, 3
    %p347 = por %p345, %p346
    %p349 = scmp.ne.s32.totalorder %s334, %s348
    %p350 = scmp.eq.s32.totalorder %s30, 0
    %p351 = por %p349, %p350
    %s353 = sadd.s32 %s352, 1
    %p356 = scmp.eq.s32.totalorder %s24, 3
    %p357 = scmp.ne.s32.totalorder %s352, %s354
    %p358 = scmp.eq.s32.totalorder %s24, 0
    %p359 = por %p357, %p358
    %p360 = scmp.ne.s32.totalorder %s352, %s354
    %p361 = scmp.eq.s32.totalorder %s29, 3
    %p362 = por %p360, %p361
    %p363 = scmp.ne.s32.totalorder %s354, %s355
    %p364 = scmp.eq.s32.totalorder %s29, 0
    %p365 = por %p363, %p364
    %p366 = scmp.ne.s32.totalorder %s354, %s355
    %p367 = scmp.eq.s32.totalorder %s30, 3
    %p368 = por %p366, %p367
    %p370 = scmp.ne.s32.totalorder %s355, %s369
    %p371 = scmp.eq.s32.totalorder %s30, 0
    %p372 = por %p370, %p371
    %s373 = ssub.s32 %s24, %s31
    %p374 = scmp.eq.s32.totalorder %s373, 0
    %s376 = sadd.s32 %s375, 1
    %s377 = scalar_select %p374, %s375, %s376
    %p380 = pneg %p374
    %p381 = scmp.eq.s32.totalorder %s24, 3
    %p382 = por %p380, %p381
    %p383 = scmp.ne.s32.totalorder %s375, %s378
    %p384 = scmp.eq.s32.totalorder %s24, 0
    %p385 = por %p383, %p384
    %p386 = scmp.ne.s32.totalorder %s375, %s378
    %p387 = scmp.eq.s32.totalorder %s29, 3
    %p388 = por %p386, %p387
    %p389 = scmp.ne.s32.totalorder %s378, %s379
    %p390 = scmp.eq.s32.totalorder %s29, 0
    %p391 = por %p389, %p390
    %p392 = scmp.ne.s32.totalorder %s378, %s379
    %p393 = scmp.eq.s32.totalorder %s30, 3
    %p394 = por %p392, %p393
    %p396 = scmp.ne.s32.totalorder %s379, %s395
    %p397 = scmp.eq.s32.totalorder %s30, 0
    %p398 = por %p396, %p397
    %p399 = scmp.le.s32.totalorder 1, %s24
    %p400 = scmp.lt.s32.totalorder %s24, 5
    %p401 = pnand %p399, %p400
    %p402 = pneg %p401
    // Predicated region
    $region9: #{mini_backbone_forward.1} parent=5 // pred_check
      _
    $region10: #{mini_backbone_forward.1} parent=5 // pred_check_branch
      %404 = sbr.rel (%p401) target = $region12
    $region11: #{mini_backbone_forward.1} parent=5 // pred_region
      %s405 = ssub.s32 %s24, 1
      // Predicated region
      $region13: #{mini_backbone_forward.1} parent=11 // pred_check
        %p406 = pneg %p71
      $region14: #{mini_backbone_forward.1} parent=11 // pred_check_branch
        %408 = sbr.rel (%p406) target = $region16
      $region15: #{mini_backbone_forward.1} parent=11 // pred_region
        _
      $region16: #{mini_backbone_forward.1} parent=11 // pred_fallthru
        _
      // Predicated region
      $region17: #{mini_backbone_forward.1} parent=11 // pred_check
        %p409 = pneg %p92
      $region18: #{mini_backbone_forward.1} parent=11 // pred_check_branch
        %411 = sbr.rel (%p409) target = $region20
      $region19: #{mini_backbone_forward.1} parent=11 // pred_region
        _
      $region20: #{mini_backbone_forward.1} parent=11 // pred_fallthru
        _
      // Predicated region
      $region21: #{mini_backbone_forward.1} parent=11 // pred_check
        %p412 = pneg %p113
      $region22: #{mini_backbone_forward.1} parent=11 // pred_check_branch
        %414 = sbr.rel (%p412) target = $region24
      $region23: #{mini_backbone_forward.1} parent=11 // pred_region
        _
      $region24: #{mini_backbone_forward.1} parent=11 // pred_fallthru
        _
      // Predicated region
      $region25: #{mini_backbone_forward.1} parent=11 // pred_check
        %p415 = pneg %p134
      $region26: #{mini_backbone_forward.1} parent=11 // pred_check_branch
        %417 = sbr.rel (%p415) target = $region28
      $region27: #{mini_backbone_forward.1} parent=11 // pred_region
        _
      $region28: #{mini_backbone_forward.1} parent=11 // pred_fallthru
        _
      // Predicated region
      $region29: #{mini_backbone_forward.1} parent=11 // pred_check
        %p418 = pneg %p155
      $region30: #{mini_backbone_forward.1} parent=11 // pred_check_branch
        %420 = sbr.rel (%p418) target = $region32
      $region31: #{mini_backbone_forward.1} parent=11 // pred_region
        _
      $region32: #{mini_backbone_forward.1} parent=11 // pred_fallthru
        _
      // Predicated region
      $region33: #{mini_backbone_forward.1} parent=11 // pred_check
        %p421 = pneg %p176
      $region34: #{mini_backbone_forward.1} parent=11 // pred_check_branch
        %423 = sbr.rel (%p421) target = $region36
      $region35: #{mini_backbone_forward.1} parent=11 // pred_region
        _
      $region36: #{mini_backbone_forward.1} parent=11 // pred_fallthru
        _
      // Predicated region
      $region37: #{mini_backbone_forward.1} parent=11 // pred_check
        %p424 = pneg %p197
      $region38: #{mini_backbone_forward.1} parent=11 // pred_check_branch
        %426 = sbr.rel (%p424) target = $region40
      $region39: #{mini_backbone_forward.1} parent=11 // pred_region
        _
      $region40: #{mini_backbone_forward.1} parent=11 // pred_fallthru
        _
      // Predicated region
      $region41: #{mini_backbone_forward.1} parent=11 // pred_check
        %p427 = pneg %p218
      $region42: #{mini_backbone_forward.1} parent=11 // pred_check_branch
        %429 = sbr.rel (%p427) target = $region44
      $region43: #{mini_backbone_forward.1} parent=11 // pred_region
        _
      $region44: #{mini_backbone_forward.1} parent=11 // pred_fallthru
        _
      // Predicated region
      $region45: #{mini_backbone_forward.1} parent=11 // pred_check
        %p430 = pneg %p239
      $region46: #{mini_backbone_forward.1} parent=11 // pred_check_branch
        %432 = sbr.rel (%p430) target = $region48
      $region47: #{mini_backbone_forward.1} parent=11 // pred_region
        _
      $region48: #{mini_backbone_forward.1} parent=11 // pred_fallthru
        _
      // Predicated region
      $region49: #{mini_backbone_forward.1} parent=11 // pred_check
        %p433 = pneg %p260
      $region50: #{mini_backbone_forward.1} parent=11 // pred_check_branch
        %435 = sbr.rel (%p433) target = $region52
      $region51: #{mini_backbone_forward.1} parent=11 // pred_region
        _
      $region52: #{mini_backbone_forward.1} parent=11 // pred_fallthru
        _
      // Predicated region
      $region53: #{mini_backbone_forward.1} parent=11 // pred_check
        %p436 = pneg %p281
      $region54: #{mini_backbone_forward.1} parent=11 // pred_check_branch
        %438 = sbr.rel (%p436) target = $region56
      $region55: #{mini_backbone_forward.1} parent=11 // pred_region
        _
      $region56: #{mini_backbone_forward.1} parent=11 // pred_fallthru
        _
      // Predicated region
      $region57: #{mini_backbone_forward.1} parent=11 // pred_check
        %p439 = pneg %p302
      $region58: #{mini_backbone_forward.1} parent=11 // pred_check_branch
        %441 = sbr.rel (%p439) target = $region60
      $region59: #{mini_backbone_forward.1} parent=11 // pred_region
        _
      $region60: #{mini_backbone_forward.1} parent=11 // pred_fallthru
        _
      // Predicated region
      $region61: #{mini_backbone_forward.1} parent=11 // pred_check
        %p442 = pneg %p323
      $region62: #{mini_backbone_forward.1} parent=11 // pred_check_branch
        %444 = sbr.rel (%p442) target = $region64
      $region63: #{mini_backbone_forward.1} parent=11 // pred_region
        _
      $region64: #{mini_backbone_forward.1} parent=11 // pred_fallthru
        _
      // Predicated region
      $region65: #{mini_backbone_forward.1} parent=11 // pred_check
        %p445 = pneg %p344
      $region66: #{mini_backbone_forward.1} parent=11 // pred_check_branch
        %447 = sbr.rel (%p445) target = $region68
      $region67: #{mini_backbone_forward.1} parent=11 // pred_region
        _
      $region68: #{mini_backbone_forward.1} parent=11 // pred_fallthru
        _
      // Predicated region
      $region69: #{mini_backbone_forward.1} parent=11 // pred_check
        %p448 = pneg %p365
      $region70: #{mini_backbone_forward.1} parent=11 // pred_check_branch
        %450 = sbr.rel (%p448) target = $region72
      $region71: #{mini_backbone_forward.1} parent=11 // pred_region
        _
      $region72: #{mini_backbone_forward.1} parent=11 // pred_fallthru
        _
    $region12: #{mini_backbone_forward.1} parent=5 // pred_fallthru
      _
    %p451 = scmp.lt.s32.totalorder %s24, 4
    // Predicated region
    $region73: #{mini_backbone_forward.1} parent=5 // pred_check
      %p452 = pneg %p451
    $region74: #{mini_backbone_forward.1} parent=5 // pred_check_branch
      %454 = sbr.rel (%p452) target = $region76
    $region75: #{mini_backbone_forward.1} parent=5 // pred_region
      // Predicated region
      $region77: #{mini_backbone_forward.1} parent=75 // pred_check
        %p455 = pneg %p44
      $region78: #{mini_backbone_forward.1} parent=75 // pred_check_branch
        %457 = sbr.rel (%p455) target = $region80
      $region79: #{mini_backbone_forward.1} parent=75 // pred_region
        %p458 = scmp.lt.s32.totalorder %s24, 3
        %s459 = scalar_select %p458, %s24, 3
        %s460 = smul.addr %s459, 32
        %s461 = smul.addr %s460, 8
        %s462 = scalar_lea.vmem %s0, %s461
      $region80: #{mini_backbone_forward.1} parent=75 // pred_fallthru
        _
    $region76: #{mini_backbone_forward.1} parent=5 // pred_fallthru
      _
    %p463 = scmp.le.s32.totalorder 1, %s24
    %p464 = scmp.lt.s32.totalorder %s24, 5
    %p465 = pnand %p463, %p464
    %p466 = pneg %p465
    // Predicated region
    $region81: #{mini_backbone_forward.1} parent=5 // pred_check
      _
    $region82: #{mini_backbone_forward.1} parent=5 // pred_check_branch
      %468 = sbr.rel (%p465) target = $region84
    $region83: #{mini_backbone_forward.1} parent=5 // pred_region
      %s469 = ssub.s32 %s24, 1
      %p470 = scmp.lt.s32.totalorder %s29, 3
      %s471 = scalar_select %p470, %s29, 3
      %s472 = smul.addr %s471, 32
      %s473 = smul.addr %s472, 8
      %s474 = scalar_lea.vmem %s0, %s473
      %p475 = pneg %p50
      %p476 = pneg %p47
      %p477 = pneg %p71
      %p478 = pneg %p68
      %p479 = pneg %p92
      %p480 = pneg %p89
      %p481 = pneg %p113
      %p482 = pneg %p110
      %p483 = pneg %p134
      %p484 = pneg %p131
      %p485 = pneg %p155
      %p486 = pneg %p152
      %p487 = pneg %p176
      %p488 = pneg %p173
      %p489 = pneg %p197
      %p490 = pneg %p194
      %p491 = pneg %p218
      %p492 = pneg %p215
      %p493 = pneg %p239
      %p494 = pneg %p236
      %p495 = pneg %p260
      %p496 = pneg %p257
      %p497 = pneg %p281
      %p498 = pneg %p278
      %p499 = pneg %p302
      %p500 = pneg %p299
      %p501 = pneg %p323
      %p502 = pneg %p320
      %p503 = pneg %p344
      %p504 = pneg %p341
      %p505 = pneg %p365
      %p506 = pneg %p362
      %p507 = pneg %p391
      %p508 = pneg %p388
      %p509 = scmp.lt.s32.totalorder %s29, 3
      %s510 = scalar_select %p509, %s29, 3
      %s511 = scalar_lea.vmem %s16, %s510
      %p512 = scmp.lt.s32.totalorder %s29, 3
      %s513 = scalar_select %p512, %s29, 3
      %s514 = smul.addr %s513, 32
      %s515 = smul.addr %s514, 8
      %s516 = scalar_lea.vmem %s0, %s515
      %p517 = scmp.lt.s32.totalorder %s29, 3
      %s518 = scalar_select %p517, %s29, 3
      %s519 = scalar_lea.vmem %s16, %s518
      %v520 = vld [vmem:[%s1] sm:$0xf]
      %v521 = vld [vmem:[%s516] sm:$0xff]
      %v522 = vld [vmem:[%s516 + $0x8] sm:$0xff]
      %v523 = vld [vmem:[%s516 + $0x10] sm:$0xff]
      %v524 = vld [vmem:[%s516 + $0x18] sm:$0xff]
      %v525 = vld [vmem:[%s516 + $0x20] sm:$0xff]
      %v526 = vld [vmem:[%s516 + $0x28] sm:$0xff]
      %v527 = vld [vmem:[%s516 + $0x30] sm:$0xff]
      %v528 = vld [vmem:[%s516 + $0x38] sm:$0xff]
      %v529 = vld [vmem:[%s516 + $0x40] sm:$0xff]
      %v530 = vld [vmem:[%s516 + $0x48] sm:$0xff]
      %v531 = vld [vmem:[%s516 + $0x50] sm:$0xff]
      %v532 = vld [vmem:[%s516 + $0x58] sm:$0xff]
      %v533 = vld [vmem:[%s516 + $0x60] sm:$0xff]
      %v534 = vld [vmem:[%s516 + $0x68] sm:$0xff]
      %v535 = vld [vmem:[%s516 + $0x70] sm:$0xff]
      %v536 = vld [vmem:[%s516 + $0x78] sm:$0xff]
      %v537 = vld [vmem:[%s516 + $0x80] sm:$0xff]
      %v538 = vld [vmem:[%s516 + $0x88] sm:$0xff]
      %v539 = vld [vmem:[%s516 + $0x90] sm:$0xff]
      %v540 = vld [vmem:[%s516 + $0x98] sm:$0xff]
      %v541 = vld [vmem:[%s516 + $0xa0] sm:$0xff]
      %v542 = vld [vmem:[%s516 + $0xa8] sm:$0xff]
      %v543 = vld [vmem:[%s516 + $0xb0] sm:$0xff]
      %v544 = vld [vmem:[%s516 + $0xb8] sm:$0xff]
      %v545 = vld [vmem:[%s516 + $0xc0] sm:$0xff]
      %v546 = vld [vmem:[%s516 + $0xc8] sm:$0xff]
      %v547 = vld [vmem:[%s516 + $0xd0] sm:$0xff]
      %v548 = vld [vmem:[%s516 + $0xd8] sm:$0xff]
      %v549 = vld [vmem:[%s516 + $0xe0] sm:$0xff]
      %v550 = vld [vmem:[%s516 + $0xe8] sm:$0xff]
      %v551 = vld [vmem:[%s516 + $0xf0] sm:$0xff]
      %v552 = vld [vmem:[%s516 + $0xf8] sm:$0xff]
      %v553 = vld [vmem:[%s2] sm:$0xf]
      %555 = vset.pattern.permute.xlu0 0
      %556 = vperm.xlu0 %555, %v553
      %v557 = vpop.permute.xlu0 %556
      %vm559 = vcmask 261120
      %v561 = vsel %vm559, %v520, 0
      %563 = vmatprep.subr.mxu0 %v522
      %564 = vmatpush1.msra.mxu0 %v521
      %565 = vmatprep.subr.mxu0 %v530
      %566 = vmatpush1.msra.mxu0 %v529
      %567 = vmatprep.subr.mxu0 %v538
      %568 = vmatpush1.msra.mxu0 %v537
      %569 = vmatprep.subr.mxu0 %v546
      %570 = vmatpush1.msra.mxu0 %v545
      %571 = vmatprep.subr.mxu0 0.0
      %572 = vmatpush1.msra.mxu0 0.0
      %573 = vmatprep.subr.mxu0 0.0
      %574 = vmatpush1.msra.mxu0 0.0
      %575 = vmatprep.subr.mxu0 0.0
      %576 = vmatpush1.msra.mxu0 0.0
      %577 = vmatprep.subr.mxu0 0.0
      %578 = vmatpush1.msra.mxu0 0.0
      %579 = vmatprep.subr.mxu0 0.0
      %580 = vmatpush1.msra.mxu0 0.0
      %581 = vmatprep.subr.mxu0 0.0
      %582 = vmatpush1.msra.mxu0 0.0
      %583 = vmatprep.subr.mxu0 0.0
      %584 = vmatpush1.msra.mxu0 0.0
      %585 = vmatprep.subr.mxu0 0.0
      %586 = vmatpush1.msra.mxu0 0.0
      %587 = vmatprep.subr.mxu0 0.0
      %588 = vmatpush1.msra.mxu0 0.0
      %589 = vmatprep.subr.mxu0 0.0
      %590 = vmatpush1.msra.mxu0 0.0
      %591 = vmatprep.subr.mxu0 0.0
      %592 = vmatpush1.msra.mxu0 0.0
      %593 = vmatprep.subr.mxu0 0.0
      %594 = vmatpush1.msra.mxu0 0.0
      %595 = vmatprep.subr.mxu0 0.0
      %596 = vmatpush1.msra.mxu0 0.0
      %597 = vmatprep.subr.mxu0 0.0
      %598 = vmatpush1.msra.mxu0 0.0
      %599 = vmatprep.subr.mxu0 0.0
      %600 = vmatpush1.msra.mxu0 0.0
      %601 = vmatprep.subr.mxu0 0.0
      %602 = vmatpush1.msra.mxu0 0.0
      %603 = vmatprep.subr.mxu0 0.0
      %604 = vmatpush1.msra.mxu0 0.0
      %605 = vmatprep.subr.mxu0 0.0
      %606 = vmatpush1.msra.mxu0 0.0
      %607 = vmatprep.subr.mxu0 0.0
      %608 = vmatpush1.msra.mxu0 0.0
      %609 = vmatprep.subr.mxu0 0.0
      %610 = vmatpush1.msra.mxu0 0.0
      %611 = vmatprep.subr.mxu0 0.0
      %612 = vmatpush1.msra.mxu0 0.0
      %613 = vmatprep.subr.mxu0 0.0
      %614 = vmatpush1.msra.mxu0 0.0
      %615 = vmatprep.subr.mxu0 0.0
      %616 = vmatpush1.msra.mxu0 0.0
      %617 = vmatprep.subr.mxu0 0.0
      %618 = vmatpush1.msra.mxu0 0.0
      %619 = vmatprep.subr.mxu0 0.0
      %620 = vmatpush1.msra.mxu0 0.0
      %621 = vmatprep.subr.mxu0 0.0
      %622 = vmatpush1.msra.mxu0 0.0
      %623 = vmatprep.subr.mxu0 0.0
      %624 = vmatpush1.msra.mxu0 0.0
      %625 = vmatprep.subr.mxu0 0.0
      %626 = vmatpush1.msra.mxu0 0.0
      %627 = vmatprep.mubr.f32.mxu0 0.0
      %628 = vmatmul.mubr.f32.gmra.mrb[0].mxu0 %v561
      %v629 = vpop.f32.mrb[0].mxu0
      %v630 = vadd.f32 %v557, %v629
      %v631 = vpop.f32.mrb[0].mxu0
      %v632 = vadd.f32 %v557, %v631
      %633 = vdwg.mxu0
      %634 = vmatprep.subr.mxu0 %v524
      %635 = vmatpush1.msra.mxu0 %v523
      %636 = vmatprep.subr.mxu0 %v532
      %637 = vmatpush1.msra.mxu0 %v531
      %638 = vmatprep.subr.mxu0 %v540
      %639 = vmatpush1.msra.mxu0 %v539
      %640 = vmatprep.subr.mxu0 %v548
      %641 = vmatpush1.msra.mxu0 %v547
      %642 = vmatprep.subr.mxu0 0.0
      %643 = vmatpush1.msra.mxu0 0.0
      %644 = vmatprep.subr.mxu0 0.0
      %645 = vmatpush1.msra.mxu0 0.0
      %646 = vmatprep.subr.mxu0 0.0
      %647 = vmatpush1.msra.mxu0 0.0
      %648 = vmatprep.subr.mxu0 0.0
      %649 = vmatpush1.msra.mxu0 0.0
      %650 = vmatprep.subr.mxu0 0.0
      %651 = vmatpush1.msra.mxu0 0.0
      %652 = vmatprep.subr.mxu0 0.0
      %653 = vmatpush1.msra.mxu0 0.0
      %654 = vmatprep.subr.mxu0 0.0
      %655 = vmatpush1.msra.mxu0 0.0
      %656 = vmatprep.subr.mxu0 0.0
      %657 = vmatpush1.msra.mxu0 0.0
      %658 = vmatprep.subr.mxu0 0.0
      %659 = vmatpush1.msra.mxu0 0.0
      %660 = vmatprep.subr.mxu0 0.0
      %661 = vmatpush1.msra.mxu0 0.0
      %662 = vmatprep.subr.mxu0 0.0
      %663 = vmatpush1.msra.mxu0 0.0
      %664 = vmatprep.subr.mxu0 0.0
      %665 = vmatpush1.msra.mxu0 0.0
      %666 = vmatprep.subr.mxu0 0.0
      %667 = vmatpush1.msra.mxu0 0.0
      %668 = vmatprep.subr.mxu0 0.0
      %669 = vmatpush1.msra.mxu0 0.0
      %670 = vmatprep.subr.mxu0 0.0
      %671 = vmatpush1.msra.mxu0 0.0
      %672 = vmatprep.subr.mxu0 0.0
      %673 = vmatpush1.msra.mxu0 0.0
      %674 = vmatprep.subr.mxu0 0.0
      %675 = vmatpush1.msra.mxu0 0.0
      %676 = vmatprep.subr.mxu0 0.0
      %677 = vmatpush1.msra.mxu0 0.0
      %678 = vmatprep.subr.mxu0 0.0
      %679 = vmatpush1.msra.mxu0 0.0
      %680 = vmatprep.subr.mxu0 0.0
      %681 = vmatpush1.msra.mxu0 0.0
      %682 = vmatprep.subr.mxu0 0.0
      %683 = vmatpush1.msra.mxu0 0.0
      %684 = vmatprep.subr.mxu0 0.0
      %685 = vmatpush1.msra.mxu0 0.0
      %686 = vmatprep.subr.mxu0 0.0
      %687 = vmatpush1.msra.mxu0 0.0
      %688 = vmatprep.subr.mxu0 0.0
      %689 = vmatpush1.msra.mxu0 0.0
      %690 = vmatprep.subr.mxu0 0.0
      %691 = vmatpush1.msra.mxu0 0.0
      %692 = vmatprep.subr.mxu0 0.0
      %693 = vmatpush1.msra.mxu0 0.0
      %694 = vmatprep.subr.mxu0 0.0
      %695 = vmatpush1.msra.mxu0 0.0
      %696 = vmatprep.subr.mxu0 0.0
      %697 = vmatpush1.msra.mxu0 0.0
      %698 = vmatprep.mubr.f32.mxu0 0.0
      %699 = vmatmul.mubr.f32.gmra.mrb[0].mxu0 %v561
      %v700 = vpop.f32.mrb[0].mxu0
      %v701 = vadd.f32 %v557, %v700
      %v702 = vpop.f32.mrb[0].mxu0
      %v703 = vadd.f32 %v557, %v702
      %704 = vdwg.mxu0
      %705 = vmatprep.subr.mxu0 %v526
      %706 = vmatpush1.msra.mxu0 %v525
      %707 = vmatprep.subr.mxu0 %v534
      %708 = vmatpush1.msra.mxu0 %v533
      %709 = vmatprep.subr.mxu0 %v542
      %710 = vmatpush1.msra.mxu0 %v541
      %711 = vmatprep.subr.mxu0 %v550
      %712 = vmatpush1.msra.mxu0 %v549
      %713 = vmatprep.subr.mxu0 0.0
      %714 = vmatpush1.msra.mxu0 0.0
      %715 = vmatprep.subr.mxu0 0.0
      %716 = vmatpush1.msra.mxu0 0.0
      %717 = vmatprep.subr.mxu0 0.0
      %718 = vmatpush1.msra.mxu0 0.0
      %719 = vmatprep.subr.mxu0 0.0
      %720 = vmatpush1.msra.mxu0 0.0
      %721 = vmatprep.subr.mxu0 0.0
      %722 = vmatpush1.msra.mxu0 0.0
      %723 = vmatprep.subr.mxu0 0.0
      %724 = vmatpush1.msra.mxu0 0.0
      %725 = vmatprep.subr.mxu0 0.0
      %726 = vmatpush1.msra.mxu0 0.0
      %727 = vmatprep.subr.mxu0 0.0
      %728 = vmatpush1.msra.mxu0 0.0
      %729 = vmatprep.subr.mxu0 0.0
      %730 = vmatpush1.msra.mxu0 0.0
      %731 = vmatprep.subr.mxu0 0.0
      %732 = vmatpush1.msra.mxu0 0.0
      %733 = vmatprep.subr.mxu0 0.0
      %734 = vmatpush1.msra.mxu0 0.0
      %735 = vmatprep.subr.mxu0 0.0
      %736 = vmatpush1.msra.mxu0 0.0
      %737 = vmatprep.subr.mxu0 0.0
      %738 = vmatpush1.msra.mxu0 0.0
      %739 = vmatprep.subr.mxu0 0.0
      %740 = vmatpush1.msra.mxu0 0.0
      %741 = vmatprep.subr.mxu0 0.0
      %742 = vmatpush1.msra.mxu0 0.0
      %743 = vmatprep.subr.mxu0 0.0
      %744 = vmatpush1.msra.mxu0 0.0
      %745 = vmatprep.subr.mxu0 0.0
      %746 = vmatpush1.msra.mxu0 0.0
      %747 = vmatprep.subr.mxu0 0.0
      %748 = vmatpush1.msra.mxu0 0.0
      %749 = vmatprep.subr.mxu0 0.0
      %750 = vmatpush1.msra.mxu0 0.0
      %751 = vmatprep.subr.mxu0 0.0
      %752 = vmatpush1.msra.mxu0 0.0
      %753 = vmatprep.subr.mxu0 0.0
      %754 = vmatpush1.msra.mxu0 0.0
      %755 = vmatprep.subr.mxu0 0.0
      %756 = vmatpush1.msra.mxu0 0.0
      %757 = vmatprep.subr.mxu0 0.0
      %758 = vmatpush1.msra.mxu0 0.0
      %759 = vmatprep.subr.mxu0 0.0
      %760 = vmatpush1.msra.mxu0 0.0
      %761 = vmatprep.subr.mxu0 0.0
      %762 = vmatpush1.msra.mxu0 0.0
      %763 = vmatprep.subr.mxu0 0.0
      %764 = vmatpush1.msra.mxu0 0.0
      %765 = vmatprep.subr.mxu0 0.0
      %766 = vmatpush1.msra.mxu0 0.0
      %767 = vmatprep.subr.mxu0 0.0
      %768 = vmatpush1.msra.mxu0 0.0
      %769 = vmatprep.mubr.f32.mxu0 0.0
      %770 = vmatmul.mubr.f32.gmra.mrb[0].mxu0 %v561
      %v771 = vpop.f32.mrb[0].mxu0
      %v772 = vadd.f32 %v557, %v771
      %v773 = vpop.f32.mrb[0].mxu0
      %v774 = vadd.f32 %v557, %v773
      %775 = vdwg.mxu0
      %776 = vmatprep.subr.mxu0 %v528
      %777 = vmatpush1.msra.mxu0 %v527
      %778 = vmatprep.subr.mxu0 %v536
      %779 = vmatpush1.msra.mxu0 %v535
      %780 = vmatprep.subr.mxu0 %v544
      %781 = vmatpush1.msra.mxu0 %v543
      %782 = vmatprep.subr.mxu0 %v552
      %783 = vmatpush1.msra.mxu0 %v551
      %784 = vmatprep.subr.mxu0 0.0
      %785 = vmatpush1.msra.mxu0 0.0
      %786 = vmatprep.subr.mxu0 0.0
      %787 = vmatpush1.msra.mxu0 0.0
      %788 = vmatprep.subr.mxu0 0.0
      %789 = vmatpush1.msra.mxu0 0.0
      %790 = vmatprep.subr.mxu0 0.0
      %791 = vmatpush1.msra.mxu0 0.0
      %792 = vmatprep.subr.mxu0 0.0
      %793 = vmatpush1.msra.mxu0 0.0
      %794 = vmatprep.subr.mxu0 0.0
      %795 = vmatpush1.msra.mxu0 0.0
      %796 = vmatprep.subr.mxu0 0.0
      %797 = vmatpush1.msra.mxu0 0.0
      %798 = vmatprep.subr.mxu0 0.0
      %799 = vmatpush1.msra.mxu0 0.0
      %800 = vmatprep.subr.mxu0 0.0
      %801 = vmatpush1.msra.mxu0 0.0
      %802 = vmatprep.subr.mxu0 0.0
      %803 = vmatpush1.msra.mxu0 0.0
      %804 = vmatprep.subr.mxu0 0.0
      %805 = vmatpush1.msra.mxu0 0.0
      %806 = vmatprep.subr.mxu0 0.0
      %807 = vmatpush1.msra.mxu0 0.0
      %808 = vmatprep.subr.mxu0 0.0
      %809 = vmatpush1.msra.mxu0 0.0
      %810 = vmatprep.subr.mxu0 0.0
      %811 = vmatpush1.msra.mxu0 0.0
      %812 = vmatprep.subr.mxu0 0.0
      %813 = vmatpush1.msra.mxu0 0.0
      %814 = vmatprep.subr.mxu0 0.0
      %815 = vmatpush1.msra.mxu0 0.0
      %816 = vmatprep.subr.mxu0 0.0
      %817 = vmatpush1.msra.mxu0 0.0
      %818 = vmatprep.subr.mxu0 0.0
      %819 = vmatpush1.msra.mxu0 0.0
      %820 = vmatprep.subr.mxu0 0.0
      %821 = vmatpush1.msra.mxu0 0.0
      %822 = vmatprep.subr.mxu0 0.0
      %823 = vmatpush1.msra.mxu0 0.0
      %824 = vmatprep.subr.mxu0 0.0
      %825 = vmatpush1.msra.mxu0 0.0
      %826 = vmatprep.subr.mxu0 0.0
      %827 = vmatpush1.msra.mxu0 0.0
      %828 = vmatprep.subr.mxu0 0.0
      %829 = vmatpush1.msra.mxu0 0.0
      %830 = vmatprep.subr.mxu0 0.0
      %831 = vmatpush1.msra.mxu0 0.0
      %832 = vmatprep.subr.mxu0 0.0
      %833 = vmatpush1.msra.mxu0 0.0
      %834 = vmatprep.subr.mxu0 0.0
      %835 = vmatpush1.msra.mxu0 0.0
      %836 = vmatprep.subr.mxu0 0.0
      %837 = vmatpush1.msra.mxu0 0.0
      %838 = vmatprep.subr.mxu0 0.0
      %839 = vmatpush1.msra.mxu0 0.0
      %840 = vmatprep.mubr.f32.mxu0 0.0
      %841 = vmatmul.mubr.f32.gmra.mrb[0].mxu0 %v561
      %v842 = vpop.f32.mrb[0].mxu0
      %v843 = vadd.f32 %v557, %v842
      %v844 = vpop.f32.mrb[0].mxu0
      %v845 = vadd.f32 %v557, %v844
      %846 = vdwg.mxu0
      %v847 = vld [vmem:[%s3] sm:$0xf]
      %v848 = vld [vmem:[%s4] sm:$0xf]
      %vm849 = vcmask 1043456
      %v850 = vsel %vm849, %v630, 0.0
      %v851 = vsel %vm849, %v632, 0.0
      %v852 = vadd.f32 %v850, %v851
      %v853 = vsel %vm849, %v701, 0.0
      %v854 = vadd.f32 %v852, %v853
      %v855 = vsel %vm849, %v703, 0.0
      %v856 = vadd.f32 %v854, %v855
      %v857 = vsel %vm849, %v772, 0.0
      %v858 = vadd.f32 %v856, %v857
      %v859 = vsel %vm849, %v774, 0.0
      %v860 = vadd.f32 %v858, %v859
      %v861 = vsel %vm849, %v843, 0.0
      %v862 = vadd.f32 %v860, %v861
      %vm863 = vcmask 519168
      %v864 = vsel %vm863, %v845, 0.0
      %v865 = vadd.f32 %v862, %v864
      %866 = vadd.xlane.f32.xlu0 %v865
      %v867 = vpop.xlane.xlu0 %866
      %v868 = vmul.f32 %v867, 0.0010416667
      %v869 = vmul.f32 %v630, %v630
      %v870 = vmul.f32 %v632, %v632
      %v871 = vmul.f32 %v701, %v701
      %v872 = vmul.f32 %v703, %v703
      %v873 = vmul.f32 %v772, %v772
      %v874 = vmul.f32 %v774, %v774
      %v875 = vmul.f32 %v843, %v843
      %v876 = vmul.f32 %v845, %v845
      %v877 = vsel %vm849, %v869, 0.0
      %v878 = vsel %vm849, %v870, 0.0
      %v879 = vadd.f32 %v877, %v878
      %v880 = vsel %vm849, %v871, 0.0
      %v881 = vadd.f32 %v879, %v880
      %v882 = vsel %vm849, %v872, 0.0
      %v883 = vadd.f32 %v881, %v882
      %v884 = vsel %vm849, %v873, 0.0
      %v885 = vadd.f32 %v883, %v884
      %v886 = vsel %vm849, %v874, 0.0
      %v887 = vadd.f32 %v885, %v886
      %v888 = vsel %vm849, %v875, 0.0
      %v889 = vadd.f32 %v887, %v888
      %v890 = vsel %vm863, %v876, 0.0
      %v891 = vadd.f32 %v889, %v890
      %892 = vadd.xlane.f32.xlu0 %v891
      %v893 = vpop.xlane.xlu0 %892
      %v894 = vmul.f32 %v893, 0.0010416667
      %v895 = vmul.f32 %v868, %v868
      %v896 = vsub.f32 %v894, %v895
      %v897 = vadd.f32 %v896, 1e-05
      %v898 = vrsqrt.pop %v897
      %v899 = vsub.f32 %v630, %v868
      %v900 = vsub.f32 %v632, %v868
      %v901 = vsub.f32 %v701, %v868
      %v902 = vsub.f32 %v703, %v868
      %v903 = vsub.f32 %v772, %v868
      %v904 = vsub.f32 %v774, %v868
      %v905 = vsub.f32 %v843, %v868
      %v906 = vsub.f32 %v845, %v868
      %v907 = vmul.f32 %v899, %v898
      %v908 = vmul.f32 %v900, %v898
      %v909 = vmul.f32 %v901, %v898
      %v910 = vmul.f32 %v902, %v898
      %v911 = vmul.f32 %v903, %v898
      %v912 = vmul.f32 %v904, %v898
      %v913 = vmul.f32 %v905, %v898
      %v914 = vmul.f32 %v906, %v898
      %916 = vset.pattern.permute.xlu0 0
      %917 = vperm.xlu0 %916, %v847
      %v918 = vpop.permute.xlu0 %917
      %v920 = vmul.f32 %v907, %v918
      %v921 = vmul.f32 %v908, %v918
      %v922 = vmul.f32 %v909, %v918
      %v923 = vmul.f32 %v910, %v918
      %v924 = vmul.f32 %v911, %v918
      %v925 = vmul.f32 %v912, %v918
      %v926 = vmul.f32 %v913, %v918
      %v927 = vmul.f32 %v914, %v918
      %929 = vset.pattern.permute.xlu0 0
      %930 = vperm.xlu0 %929, %v848
      %v931 = vpop.permute.xlu0 %930
      %v933 = vadd.f32 %v920, %v931
      %v934 = vadd.f32 %v921, %v931
      %v935 = vadd.f32 %v922, %v931
      %v936 = vadd.f32 %v923, %v931
      %v937 = vadd.f32 %v924, %v931
      %v938 = vadd.f32 %v925, %v931
      %v939 = vadd.f32 %v926, %v931
      %v940 = vadd.f32 %v927, %v931
      %v941 = vmax.f32 %v933, 0.0
      %v942 = vmax.f32 %v934, 0.0
      %v943 = vmax.f32 %v935, 0.0
      %v944 = vmax.f32 %v936, 0.0
      %v945 = vmax.f32 %v937, 0.0
      %v946 = vmax.f32 %v938, 0.0
      %v947 = vmax.f32 %v939, 0.0
      %v948 = vmax.f32 %v940, 0.0
      %v949 = vld [vmem:[%s6] sm:$0xff]
      %v950 = vld [vmem:[%s6 + $0x8] sm:$0xff]
      %v951 = vld [vmem:[%s6 + $0x10] sm:$0xff]
      %v952 = vld [vmem:[%s6 + $0x18] sm:$0xff]
      %v953 = vld [vmem:[%s6 + $0x20] sm:$0xff]
      %v954 = vld [vmem:[%s6 + $0x28] sm:$0xff]
      %v955 = vld [vmem:[%s6 + $0x30] sm:$0xff]
      %v956 = vld [vmem:[%s6 + $0x38] sm:$0xff]
      %v957 = vld [vmem:[%s6 + $0x40] sm:$0xff]
      %v958 = vld [vmem:[%s6 + $0x48] sm:$0xff]
      %v959 = vld [vmem:[%s6 + $0x50] sm:$0xff]
      %v960 = vld [vmem:[%s6 + $0x58] sm:$0xff]
      %v961 = vld [vmem:[%s6 + $0x60] sm:$0xff]
      %v962 = vld [vmem:[%s6 + $0x68] sm:$0xff]
      %v963 = vld [vmem:[%s6 + $0x70] sm:$0xff]
      %v964 = vld [vmem:[%s6 + $0x78] sm:$0xff]
      %v965 = vld [vmem:[%s6 + $0x80] sm:$0xff]
      %v966 = vld [vmem:[%s6 + $0x88] sm:$0xff]
      %v967 = vld [vmem:[%s6 + $0x90] sm:$0xff]
      %v968 = vld [vmem:[%s6 + $0x98] sm:$0xff]
      %v969 = vld [vmem:[%s6 + $0xa0] sm:$0xff]
      %v970 = vld [vmem:[%s6 + $0xa8] sm:$0xff]
      %v971 = vld [vmem:[%s6 + $0xb0] sm:$0xff]
      %v972 = vld [vmem:[%s6 + $0xb8] sm:$0xff]
      %v973 = vld [vmem:[%s6 + $0xc0] sm:$0xff]
      %v974 = vld [vmem:[%s6 + $0xc8] sm:$0xff]
      %v975 = vld [vmem:[%s6 + $0xd0] sm:$0xff]
      %v976 = vld [vmem:[%s6 + $0xd8] sm:$0xff]
      %v977 = vld [vmem:[%s6 + $0xe0] sm:$0xff]
      %v978 = vld [vmem:[%s6 + $0xe8] sm:$0xff]
      %v979 = vld [vmem:[%s6 + $0xf0] sm:$0xff]
      %v980 = vld [vmem:[%s6 + $0xf8] sm:$0xff]
      %v981 = vld [vmem:[%s6 + $0x100] sm:$0xff]
      %v982 = vld [vmem:[%s6 + $0x108] sm:$0xff]
      %v983 = vld [vmem:[%s6 + $0x110] sm:$0xff]
      %v984 = vld [vmem:[%s6 + $0x118] sm:$0xff]
      %v985 = vld [vmem:[%s6 + $0x120] sm:$0xff]
      %v986 = vld [vmem:[%s6 + $0x128] sm:$0xff]
      %v987 = vld [vmem:[%s6 + $0x130] sm:$0xff]
      %v988 = vld [vmem:[%s6 + $0x138] sm:$0xff]
      %v989 = vld [vmem:[%s6 + $0x140] sm:$0xff]
      %v990 = vld [vmem:[%s6 + $0x148] sm:$0xff]
      %v991 = vld [vmem:[%s6 + $0x150] sm:$0xff]
      %v992 = vld [vmem:[%s6 + $0x158] sm:$0xff]
      %v993 = vld [vmem:[%s6 + $0x160] sm:$0xff]
      %v994 = vld [vmem:[%s6 + $0x168] sm:$0xff]
      %v995 = vld [vmem:[%s6 + $0x170] sm:$0xff]
      %v996 = vld [vmem:[%s6 + $0x178] sm:$0xff]
      %v997 = vld [vmem:[%s6 + $0x180] sm:$0xff]
      %v998 = vld [vmem:[%s6 + $0x188] sm:$0xff]
      %v999 = vld [vmem:[%s6 + $0x190] sm:$0xff]
      %v1000 = vld [vmem:[%s6 + $0x198] sm:$0xff]
      %v1001 = vld [vmem:[%s6 + $0x1a0] sm:$0xff]
      %v1002 = vld [vmem:[%s6 + $0x1a8] sm:$0xff]
      %v1003 = vld [vmem:[%s6 + $0x1b0] sm:$0xff]
      %v1004 = vld [vmem:[%s6 + $0x1b8] sm:$0xff]
      %v1005 = vld [vmem:[%s6 + $0x1c0] sm:$0xff]
      %v1006 = vld [vmem:[%s6 + $0x1c8] sm:$0xff]
      %v1007 = vld [vmem:[%s6 + $0x1d0] sm:$0xff]
      %v1008 = vld [vmem:[%s6 + $0x1d8] sm:$0xff]
      %v1009 = vld [vmem:[%s6 + $0x1e0] sm:$0xff]
      %v1010 = vld [vmem:[%s6 + $0x1e8] sm:$0xff]
      %v1011 = vld [vmem:[%s6 + $0x1f0] sm:$0xff]
      %v1012 = vld [vmem:[%s6 + $0x1f8] sm:$0xff]
      %v1013 = vld [vmem:[%s6 + $0x200] sm:$0xff]
      %v1014 = vld [vmem:[%s6 + $0x208] sm:$0xff]
      %v1015 = vld [vmem:[%s6 + $0x210] sm:$0xff]
      %v1016 = vld [vmem:[%s6 + $0x218] sm:$0xff]
      %v1017 = vld [vmem:[%s6 + $0x220] sm:$0xff]
      %v1018 = vld [vmem:[%s6 + $0x228] sm:$0xff]
      %v1019 = vld [vmem:[%s6 + $0x230] sm:$0xff]
      %v1020 = vld [vmem:[%s6 + $0x238] sm:$0xff]
      %v1021 = vld [vmem:[%s6 + $0x240] sm:$0xff]
      %v1022 = vld [vmem:[%s6 + $0x248] sm:$0xff]
      %v1023 = vld [vmem:[%s6 + $0x250] sm:$0xff]
      %v1024 = vld [vmem:[%s6 + $0x258] sm:$0xff]
      %v1025 = vld [vmem:[%s6 + $0x260] sm:$0xff]
      %v1026 = vld [vmem:[%s6 + $0x268] sm:$0xff]
      %v1027 = vld [vmem:[%s6 + $0x270] sm:$0xff]
      %v1028 = vld [vmem:[%s6 + $0x278] sm:$0xff]
      %v1029 = vld [vmem:[%s6 + $0x280] sm:$0xff]
      %v1030 = vld [vmem:[%s6 + $0x288] sm:$0xff]
      %v1031 = vld [vmem:[%s6 + $0x290] sm:$0xff]
      %v1032 = vld [vmem:[%s6 + $0x298] sm:$0xff]
      %v1033 = vld [vmem:[%s6 + $0x2a0] sm:$0xff]
      %v1034 = vld [vmem:[%s6 + $0x2a8] sm:$0xff]
      %v1035 = vld [vmem:[%s6 + $0x2b0] sm:$0xff]
      %v1036 = vld [vmem:[%s6 + $0x2b8] sm:$0xff]
      %v1037 = vld [vmem:[%s6 + $0x2c0] sm:$0xff]
      %v1038 = vld [vmem:[%s6 + $0x2c8] sm:$0xff]
      %v1039 = vld [vmem:[%s6 + $0x2d0] sm:$0xff]
      %v1040 = vld [vmem:[%s6 + $0x2d8] sm:$0xff]
      %v1041 = vld [vmem:[%s6 + $0x2e0] sm:$0xff]
      %v1042 = vld [vmem:[%s6 + $0x2e8] sm:$0xff]
      %v1043 = vld [vmem:[%s6 + $0x2f0] sm:$0xff]
      %v1044 = vld [vmem:[%s6 + $0x2f8] sm:$0xff]
      %v1045 = vld [vmem:[%s6 + $0x300] sm:$0xff]
      %v1046 = vld [vmem:[%s6 + $0x308] sm:$0xff]
      %v1047 = vld [vmem:[%s6 + $0x310] sm:$0xff]
      %v1048 = vld [vmem:[%s6 + $0x318] sm:$0xff]
      %v1049 = vld [vmem:[%s6 + $0x320] sm:$0xff]
      %v1050 = vld [vmem:[%s6 + $0x328] sm:$0xff]
      %v1051 = vld [vmem:[%s6 + $0x330] sm:$0xff]
      %v1052 = vld [vmem:[%s6 + $0x338] sm:$0xff]
      %v1053 = vld [vmem:[%s6 + $0x340] sm:$0xff]
      %v1054 = vld [vmem:[%s6 + $0x348] sm:$0xff]
      %v1055 = vld [vmem:[%s6 + $0x350] sm:$0xff]
      %v1056 = vld [vmem:[%s6 + $0x358] sm:$0xff]
      %v1057 = vld [vmem:[%s6 + $0x360] sm:$0xff]
      %v1058 = vld [vmem:[%s6 + $0x368] sm:$0xff]
      %v1059 = vld [vmem:[%s6 + $0x370] sm:$0xff]
      %v1060 = vld [vmem:[%s6 + $0x378] sm:$0xff]
      %v1061 = vld [vmem:[%s6 + $0x380] sm:$0xff]
      %v1062 = vld [vmem:[%s6 + $0x388] sm:$0xff]
      %v1063 = vld [vmem:[%s6 + $0x390] sm:$0xff]
      %v1064 = vld [vmem:[%s6 + $0x398] sm:$0xff]
      %v1065 = vld [vmem:[%s6 + $0x3a0] sm:$0xff]
      %v1066 = vld [vmem:[%s6 + $0x3a8] sm:$0xff]
      %v1067 = vld [vmem:[%s6 + $0x3b0] sm:$0xff]
      %v1068 = vld [vmem:[%s6 + $0x3b8] sm:$0xff]
      %vm1069 = vcmask 523264
      %v1071 = vsel %vm1069, %v948, 0
      %1073 = vmatprep.subr.mxu0 0.0
      %1074 = vmatpush1.msra.mxu0 %v949
      %1075 = vmatprep.subr.mxu0 0.0
      %1076 = vmatpush1.msra.mxu0 %v950
      %1077 = vmatprep.subr.mxu0 0.0
      %1078 = vmatpush1.msra.mxu0 %v951
      %1079 = vmatprep.subr.mxu0 0.0
      %1080 = vmatpush1.msra.mxu0 %v952
      %1081 = vmatprep.subr.mxu0 0.0
      %1082 = vmatpush1.msra.mxu0 %v953
      %1083 = vmatprep.subr.mxu0 0.0
      %1084 = vmatpush1.msra.mxu0 %v954
      %1085 = vmatprep.subr.mxu0 0.0
      %1086 = vmatpush1.msra.mxu0 %v955
      %1087 = vmatprep.subr.mxu0 0.0
      %1088 = vmatpush1.msra.mxu0 %v956
      %1089 = vmatprep.subr.mxu0 0.0
      %1090 = vmatpush1.msra.mxu0 %v957
      %1091 = vmatprep.subr.mxu0 0.0
      %1092 = vmatpush1.msra.mxu0 %v958
      %1093 = vmatprep.subr.mxu0 0.0
      %1094 = vmatpush1.msra.mxu0 %v959
      %1095 = vmatprep.subr.mxu0 0.0
      %1096 = vmatpush1.msra.mxu0 %v960
      %1097 = vmatprep.subr.mxu0 0.0
      %1098 = vmatpush1.msra.mxu0 %v961
      %1099 = vmatprep.subr.mxu0 0.0
      %1100 = vmatpush1.msra.mxu0 %v962
      %1101 = vmatprep.subr.mxu0 0.0
      %1102 = vmatpush1.msra.mxu0 %v963
      %1103 = vmatprep.subr.mxu0 0.0
      %1104 = vmatpush1.msra.mxu0 %v964
      %1105 = vmatprep.subr.mxu0 0.0
      %1106 = vmatpush1.msra.mxu0 %v965
      %1107 = vmatprep.subr.mxu0 0.0
      %1108 = vmatpush1.msra.mxu0 %v966
      %1109 = vmatprep.subr.mxu0 0.0
      %1110 = vmatpush1.msra.mxu0 %v967
      %1111 = vmatprep.subr.mxu0 0.0
      %1112 = vmatpush1.msra.mxu0 %v968
      %1113 = vmatprep.subr.mxu0 0.0
      %1114 = vmatpush1.msra.mxu0 %v969
      %1115 = vmatprep.subr.mxu0 0.0
      %1116 = vmatpush1.msra.mxu0 %v970
      %1117 = vmatprep.subr.mxu0 0.0
      %1118 = vmatpush1.msra.mxu0 %v971
      %1119 = vmatprep.subr.mxu0 0.0
      %1120 = vmatpush1.msra.mxu0 %v972
      %1121 = vmatprep.subr.mxu0 0.0
      %1122 = vmatpush1.msra.mxu0 %v973
      %1123 = vmatprep.subr.mxu0 0.0
      %1124 = vmatpush1.msra.mxu0 %v974
      %1125 = vmatprep.subr.mxu0 0.0
      %1126 = vmatpush1.msra.mxu0 %v975
      %1127 = vmatprep.subr.mxu0 0.0
      %1128 = vmatpush1.msra.mxu0 %v976
      %1129 = vmatprep.subr.mxu0 0.0
      %1130 = vmatpush1.msra.mxu0 %v977
      %1131 = vmatprep.subr.mxu0 0.0
      %1132 = vmatpush1.msra.mxu0 %v978
      %1133 = vmatprep.subr.mxu0 0.0
      %1134 = vmatpush1.msra.mxu0 %v979
      %1135 = vmatprep.subr.mxu0 0.0
      %1136 = vmatpush1.msra.mxu0 %v980
      %1137 = vmatprep.mubr.f32.mxu0 %v942
      %1138 = vmatmul.mubr.f32.gmra.mrb[0].mxu0 %v941
      %v1139 = vpop.f32.mrb[0].mxu0
      %v1140 = vadd.f32 0.0, %v1139
      %v1141 = vpop.f32.mrb[0].mxu0
      %1142 = vdwg.mxu0
      %1143 = vmatprep.subr.mxu0 0.0
      %1144 = vmatpush1.msra.mxu0 %v981
      %1145 = vmatprep.subr.mxu0 0.0
      %1146 = vmatpush1.msra.mxu0 %v982
      %1147 = vmatprep.subr.mxu0 0.0
      %1148 = vmatpush1.msra.mxu0 %v983
      %1149 = vmatprep.subr.mxu0 0.0
      %1150 = vmatpush1.msra.mxu0 %v984
      %1151 = vmatprep.subr.mxu0 0.0
      %1152 = vmatpush1.msra.mxu0 %v985
      %1153 = vmatprep.subr.mxu0 0.0
      %1154 = vmatpush1.msra.mxu0 %v986
      %1155 = vmatprep.subr.mxu0 0.0
      %1156 = vmatpush1.msra.mxu0 %v987
      %1157 = vmatprep.subr.mxu0 0.0
      %1158 = vmatpush1.msra.mxu0 %v988
      %1159 = vmatprep.subr.mxu0 0.0
      %1160 = vmatpush1.msra.mxu0 %v989
      %1161 = vmatprep.subr.mxu0 0.0
      %1162 = vmatpush1.msra.mxu0 %v990
      %1163 = vmatprep.subr.mxu0 0.0
      %1164 = vmatpush1.msra.mxu0 %v991
      %1165 = vmatprep.subr.mxu0 0.0
      %1166 = vmatpush1.msra.mxu0 %v992
      %1167 = vmatprep.subr.mxu0 0.0
      %1168 = vmatpush1.msra.mxu0 %v993
      %1169 = vmatprep.subr.mxu0 0.0
      %1170 = vmatpush1.msra.mxu0 %v994
      %1171 = vmatprep.subr.mxu0 0.0
      %1172 = vmatpush1.msra.mxu0 %v995
      %1173 = vmatprep.subr.mxu0 0.0
      %1174 = vmatpush1.msra.mxu0 %v996
      %1175 = vmatprep.subr.mxu0 0.0
      %1176 = vmatpush1.msra.mxu0 %v997
      %1177 = vmatprep.subr.mxu0 0.0
      %1178 = vmatpush1.msra.mxu0 %v998
      %1179 = vmatprep.subr.mxu0 0.0
      %1180 = vmatpush1.msra.mxu0 %v999
      %1181 = vmatprep.subr.mxu0 0.0
      %1182 = vmatpush1.msra.mxu0 %v1000
      %1183 = vmatprep.subr.mxu0 0.0
      %1184 = vmatpush1.msra.mxu0 %v1001
      %1185 = vmatprep.subr.mxu0 0.0
      %1186 = vmatpush1.msra.mxu0 %v1002
      %1187 = vmatprep.subr.mxu0 0.0
      %1188 = vmatpush1.msra.mxu0 %v1003
      %1189 = vmatprep.subr.mxu0 0.0
      %1190 = vmatpush1.msra.mxu0 %v1004
      %1191 = vmatprep.subr.mxu0 0.0
      %1192 = vmatpush1.msra.mxu0 %v1005
      %1193 = vmatprep.subr.mxu0 0.0
      %1194 = vmatpush1.msra.mxu0 %v1006
      %1195 = vmatprep.subr.mxu0 0.0
      %1196 = vmatpush1.msra.mxu0 %v1007
      %1197 = vmatprep.subr.mxu0 0.0
      %1198 = vmatpush1.msra.mxu0 %v1008
      %1199 = vmatprep.subr.mxu0 0.0
      %1200 = vmatpush1.msra.mxu0 %v1009
      %1201 = vmatprep.subr.mxu0 0.0
      %1202 = vmatpush1.msra.mxu0 %v1010
      %1203 = vmatprep.subr.mxu0 0.0
      %1204 = vmatpush1.msra.mxu0 %v1011
      %1205 = vmatprep.subr.mxu0 0.0
      %1206 = vmatpush1.msra.mxu0 %v1012
      %1207 = vmatprep.mubr.f32.mxu0 %v944
      %1208 = vmatmul.mubr.f32.gmra.mrb[0].mxu0 %v943
      %v1209 = vpop.f32.mrb[0].mxu0
      %v1210 = vadd.f32 %v1140, %v1209
      %v1211 = vpop.f32.mrb[0].mxu0
      %1212 = vdwg.mxu0
      %1213 = vmatprep.subr.mxu0 0.0
      %1214 = vmatpush1.msra.mxu0 %v1013
      %1215 = vmatprep.subr.mxu0 0.0
      %1216 = vmatpush1.msra.mxu0 %v1014
      %1217 = vmatprep.subr.mxu0 0.0
      %1218 = vmatpush1.msra.mxu0 %v1015
      %1219 = vmatprep.subr.mxu0 0.0
      %1220 = vmatpush1.msra.mxu0 %v1016
      %1221 = vmatprep.subr.mxu0 0.0
      %1222 = vmatpush1.msra.mxu0 %v1017
      %1223 = vmatprep.subr.mxu0 0.0
      %1224 = vmatpush1.msra.mxu0 %v1018
      %1225 = vmatprep.subr.mxu0 0.0
      %1226 = vmatpush1.msra.mxu0 %v1019
      %1227 = vmatprep.subr.mxu0 0.0
      %1228 = vmatpush1.msra.mxu0 %v1020
      %1229 = vmatprep.subr.mxu0 0.0
      %1230 = vmatpush1.msra.mxu0 %v1021
      %1231 = vmatprep.subr.mxu0 0.0
      %1232 = vmatpush1.msra.mxu0 %v1022
      %1233 = vmatprep.subr.mxu0 0.0
      %1234 = vmatpush1.msra.mxu0 %v1023
      %1235 = vmatprep.subr.mxu0 0.0
      %1236 = vmatpush1.msra.mxu0 %v1024
      %1237 = vmatprep.subr.mxu0 0.0
      %1238 = vmatpush1.msra.mxu0 %v1025
      %1239 = vmatprep.subr.mxu0 0.0
      %1240 = vmatpush1.msra.mxu0 %v1026
      %1241 = vmatprep.subr.mxu0 0.0
      %1242 = vmatpush1.msra.mxu0 %v1027
      %1243 = vmatprep.subr.mxu0 0.0
      %1244 = vmatpush1.msra.mxu0 %v1028
      %1245 = vmatprep.subr.mxu0 0.0
      %1246 = vmatpush1.msra.mxu0 %v1029
      %1247 = vmatprep.subr.mxu0 0.0
      %1248 = vmatpush1.msra.mxu0 %v1030
      %1249 = vmatprep.subr.mxu0 0.0
      %1250 = vmatpush1.msra.mxu0 %v1031
      %1251 = vmatprep.subr.mxu0 0.0
      %1252 = vmatpush1.msra.mxu0 %v1032
      %1253 = vmatprep.subr.mxu0 0.0
      %1254 = vmatpush1.msra.mxu0 %v1033
      %1255 = vmatprep.subr.mxu0 0.0
      %1256 = vmatpush1.msra.mxu0 %v1034
      %1257 = vmatprep.subr.mxu0 0.0
      %1258 = vmatpush1.msra.mxu0 %v1035
      %1259 = vmatprep.subr.mxu0 0.0
      %1260 = vmatpush1.msra.mxu0 %v1036
      %1261 = vmatprep.subr.mxu0 0.0
      %1262 = vmatpush1.msra.mxu0 %v1037
      %1263 = vmatprep.subr.mxu0 0.0
      %1264 = vmatpush1.msra.mxu0 %v1038
      %1265 = vmatprep.subr.mxu0 0.0
      %1266 = vmatpush1.msra.mxu0 %v1039
      %1267 = vmatprep.subr.mxu0 0.0
      %1268 = vmatpush1.msra.mxu0 %v1040
      %1269 = vmatprep.subr.mxu0 0.0
      %1270 = vmatpush1.msra.mxu0 %v1041
      %1271 = vmatprep.subr.mxu0 0.0
      %1272 = vmatpush1.msra.mxu0 %v1042
      %1273 = vmatprep.subr.mxu0 0.0
      %1274 = vmatpush1.msra.mxu0 %v1043
      %1275 = vmatprep.subr.mxu0 0.0
      %1276 = vmatpush1.msra.mxu0 %v1044
      %1277 = vmatprep.mubr.f32.mxu0 %v946
      %1278 = vmatmul.mubr.f32.gmra.mrb[0].mxu0 %v945
      %v1279 = vpop.f32.mrb[0].mxu0
      %v1280 = vadd.f32 %v1210, %v1279
      %v1281 = vpop.f32.mrb[0].mxu0
      %1282 = vdwg.mxu0
      %1283 = vmatprep.subr.mxu0 0.0
      %1284 = vmatpush1.msra.mxu0 %v1045
      %1285 = vmatprep.subr.mxu0 0.0
      %1286 = vmatpush1.msra.mxu0 %v1046
      %1287 = vmatprep.subr.mxu0 0.0
      %1288 = vmatpush1.msra.mxu0 %v1047
      %1289 = vmatprep.subr.mxu0 0.0
      %1290 = vmatpush1.msra.mxu0 %v1048
      %1291 = vmatprep.subr.mxu0 0.0
      %1292 = vmatpush1.msra.mxu0 %v1049
      %1293 = vmatprep.subr.mxu0 0.0
      %1294 = vmatpush1.msra.mxu0 %v1050
      %1295 = vmatprep.subr.mxu0 0.0
      %1296 = vmatpush1.msra.mxu0 %v1051
      %1297 = vmatprep.subr.mxu0 0.0
      %1298 = vmatpush1.msra.mxu0 %v1052
      %1299 = vmatprep.subr.mxu0 0.0
      %1300 = vmatpush1.msra.mxu0 %v1053
      %1301 = vmatprep.subr.mxu0 0.0
      %1302 = vmatpush1.msra.mxu0 %v1054
      %1303 = vmatprep.subr.mxu0 0.0
      %1304 = vmatpush1.msra.mxu0 %v1055
      %1305 = vmatprep.subr.mxu0 0.0
      %1306 = vmatpush1.msra.mxu0 %v1056
      %1307 = vmatprep.subr.mxu0 0.0
      %1308 = vmatpush1.msra.mxu0 %v1057
      %1309 = vmatprep.subr.mxu0 0.0
      %1310 = vmatpush1.msra.mxu0 %v1058
      %1311 = vmatprep.subr.mxu0 0.0
      %1312 = vmatpush1.msra.mxu0 %v1059
      %1313 = vmatprep.subr.mxu0 0.0
      %1314 = vmatpush1.msra.mxu0 %v1060
      %1315 = vmatprep.subr.mxu0 0.0
      %1316 = vmatpush1.msra.mxu0 %v1061
      %1317 = vmatprep.subr.mxu0 0.0
      %1318 = vmatpush1.msra.mxu0 %v1062
      %1319 = vmatprep.subr.mxu0 0.0
      %1320 = vmatpush1.msra.mxu0 %v1063
      %1321 = vmatprep.subr.mxu0 0.0
      %1322 = vmatpush1.msra.mxu0 %v1064
      %1323 = vmatprep.subr.mxu0 0.0
      %1324 = vmatpush1.msra.mxu0 %v1065
      %1325 = vmatprep.subr.mxu0 0.0
      %1326 = vmatpush1.msra.mxu0 %v1066
      %1327 = vmatprep.subr.mxu0 0.0
      %1328 = vmatpush1.msra.mxu0 %v1067
      %1329 = vmatprep.subr.mxu0 0.0
      %1330 = vmatpush1.msra.mxu0 %v1068
      %1331 = vmatprep.subr.mxu0 0.0
      %1332 = vmatpush1.msra.mxu0 0.0
      %1333 = vmatprep.subr.mxu0 0.0
      %1334 = vmatpush1.msra.mxu0 0.0
      %1335 = vmatprep.subr.mxu0 0.0
      %1336 = vmatpush1.msra.mxu0 0.0
      %1337 = vmatprep.subr.mxu0 0.0
      %1338 = vmatpush1.msra.mxu0 0.0
      %1339 = vmatprep.subr.mxu0 0.0
      %1340 = vmatpush1.msra.mxu0 0.0
      %1341 = vmatprep.subr.mxu0 0.0
      %1342 = vmatpush1.msra.mxu0 0.0
      %1343 = vmatprep.subr.mxu0 0.0
      %1344 = vmatpush1.msra.mxu0 0.0
      %1345 = vmatprep.subr.mxu0 0.0
      %1346 = vmatpush1.msra.mxu0 0.0
      %1347 = vmatprep.mubr.f32.mxu0 %v1071
      %1348 = vmatmul.mubr.f32.gmra.mrb[0].mxu0 %v947
      %v1349 = vpop.f32.mrb[0].mxu0
      %v1350 = vadd.f32 %v1280, %v1349
      %v1351 = vpop.f32.mrb[0].mxu0
      %1352 = vdwg.mxu0
      %v1353 = vld [vmem:[%s7] sm:$0xf]
      %v1354 = vld [vmem:[%s8] sm:$0xf]
      %1356 = vset.pattern.permute.xlu0 0
      %1357 = vperm.xlu0 %1356, %v1354
      %v1358 = vpop.permute.xlu0 %1357
      %vm1360 = vcmask 31744
      %v1362 = vsel %vm1360, %v1353, 0
      %v1365 = vsel %vm849, %v1350, 0
      %1367 = vmatprep.subr.mxu0 0.0
      %1368 = vmatpush1.msra.mxu0 %v1365
      %1369 = vmatprep.subr.mxu0 0.0
      %1370 = vmatpush1.msra.mxu0 0.0
      %1371 = vmatprep.subr.mxu0 0.0
      %1372 = vmatpush1.msra.mxu0 0.0
      %1373 = vmatprep.subr.mxu0 0.0
      %1374 = vmatpush1.msra.mxu0 0.0
      %1375 = vmatprep.subr.mxu0 0.0
      %1376 = vmatpush1.msra.mxu0 0.0
      %1377 = vmatprep.subr.mxu0 0.0
      %1378 = vmatpush1.msra.mxu0 0.0
      %1379 = vmatprep.subr.mxu0 0.0
      %1380 = vmatpush1.msra.mxu0 0.0
      %1381 = vmatprep.subr.mxu0 0.0
      %1382 = vmatpush1.msra.mxu0 0.0
      %1383 = vmatprep.subr.mxu0 0.0
      %1384 = vmatpush1.msra.mxu0 0.0
      %1385 = vmatprep.subr.mxu0 0.0
      %1386 = vmatpush1.msra.mxu0 0.0
      %1387 = vmatprep.subr.mxu0 0.0
      %1388 = vmatpush1.msra.mxu0 0.0
      %1389 = vmatprep.subr.mxu0 0.0
      %1390 = vmatpush1.msra.mxu0 0.0
      %1391 = vmatprep.subr.mxu0 0.0
      %1392 = vmatpush1.msra.mxu0 0.0
      %1393 = vmatprep.subr.mxu0 0.0
      %1394 = vmatpush1.msra.mxu0 0.0
      %1395 = vmatprep.subr.mxu0 0.0
      %1396 = vmatpush1.msra.mxu0 0.0
      %1397 = vmatprep.subr.mxu0 0.0
      %1398 = vmatpush1.msra.mxu0 0.0
      %1399 = vmatprep.subr.mxu0 0.0
      %1400 = vmatpush1.msra.mxu0 0.0
      %1401 = vmatprep.subr.mxu0 0.0
      %1402 = vmatpush1.msra.mxu0 0.0
      %1403 = vmatprep.subr.mxu0 0.0
      %1404 = vmatpush1.msra.mxu0 0.0
      %1405 = vmatprep.subr.mxu0 0.0
      %1406 = vmatpush1.msra.mxu0 0.0
      %1407 = vmatprep.subr.mxu0 0.0
      %1408 = vmatpush1.msra.mxu0 0.0
      %1409 = vmatprep.subr.mxu0 0.0
      %1410 = vmatpush1.msra.mxu0 0.0
      %1411 = vmatprep.subr.mxu0 0.0
      %1412 = vmatpush1.msra.mxu0 0.0
      %1413 = vmatprep.subr.mxu0 0.0
      %1414 = vmatpush1.msra.mxu0 0.0
      %1415 = vmatprep.subr.mxu0 0.0
      %1416 = vmatpush1.msra.mxu0 0.0
      %1417 = vmatprep.subr.mxu0 0.0
      %1418 = vmatpush1.msra.mxu0 0.0
      %1419 = vmatprep.subr.mxu0 0.0
      %1420 = vmatpush1.msra.mxu0 0.0
      %1421 = vmatprep.subr.mxu0 0.0
      %1422 = vmatpush1.msra.mxu0 0.0
      %1423 = vmatprep.subr.mxu0 0.0
      %1424 = vmatpush1.msra.mxu0 0.0
      %1425 = vmatprep.subr.mxu0 0.0
      %1426 = vmatpush1.msra.mxu0 0.0
      %1427 = vmatprep.subr.mxu0 0.0
      %1428 = vmatpush1.msra.mxu0 0.0
      %1429 = vmatprep.subr.mxu0 0.0
      %1430 = vmatpush1.msra.mxu0 0.0
      %1431 = vmatprep.mubr.f32.mxu0 0.0
      %1432 = vmatmul.mubr.f32.gmra.mrb[0].mxu0 %v1362
      %v1433 = vpop.f32.mrb[0].mxu0
      %v1434 = vadd.f32 %v1358, %v1433
      %v1435 = vpop.f32.mrb[0].mxu0
      %1436 = vdwg.mxu0
      %v1437 = vld [vmem:[%s11] sm:$0xf]
      %1439 = vset.pattern.permute.xlu0 0
      %1440 = vperm.xlu0 %1439, %v1437
      %v1441 = vpop.permute.xlu0 %1440
      %v1443 = vadd.f32 %v1350, %v1441
      %v1444 = vld [vmem:[%s10] sm:$0xff]
      %v1445 = vld [vmem:[%s10 + $0x8] sm:$0xff]
      %v1446 = vld [vmem:[%s10 + $0x10] sm:$0xff]
      %v1447 = vld [vmem:[%s10 + $0x18] sm:$0xff]
      %v1448 = vld [vmem:[%s10 + $0x20] sm:$0xff]
      %v1449 = vld [vmem:[%s10 + $0x28] sm:$0xff]
      %v1450 = vld [vmem:[%s10 + $0x30] sm:$0xff]
      %v1451 = vld [vmem:[%s10 + $0x38] sm:$0xff]
      %v1452 = vld [vmem:[%s10 + $0x40] sm:$0xff]
      %v1453 = vld [vmem:[%s10 + $0x48] sm:$0xff]
      %v1454 = vld [vmem:[%s10 + $0x50] sm:$0xff]
      %v1455 = vld [vmem:[%s10 + $0x58] sm:$0xff]
      %v1456 = vld [vmem:[%s10 + $0x60] sm:$0xff]
      %v1457 = vld [vmem:[%s10 + $0x68] sm:$0xff]
      %v1458 = vld [vmem:[%s10 + $0x70] sm:$0xff]
      %vm1459 = vcmask 982016
      %v1461 = vsel %vm1459, %v1434, 0
      %1463 = vmatprep.subr.mxu0 0.0
      %1464 = vmatpush1.msra.mxu0 %v1444
      %1465 = vmatprep.subr.mxu0 0.0
      %1466 = vmatpush1.msra.mxu0 %v1445
      %1467 = vmatprep.subr.mxu0 0.0
      %1468 = vmatpush1.msra.mxu0 %v1446
      %1469 = vmatprep.subr.mxu0 0.0
      %1470 = vmatpush1.msra.mxu0 %v1447
      %1471 = vmatprep.subr.mxu0 0.0
      %1472 = vmatpush1.msra.mxu0 %v1448
      %1473 = vmatprep.subr.mxu0 0.0
      %1474 = vmatpush1.msra.mxu0 %v1449
      %1475 = vmatprep.subr.mxu0 0.0
      %1476 = vmatpush1.msra.mxu0 %v1450
      %1477 = vmatprep.subr.mxu0 0.0
      %1478 = vmatpush1.msra.mxu0 %v1451
      %1479 = vmatprep.subr.mxu0 0.0
      %1480 = vmatpush1.msra.mxu0 %v1452
      %1481 = vmatprep.subr.mxu0 0.0
      %1482 = vmatpush1.msra.mxu0 %v1453
      %1483 = vmatprep.subr.mxu0 0.0
      %1484 = vmatpush1.msra.mxu0 %v1454
      %1485 = vmatprep.subr.mxu0 0.0
      %1486 = vmatpush1.msra.mxu0 %v1455
      %1487 = vmatprep.subr.mxu0 0.0
      %1488 = vmatpush1.msra.mxu0 %v1456
      %1489 = vmatprep.subr.mxu0 0.0
      %1490 = vmatpush1.msra.mxu0 %v1457
      %1491 = vmatprep.subr.mxu0 0.0
      %1492 = vmatpush1.msra.mxu0 %v1458
      %1493 = vmatprep.subr.mxu0 0.0
      %1494 = vmatpush1.msra.mxu0 0.0
      %1495 = vmatprep.subr.mxu0 0.0
      %1496 = vmatpush1.msra.mxu0 0.0
      %1497 = vmatprep.subr.mxu0 0.0
      %1498 = vmatpush1.msra.mxu0 0.0
      %1499 = vmatprep.subr.mxu0 0.0
      %1500 = vmatpush1.msra.mxu0 0.0
      %1501 = vmatprep.subr.mxu0 0.0
      %1502 = vmatpush1.msra.mxu0 0.0
      %1503 = vmatprep.subr.mxu0 0.0
      %1504 = vmatpush1.msra.mxu0 0.0
      %1505 = vmatprep.subr.mxu0 0.0
      %1506 = vmatpush1.msra.mxu0 0.0
      %1507 = vmatprep.subr.mxu0 0.0
      %1508 = vmatpush1.msra.mxu0 0.0
      %1509 = vmatprep.subr.mxu0 0.0
      %1510 = vmatpush1.msra.mxu0 0.0
      %1511 = vmatprep.subr.mxu0 0.0
      %1512 = vmatpush1.msra.mxu0 0.0
      %1513 = vmatprep.subr.mxu0 0.0
      %1514 = vmatpush1.msra.mxu0 0.0
      %1515 = vmatprep.subr.mxu0 0.0
      %1516 = vmatpush1.msra.mxu0 0.0
      %1517 = vmatprep.subr.mxu0 0.0
      %1518 = vmatpush1.msra.mxu0 0.0
      %1519 = vmatprep.subr.mxu0 0.0
      %1520 = vmatpush1.msra.mxu0 0.0
      %1521 = vmatprep.subr.mxu0 0.0
      %1522 = vmatpush1.msra.mxu0 0.0
      %1523 = vmatprep.subr.mxu0 0.0
      %1524 = vmatpush1.msra.mxu0 0.0
      %1525 = vmatprep.subr.mxu0 0.0
      %1526 = vmatpush1.msra.mxu0 0.0
      %1527 = vmatprep.mubr.f32.mxu0 0.0
      %1528 = vmatmul.mubr.f32.gmra.mrb[0].mxu0 %v1461
      %v1529 = vpop.f32.mrb[0].mxu0
      %v1530 = vadd.f32 0.0, %v1529
      %v1531 = vpop.f32.mrb[0].mxu0
      %1532 = vdwg.mxu0
      %v1533 = vld [vmem:[%s9] sm:$0xf]
      %v1535 = vsel %vm1360, %v1533, 0
      %v1538 = vsel %vm849, %v1530, 0
      %1540 = vmatprep.subr.mxu0 0.0
      %1541 = vmatpush1.msra.mxu0 %v1538
      %1542 = vmatprep.subr.mxu0 0.0
      %1543 = vmatpush1.msra.mxu0 0.0
      %1544 = vmatprep.subr.mxu0 0.0
      %1545 = vmatpush1.msra.mxu0 0.0
      %1546 = vmatprep.subr.mxu0 0.0
      %1547 = vmatpush1.msra.mxu0 0.0
      %1548 = vmatprep.subr.mxu0 0.0
      %1549 = vmatpush1.msra.mxu0 0.0
      %1550 = vmatprep.subr.mxu0 0.0
      %1551 = vmatpush1.msra.mxu0 0.0
      %1552 = vmatprep.subr.mxu0 0.0
      %1553 = vmatpush1.msra.mxu0 0.0
      %1554 = vmatprep.subr.mxu0 0.0
      %1555 = vmatpush1.msra.mxu0 0.0
      %1556 = vmatprep.subr.mxu0 0.0
      %1557 = vmatpush1.msra.mxu0 0.0
      %1558 = vmatprep.subr.mxu0 0.0
      %1559 = vmatpush1.msra.mxu0 0.0
      %1560 = vmatprep.subr.mxu0 0.0
      %1561 = vmatpush1.msra.mxu0 0.0
      %1562 = vmatprep.subr.mxu0 0.0
      %1563 = vmatpush1.msra.mxu0 0.0
      %1564 = vmatprep.subr.mxu0 0.0
      %1565 = vmatpush1.msra.mxu0 0.0
      %1566 = vmatprep.subr.mxu0 0.0
      %1567 = vmatpush1.msra.mxu0 0.0
      %1568 = vmatprep.subr.mxu0 0.0
      %1569 = vmatpush1.msra.mxu0 0.0
      %1570 = vmatprep.subr.mxu0 0.0
      %1571 = vmatpush1.msra.mxu0 0.0
      %1572 = vmatprep.subr.mxu0 0.0
      %1573 = vmatpush1.msra.mxu0 0.0
      %1574 = vmatprep.subr.mxu0 0.0
      %1575 = vmatpush1.msra.mxu0 0.0
      %1576 = vmatprep.subr.mxu0 0.0
      %1577 = vmatpush1.msra.mxu0 0.0
      %1578 = vmatprep.subr.mxu0 0.0
      %1579 = vmatpush1.msra.mxu0 0.0
      %1580 = vmatprep.subr.mxu0 0.0
      %1581 = vmatpush1.msra.mxu0 0.0
      %1582 = vmatprep.subr.mxu0 0.0
      %1583 = vmatpush1.msra.mxu0 0.0
      %1584 = vmatprep.subr.mxu0 0.0
      %1585 = vmatpush1.msra.mxu0 0.0
      %1586 = vmatprep.subr.mxu0 0.0
      %1587 = vmatpush1.msra.mxu0 0.0
      %1588 = vmatprep.subr.mxu0 0.0
      %1589 = vmatpush1.msra.mxu0 0.0
      %1590 = vmatprep.subr.mxu0 0.0
      %1591 = vmatpush1.msra.mxu0 0.0
      %1592 = vmatprep.subr.mxu0 0.0
      %1593 = vmatpush1.msra.mxu0 0.0
      %1594 = vmatprep.subr.mxu0 0.0
      %1595 = vmatpush1.msra.mxu0 0.0
      %1596 = vmatprep.subr.mxu0 0.0
      %1597 = vmatpush1.msra.mxu0 0.0
      %1598 = vmatprep.subr.mxu0 0.0
      %1599 = vmatpush1.msra.mxu0 0.0
      %1600 = vmatprep.subr.mxu0 0.0
      %1601 = vmatpush1.msra.mxu0 0.0
      %1602 = vmatprep.subr.mxu0 0.0
      %1603 = vmatpush1.msra.mxu0 0.0
      %1604 = vmatprep.mubr.f32.mxu0 0.0
      %1605 = vmatmul.mubr.f32.gmra.mrb[0].mxu0 %v1535
      %v1606 = vpop.f32.mrb[0].mxu0
      %v1607 = vadd.f32 0.0, %v1606
      %v1608 = vpop.f32.mrb[0].mxu0
      %1609 = vdwg.mxu0
      %v1610 = vadd.f32 %v1443, %v1607
      %s1611 = scalar_lea.vmem %s10, 120
      %v1612 = vld [vmem:[%s1611] sm:$0xff]
      %v1613 = vld [vmem:[%s1611 + $0x8] sm:$0xff]
      %v1614 = vld [vmem:[%s1611 + $0x10] sm:$0xff]
      %v1615 = vld [vmem:[%s1611 + $0x18] sm:$0xff]
      %v1616 = vld [vmem:[%s1611 + $0x20] sm:$0xff]
      %v1617 = vld [vmem:[%s1611 + $0x28] sm:$0xff]
      %v1618 = vld [vmem:[%s1611 + $0x30] sm:$0xff]
      %v1619 = vld [vmem:[%s1611 + $0x38] sm:$0xff]
      %v1620 = vld [vmem:[%s1611 + $0x40] sm:$0xff]
      %v1621 = vld [vmem:[%s1611 + $0x48] sm:$0xff]
      %v1622 = vld [vmem:[%s1611 + $0x50] sm:$0xff]
      %v1623 = vld [vmem:[%s1611 + $0x58] sm:$0xff]
      %v1624 = vld [vmem:[%s1611 + $0x60] sm:$0xff]
      %v1625 = vld [vmem:[%s1611 + $0x68] sm:$0xff]
      %v1626 = vld [vmem:[%s1611 + $0x70] sm:$0xff]
      %1627 = vmatprep.subr.mxu0 0.0
      %1628 = vmatpush1.msra.mxu0 %v1612
      %1629 = vmatprep.subr.mxu0 0.0
      %1630 = vmatpush1.msra.mxu0 %v1613
      %1631 = vmatprep.subr.mxu0 0.0
      %1632 = vmatpush1.msra.mxu0 %v1614
      %1633 = vmatprep.subr.mxu0 0.0
      %1634 = vmatpush1.msra.mxu0 %v1615
      %1635 = vmatprep.subr.mxu0 0.0
      %1636 = vmatpush1.msra.mxu0 %v1616
      %1637 = vmatprep.subr.mxu0 0.0
      %1638 = vmatpush1.msra.mxu0 %v1617
      %1639 = vmatprep.subr.mxu0 0.0
      %1640 = vmatpush1.msra.mxu0 %v1618
      %1641 = vmatprep.subr.mxu0 0.0
      %1642 = vmatpush1.msra.mxu0 %v1619
      %1643 = vmatprep.subr.mxu0 0.0
      %1644 = vmatpush1.msra.mxu0 %v1620
      %1645 = vmatprep.subr.mxu0 0.0
      %1646 = vmatpush1.msra.mxu0 %v1621
      %1647 = vmatprep.subr.mxu0 0.0
      %1648 = vmatpush1.msra.mxu0 %v1622
      %1649 = vmatprep.subr.mxu0 0.0
      %1650 = vmatpush1.msra.mxu0 %v1623
      %1651 = vmatprep.subr.mxu0 0.0
      %1652 = vmatpush1.msra.mxu0 %v1624
      %1653 = vmatprep.subr.mxu0 0.0
      %1654 = vmatpush1.msra.mxu0 %v1625
      %1655 = vmatprep.subr.mxu0 0.0
      %1656 = vmatpush1.msra.mxu0 %v1626
      %1657 = vmatprep.subr.mxu0 0.0
      %1658 = vmatpush1.msra.mxu0 0.0
      %1659 = vmatprep.subr.mxu0 0.0
      %1660 = vmatpush1.msra.mxu0 0.0
      %1661 = vmatprep.subr.mxu0 0.0
      %1662 = vmatpush1.msra.mxu0 0.0
      %1663 = vmatprep.subr.mxu0 0.0
      %1664 = vmatpush1.msra.mxu0 0.0
      %1665 = vmatprep.subr.mxu0 0.0
      %1666 = vmatpush1.msra.mxu0 0.0
      %1667 = vmatprep.subr.mxu0 0.0
      %1668 = vmatpush1.msra.mxu0 0.0
      %1669 = vmatprep.subr.mxu0 0.0
      %1670 = vmatpush1.msra.mxu0 0.0
      %1671 = vmatprep.subr.mxu0 0.0
      %1672 = vmatpush1.msra.mxu0 0.0
      %1673 = vmatprep.subr.mxu0 0.0
      %1674 = vmatpush1.msra.mxu0 0.0
      %1675 = vmatprep.subr.mxu0 0.0
      %1676 = vmatpush1.msra.mxu0 0.0
      %1677 = vmatprep.subr.mxu0 0.0
      %1678 = vmatpush1.msra.mxu0 0.0
      %1679 = vmatprep.subr.mxu0 0.0
      %1680 = vmatpush1.msra.mxu0 0.0
      %1681 = vmatprep.subr.mxu0 0.0
      %1682 = vmatpush1.msra.mxu0 0.0
      %1683 = vmatprep.subr.mxu0 0.0
      %1684 = vmatpush1.msra.mxu0 0.0
      %1685 = vmatprep.subr.mxu0 0.0
      %1686 = vmatpush1.msra.mxu0 0.0
      %1687 = vmatprep.subr.mxu0 0.0
      %1688 = vmatpush1.msra.mxu0 0.0
      %1689 = vmatprep.subr.mxu0 0.0
      %1690 = vmatpush1.msra.mxu0 0.0
      %1691 = vmatprep.mubr.f32.mxu0 0.0
      %1692 = vmatmul.mubr.f32.gmra.mrb[0].mxu0 %v1461
      %v1693 = vpop.f32.mrb[0].mxu0
      %v1694 = vadd.f32 0.0, %v1693
      %v1695 = vpop.f32.mrb[0].mxu0
      %1696 = vdwg.mxu0
      %s1697 = scalar_lea.vmem %s9, 4
      %v1698 = vld [vmem:[%s1697] sm:$0xf]
      %v1700 = vsel %vm1360, %v1698, 0
      %v1703 = vsel %vm849, %v1694, 0
      %1705 = vmatprep.subr.mxu0 0.0
      %1706 = vmatpush1.msra.mxu0 %v1703
      %1707 = vmatprep.subr.mxu0 0.0
      %1708 = vmatpush1.msra.mxu0 0.0
      %1709 = vmatprep.subr.mxu0 0.0
      %1710 = vmatpush1.msra.mxu0 0.0
      %1711 = vmatprep.subr.mxu0 0.0
      %1712 = vmatpush1.msra.mxu0 0.0
      %1713 = vmatprep.subr.mxu0 0.0
      %1714 = vmatpush1.msra.mxu0 0.0
      %1715 = vmatprep.subr.mxu0 0.0
      %1716 = vmatpush1.msra.mxu0 0.0
      %1717 = vmatprep.subr.mxu0 0.0
      %1718 = vmatpush1.msra.mxu0 0.0
      %1719 = vmatprep.subr.mxu0 0.0
      %1720 = vmatpush1.msra.mxu0 0.0
      %1721 = vmatprep.subr.mxu0 0.0
      %1722 = vmatpush1.msra.mxu0 0.0
      %1723 = vmatprep.subr.mxu0 0.0
      %1724 = vmatpush1.msra.mxu0 0.0
      %1725 = vmatprep.subr.mxu0 0.0
      %1726 = vmatpush1.msra.mxu0 0.0
      %1727 = vmatprep.subr.mxu0 0.0
      %1728 = vmatpush1.msra.mxu0 0.0
      %1729 = vmatprep.subr.mxu0 0.0
      %1730 = vmatpush1.msra.mxu0 0.0
      %1731 = vmatprep.subr.mxu0 0.0
      %1732 = vmatpush1.msra.mxu0 0.0
      %1733 = vmatprep.subr.mxu0 0.0
      %1734 = vmatpush1.msra.mxu0 0.0
      %1735 = vmatprep.subr.mxu0 0.0
      %1736 = vmatpush1.msra.mxu0 0.0
      %1737 = vmatprep.subr.mxu0 0.0
      %1738 = vmatpush1.msra.mxu0 0.0
      %1739 = vmatprep.subr.mxu0 0.0
      %1740 = vmatpush1.msra.mxu0 0.0
      %1741 = vmatprep.subr.mxu0 0.0
      %1742 = vmatpush1.msra.mxu0 0.0
      %1743 = vmatprep.subr.mxu0 0.0
      %1744 = vmatpush1.msra.mxu0 0.0
      %1745 = vmatprep.subr.mxu0 0.0
      %1746 = vmatpush1.msra.mxu0 0.0
      %1747 = vmatprep.subr.mxu0 0.0
      %1748 = vmatpush1.msra.mxu0 0.0
      %1749 = vmatprep.subr.mxu0 0.0
      %1750 = vmatpush1.msra.mxu0 0.0
      %1751 = vmatprep.subr.mxu0 0.0
      %1752 = vmatpush1.msra.mxu0 0.0
      %1753 = vmatprep.subr.mxu0 0.0
      %1754 = vmatpush1.msra.mxu0 0.0
      %1755 = vmatprep.subr.mxu0 0.0
      %1756 = vmatpush1.msra.mxu0 0.0
      %1757 = vmatprep.subr.mxu0 0.0
      %1758 = vmatpush1.msra.mxu0 0.0
      %1759 = vmatprep.subr.mxu0 0.0
      %1760 = vmatpush1.msra.mxu0 0.0
      %1761 = vmatprep.subr.mxu0 0.0
      %1762 = vmatpush1.msra.mxu0 0.0
      %1763 = vmatprep.subr.mxu0 0.0
      %1764 = vmatpush1.msra.mxu0 0.0
      %1765 = vmatprep.subr.mxu0 0.0
      %1766 = vmatpush1.msra.mxu0 0.0
      %1767 = vmatprep.subr.mxu0 0.0
      %1768 = vmatpush1.msra.mxu0 0.0
      %1769 = vmatprep.mubr.f32.mxu0 0.0
      %1770 = vmatmul.mubr.f32.gmra.mrb[0].mxu0 %v1700
      %v1771 = vpop.f32.mrb[0].mxu0
      %v1772 = vadd.f32 0.0, %v1771
      %v1773 = vpop.f32.mrb[0].mxu0
      %1774 = vdwg.mxu0
      %v1775 = vadd.f32 %v1610, %v1772
      %s1776 = scalar_lea.vmem %s10, 240
      %v1777 = vld [vmem:[%s1776] sm:$0xff]
      %v1778 = vld [vmem:[%s1776 + $0x8] sm:$0xff]
      %v1779 = vld [vmem:[%s1776 + $0x10] sm:$0xff]
      %v1780 = vld [vmem:[%s1776 + $0x18] sm:$0xff]
      %v1781 = vld [vmem:[%s1776 + $0x20] sm:$0xff]
      %v1782 = vld [vmem:[%s1776 + $0x28] sm:$0xff]
      %v1783 = vld [vmem:[%s1776 + $0x30] sm:$0xff]
      %v1784 = vld [vmem:[%s1776 + $0x38] sm:$0xff]
      %v1785 = vld [vmem:[%s1776 + $0x40] sm:$0xff]
      %v1786 = vld [vmem:[%s1776 + $0x48] sm:$0xff]
      %v1787 = vld [vmem:[%s1776 + $0x50] sm:$0xff]
      %v1788 = vld [vmem:[%s1776 + $0x58] sm:$0xff]
      %v1789 = vld [vmem:[%s1776 + $0x60] sm:$0xff]
      %v1790 = vld [vmem:[%s1776 + $0x68] sm:$0xff]
      %v1791 = vld [vmem:[%s1776 + $0x70] sm:$0xff]
      %1792 = vmatprep.subr.mxu0 0.0
      %1793 = vmatpush1.msra.mxu0 %v1777
      %1794 = vmatprep.subr.mxu0 0.0
      %1795 = vmatpush1.msra.mxu0 %v1778
      %1796 = vmatprep.subr.mxu0 0.0
      %1797 = vmatpush1.msra.mxu0 %v1779
      %1798 = vmatprep.subr.mxu0 0.0
      %1799 = vmatpush1.msra.mxu0 %v1780
      %1800 = vmatprep.subr.mxu0 0.0
      %1801 = vmatpush1.msra.mxu0 %v1781
      %1802 = vmatprep.subr.mxu0 0.0
      %1803 = vmatpush1.msra.mxu0 %v1782
      %1804 = vmatprep.subr.mxu0 0.0
      %1805 = vmatpush1.msra.mxu0 %v1783
      %1806 = vmatprep.subr.mxu0 0.0
      %1807 = vmatpush1.msra.mxu0 %v1784
      %1808 = vmatprep.subr.mxu0 0.0
      %1809 = vmatpush1.msra.mxu0 %v1785
      %1810 = vmatprep.subr.mxu0 0.0
      %1811 = vmatpush1.msra.mxu0 %v1786
      %1812 = vmatprep.subr.mxu0 0.0
      %1813 = vmatpush1.msra.mxu0 %v1787
      %1814 = vmatprep.subr.mxu0 0.0
      %1815 = vmatpush1.msra.mxu0 %v1788
      %1816 = vmatprep.subr.mxu0 0.0
      %1817 = vmatpush1.msra.mxu0 %v1789
      %1818 = vmatprep.subr.mxu0 0.0
      %1819 = vmatpush1.msra.mxu0 %v1790
      %1820 = vmatprep.subr.mxu0 0.0
      %1821 = vmatpush1.msra.mxu0 %v1791
      %1822 = vmatprep.subr.mxu0 0.0
      %1823 = vmatpush1.msra.mxu0 0.0
      %1824 = vmatprep.subr.mxu0 0.0
      %1825 = vmatpush1.msra.mxu0 0.0
      %1826 = vmatprep.subr.mxu0 0.0
      %1827 = vmatpush1.msra.mxu0 0.0
      %1828 = vmatprep.subr.mxu0 0.0
      %1829 = vmatpush1.msra.mxu0 0.0
      %1830 = vmatprep.subr.mxu0 0.0
      %1831 = vmatpush1.msra.mxu0 0.0
      %1832 = vmatprep.subr.mxu0 0.0
      %1833 = vmatpush1.msra.mxu0 0.0
      %1834 = vmatprep.subr.mxu0 0.0
      %1835 = vmatpush1.msra.mxu0 0.0
      %1836 = vmatprep.subr.mxu0 0.0
      %1837 = vmatpush1.msra.mxu0 0.0
      %1838 = vmatprep.subr.mxu0 0.0
      %1839 = vmatpush1.msra.mxu0 0.0
      %1840 = vmatprep.subr.mxu0 0.0
      %1841 = vmatpush1.msra.mxu0 0.0
      %1842 = vmatprep.subr.mxu0 0.0
      %1843 = vmatpush1.msra.mxu0 0.0
      %1844 = vmatprep.subr.mxu0 0.0
      %1845 = vmatpush1.msra.mxu0 0.0
      %1846 = vmatprep.subr.mxu0 0.0
      %1847 = vmatpush1.msra.mxu0 0.0
      %1848 = vmatprep.subr.mxu0 0.0
      %1849 = vmatpush1.msra.mxu0 0.0
      %1850 = vmatprep.subr.mxu0 0.0
      %1851 = vmatpush1.msra.mxu0 0.0
      %1852 = vmatprep.subr.mxu0 0.0
      %1853 = vmatpush1.msra.mxu0 0.0
      %1854 = vmatprep.subr.mxu0 0.0
      %1855 = vmatpush1.msra.mxu0 0.0
      %1856 = vmatprep.mubr.f32.mxu0 0.0
      %1857 = vmatmul.mubr.f32.gmra.mrb[0].mxu0 %v1461
      %v1858 = vpop.f32.mrb[0].mxu0
      %v1859 = vadd.f32 0.0, %v1858
      %v1860 = vpop.f32.mrb[0].mxu0
      %1861 = vdwg.mxu0
      %s1862 = scalar_lea.vmem %s9, 8
      %v1863 = vld [vmem:[%s1862] sm:$0xf]
      %v1865 = vsel %vm1360, %v1863, 0
      %v1868 = vsel %vm849, %v1859, 0
      %1870 = vmatprep.subr.mxu0 0.0
      %1871 = vmatpush1.msra.mxu0 %v1868
      %1872 = vmatprep.subr.mxu0 0.0
      %1873 = vmatpush1.msra.mxu0 0.0
      %1874 = vmatprep.subr.mxu0 0.0
      %1875 = vmatpush1.msra.mxu0 0.0
      %1876 = vmatprep.subr.mxu0 0.0
      %1877 = vmatpush1.msra.mxu0 0.0
      %1878 = vmatprep.subr.mxu0 0.0
      %1879 = vmatpush1.msra.mxu0 0.0
      %1880 = vmatprep.subr.mxu0 0.0
      %1881 = vmatpush1.msra.mxu0 0.0
      %1882 = vmatprep.subr.mxu0 0.0
      %1883 = vmatpush1.msra.mxu0 0.0
      %1884 = vmatprep.subr.mxu0 0.0
      %1885 = vmatpush1.msra.mxu0 0.0
      %1886 = vmatprep.subr.mxu0 0.0
      %1887 = vmatpush1.msra.mxu0 0.0
      %1888 = vmatprep.subr.mxu0 0.0
      %1889 = vmatpush1.msra.mxu0 0.0
      %1890 = vmatprep.subr.mxu0 0.0
      %1891 = vmatpush1.msra.mxu0 0.0
      %1892 = vmatprep.subr.mxu0 0.0
      %1893 = vmatpush1.msra.mxu0 0.0
      %1894 = vmatprep.subr.mxu0 0.0
      %1895 = vmatpush1.msra.mxu0 0.0
      %1896 = vmatprep.subr.mxu0 0.0
      %1897 = vmatpush1.msra.mxu0 0.0
      %1898 = vmatprep.subr.mxu0 0.0
      %1899 = vmatpush1.msra.mxu0 0.0
      %1900 = vmatprep.subr.mxu0 0.0
      %1901 = vmatpush1.msra.mxu0 0.0
      %1902 = vmatprep.subr.mxu0 0.0
      %1903 = vmatpush1.msra.mxu0 0.0
      %1904 = vmatprep.subr.mxu0 0.0
      %1905 = vmatpush1.msra.mxu0 0.0
      %1906 = vmatprep.subr.mxu0 0.0
      %1907 = vmatpush1.msra.mxu0 0.0
      %1908 = vmatprep.subr.mxu0 0.0
      %1909 = vmatpush1.msra.mxu0 0.0
      %1910 = vmatprep.subr.mxu0 0.0
      %1911 = vmatpush1.msra.mxu0 0.0
      %1912 = vmatprep.subr.mxu0 0.0
      %1913 = vmatpush1.msra.mxu0 0.0
      %1914 = vmatprep.subr.mxu0 0.0
      %1915 = vmatpush1.msra.mxu0 0.0
      %1916 = vmatprep.subr.mxu0 0.0
      %1917 = vmatpush1.msra.mxu0 0.0
      %1918 = vmatprep.subr.mxu0 0.0
      %1919 = vmatpush1.msra.mxu0 0.0
      %1920 = vmatprep.subr.mxu0 0.0
      %1921 = vmatpush1.msra.mxu0 0.0
      %1922 = vmatprep.subr.mxu0 0.0
      %1923 = vmatpush1.msra.mxu0 0.0
      %1924 = vmatprep.subr.mxu0 0.0
      %1925 = vmatpush1.msra.mxu0 0.0
      %1926 = vmatprep.subr.mxu0 0.0
      %1927 = vmatpush1.msra.mxu0 0.0
      %1928 = vmatprep.subr.mxu0 0.0
      %1929 = vmatpush1.msra.mxu0 0.0
      %1930 = vmatprep.subr.mxu0 0.0
      %1931 = vmatpush1.msra.mxu0 0.0
      %1932 = vmatprep.subr.mxu0 0.0
      %1933 = vmatpush1.msra.mxu0 0.0
      %1934 = vmatprep.mubr.f32.mxu0 0.0
      %1935 = vmatmul.mubr.f32.gmra.mrb[0].mxu0 %v1865
      %v1936 = vpop.f32.mrb[0].mxu0
      %v1937 = vadd.f32 0.0, %v1936
      %v1938 = vpop.f32.mrb[0].mxu0
      %1939 = vdwg.mxu0
      %v1940 = vadd.f32 %v1775, %v1937
      %s1941 = scalar_lea.vmem %s10, 360
      %v1942 = vld [vmem:[%s1941] sm:$0xff]
      %v1943 = vld [vmem:[%s1941 + $0x8] sm:$0xff]
      %v1944 = vld [vmem:[%s1941 + $0x10] sm:$0xff]
      %v1945 = vld [vmem:[%s1941 + $0x18] sm:$0xff]
      %v1946 = vld [vmem:[%s1941 + $0x20] sm:$0xff]
      %v1947 = vld [vmem:[%s1941 + $0x28] sm:$0xff]
      %v1948 = vld [vmem:[%s1941 + $0x30] sm:$0xff]
      %v1949 = vld [vmem:[%s1941 + $0x38] sm:$0xff]
      %v1950 = vld [vmem:[%s1941 + $0x40] sm:$0xff]
      %v1951 = vld [vmem:[%s1941 + $0x48] sm:$0xff]
      %v1952 = vld [vmem:[%s1941 + $0x50] sm:$0xff]
      %v1953 = vld [vmem:[%s1941 + $0x58] sm:$0xff]
      %v1954 = vld [vmem:[%s1941 + $0x60] sm:$0xff]
      %v1955 = vld [vmem:[%s1941 + $0x68] sm:$0xff]
      %v1956 = vld [vmem:[%s1941 + $0x70] sm:$0xff]
      %1957 = vmatprep.subr.mxu0 0.0
      %1958 = vmatpush1.msra.mxu0 %v1942
      %1959 = vmatprep.subr.mxu0 0.0
      %1960 = vmatpush1.msra.mxu0 %v1943
      %1961 = vmatprep.subr.mxu0 0.0
      %1962 = vmatpush1.msra.mxu0 %v1944
      %1963 = vmatprep.subr.mxu0 0.0
      %1964 = vmatpush1.msra.mxu0 %v1945
      %1965 = vmatprep.subr.mxu0 0.0
      %1966 = vmatpush1.msra.mxu0 %v1946
      %1967 = vmatprep.subr.mxu0 0.0
      %1968 = vmatpush1.msra.mxu0 %v1947
      %1969 = vmatprep.subr.mxu0 0.0
      %1970 = vmatpush1.msra.mxu0 %v1948
      %1971 = vmatprep.subr.mxu0 0.0
      %1972 = vmatpush1.msra.mxu0 %v1949
      %1973 = vmatprep.subr.mxu0 0.0
      %1974 = vmatpush1.msra.mxu0 %v1950
      %1975 = vmatprep.subr.mxu0 0.0
      %1976 = vmatpush1.msra.mxu0 %v1951
      %1977 = vmatprep.subr.mxu0 0.0
      %1978 = vmatpush1.msra.mxu0 %v1952
      %1979 = vmatprep.subr.mxu0 0.0
      %1980 = vmatpush1.msra.mxu0 %v1953
      %1981 = vmatprep.subr.mxu0 0.0
      %1982 = vmatpush1.msra.mxu0 %v1954
      %1983 = vmatprep.subr.mxu0 0.0
      %1984 = vmatpush1.msra.mxu0 %v1955
      %1985 = vmatprep.subr.mxu0 0.0
      %1986 = vmatpush1.msra.mxu0 %v1956
      %1987 = vmatprep.subr.mxu0 0.0
      %1988 = vmatpush1.msra.mxu0 0.0
      %1989 = vmatprep.subr.mxu0 0.0
      %1990 = vmatpush1.msra.mxu0 0.0
      %1991 = vmatprep.subr.mxu0 0.0
      %1992 = vmatpush1.msra.mxu0 0.0
      %1993 = vmatprep.subr.mxu0 0.0
      %1994 = vmatpush1.msra.mxu0 0.0
      %1995 = vmatprep.subr.mxu0 0.0
      %1996 = vmatpush1.msra.mxu0 0.0
      %1997 = vmatprep.subr.mxu0 0.0
      %1998 = vmatpush1.msra.mxu0 0.0
      %1999 = vmatprep.subr.mxu0 0.0
      %2000 = vmatpush1.msra.mxu0 0.0
      %2001 = vmatprep.subr.mxu0 0.0
      %2002 = vmatpush1.msra.mxu0 0.0
      %2003 = vmatprep.subr.mxu0 0.0
      %2004 = vmatpush1.msra.mxu0 0.0
      %2005 = vmatprep.subr.mxu0 0.0
      %2006 = vmatpush1.msra.mxu0 0.0
      %2007 = vmatprep.subr.mxu0 0.0
      %2008 = vmatpush1.msra.mxu0 0.0
      %2009 = vmatprep.subr.mxu0 0.0
      %2010 = vmatpush1.msra.mxu0 0.0
      %2011 = vmatprep.subr.mxu0 0.0
      %2012 = vmatpush1.msra.mxu0 0.0
      %2013 = vmatprep.subr.mxu0 0.0
      %2014 = vmatpush1.msra.mxu0 0.0
      %2015 = vmatprep.subr.mxu0 0.0
      %2016 = vmatpush1.msra.mxu0 0.0
      %2017 = vmatprep.subr.mxu0 0.0
      %2018 = vmatpush1.msra.mxu0 0.0
      %2019 = vmatprep.subr.mxu0 0.0
      %2020 = vmatpush1.msra.mxu0 0.0
      %2021 = vmatprep.mubr.f32.mxu0 0.0
      %2022 = vmatmul.mubr.f32.gmra.mrb[0].mxu0 %v1461
      %v2023 = vpop.f32.mrb[0].mxu0
      %v2024 = vadd.f32 0.0, %v2023
      %v2025 = vpop.f32.mrb[0].mxu0
      %2026 = vdwg.mxu0
      %s2027 = scalar_lea.vmem %s9, 12
      %v2028 = vld [vmem:[%s2027] sm:$0xf]
      %v2030 = vsel %vm1360, %v2028, 0
      %v2033 = vsel %vm849, %v2024, 0
      %2035 = vmatprep.subr.mxu0 0.0
      %2036 = vmatpush1.msra.mxu0 %v2033
      %2037 = vmatprep.subr.mxu0 0.0
      %2038 = vmatpush1.msra.mxu0 0.0
      %2039 = vmatprep.subr.mxu0 0.0
      %2040 = vmatpush1.msra.mxu0 0.0
      %2041 = vmatprep.subr.mxu0 0.0
      %2042 = vmatpush1.msra.mxu0 0.0
      %2043 = vmatprep.subr.mxu0 0.0
      %2044 = vmatpush1.msra.mxu0 0.0
      %2045 = vmatprep.subr.mxu0 0.0
      %2046 = vmatpush1.msra.mxu0 0.0
      %2047 = vmatprep.subr.mxu0 0.0
      %2048 = vmatpush1.msra.mxu0 0.0
      %2049 = vmatprep.subr.mxu0 0.0
      %2050 = vmatpush1.msra.mxu0 0.0
      %2051 = vmatprep.subr.mxu0 0.0
      %2052 = vmatpush1.msra.mxu0 0.0
      %2053 = vmatprep.subr.mxu0 0.0
      %2054 = vmatpush1.msra.mxu0 0.0
      %2055 = vmatprep.subr.mxu0 0.0
      %2056 = vmatpush1.msra.mxu0 0.0
      %2057 = vmatprep.subr.mxu0 0.0
      %2058 = vmatpush1.msra.mxu0 0.0
      %2059 = vmatprep.subr.mxu0 0.0
      %2060 = vmatpush1.msra.mxu0 0.0
      %2061 = vmatprep.subr.mxu0 0.0
      %2062 = vmatpush1.msra.mxu0 0.0
      %2063 = vmatprep.subr.mxu0 0.0
      %2064 = vmatpush1.msra.mxu0 0.0
      %2065 = vmatprep.subr.mxu0 0.0
      %2066 = vmatpush1.msra.mxu0 0.0
      %2067 = vmatprep.subr.mxu0 0.0
      %2068 = vmatpush1.msra.mxu0 0.0
      %2069 = vmatprep.subr.mxu0 0.0
      %2070 = vmatpush1.msra.mxu0 0.0
      %2071 = vmatprep.subr.mxu0 0.0
      %2072 = vmatpush1.msra.mxu0 0.0
      %2073 = vmatprep.subr.mxu0 0.0
      %2074 = vmatpush1.msra.mxu0 0.0
      %2075 = vmatprep.subr.mxu0 0.0
      %2076 = vmatpush1.msra.mxu0 0.0
      %2077 = vmatprep.subr.mxu0 0.0
      %2078 = vmatpush1.msra.mxu0 0.0
      %2079 = vmatprep.subr.mxu0 0.0
      %2080 = vmatpush1.msra.mxu0 0.0
      %2081 = vmatprep.subr.mxu0 0.0
      %2082 = vmatpush1.msra.mxu0 0.0
      %2083 = vmatprep.subr.mxu0 0.0
      %2084 = vmatpush1.msra.mxu0 0.0
      %2085 = vmatprep.subr.mxu0 0.0
      %2086 = vmatpush1.msra.mxu0 0.0
      %2087 = vmatprep.subr.mxu0 0.0
      %2088 = vmatpush1.msra.mxu0 0.0
      %2089 = vmatprep.subr.mxu0 0.0
      %2090 = vmatpush1.msra.mxu0 0.0
      %2091 = vmatprep.subr.mxu0 0.0
      %2092 = vmatpush1.msra.mxu0 0.0
      %2093 = vmatprep.subr.mxu0 0.0
      %2094 = vmatpush1.msra.mxu0 0.0
      %2095 = vmatprep.subr.mxu0 0.0
      %2096 = vmatpush1.msra.mxu0 0.0
      %2097 = vmatprep.subr.mxu0 0.0
      %2098 = vmatpush1.msra.mxu0 0.0
      %2099 = vmatprep.mubr.f32.mxu0 0.0
      %2100 = vmatmul.mubr.f32.gmra.mrb[0].mxu0 %v2030
      %v2101 = vpop.f32.mrb[0].mxu0
      %v2102 = vadd.f32 0.0, %v2101
      %v2103 = vpop.f32.mrb[0].mxu0
      %2104 = vdwg.mxu0
      %v2105 = vadd.f32 %v1940, %v2102
      %s2106 = scalar_lea.vmem %s10, 480
      %v2107 = vld [vmem:[%s2106] sm:$0xff]
      %v2108 = vld [vmem:[%s2106 + $0x8] sm:$0xff]
      %v2109 = vld [vmem:[%s2106 + $0x10] sm:$0xff]
      %v2110 = vld [vmem:[%s2106 + $0x18] sm:$0xff]
      %v2111 = vld [vmem:[%s2106 + $0x20] sm:$0xff]
      %v2112 = vld [vmem:[%s2106 + $0x28] sm:$0xff]
      %v2113 = vld [vmem:[%s2106 + $0x30] sm:$0xff]
      %v2114 = vld [vmem:[%s2106 + $0x38] sm:$0xff]
      %v2115 = vld [vmem:[%s2106 + $0x40] sm:$0xff]
      %v2116 = vld [vmem:[%s2106 + $0x48] sm:$0xff]
      %v2117 = vld [vmem:[%s2106 + $0x50] sm:$0xff]
      %v2118 = vld [vmem:[%s2106 + $0x58] sm:$0xff]
      %v2119 = vld [vmem:[%s2106 + $0x60] sm:$0xff]
      %v2120 = vld [vmem:[%s2106 + $0x68] sm:$0xff]
      %v2121 = vld [vmem:[%s2106 + $0x70] sm:$0xff]
      %2122 = vmatprep.subr.mxu0 0.0
      %2123 = vmatpush1.msra.mxu0 %v2107
      %2124 = vmatprep.subr.mxu0 0.0
      %2125 = vmatpush1.msra.mxu0 %v2108
      %2126 = vmatprep.subr.mxu0 0.0
      %2127 = vmatpush1.msra.mxu0 %v2109
      %2128 = vmatprep.subr.mxu0 0.0
      %2129 = vmatpush1.msra.mxu0 %v2110
      %2130 = vmatprep.subr.mxu0 0.0
      %2131 = vmatpush1.msra.mxu0 %v2111
      %2132 = vmatprep.subr.mxu0 0.0
      %2133 = vmatpush1.msra.mxu0 %v2112
      %2134 = vmatprep.subr.mxu0 0.0
      %2135 = vmatpush1.msra.mxu0 %v2113
      %2136 = vmatprep.subr.mxu0 0.0
      %2137 = vmatpush1.msra.mxu0 %v2114
      %2138 = vmatprep.subr.mxu0 0.0
      %2139 = vmatpush1.msra.mxu0 %v2115
      %2140 = vmatprep.subr.mxu0 0.0
      %2141 = vmatpush1.msra.mxu0 %v2116
      %2142 = vmatprep.subr.mxu0 0.0
      %2143 = vmatpush1.msra.mxu0 %v2117
      %2144 = vmatprep.subr.mxu0 0.0
      %2145 = vmatpush1.msra.mxu0 %v2118
      %2146 = vmatprep.subr.mxu0 0.0
      %2147 = vmatpush1.msra.mxu0 %v2119
      %2148 = vmatprep.subr.mxu0 0.0
      %2149 = vmatpush1.msra.mxu0 %v2120
      %2150 = vmatprep.subr.mxu0 0.0
      %2151 = vmatpush1.msra.mxu0 %v2121
      %2152 = vmatprep.subr.mxu0 0.0
      %2153 = vmatpush1.msra.mxu0 0.0
      %2154 = vmatprep.subr.mxu0 0.0
      %2155 = vmatpush1.msra.mxu0 0.0
      %2156 = vmatprep.subr.mxu0 0.0
      %2157 = vmatpush1.msra.mxu0 0.0
      %2158 = vmatprep.subr.mxu0 0.0
      %2159 = vmatpush1.msra.mxu0 0.0
      %2160 = vmatprep.subr.mxu0 0.0
      %2161 = vmatpush1.msra.mxu0 0.0
      %2162 = vmatprep.subr.mxu0 0.0
      %2163 = vmatpush1.msra.mxu0 0.0
      %2164 = vmatprep.subr.mxu0 0.0
      %2165 = vmatpush1.msra.mxu0 0.0
      %2166 = vmatprep.subr.mxu0 0.0
      %2167 = vmatpush1.msra.mxu0 0.0
      %2168 = vmatprep.subr.mxu0 0.0
      %2169 = vmatpush1.msra.mxu0 0.0
      %2170 = vmatprep.subr.mxu0 0.0
      %2171 = vmatpush1.msra.mxu0 0.0
      %2172 = vmatprep.subr.mxu0 0.0
      %2173 = vmatpush1.msra.mxu0 0.0
      %2174 = vmatprep.subr.mxu0 0.0
      %2175 = vmatpush1.msra.mxu0 0.0
      %2176 = vmatprep.subr.mxu0 0.0
      %2177 = vmatpush1.msra.mxu0 0.0
      %2178 = vmatprep.subr.mxu0 0.0
      %2179 = vmatpush1.msra.mxu0 0.0
      %2180 = vmatprep.subr.mxu0 0.0
      %2181 = vmatpush1.msra.mxu0 0.0
      %2182 = vmatprep.subr.mxu0 0.0
      %2183 = vmatpush1.msra.mxu0 0.0
      %2184 = vmatprep.subr.mxu0 0.0
      %2185 = vmatpush1.msra.mxu0 0.0
      %2186 = vmatprep.mubr.f32.mxu0 0.0
      %2187 = vmatmul.mubr.f32.gmra.mrb[0].mxu0 %v1461
      %v2188 = vpop.f32.mrb[0].mxu0
      %v2189 = vadd.f32 0.0, %v2188
      %v2190 = vpop.f32.mrb[0].mxu0
      %2191 = vdwg.mxu0
      %s2192 = scalar_lea.vmem %s9, 16
      %v2193 = vld [vmem:[%s2192] sm:$0xf]
      %v2195 = vsel %vm1360, %v2193, 0
      %v2198 = vsel %vm849, %v2189, 0
      %2200 = vmatprep.subr.mxu0 0.0
      %2201 = vmatpush1.msra.mxu0 %v2198
      %2202 = vmatprep.subr.mxu0 0.0
      %2203 = vmatpush1.msra.mxu0 0.0
      %2204 = vmatprep.subr.mxu0 0.0
      %2205 = vmatpush1.msra.mxu0 0.0
      %2206 = vmatprep.subr.mxu0 0.0
      %2207 = vmatpush1.msra.mxu0 0.0
      %2208 = vmatprep.subr.mxu0 0.0
      %2209 = vmatpush1.msra.mxu0 0.0
      %2210 = vmatprep.subr.mxu0 0.0
      %2211 = vmatpush1.msra.mxu0 0.0
      %2212 = vmatprep.subr.mxu0 0.0
      %2213 = vmatpush1.msra.mxu0 0.0
      %2214 = vmatprep.subr.mxu0 0.0
      %2215 = vmatpush1.msra.mxu0 0.0
      %2216 = vmatprep.subr.mxu0 0.0
      %2217 = vmatpush1.msra.mxu0 0.0
      %2218 = vmatprep.subr.mxu0 0.0
      %2219 = vmatpush1.msra.mxu0 0.0
      %2220 = vmatprep.subr.mxu0 0.0
      %2221 = vmatpush1.msra.mxu0 0.0
      %2222 = vmatprep.subr.mxu0 0.0
      %2223 = vmatpush1.msra.mxu0 0.0
      %2224 = vmatprep.subr.mxu0 0.0
      %2225 = vmatpush1.msra.mxu0 0.0
      %2226 = vmatprep.subr.mxu0 0.0
      %2227 = vmatpush1.msra.mxu0 0.0
      %2228 = vmatprep.subr.mxu0 0.0
      %2229 = vmatpush1.msra.mxu0 0.0
      %2230 = vmatprep.subr.mxu0 0.0
      %2231 = vmatpush1.msra.mxu0 0.0
      %2232 = vmatprep.subr.mxu0 0.0
      %2233 = vmatpush1.msra.mxu0 0.0
      %2234 = vmatprep.subr.mxu0 0.0
      %2235 = vmatpush1.msra.mxu0 0.0
      %2236 = vmatprep.subr.mxu0 0.0
      %2237 = vmatpush1.msra.mxu0 0.0
      %2238 = vmatprep.subr.mxu0 0.0
      %2239 = vmatpush1.msra.mxu0 0.0
      %2240 = vmatprep.subr.mxu0 0.0
      %2241 = vmatpush1.msra.mxu0 0.0
      %2242 = vmatprep.subr.mxu0 0.0
      %2243 = vmatpush1.msra.mxu0 0.0
      %2244 = vmatprep.subr.mxu0 0.0
      %2245 = vmatpush1.msra.mxu0 0.0
      %2246 = vmatprep.subr.mxu0 0.0
      %2247 = vmatpush1.msra.mxu0 0.0
      %2248 = vmatprep.subr.mxu0 0.0
      %2249 = vmatpush1.msra.mxu0 0.0
      %2250 = vmatprep.subr.mxu0 0.0
      %2251 = vmatpush1.msra.mxu0 0.0
      %2252 = vmatprep.subr.mxu0 0.0
      %2253 = vmatpush1.msra.mxu0 0.0
      %2254 = vmatprep.subr.mxu0 0.0
      %2255 = vmatpush1.msra.mxu0 0.0
      %2256 = vmatprep.subr.mxu0 0.0
      %2257 = vmatpush1.msra.mxu0 0.0
      %2258 = vmatprep.subr.mxu0 0.0
      %2259 = vmatpush1.msra.mxu0 0.0
      %2260 = vmatprep.subr.mxu0 0.0
      %2261 = vmatpush1.msra.mxu0 0.0
      %2262 = vmatprep.subr.mxu0 0.0
      %2263 = vmatpush1.msra.mxu0 0.0
      %2264 = vmatprep.mubr.f32.mxu0 0.0
      %2265 = vmatmul.mubr.f32.gmra.mrb[0].mxu0 %v2195
      %v2266 = vpop.f32.mrb[0].mxu0
      %v2267 = vadd.f32 0.0, %v2266
      %v2268 = vpop.f32.mrb[0].mxu0
      %2269 = vdwg.mxu0
      %v2270 = vadd.f32 %v2105, %v2267
      %s2271 = scalar_lea.vmem %s10, 600
      %v2272 = vld [vmem:[%s2271] sm:$0xff]
      %v2273 = vld [vmem:[%s2271 + $0x8] sm:$0xff]
      %v2274 = vld [vmem:[%s2271 + $0x10] sm:$0xff]
      %v2275 = vld [vmem:[%s2271 + $0x18] sm:$0xff]
      %v2276 = vld [vmem:[%s2271 + $0x20] sm:$0xff]
      %v2277 = vld [vmem:[%s2271 + $0x28] sm:$0xff]
      %v2278 = vld [vmem:[%s2271 + $0x30] sm:$0xff]
      %v2279 = vld [vmem:[%s2271 + $0x38] sm:$0xff]
      %v2280 = vld [vmem:[%s2271 + $0x40] sm:$0xff]
      %v2281 = vld [vmem:[%s2271 + $0x48] sm:$0xff]
      %v2282 = vld [vmem:[%s2271 + $0x50] sm:$0xff]
      %v2283 = vld [vmem:[%s2271 + $0x58] sm:$0xff]
      %v2284 = vld [vmem:[%s2271 + $0x60] sm:$0xff]
      %v2285 = vld [vmem:[%s2271 + $0x68] sm:$0xff]
      %v2286 = vld [vmem:[%s2271 + $0x70] sm:$0xff]
      %2287 = vmatprep.subr.mxu0 0.0
      %2288 = vmatpush1.msra.mxu0 %v2272
      %2289 = vmatprep.subr.mxu0 0.0
      %2290 = vmatpush1.msra.mxu0 %v2273
      %2291 = vmatprep.subr.mxu0 0.0
      %2292 = vmatpush1.msra.mxu0 %v2274
      %2293 = vmatprep.subr.mxu0 0.0
      %2294 = vmatpush1.msra.mxu0 %v2275
      %2295 = vmatprep.subr.mxu0 0.0
      %2296 = vmatpush1.msra.mxu0 %v2276
      %2297 = vmatprep.subr.mxu0 0.0
      %2298 = vmatpush1.msra.mxu0 %v2277
      %2299 = vmatprep.subr.mxu0 0.0
      %2300 = vmatpush1.msra.mxu0 %v2278
      %2301 = vmatprep.subr.mxu0 0.0
      %2302 = vmatpush1.msra.mxu0 %v2279
      %2303 = vmatprep.subr.mxu0 0.0
      %2304 = vmatpush1.msra.mxu0 %v2280
      %2305 = vmatprep.subr.mxu0 0.0
      %2306 = vmatpush1.msra.mxu0 %v2281
      %2307 = vmatprep.subr.mxu0 0.0
      %2308 = vmatpush1.msra.mxu0 %v2282
      %2309 = vmatprep.subr.mxu0 0.0
      %2310 = vmatpush1.msra.mxu0 %v2283
      %2311 = vmatprep.subr.mxu0 0.0
      %2312 = vmatpush1.msra.mxu0 %v2284
      %2313 = vmatprep.subr.mxu0 0.0
      %2314 = vmatpush1.msra.mxu0 %v2285
      %2315 = vmatprep.subr.mxu0 0.0
      %2316 = vmatpush1.msra.mxu0 %v2286
      %2317 = vmatprep.subr.mxu0 0.0
      %2318 = vmatpush1.msra.mxu0 0.0
      %2319 = vmatprep.subr.mxu0 0.0
      %2320 = vmatpush1.msra.mxu0 0.0
      %2321 = vmatprep.subr.mxu0 0.0
      %2322 = vmatpush1.msra.mxu0 0.0
      %2323 = vmatprep.subr.mxu0 0.0
      %2324 = vmatpush1.msra.mxu0 0.0
      %2325 = vmatprep.subr.mxu0 0.0
      %2326 = vmatpush1.msra.mxu0 0.0
      %2327 = vmatprep.subr.mxu0 0.0
      %2328 = vmatpush1.msra.mxu0 0.0
      %2329 = vmatprep.subr.mxu0 0.0
      %2330 = vmatpush1.msra.mxu0 0.0
      %2331 = vmatprep.subr.mxu0 0.0
      %2332 = vmatpush1.msra.mxu0 0.0
      %2333 = vmatprep.subr.mxu0 0.0
      %2334 = vmatpush1.msra.mxu0 0.0
      %2335 = vmatprep.subr.mxu0 0.0
      %2336 = vmatpush1.msra.mxu0 0.0
      %2337 = vmatprep.subr.mxu0 0.0
      %2338 = vmatpush1.msra.mxu0 0.0
      %2339 = vmatprep.subr.mxu0 0.0
      %2340 = vmatpush1.msra.mxu0 0.0
      %2341 = vmatprep.subr.mxu0 0.0
      %2342 = vmatpush1.msra.mxu0 0.0
      %2343 = vmatprep.subr.mxu0 0.0
      %2344 = vmatpush1.msra.mxu0 0.0
      %2345 = vmatprep.subr.mxu0 0.0
      %2346 = vmatpush1.msra.mxu0 0.0
      %2347 = vmatprep.subr.mxu0 0.0
      %2348 = vmatpush1.msra.mxu0 0.0
      %2349 = vmatprep.subr.mxu0 0.0
      %2350 = vmatpush1.msra.mxu0 0.0
      %2351 = vmatprep.mubr.f32.mxu0 0.0
      %2352 = vmatmul.mubr.f32.gmra.mrb[0].mxu0 %v1461
      %v2353 = vpop.f32.mrb[0].mxu0
      %v2354 = vadd.f32 0.0, %v2353
      %v2355 = vpop.f32.mrb[0].mxu0
      %2356 = vdwg.mxu0
      %s2357 = scalar_lea.vmem %s9, 20
      %v2358 = vld [vmem:[%s2357] sm:$0xf]
      %v2360 = vsel %vm1360, %v2358, 0
      %v2363 = vsel %vm849, %v2354, 0
      %2365 = vmatprep.subr.mxu0 0.0
      %2366 = vmatpush1.msra.mxu0 %v2363
      %2367 = vmatprep.subr.mxu0 0.0
      %2368 = vmatpush1.msra.mxu0 0.0
      %2369 = vmatprep.subr.mxu0 0.0
      %2370 = vmatpush1.msra.mxu0 0.0
      %2371 = vmatprep.subr.mxu0 0.0
      %2372 = vmatpush1.msra.mxu0 0.0
      %2373 = vmatprep.subr.mxu0 0.0
      %2374 = vmatpush1.msra.mxu0 0.0
      %2375 = vmatprep.subr.mxu0 0.0
      %2376 = vmatpush1.msra.mxu0 0.0
      %2377 = vmatprep.subr.mxu0 0.0
      %2378 = vmatpush1.msra.mxu0 0.0
      %2379 = vmatprep.subr.mxu0 0.0
      %2380 = vmatpush1.msra.mxu0 0.0
      %2381 = vmatprep.subr.mxu0 0.0
      %2382 = vmatpush1.msra.mxu0 0.0
      %2383 = vmatprep.subr.mxu0 0.0
      %2384 = vmatpush1.msra.mxu0 0.0
      %2385 = vmatprep.subr.mxu0 0.0
      %2386 = vmatpush1.msra.mxu0 0.0
      %2387 = vmatprep.subr.mxu0 0.0
      %2388 = vmatpush1.msra.mxu0 0.0
      %2389 = vmatprep.subr.mxu0 0.0
      %2390 = vmatpush1.msra.mxu0 0.0
      %2391 = vmatprep.subr.mxu0 0.0
      %2392 = vmatpush1.msra.mxu0 0.0
      %2393 = vmatprep.subr.mxu0 0.0
      %2394 = vmatpush1.msra.mxu0 0.0
      %2395 = vmatprep.subr.mxu0 0.0
      %2396 = vmatpush1.msra.mxu0 0.0
      %2397 = vmatprep.subr.mxu0 0.0
      %2398 = vmatpush1.msra.mxu0 0.0
      %2399 = vmatprep.subr.mxu0 0.0
      %2400 = vmatpush1.msra.mxu0 0.0
      %2401 = vmatprep.subr.mxu0 0.0
      %2402 = vmatpush1.msra.mxu0 0.0
      %2403 = vmatprep.subr.mxu0 0.0
      %2404 = vmatpush1.msra.mxu0 0.0
      %2405 = vmatprep.subr.mxu0 0.0
      %2406 = vmatpush1.msra.mxu0 0.0
      %2407 = vmatprep.subr.mxu0 0.0
      %2408 = vmatpush1.msra.mxu0 0.0
      %2409 = vmatprep.subr.mxu0 0.0
      %2410 = vmatpush1.msra.mxu0 0.0
      %2411 = vmatprep.subr.mxu0 0.0
      %2412 = vmatpush1.msra.mxu0 0.0
      %2413 = vmatprep.subr.mxu0 0.0
      %2414 = vmatpush1.msra.mxu0 0.0
      %2415 = vmatprep.subr.mxu0 0.0
      %2416 = vmatpush1.msra.mxu0 0.0
      %2417 = vmatprep.subr.mxu0 0.0
      %2418 = vmatpush1.msra.mxu0 0.0
      %2419 = vmatprep.subr.mxu0 0.0
      %2420 = vmatpush1.msra.mxu0 0.0
      %2421 = vmatprep.subr.mxu0 0.0
      %2422 = vmatpush1.msra.mxu0 0.0
      %2423 = vmatprep.subr.mxu0 0.0
      %2424 = vmatpush1.msra.mxu0 0.0
      %2425 = vmatprep.subr.mxu0 0.0
      %2426 = vmatpush1.msra.mxu0 0.0
      %2427 = vmatprep.subr.mxu0 0.0
      %2428 = vmatpush1.msra.mxu0 0.0
      %2429 = vmatprep.mubr.f32.mxu0 0.0
      %2430 = vmatmul.mubr.f32.gmra.mrb[0].mxu0 %v2360
      %v2431 = vpop.f32.mrb[0].mxu0
      %v2432 = vadd.f32 0.0, %v2431
      %v2433 = vpop.f32.mrb[0].mxu0
      %2434 = vdwg.mxu0
      %v2435 = vadd.f32 %v2270, %v2432
      %s2436 = scalar_lea.vmem %s10, 720
      %v2437 = vld [vmem:[%s2436] sm:$0xff]
      %v2438 = vld [vmem:[%s2436 + $0x8] sm:$0xff]
      %v2439 = vld [vmem:[%s2436 + $0x10] sm:$0xff]
      %v2440 = vld [vmem:[%s2436 + $0x18] sm:$0xff]
      %v2441 = vld [vmem:[%s2436 + $0x20] sm:$0xff]
      %v2442 = vld [vmem:[%s2436 + $0x28] sm:$0xff]
      %v2443 = vld [vmem:[%s2436 + $0x30] sm:$0xff]
      %v2444 = vld [vmem:[%s2436 + $0x38] sm:$0xff]
      %v2445 = vld [vmem:[%s2436 + $0x40] sm:$0xff]
      %v2446 = vld [vmem:[%s2436 + $0x48] sm:$0xff]
      %v2447 = vld [vmem:[%s2436 + $0x50] sm:$0xff]
      %v2448 = vld [vmem:[%s2436 + $0x58] sm:$0xff]
      %v2449 = vld [vmem:[%s2436 + $0x60] sm:$0xff]
      %v2450 = vld [vmem:[%s2436 + $0x68] sm:$0xff]
      %v2451 = vld [vmem:[%s2436 + $0x70] sm:$0xff]
      %2452 = vmatprep.subr.mxu0 0.0
      %2453 = vmatpush1.msra.mxu0 %v2437
      %2454 = vmatprep.subr.mxu0 0.0
      %2455 = vmatpush1.msra.mxu0 %v2438
      %2456 = vmatprep.subr.mxu0 0.0
      %2457 = vmatpush1.msra.mxu0 %v2439
      %2458 = vmatprep.subr.mxu0 0.0
      %2459 = vmatpush1.msra.mxu0 %v2440
      %2460 = vmatprep.subr.mxu0 0.0
      %2461 = vmatpush1.msra.mxu0 %v2441
      %2462 = vmatprep.subr.mxu0 0.0
      %2463 = vmatpush1.msra.mxu0 %v2442
      %2464 = vmatprep.subr.mxu0 0.0
      %2465 = vmatpush1.msra.mxu0 %v2443
      %2466 = vmatprep.subr.mxu0 0.0
      %2467 = vmatpush1.msra.mxu0 %v2444
      %2468 = vmatprep.subr.mxu0 0.0
      %2469 = vmatpush1.msra.mxu0 %v2445
      %2470 = vmatprep.subr.mxu0 0.0
      %2471 = vmatpush1.msra.mxu0 %v2446
      %2472 = vmatprep.subr.mxu0 0.0
      %2473 = vmatpush1.msra.mxu0 %v2447
      %2474 = vmatprep.subr.mxu0 0.0
      %2475 = vmatpush1.msra.mxu0 %v2448
      %2476 = vmatprep.subr.mxu0 0.0
      %2477 = vmatpush1.msra.mxu0 %v2449
      %2478 = vmatprep.subr.mxu0 0.0
      %2479 = vmatpush1.msra.mxu0 %v2450
      %2480 = vmatprep.subr.mxu0 0.0
      %2481 = vmatpush1.msra.mxu0 %v2451
      %2482 = vmatprep.subr.mxu0 0.0
      %2483 = vmatpush1.msra.mxu0 0.0
      %2484 = vmatprep.subr.mxu0 0.0
      %2485 = vmatpush1.msra.mxu0 0.0
      %2486 = vmatprep.subr.mxu0 0.0
      %2487 = vmatpush1.msra.mxu0 0.0
      %2488 = vmatprep.subr.mxu0 0.0
      %2489 = vmatpush1.msra.mxu0 0.0
      %2490 = vmatprep.subr.mxu0 0.0
      %2491 = vmatpush1.msra.mxu0 0.0
      %2492 = vmatprep.subr.mxu0 0.0
      %2493 = vmatpush1.msra.mxu0 0.0
      %2494 = vmatprep.subr.mxu0 0.0
      %2495 = vmatpush1.msra.mxu0 0.0
      %2496 = vmatprep.subr.mxu0 0.0
      %2497 = vmatpush1.msra.mxu0 0.0
      %2498 = vmatprep.subr.mxu0 0.0
      %2499 = vmatpush1.msra.mxu0 0.0
      %2500 = vmatprep.subr.mxu0 0.0
      %2501 = vmatpush1.msra.mxu0 0.0
      %2502 = vmatprep.subr.mxu0 0.0
      %2503 = vmatpush1.msra.mxu0 0.0
      %2504 = vmatprep.subr.mxu0 0.0
      %2505 = vmatpush1.msra.mxu0 0.0
      %2506 = vmatprep.subr.mxu0 0.0
      %2507 = vmatpush1.msra.mxu0 0.0
      %2508 = vmatprep.subr.mxu0 0.0
      %2509 = vmatpush1.msra.mxu0 0.0
      %2510 = vmatprep.subr.mxu0 0.0
      %2511 = vmatpush1.msra.mxu0 0.0
      %2512 = vmatprep.subr.mxu0 0.0
      %2513 = vmatpush1.msra.mxu0 0.0
      %2514 = vmatprep.subr.mxu0 0.0
      %2515 = vmatpush1.msra.mxu0 0.0
      %2516 = vmatprep.mubr.f32.mxu0 0.0
      %2517 = vmatmul.mubr.f32.gmra.mrb[0].mxu0 %v1461
      %v2518 = vpop.f32.mrb[0].mxu0
      %v2519 = vadd.f32 0.0, %v2518
      %v2520 = vpop.f32.mrb[0].mxu0
      %2521 = vdwg.mxu0
      %s2522 = scalar_lea.vmem %s9, 24
      %v2523 = vld [vmem:[%s2522] sm:$0xf]
      %v2525 = vsel %vm1360, %v2523, 0
      %v2528 = vsel %vm849, %v2519, 0
      %2530 = vmatprep.subr.mxu0 0.0
      %2531 = vmatpush1.msra.mxu0 %v2528
      %2532 = vmatprep.subr.mxu0 0.0
      %2533 = vmatpush1.msra.mxu0 0.0
      %2534 = vmatprep.subr.mxu0 0.0
      %2535 = vmatpush1.msra.mxu0 0.0
      %2536 = vmatprep.subr.mxu0 0.0
      %2537 = vmatpush1.msra.mxu0 0.0
      %2538 = vmatprep.subr.mxu0 0.0
      %2539 = vmatpush1.msra.mxu0 0.0
      %2540 = vmatprep.subr.mxu0 0.0
      %2541 = vmatpush1.msra.mxu0 0.0
      %2542 = vmatprep.subr.mxu0 0.0
      %2543 = vmatpush1.msra.mxu0 0.0
      %2544 = vmatprep.subr.mxu0 0.0
      %2545 = vmatpush1.msra.mxu0 0.0
      %2546 = vmatprep.subr.mxu0 0.0
      %2547 = vmatpush1.msra.mxu0 0.0
      %2548 = vmatprep.subr.mxu0 0.0
      %2549 = vmatpush1.msra.mxu0 0.0
      %2550 = vmatprep.subr.mxu0 0.0
      %2551 = vmatpush1.msra.mxu0 0.0
      %2552 = vmatprep.subr.mxu0 0.0
      %2553 = vmatpush1.msra.mxu0 0.0
      %2554 = vmatprep.subr.mxu0 0.0
      %2555 = vmatpush1.msra.mxu0 0.0
      %2556 = vmatprep.subr.mxu0 0.0
      %2557 = vmatpush1.msra.mxu0 0.0
      %2558 = vmatprep.subr.mxu0 0.0
      %2559 = vmatpush1.msra.mxu0 0.0
      %2560 = vmatprep.subr.mxu0 0.0
      %2561 = vmatpush1.msra.mxu0 0.0
      %2562 = vmatprep.subr.mxu0 0.0
      %2563 = vmatpush1.msra.mxu0 0.0
      %2564 = vmatprep.subr.mxu0 0.0
      %2565 = vmatpush1.msra.mxu0 0.0
      %2566 = vmatprep.subr.mxu0 0.0
      %2567 = vmatpush1.msra.mxu0 0.0
      %2568 = vmatprep.subr.mxu0 0.0
      %2569 = vmatpush1.msra.mxu0 0.0
      %2570 = vmatprep.subr.mxu0 0.0
      %2571 = vmatpush1.msra.mxu0 0.0
      %2572 = vmatprep.subr.mxu0 0.0
      %2573 = vmatpush1.msra.mxu0 0.0
      %2574 = vmatprep.subr.mxu0 0.0
      %2575 = vmatpush1.msra.mxu0 0.0
      %2576 = vmatprep.subr.mxu0 0.0
      %2577 = vmatpush1.msra.mxu0 0.0
      %2578 = vmatprep.subr.mxu0 0.0
      %2579 = vmatpush1.msra.mxu0 0.0
      %2580 = vmatprep.subr.mxu0 0.0
      %2581 = vmatpush1.msra.mxu0 0.0
      %2582 = vmatprep.subr.mxu0 0.0
      %2583 = vmatpush1.msra.mxu0 0.0
      %2584 = vmatprep.subr.mxu0 0.0
      %2585 = vmatpush1.msra.mxu0 0.0
      %2586 = vmatprep.subr.mxu0 0.0
      %2587 = vmatpush1.msra.mxu0 0.0
      %2588 = vmatprep.subr.mxu0 0.0
      %2589 = vmatpush1.msra.mxu0 0.0
      %2590 = vmatprep.subr.mxu0 0.0
      %2591 = vmatpush1.msra.mxu0 0.0
      %2592 = vmatprep.subr.mxu0 0.0
      %2593 = vmatpush1.msra.mxu0 0.0
      %2594 = vmatprep.mubr.f32.mxu0 0.0
      %2595 = vmatmul.mubr.f32.gmra.mrb[0].mxu0 %v2525
      %v2596 = vpop.f32.mrb[0].mxu0
      %v2597 = vadd.f32 0.0, %v2596
      %v2598 = vpop.f32.mrb[0].mxu0
      %2599 = vdwg.mxu0
      %v2600 = vadd.f32 %v2435, %v2597
      %s2601 = scalar_lea.vmem %s10, 840
      %v2602 = vld [vmem:[%s2601] sm:$0xff]
      %v2603 = vld [vmem:[%s2601 + $0x8] sm:$0xff]
      %v2604 = vld [vmem:[%s2601 + $0x10] sm:$0xff]
      %v2605 = vld [vmem:[%s2601 + $0x18] sm:$0xff]
      %v2606 = vld [vmem:[%s2601 + $0x20] sm:$0xff]
      %v2607 = vld [vmem:[%s2601 + $0x28] sm:$0xff]
      %v2608 = vld [vmem:[%s2601 + $0x30] sm:$0xff]
      %v2609 = vld [vmem:[%s2601 + $0x38] sm:$0xff]
      %v2610 = vld [vmem:[%s2601 + $0x40] sm:$0xff]
      %v2611 = vld [vmem:[%s2601 + $0x48] sm:$0xff]
      %v2612 = vld [vmem:[%s2601 + $0x50] sm:$0xff]
      %v2613 = vld [vmem:[%s2601 + $0x58] sm:$0xff]
      %v2614 = vld [vmem:[%s2601 + $0x60] sm:$0xff]
      %v2615 = vld [vmem:[%s2601 + $0x68] sm:$0xff]
      %v2616 = vld [vmem:[%s2601 + $0x70] sm:$0xff]
      %2617 = vmatprep.subr.mxu0 0.0
      %2618 = vmatpush1.msra.mxu0 %v2602
      %2619 = vmatprep.subr.mxu0 0.0
      %2620 = vmatpush1.msra.mxu0 %v2603
      %2621 = vmatprep.subr.mxu0 0.0
      %2622 = vmatpush1.msra.mxu0 %v2604
      %2623 = vmatprep.subr.mxu0 0.0
      %2624 = vmatpush1.msra.mxu0 %v2605
      %2625 = vmatprep.subr.mxu0 0.0
      %2626 = vmatpush1.msra.mxu0 %v2606
      %2627 = vmatprep.subr.mxu0 0.0
      %2628 = vmatpush1.msra.mxu0 %v2607
      %2629 = vmatprep.subr.mxu0 0.0
      %2630 = vmatpush1.msra.mxu0 %v2608
      %2631 = vmatprep.subr.mxu0 0.0
      %2632 = vmatpush1.msra.mxu0 %v2609
      %2633 = vmatprep.subr.mxu0 0.0
      %2634 = vmatpush1.msra.mxu0 %v2610
      %2635 = vmatprep.subr.mxu0 0.0
      %2636 = vmatpush1.msra.mxu0 %v2611
      %2637 = vmatprep.subr.mxu0 0.0
      %2638 = vmatpush1.msra.mxu0 %v2612
      %2639 = vmatprep.subr.mxu0 0.0
      %2640 = vmatpush1.msra.mxu0 %v2613
      %2641 = vmatprep.subr.mxu0 0.0
      %2642 = vmatpush1.msra.mxu0 %v2614
      %2643 = vmatprep.subr.mxu0 0.0
      %2644 = vmatpush1.msra.mxu0 %v2615
      %2645 = vmatprep.subr.mxu0 0.0
      %2646 = vmatpush1.msra.mxu0 %v2616
      %2647 = vmatprep.subr.mxu0 0.0
      %2648 = vmatpush1.msra.mxu0 0.0
      %2649 = vmatprep.subr.mxu0 0.0
      %2650 = vmatpush1.msra.mxu0 0.0
      %2651 = vmatprep.subr.mxu0 0.0
      %2652 = vmatpush1.msra.mxu0 0.0
      %2653 = vmatprep.subr.mxu0 0.0
      %2654 = vmatpush1.msra.mxu0 0.0
      %2655 = vmatprep.subr.mxu0 0.0
      %2656 = vmatpush1.msra.mxu0 0.0
      %2657 = vmatprep.subr.mxu0 0.0
      %2658 = vmatpush1.msra.mxu0 0.0
      %2659 = vmatprep.subr.mxu0 0.0
      %2660 = vmatpush1.msra.mxu0 0.0
      %2661 = vmatprep.subr.mxu0 0.0
      %2662 = vmatpush1.msra.mxu0 0.0
      %2663 = vmatprep.subr.mxu0 0.0
      %2664 = vmatpush1.msra.mxu0 0.0
      %2665 = vmatprep.subr.mxu0 0.0
      %2666 = vmatpush1.msra.mxu0 0.0
      %2667 = vmatprep.subr.mxu0 0.0
      %2668 = vmatpush1.msra.mxu0 0.0
      %2669 = vmatprep.subr.mxu0 0.0
      %2670 = vmatpush1.msra.mxu0 0.0
      %2671 = vmatprep.subr.mxu0 0.0
      %2672 = vmatpush1.msra.mxu0 0.0
      %2673 = vmatprep.subr.mxu0 0.0
      %2674 = vmatpush1.msra.mxu0 0.0
      %2675 = vmatprep.subr.mxu0 0.0
      %2676 = vmatpush1.msra.mxu0 0.0
      %2677 = vmatprep.subr.mxu0 0.0
      %2678 = vmatpush1.msra.mxu0 0.0
      %2679 = vmatprep.subr.mxu0 0.0
      %2680 = vmatpush1.msra.mxu0 0.0
      %2681 = vmatprep.mubr.f32.mxu0 0.0
      %2682 = vmatmul.mubr.f32.gmra.mrb[0].mxu0 %v1461
      %v2683 = vpop.f32.mrb[0].mxu0
      %v2684 = vadd.f32 0.0, %v2683
      %v2685 = vpop.f32.mrb[0].mxu0
      %2686 = vdwg.mxu0
      %s2687 = scalar_lea.vmem %s9, 28
      %v2688 = vld [vmem:[%s2687] sm:$0xf]
      %v2690 = vsel %vm1360, %v2688, 0
      %v2693 = vsel %vm849, %v2684, 0
      %2695 = vmatprep.subr.mxu0 0.0
      %2696 = vmatpush1.msra.mxu0 %v2693
      %2697 = vmatprep.subr.mxu0 0.0
      %2698 = vmatpush1.msra.mxu0 0.0
      %2699 = vmatprep.subr.mxu0 0.0
      %2700 = vmatpush1.msra.mxu0 0.0
      %2701 = vmatprep.subr.mxu0 0.0
      %2702 = vmatpush1.msra.mxu0 0.0
      %2703 = vmatprep.subr.mxu0 0.0
      %2704 = vmatpush1.msra.mxu0 0.0
      %2705 = vmatprep.subr.mxu0 0.0
      %2706 = vmatpush1.msra.mxu0 0.0
      %2707 = vmatprep.subr.mxu0 0.0
      %2708 = vmatpush1.msra.mxu0 0.0
      %2709 = vmatprep.subr.mxu0 0.0
      %2710 = vmatpush1.msra.mxu0 0.0
      %2711 = vmatprep.subr.mxu0 0.0
      %2712 = vmatpush1.msra.mxu0 0.0
      %2713 = vmatprep.subr.mxu0 0.0
      %2714 = vmatpush1.msra.mxu0 0.0
      %2715 = vmatprep.subr.mxu0 0.0
      %2716 = vmatpush1.msra.mxu0 0.0
      %2717 = vmatprep.subr.mxu0 0.0
      %2718 = vmatpush1.msra.mxu0 0.0
      %2719 = vmatprep.subr.mxu0 0.0
      %2720 = vmatpush1.msra.mxu0 0.0
      %2721 = vmatprep.subr.mxu0 0.0
      %2722 = vmatpush1.msra.mxu0 0.0
      %2723 = vmatprep.subr.mxu0 0.0
      %2724 = vmatpush1.msra.mxu0 0.0
      %2725 = vmatprep.subr.mxu0 0.0
      %2726 = vmatpush1.msra.mxu0 0.0
      %2727 = vmatprep.subr.mxu0 0.0
      %2728 = vmatpush1.msra.mxu0 0.0
      %2729 = vmatprep.subr.mxu0 0.0
      %2730 = vmatpush1.msra.mxu0 0.0
      %2731 = vmatprep.subr.mxu0 0.0
      %2732 = vmatpush1.msra.mxu0 0.0
      %2733 = vmatprep.subr.mxu0 0.0
      %2734 = vmatpush1.msra.mxu0 0.0
      %2735 = vmatprep.subr.mxu0 0.0
      %2736 = vmatpush1.msra.mxu0 0.0
      %2737 = vmatprep.subr.mxu0 0.0
      %2738 = vmatpush1.msra.mxu0 0.0
      %2739 = vmatprep.subr.mxu0 0.0
      %2740 = vmatpush1.msra.mxu0 0.0
      %2741 = vmatprep.subr.mxu0 0.0
      %2742 = vmatpush1.msra.mxu0 0.0
      %2743 = vmatprep.subr.mxu0 0.0
      %2744 = vmatpush1.msra.mxu0 0.0
      %2745 = vmatprep.subr.mxu0 0.0
      %2746 = vmatpush1.msra.mxu0 0.0
      %2747 = vmatprep.subr.mxu0 0.0
      %2748 = vmatpush1.msra.mxu0 0.0
      %2749 = vmatprep.subr.mxu0 0.0
      %2750 = vmatpush1.msra.mxu0 0.0
      %2751 = vmatprep.subr.mxu0 0.0
      %2752 = vmatpush1.msra.mxu0 0.0
      %2753 = vmatprep.subr.mxu0 0.0
      %2754 = vmatpush1.msra.mxu0 0.0
      %2755 = vmatprep.subr.mxu0 0.0
      %2756 = vmatpush1.msra.mxu0 0.0
      %2757 = vmatprep.subr.mxu0 0.0
      %2758 = vmatpush1.msra.mxu0 0.0
      %2759 = vmatprep.mubr.f32.mxu0 0.0
      %2760 = vmatmul.mubr.f32.gmra.mrb[0].mxu0 %v2690
      %v2761 = vpop.f32.mrb[0].mxu0
      %v2762 = vadd.f32 0.0, %v2761
      %v2763 = vpop.f32.mrb[0].mxu0
      %2764 = vdwg.mxu0
      %v2765 = vadd.f32 %v2600, %v2762
      %s2766 = scalar_lea.vmem %s10, 960
      %v2767 = vld [vmem:[%s2766] sm:$0xff]
      %v2768 = vld [vmem:[%s2766 + $0x8] sm:$0xff]
      %v2769 = vld [vmem:[%s2766 + $0x10] sm:$0xff]
      %v2770 = vld [vmem:[%s2766 + $0x18] sm:$0xff]
      %v2771 = vld [vmem:[%s2766 + $0x20] sm:$0xff]
      %v2772 = vld [vmem:[%s2766 + $0x28] sm:$0xff]
      %v2773 = vld [vmem:[%s2766 + $0x30] sm:$0xff]
      %v2774 = vld [vmem:[%s2766 + $0x38] sm:$0xff]
      %v2775 = vld [vmem:[%s2766 + $0x40] sm:$0xff]
      %v2776 = vld [vmem:[%s2766 + $0x48] sm:$0xff]
      %v2777 = vld [vmem:[%s2766 + $0x50] sm:$0xff]
      %v2778 = vld [vmem:[%s2766 + $0x58] sm:$0xff]
      %v2779 = vld [vmem:[%s2766 + $0x60] sm:$0xff]
      %v2780 = vld [vmem:[%s2766 + $0x68] sm:$0xff]
      %v2781 = vld [vmem:[%s2766 + $0x70] sm:$0xff]
      %2782 = vmatprep.subr.mxu0 0.0
      %2783 = vmatpush1.msra.mxu0 %v2767
      %2784 = vmatprep.subr.mxu0 0.0
      %2785 = vmatpush1.msra.mxu0 %v2768
      %2786 = vmatprep.subr.mxu0 0.0
      %2787 = vmatpush1.msra.mxu0 %v2769
      %2788 = vmatprep.subr.mxu0 0.0
      %2789 = vmatpush1.msra.mxu0 %v2770
      %2790 = vmatprep.subr.mxu0 0.0
      %2791 = vmatpush1.msra.mxu0 %v2771
      %2792 = vmatprep.subr.mxu0 0.0
      %2793 = vmatpush1.msra.mxu0 %v2772
      %2794 = vmatprep.subr.mxu0 0.0
      %2795 = vmatpush1.msra.mxu0 %v2773
      %2796 = vmatprep.subr.mxu0 0.0
      %2797 = vmatpush1.msra.mxu0 %v2774
      %2798 = vmatprep.subr.mxu0 0.0
      %2799 = vmatpush1.msra.mxu0 %v2775
      %2800 = vmatprep.subr.mxu0 0.0
      %2801 = vmatpush1.msra.mxu0 %v2776
      %2802 = vmatprep.subr.mxu0 0.0
      %2803 = vmatpush1.msra.mxu0 %v2777
      %2804 = vmatprep.subr.mxu0 0.0
      %2805 = vmatpush1.msra.mxu0 %v2778
      %2806 = vmatprep.subr.mxu0 0.0
      %2807 = vmatpush1.msra.mxu0 %v2779
      %2808 = vmatprep.subr.mxu0 0.0
      %2809 = vmatpush1.msra.mxu0 %v2780
      %2810 = vmatprep.subr.mxu0 0.0
      %2811 = vmatpush1.msra.mxu0 %v2781
      %2812 = vmatprep.subr.mxu0 0.0
      %2813 = vmatpush1.msra.mxu0 0.0
      %2814 = vmatprep.subr.mxu0 0.0
      %2815 = vmatpush1.msra.mxu0 0.0
      %2816 = vmatprep.subr.mxu0 0.0
      %2817 = vmatpush1.msra.mxu0 0.0
      %2818 = vmatprep.subr.mxu0 0.0
      %2819 = vmatpush1.msra.mxu0 0.0
      %2820 = vmatprep.subr.mxu0 0.0
      %2821 = vmatpush1.msra.mxu0 0.0
      %2822 = vmatprep.subr.mxu0 0.0
      %2823 = vmatpush1.msra.mxu0 0.0
      %2824 = vmatprep.subr.mxu0 0.0
      %2825 = vmatpush1.msra.mxu0 0.0
      %2826 = vmatprep.subr.mxu0 0.0
      %2827 = vmatpush1.msra.mxu0 0.0
      %2828 = vmatprep.subr.mxu0 0.0
      %2829 = vmatpush1.msra.mxu0 0.0
      %2830 = vmatprep.subr.mxu0 0.0
      %2831 = vmatpush1.msra.mxu0 0.0
      %2832 = vmatprep.subr.mxu0 0.0
      %2833 = vmatpush1.msra.mxu0 0.0
      %2834 = vmatprep.subr.mxu0 0.0
      %2835 = vmatpush1.msra.mxu0 0.0
      %2836 = vmatprep.subr.mxu0 0.0
      %2837 = vmatpush1.msra.mxu0 0.0
      %2838 = vmatprep.subr.mxu0 0.0
      %2839 = vmatpush1.msra.mxu0 0.0
      %2840 = vmatprep.subr.mxu0 0.0
      %2841 = vmatpush1.msra.mxu0 0.0
      %2842 = vmatprep.subr.mxu0 0.0
      %2843 = vmatpush1.msra.mxu0 0.0
      %2844 = vmatprep.subr.mxu0 0.0
      %2845 = vmatpush1.msra.mxu0 0.0
      %2846 = vmatprep.mubr.f32.mxu0 0.0
      %2847 = vmatmul.mubr.f32.gmra.mrb[0].mxu0 %v1461
      %v2848 = vpop.f32.mrb[0].mxu0
      %v2849 = vadd.f32 0.0, %v2848
      %v2850 = vpop.f32.mrb[0].mxu0
      %2851 = vdwg.mxu0
      %s2852 = scalar_lea.vmem %s9, 32
      %v2853 = vld [vmem:[%s2852] sm:$0xf]
      %v2855 = vsel %vm1360, %v2853, 0
      %v2858 = vsel %vm849, %v2849, 0
      %2860 = vmatprep.subr.mxu0 0.0
      %2861 = vmatpush1.msra.mxu0 %v2858
      %2862 = vmatprep.subr.mxu0 0.0
      %2863 = vmatpush1.msra.mxu0 0.0
      %2864 = vmatprep.subr.mxu0 0.0
      %2865 = vmatpush1.msra.mxu0 0.0
      %2866 = vmatprep.subr.mxu0 0.0
      %2867 = vmatpush1.msra.mxu0 0.0
      %2868 = vmatprep.subr.mxu0 0.0
      %2869 = vmatpush1.msra.mxu0 0.0
      %2870 = vmatprep.subr.mxu0 0.0
      %2871 = vmatpush1.msra.mxu0 0.0
      %2872 = vmatprep.subr.mxu0 0.0
      %2873 = vmatpush1.msra.mxu0 0.0
      %2874 = vmatprep.subr.mxu0 0.0
      %2875 = vmatpush1.msra.mxu0 0.0
      %2876 = vmatprep.subr.mxu0 0.0
      %2877 = vmatpush1.msra.mxu0 0.0
      %2878 = vmatprep.subr.mxu0 0.0
      %2879 = vmatpush1.msra.mxu0 0.0
      %2880 = vmatprep.subr.mxu0 0.0
      %2881 = vmatpush1.msra.mxu0 0.0
      %2882 = vmatprep.subr.mxu0 0.0
      %2883 = vmatpush1.msra.mxu0 0.0
      %2884 = vmatprep.subr.mxu0 0.0
      %2885 = vmatpush1.msra.mxu0 0.0
      %2886 = vmatprep.subr.mxu0 0.0
      %2887 = vmatpush1.msra.mxu0 0.0
      %2888 = vmatprep.subr.mxu0 0.0
      %2889 = vmatpush1.msra.mxu0 0.0
      %2890 = vmatprep.subr.mxu0 0.0
      %2891 = vmatpush1.msra.mxu0 0.0
      %2892 = vmatprep.subr.mxu0 0.0
      %2893 = vmatpush1.msra.mxu0 0.0
      %2894 = vmatprep.subr.mxu0 0.0
      %2895 = vmatpush1.msra.mxu0 0.0
      %2896 = vmatprep.subr.mxu0 0.0
      %2897 = vmatpush1.msra.mxu0 0.0
      %2898 = vmatprep.subr.mxu0 0.0
      %2899 = vmatpush1.msra.mxu0 0.0
      %2900 = vmatprep.subr.mxu0 0.0
      %2901 = vmatpush1.msra.mxu0 0.0
      %2902 = vmatprep.subr.mxu0 0.0
      %2903 = vmatpush1.msra.mxu0 0.0
      %2904 = vmatprep.subr.mxu0 0.0
      %2905 = vmatpush1.msra.mxu0 0.0
      %2906 = vmatprep.subr.mxu0 0.0
      %2907 = vmatpush1.msra.mxu0 0.0
      %2908 = vmatprep.subr.mxu0 0.0
      %2909 = vmatpush1.msra.mxu0 0.0
      %2910 = vmatprep.subr.mxu0 0.0
      %2911 = vmatpush1.msra.mxu0 0.0
      %2912 = vmatprep.subr.mxu0 0.0
      %2913 = vmatpush1.msra.mxu0 0.0
      %2914 = vmatprep.subr.mxu0 0.0
      %2915 = vmatpush1.msra.mxu0 0.0
      %2916 = vmatprep.subr.mxu0 0.0
      %2917 = vmatpush1.msra.mxu0 0.0
      %2918 = vmatprep.subr.mxu0 0.0
      %2919 = vmatpush1.msra.mxu0 0.0
      %2920 = vmatprep.subr.mxu0 0.0
      %2921 = vmatpush1.msra.mxu0 0.0
      %2922 = vmatprep.subr.mxu0 0.0
      %2923 = vmatpush1.msra.mxu0 0.0
      %2924 = vmatprep.mubr.f32.mxu0 0.0
      %2925 = vmatmul.mubr.f32.gmra.mrb[0].mxu0 %v2855
      %v2926 = vpop.f32.mrb[0].mxu0
      %v2927 = vadd.f32 0.0, %v2926
      %v2928 = vpop.f32.mrb[0].mxu0
      %2929 = vdwg.mxu0
      %v2930 = vadd.f32 %v2765, %v2927
      %s2931 = scalar_lea.vmem %s10, 1080
      %v2932 = vld [vmem:[%s2931] sm:$0xff]
      %v2933 = vld [vmem:[%s2931 + $0x8] sm:$0xff]
      %v2934 = vld [vmem:[%s2931 + $0x10] sm:$0xff]
      %v2935 = vld [vmem:[%s2931 + $0x18] sm:$0xff]
      %v2936 = vld [vmem:[%s2931 + $0x20] sm:$0xff]
      %v2937 = vld [vmem:[%s2931 + $0x28] sm:$0xff]
      %v2938 = vld [vmem:[%s2931 + $0x30] sm:$0xff]
      %v2939 = vld [vmem:[%s2931 + $0x38] sm:$0xff]
      %v2940 = vld [vmem:[%s2931 + $0x40] sm:$0xff]
      %v2941 = vld [vmem:[%s2931 + $0x48] sm:$0xff]
      %v2942 = vld [vmem:[%s2931 + $0x50] sm:$0xff]
      %v2943 = vld [vmem:[%s2931 + $0x58] sm:$0xff]
      %v2944 = vld [vmem:[%s2931 + $0x60] sm:$0xff]
      %v2945 = vld [vmem:[%s2931 + $0x68] sm:$0xff]
      %v2946 = vld [vmem:[%s2931 + $0x70] sm:$0xff]
      %2947 = vmatprep.subr.mxu0 0.0
      %2948 = vmatpush1.msra.mxu0 %v2932
      %2949 = vmatprep.subr.mxu0 0.0
      %2950 = vmatpush1.msra.mxu0 %v2933
      %2951 = vmatprep.subr.mxu0 0.0
      %2952 = vmatpush1.msra.mxu0 %v2934
      %2953 = vmatprep.subr.mxu0 0.0
      %2954 = vmatpush1.msra.mxu0 %v2935
      %2955 = vmatprep.subr.mxu0 0.0
      %2956 = vmatpush1.msra.mxu0 %v2936
      %2957 = vmatprep.subr.mxu0 0.0
      %2958 = vmatpush1.msra.mxu0 %v2937
      %2959 = vmatprep.subr.mxu0 0.0
      %2960 = vmatpush1.msra.mxu0 %v2938
      %2961 = vmatprep.subr.mxu0 0.0
      %2962 = vmatpush1.msra.mxu0 %v2939
      %2963 = vmatprep.subr.mxu0 0.0
      %2964 = vmatpush1.msra.mxu0 %v2940
      %2965 = vmatprep.subr.mxu0 0.0
      %2966 = vmatpush1.msra.mxu0 %v2941
      %2967 = vmatprep.subr.mxu0 0.0
      %2968 = vmatpush1.msra.mxu0 %v2942
      %2969 = vmatprep.subr.mxu0 0.0
      %2970 = vmatpush1.msra.mxu0 %v2943
      %2971 = vmatprep.subr.mxu0 0.0
      %2972 = vmatpush1.msra.mxu0 %v2944
      %2973 = vmatprep.subr.mxu0 0.0
      %2974 = vmatpush1.msra.mxu0 %v2945
      %2975 = vmatprep.subr.mxu0 0.0
      %2976 = vmatpush1.msra.mxu0 %v2946
      %2977 = vmatprep.subr.mxu0 0.0
      %2978 = vmatpush1.msra.mxu0 0.0
      %2979 = vmatprep.subr.mxu0 0.0
      %2980 = vmatpush1.msra.mxu0 0.0
      %2981 = vmatprep.subr.mxu0 0.0
      %2982 = vmatpush1.msra.mxu0 0.0
      %2983 = vmatprep.subr.mxu0 0.0
      %2984 = vmatpush1.msra.mxu0 0.0
      %2985 = vmatprep.subr.mxu0 0.0
      %2986 = vmatpush1.msra.mxu0 0.0
      %2987 = vmatprep.subr.mxu0 0.0
      %2988 = vmatpush1.msra.mxu0 0.0
      %2989 = vmatprep.subr.mxu0 0.0
      %2990 = vmatpush1.msra.mxu0 0.0
      %2991 = vmatprep.subr.mxu0 0.0
      %2992 = vmatpush1.msra.mxu0 0.0
      %2993 = vmatprep.subr.mxu0 0.0
      %2994 = vmatpush1.msra.mxu0 0.0
      %2995 = vmatprep.subr.mxu0 0.0
      %2996 = vmatpush1.msra.mxu0 0.0
      %2997 = vmatprep.subr.mxu0 0.0
      %2998 = vmatpush1.msra.mxu0 0.0
      %2999 = vmatprep.subr.mxu0 0.0
      %3000 = vmatpush1.msra.mxu0 0.0
      %3001 = vmatprep.subr.mxu0 0.0
      %3002 = vmatpush1.msra.mxu0 0.0
      %3003 = vmatprep.subr.mxu0 0.0
      %3004 = vmatpush1.msra.mxu0 0.0
      %3005 = vmatprep.subr.mxu0 0.0
      %3006 = vmatpush1.msra.mxu0 0.0
      %3007 = vmatprep.subr.mxu0 0.0
      %3008 = vmatpush1.msra.mxu0 0.0
      %3009 = vmatprep.subr.mxu0 0.0
      %3010 = vmatpush1.msra.mxu0 0.0
      %3011 = vmatprep.mubr.f32.mxu0 0.0
      %3012 = vmatmul.mubr.f32.gmra.mrb[0].mxu0 %v1461
      %v3013 = vpop.f32.mrb[0].mxu0
      %v3014 = vadd.f32 0.0, %v3013
      %v3015 = vpop.f32.mrb[0].mxu0
      %3016 = vdwg.mxu0
      %s3017 = scalar_lea.vmem %s9, 36
      %v3018 = vld [vmem:[%s3017] sm:$0xf]
      %v3020 = vsel %vm1360, %v3018, 0
      %v3023 = vsel %vm849, %v3014, 0
      %3025 = vmatprep.subr.mxu0 0.0
      %3026 = vmatpush1.msra.mxu0 %v3023
      %3027 = vmatprep.subr.mxu0 0.0
      %3028 = vmatpush1.msra.mxu0 0.0
      %3029 = vmatprep.subr.mxu0 0.0
      %3030 = vmatpush1.msra.mxu0 0.0
      %3031 = vmatprep.subr.mxu0 0.0
      %3032 = vmatpush1.msra.mxu0 0.0
      %3033 = vmatprep.subr.mxu0 0.0
      %3034 = vmatpush1.msra.mxu0 0.0
      %3035 = vmatprep.subr.mxu0 0.0
      %3036 = vmatpush1.msra.mxu0 0.0
      %3037 = vmatprep.subr.mxu0 0.0
      %3038 = vmatpush1.msra.mxu0 0.0
      %3039 = vmatprep.subr.mxu0 0.0
      %3040 = vmatpush1.msra.mxu0 0.0
      %3041 = vmatprep.subr.mxu0 0.0
      %3042 = vmatpush1.msra.mxu0 0.0
      %3043 = vmatprep.subr.mxu0 0.0
      %3044 = vmatpush1.msra.mxu0 0.0
      %3045 = vmatprep.subr.mxu0 0.0
      %3046 = vmatpush1.msra.mxu0 0.0
      %3047 = vmatprep.subr.mxu0 0.0
      %3048 = vmatpush1.msra.mxu0 0.0
      %3049 = vmatprep.subr.mxu0 0.0
      %3050 = vmatpush1.msra.mxu0 0.0
      %3051 = vmatprep.subr.mxu0 0.0
      %3052 = vmatpush1.msra.mxu0 0.0
      %3053 = vmatprep.subr.mxu0 0.0
      %3054 = vmatpush1.msra.mxu0 0.0
      %3055 = vmatprep.subr.mxu0 0.0
      %3056 = vmatpush1.msra.mxu0 0.0
      %3057 = vmatprep.subr.mxu0 0.0
      %3058 = vmatpush1.msra.mxu0 0.0
      %3059 = vmatprep.subr.mxu0 0.0
      %3060 = vmatpush1.msra.mxu0 0.0
      %3061 = vmatprep.subr.mxu0 0.0
      %3062 = vmatpush1.msra.mxu0 0.0
      %3063 = vmatprep.subr.mxu0 0.0
      %3064 = vmatpush1.msra.mxu0 0.0
      %3065 = vmatprep.subr.mxu0 0.0
      %3066 = vmatpush1.msra.mxu0 0.0
      %3067 = vmatprep.subr.mxu0 0.0
      %3068 = vmatpush1.msra.mxu0 0.0
      %3069 = vmatprep.subr.mxu0 0.0
      %3070 = vmatpush1.msra.mxu0 0.0
      %3071 = vmatprep.subr.mxu0 0.0
      %3072 = vmatpush1.msra.mxu0 0.0
      %3073 = vmatprep.subr.mxu0 0.0
      %3074 = vmatpush1.msra.mxu0 0.0
      %3075 = vmatprep.subr.mxu0 0.0
      %3076 = vmatpush1.msra.mxu0 0.0
      %3077 = vmatprep.subr.mxu0 0.0
      %3078 = vmatpush1.msra.mxu0 0.0
      %3079 = vmatprep.subr.mxu0 0.0
      %3080 = vmatpush1.msra.mxu0 0.0
      %3081 = vmatprep.subr.mxu0 0.0
      %3082 = vmatpush1.msra.mxu0 0.0
      %3083 = vmatprep.subr.mxu0 0.0
      %3084 = vmatpush1.msra.mxu0 0.0
      %3085 = vmatprep.subr.mxu0 0.0
      %3086 = vmatpush1.msra.mxu0 0.0
      %3087 = vmatprep.subr.mxu0 0.0
      %3088 = vmatpush1.msra.mxu0 0.0
      %3089 = vmatprep.mubr.f32.mxu0 0.0
      %3090 = vmatmul.mubr.f32.gmra.mrb[0].mxu0 %v3020
      %v3091 = vpop.f32.mrb[0].mxu0
      %v3092 = vadd.f32 0.0, %v3091
      %v3093 = vpop.f32.mrb[0].mxu0
      %3094 = vdwg.mxu0
      %v3095 = vadd.f32 %v2930, %v3092
      %s3096 = scalar_lea.vmem %s10, 1200
      %v3097 = vld [vmem:[%s3096] sm:$0xff]
      %v3098 = vld [vmem:[%s3096 + $0x8] sm:$0xff]
      %v3099 = vld [vmem:[%s3096 + $0x10] sm:$0xff]
      %v3100 = vld [vmem:[%s3096 + $0x18] sm:$0xff]
      %v3101 = vld [vmem:[%s3096 + $0x20] sm:$0xff]
      %v3102 = vld [vmem:[%s3096 + $0x28] sm:$0xff]
      %v3103 = vld [vmem:[%s3096 + $0x30] sm:$0xff]
      %v3104 = vld [vmem:[%s3096 + $0x38] sm:$0xff]
      %v3105 = vld [vmem:[%s3096 + $0x40] sm:$0xff]
      %v3106 = vld [vmem:[%s3096 + $0x48] sm:$0xff]
      %v3107 = vld [vmem:[%s3096 + $0x50] sm:$0xff]
      %v3108 = vld [vmem:[%s3096 + $0x58] sm:$0xff]
      %v3109 = vld [vmem:[%s3096 + $0x60] sm:$0xff]
      %v3110 = vld [vmem:[%s3096 + $0x68] sm:$0xff]
      %v3111 = vld [vmem:[%s3096 + $0x70] sm:$0xff]
      %3112 = vmatprep.subr.mxu0 0.0
      %3113 = vmatpush1.msra.mxu0 %v3097
      %3114 = vmatprep.subr.mxu0 0.0
      %3115 = vmatpush1.msra.mxu0 %v3098
      %3116 = vmatprep.subr.mxu0 0.0
      %3117 = vmatpush1.msra.mxu0 %v3099
      %3118 = vmatprep.subr.mxu0 0.0
      %3119 = vmatpush1.msra.mxu0 %v3100
      %3120 = vmatprep.subr.mxu0 0.0
      %3121 = vmatpush1.msra.mxu0 %v3101
      %3122 = vmatprep.subr.mxu0 0.0
      %3123 = vmatpush1.msra.mxu0 %v3102
      %3124 = vmatprep.subr.mxu0 0.0
      %3125 = vmatpush1.msra.mxu0 %v3103
      %3126 = vmatprep.subr.mxu0 0.0
      %3127 = vmatpush1.msra.mxu0 %v3104
      %3128 = vmatprep.subr.mxu0 0.0
      %3129 = vmatpush1.msra.mxu0 %v3105
      %3130 = vmatprep.subr.mxu0 0.0
      %3131 = vmatpush1.msra.mxu0 %v3106
      %3132 = vmatprep.subr.mxu0 0.0
      %3133 = vmatpush1.msra.mxu0 %v3107
      %3134 = vmatprep.subr.mxu0 0.0
      %3135 = vmatpush1.msra.mxu0 %v3108
      %3136 = vmatprep.subr.mxu0 0.0
      %3137 = vmatpush1.msra.mxu0 %v3109
      %3138 = vmatprep.subr.mxu0 0.0
      %3139 = vmatpush1.msra.mxu0 %v3110
      %3140 = vmatprep.subr.mxu0 0.0
      %3141 = vmatpush1.msra.mxu0 %v3111
      %3142 = vmatprep.subr.mxu0 0.0
      %3143 = vmatpush1.msra.mxu0 0.0
      %3144 = vmatprep.subr.mxu0 0.0
      %3145 = vmatpush1.msra.mxu0 0.0
      %3146 = vmatprep.subr.mxu0 0.0
      %3147 = vmatpush1.msra.mxu0 0.0
      %3148 = vmatprep.subr.mxu0 0.0
      %3149 = vmatpush1.msra.mxu0 0.0
      %3150 = vmatprep.subr.mxu0 0.0
      %3151 = vmatpush1.msra.mxu0 0.0
      %3152 = vmatprep.subr.mxu0 0.0
      %3153 = vmatpush1.msra.mxu0 0.0
      %3154 = vmatprep.subr.mxu0 0.0
      %3155 = vmatpush1.msra.mxu0 0.0
      %3156 = vmatprep.subr.mxu0 0.0
      %3157 = vmatpush1.msra.mxu0 0.0
      %3158 = vmatprep.subr.mxu0 0.0
      %3159 = vmatpush1.msra.mxu0 0.0
      %3160 = vmatprep.subr.mxu0 0.0
      %3161 = vmatpush1.msra.mxu0 0.0
      %3162 = vmatprep.subr.mxu0 0.0
      %3163 = vmatpush1.msra.mxu0 0.0
      %3164 = vmatprep.subr.mxu0 0.0
      %3165 = vmatpush1.msra.mxu0 0.0
      %3166 = vmatprep.subr.mxu0 0.0
      %3167 = vmatpush1.msra.mxu0 0.0
      %3168 = vmatprep.subr.mxu0 0.0
      %3169 = vmatpush1.msra.mxu0 0.0
      %3170 = vmatprep.subr.mxu0 0.0
      %3171 = vmatpush1.msra.mxu0 0.0
      %3172 = vmatprep.subr.mxu0 0.0
      %3173 = vmatpush1.msra.mxu0 0.0
      %3174 = vmatprep.subr.mxu0 0.0
      %3175 = vmatpush1.msra.mxu0 0.0
      %3176 = vmatprep.mubr.f32.mxu0 0.0
      %3177 = vmatmul.mubr.f32.gmra.mrb[0].mxu0 %v1461
      %v3178 = vpop.f32.mrb[0].mxu0
      %v3179 = vadd.f32 0.0, %v3178
      %v3180 = vpop.f32.mrb[0].mxu0
      %3181 = vdwg.mxu0
      %s3182 = scalar_lea.vmem %s9, 40
      %v3183 = vld [vmem:[%s3182] sm:$0xf]
      %v3185 = vsel %vm1360, %v3183, 0
      %v3188 = vsel %vm849, %v3179, 0
      %3190 = vmatprep.subr.mxu0 0.0
      %3191 = vmatpush1.msra.mxu0 %v3188
      %3192 = vmatprep.subr.mxu0 0.0
      %3193 = vmatpush1.msra.mxu0 0.0
      %3194 = vmatprep.subr.mxu0 0.0
      %3195 = vmatpush1.msra.mxu0 0.0
      %3196 = vmatprep.subr.mxu0 0.0
      %3197 = vmatpush1.msra.mxu0 0.0
      %3198 = vmatprep.subr.mxu0 0.0
      %3199 = vmatpush1.msra.mxu0 0.0
      %3200 = vmatprep.subr.mxu0 0.0
      %3201 = vmatpush1.msra.mxu0 0.0
      %3202 = vmatprep.subr.mxu0 0.0
      %3203 = vmatpush1.msra.mxu0 0.0
      %3204 = vmatprep.subr.mxu0 0.0
      %3205 = vmatpush1.msra.mxu0 0.0
      %3206 = vmatprep.subr.mxu0 0.0
      %3207 = vmatpush1.msra.mxu0 0.0
      %3208 = vmatprep.subr.mxu0 0.0
      %3209 = vmatpush1.msra.mxu0 0.0
      %3210 = vmatprep.subr.mxu0 0.0
      %3211 = vmatpush1.msra.mxu0 0.0
      %3212 = vmatprep.subr.mxu0 0.0
      %3213 = vmatpush1.msra.mxu0 0.0
      %3214 = vmatprep.subr.mxu0 0.0
      %3215 = vmatpush1.msra.mxu0 0.0
      %3216 = vmatprep.subr.mxu0 0.0
      %3217 = vmatpush1.msra.mxu0 0.0
      %3218 = vmatprep.subr.mxu0 0.0
      %3219 = vmatpush1.msra.mxu0 0.0
      %3220 = vmatprep.subr.mxu0 0.0
      %3221 = vmatpush1.msra.mxu0 0.0
      %3222 = vmatprep.subr.mxu0 0.0
      %3223 = vmatpush1.msra.mxu0 0.0
      %3224 = vmatprep.subr.mxu0 0.0
      %3225 = vmatpush1.msra.mxu0 0.0
      %3226 = vmatprep.subr.mxu0 0.0
      %3227 = vmatpush1.msra.mxu0 0.0
      %3228 = vmatprep.subr.mxu0 0.0
      %3229 = vmatpush1.msra.mxu0 0.0
      %3230 = vmatprep.subr.mxu0 0.0
      %3231 = vmatpush1.msra.mxu0 0.0
      %3232 = vmatprep.subr.mxu0 0.0
      %3233 = vmatpush1.msra.mxu0 0.0
      %3234 = vmatprep.subr.mxu0 0.0
      %3235 = vmatpush1.msra.mxu0 0.0
      %3236 = vmatprep.subr.mxu0 0.0
      %3237 = vmatpush1.msra.mxu0 0.0
      %3238 = vmatprep.subr.mxu0 0.0
      %3239 = vmatpush1.msra.mxu0 0.0
      %3240 = vmatprep.subr.mxu0 0.0
      %3241 = vmatpush1.msra.mxu0 0.0
      %3242 = vmatprep.subr.mxu0 0.0
      %3243 = vmatpush1.msra.mxu0 0.0
      %3244 = vmatprep.subr.mxu0 0.0
      %3245 = vmatpush1.msra.mxu0 0.0
      %3246 = vmatprep.subr.mxu0 0.0
      %3247 = vmatpush1.msra.mxu0 0.0
      %3248 = vmatprep.subr.mxu0 0.0
      %3249 = vmatpush1.msra.mxu0 0.0
      %3250 = vmatprep.subr.mxu0 0.0
      %3251 = vmatpush1.msra.mxu0 0.0
      %3252 = vmatprep.subr.mxu0 0.0
      %3253 = vmatpush1.msra.mxu0 0.0
      %3254 = vmatprep.mubr.f32.mxu0 0.0
      %3255 = vmatmul.mubr.f32.gmra.mrb[0].mxu0 %v3185
      %v3256 = vpop.f32.mrb[0].mxu0
      %v3257 = vadd.f32 0.0, %v3256
      %v3258 = vpop.f32.mrb[0].mxu0
      %3259 = vdwg.mxu0
      %v3260 = vadd.f32 %v3095, %v3257
      %s3261 = scalar_lea.vmem %s10, 1320
      %v3262 = vld [vmem:[%s3261] sm:$0xff]
      %v3263 = vld [vmem:[%s3261 + $0x8] sm:$0xff]
      %v3264 = vld [vmem:[%s3261 + $0x10] sm:$0xff]
      %v3265 = vld [vmem:[%s3261 + $0x18] sm:$0xff]
      %v3266 = vld [vmem:[%s3261 + $0x20] sm:$0xff]
      %v3267 = vld [vmem:[%s3261 + $0x28] sm:$0xff]
      %v3268 = vld [vmem:[%s3261 + $0x30] sm:$0xff]
      %v3269 = vld [vmem:[%s3261 + $0x38] sm:$0xff]
      %v3270 = vld [vmem:[%s3261 + $0x40] sm:$0xff]
      %v3271 = vld [vmem:[%s3261 + $0x48] sm:$0xff]
      %v3272 = vld [vmem:[%s3261 + $0x50] sm:$0xff]
      %v3273 = vld [vmem:[%s3261 + $0x58] sm:$0xff]
      %v3274 = vld [vmem:[%s3261 + $0x60] sm:$0xff]
      %v3275 = vld [vmem:[%s3261 + $0x68] sm:$0xff]
      %v3276 = vld [vmem:[%s3261 + $0x70] sm:$0xff]
      %3277 = vmatprep.subr.mxu0 0.0
      %3278 = vmatpush1.msra.mxu0 %v3262
      %3279 = vmatprep.subr.mxu0 0.0
      %3280 = vmatpush1.msra.mxu0 %v3263
      %3281 = vmatprep.subr.mxu0 0.0
      %3282 = vmatpush1.msra.mxu0 %v3264
      %3283 = vmatprep.subr.mxu0 0.0
      %3284 = vmatpush1.msra.mxu0 %v3265
      %3285 = vmatprep.subr.mxu0 0.0
      %3286 = vmatpush1.msra.mxu0 %v3266
      %3287 = vmatprep.subr.mxu0 0.0
      %3288 = vmatpush1.msra.mxu0 %v3267
      %3289 = vmatprep.subr.mxu0 0.0
      %3290 = vmatpush1.msra.mxu0 %v3268
      %3291 = vmatprep.subr.mxu0 0.0
      %3292 = vmatpush1.msra.mxu0 %v3269
      %3293 = vmatprep.subr.mxu0 0.0
      %3294 = vmatpush1.msra.mxu0 %v3270
      %3295 = vmatprep.subr.mxu0 0.0
      %3296 = vmatpush1.msra.mxu0 %v3271
      %3297 = vmatprep.subr.mxu0 0.0
      %3298 = vmatpush1.msra.mxu0 %v3272
      %3299 = vmatprep.subr.mxu0 0.0
      %3300 = vmatpush1.msra.mxu0 %v3273
      %3301 = vmatprep.subr.mxu0 0.0
      %3302 = vmatpush1.msra.mxu0 %v3274
      %3303 = vmatprep.subr.mxu0 0.0
      %3304 = vmatpush1.msra.mxu0 %v3275
      %3305 = vmatprep.subr.mxu0 0.0
      %3306 = vmatpush1.msra.mxu0 %v3276
      %3307 = vmatprep.subr.mxu0 0.0
      %3308 = vmatpush1.msra.mxu0 0.0
      %3309 = vmatprep.subr.mxu0 0.0
      %3310 = vmatpush1.msra.mxu0 0.0
      %3311 = vmatprep.subr.mxu0 0.0
      %3312 = vmatpush1.msra.mxu0 0.0
      %3313 = vmatprep.subr.mxu0 0.0
      %3314 = vmatpush1.msra.mxu0 0.0
      %3315 = vmatprep.subr.mxu0 0.0
      %3316 = vmatpush1.msra.mxu0 0.0
      %3317 = vmatprep.subr.mxu0 0.0
      %3318 = vmatpush1.msra.mxu0 0.0
      %3319 = vmatprep.subr.mxu0 0.0
      %3320 = vmatpush1.msra.mxu0 0.0
      %3321 = vmatprep.subr.mxu0 0.0
      %3322 = vmatpush1.msra.mxu0 0.0
      %3323 = vmatprep.subr.mxu0 0.0
      %3324 = vmatpush1.msra.mxu0 0.0
      %3325 = vmatprep.subr.mxu0 0.0
      %3326 = vmatpush1.msra.mxu0 0.0
      %3327 = vmatprep.subr.mxu0 0.0
      %3328 = vmatpush1.msra.mxu0 0.0
      %3329 = vmatprep.subr.mxu0 0.0
      %3330 = vmatpush1.msra.mxu0 0.0
      %3331 = vmatprep.subr.mxu0 0.0
      %3332 = vmatpush1.msra.mxu0 0.0
      %3333 = vmatprep.subr.mxu0 0.0
      %3334 = vmatpush1.msra.mxu0 0.0
      %3335 = vmatprep.subr.mxu0 0.0
      %3336 = vmatpush1.msra.mxu0 0.0
      %3337 = vmatprep.subr.mxu0 0.0
      %3338 = vmatpush1.msra.mxu0 0.0
      %3339 = vmatprep.subr.mxu0 0.0
      %3340 = vmatpush1.msra.mxu0 0.0
      %3341 = vmatprep.mubr.f32.mxu0 0.0
      %3342 = vmatmul.mubr.f32.gmra.mrb[0].mxu0 %v1461
      %v3343 = vpop.f32.mrb[0].mxu0
      %v3344 = vadd.f32 0.0, %v3343
      %v3345 = vpop.f32.mrb[0].mxu0
      %3346 = vdwg.mxu0
      %s3347 = scalar_lea.vmem %s9, 44
      %v3348 = vld [vmem:[%s3347] sm:$0xf]
      %v3350 = vsel %vm1360, %v3348, 0
      %v3353 = vsel %vm849, %v3344, 0
      %3355 = vmatprep.subr.mxu0 0.0
      %3356 = vmatpush1.msra.mxu0 %v3353
      %3357 = vmatprep.subr.mxu0 0.0
      %3358 = vmatpush1.msra.mxu0 0.0
      %3359 = vmatprep.subr.mxu0 0.0
      %3360 = vmatpush1.msra.mxu0 0.0
      %3361 = vmatprep.subr.mxu0 0.0
      %3362 = vmatpush1.msra.mxu0 0.0
      %3363 = vmatprep.subr.mxu0 0.0
      %3364 = vmatpush1.msra.mxu0 0.0
      %3365 = vmatprep.subr.mxu0 0.0
      %3366 = vmatpush1.msra.mxu0 0.0
      %3367 = vmatprep.subr.mxu0 0.0
      %3368 = vmatpush1.msra.mxu0 0.0
      %3369 = vmatprep.subr.mxu0 0.0
      %3370 = vmatpush1.msra.mxu0 0.0
      %3371 = vmatprep.subr.mxu0 0.0
      %3372 = vmatpush1.msra.mxu0 0.0
      %3373 = vmatprep.subr.mxu0 0.0
      %3374 = vmatpush1.msra.mxu0 0.0
      %3375 = vmatprep.subr.mxu0 0.0
      %3376 = vmatpush1.msra.mxu0 0.0
      %3377 = vmatprep.subr.mxu0 0.0
      %3378 = vmatpush1.msra.mxu0 0.0
      %3379 = vmatprep.subr.mxu0 0.0
      %3380 = vmatpush1.msra.mxu0 0.0
      %3381 = vmatprep.subr.mxu0 0.0
      %3382 = vmatpush1.msra.mxu0 0.0
      %3383 = vmatprep.subr.mxu0 0.0
      %3384 = vmatpush1.msra.mxu0 0.0
      %3385 = vmatprep.subr.mxu0 0.0
      %3386 = vmatpush1.msra.mxu0 0.0
      %3387 = vmatprep.subr.mxu0 0.0
      %3388 = vmatpush1.msra.mxu0 0.0
      %3389 = vmatprep.subr.mxu0 0.0
      %3390 = vmatpush1.msra.mxu0 0.0
      %3391 = vmatprep.subr.mxu0 0.0
      %3392 = vmatpush1.msra.mxu0 0.0
      %3393 = vmatprep.subr.mxu0 0.0
      %3394 = vmatpush1.msra.mxu0 0.0
      %3395 = vmatprep.subr.mxu0 0.0
      %3396 = vmatpush1.msra.mxu0 0.0
      %3397 = vmatprep.subr.mxu0 0.0
      %3398 = vmatpush1.msra.mxu0 0.0
      %3399 = vmatprep.subr.mxu0 0.0
      %3400 = vmatpush1.msra.mxu0 0.0
      %3401 = vmatprep.subr.mxu0 0.0
      %3402 = vmatpush1.msra.mxu0 0.0
      %3403 = vmatprep.subr.mxu0 0.0
      %3404 = vmatpush1.msra.mxu0 0.0
      %3405 = vmatprep.subr.mxu0 0.0
      %3406 = vmatpush1.msra.mxu0 0.0
      %3407 = vmatprep.subr.mxu0 0.0
      %3408 = vmatpush1.msra.mxu0 0.0
      %3409 = vmatprep.subr.mxu0 0.0
      %3410 = vmatpush1.msra.mxu0 0.0
      %3411 = vmatprep.subr.mxu0 0.0
      %3412 = vmatpush1.msra.mxu0 0.0
      %3413 = vmatprep.subr.mxu0 0.0
      %3414 = vmatpush1.msra.mxu0 0.0
      %3415 = vmatprep.subr.mxu0 0.0
      %3416 = vmatpush1.msra.mxu0 0.0
      %3417 = vmatprep.subr.mxu0 0.0
      %3418 = vmatpush1.msra.mxu0 0.0
      %3419 = vmatprep.mubr.f32.mxu0 0.0
      %3420 = vmatmul.mubr.f32.gmra.mrb[0].mxu0 %v3350
      %v3421 = vpop.f32.mrb[0].mxu0
      %v3422 = vadd.f32 0.0, %v3421
      %v3423 = vpop.f32.mrb[0].mxu0
      %3424 = vdwg.mxu0
      %v3425 = vadd.f32 %v3260, %v3422
      %s3426 = scalar_lea.vmem %s10, 1440
      %v3427 = vld [vmem:[%s3426] sm:$0xff]
      %v3428 = vld [vmem:[%s3426 + $0x8] sm:$0xff]
      %v3429 = vld [vmem:[%s3426 + $0x10] sm:$0xff]
      %v3430 = vld [vmem:[%s3426 + $0x18] sm:$0xff]
      %v3431 = vld [vmem:[%s3426 + $0x20] sm:$0xff]
      %v3432 = vld [vmem:[%s3426 + $0x28] sm:$0xff]
      %v3433 = vld [vmem:[%s3426 + $0x30] sm:$0xff]
      %v3434 = vld [vmem:[%s3426 + $0x38] sm:$0xff]
      %v3435 = vld [vmem:[%s3426 + $0x40] sm:$0xff]
      %v3436 = vld [vmem:[%s3426 + $0x48] sm:$0xff]
      %v3437 = vld [vmem:[%s3426 + $0x50] sm:$0xff]
      %v3438 = vld [vmem:[%s3426 + $0x58] sm:$0xff]
      %v3439 = vld [vmem:[%s3426 + $0x60] sm:$0xff]
      %v3440 = vld [vmem:[%s3426 + $0x68] sm:$0xff]
      %v3441 = vld [vmem:[%s3426 + $0x70] sm:$0xff]
      %3442 = vmatprep.subr.mxu0 0.0
      %3443 = vmatpush1.msra.mxu0 %v3427
      %3444 = vmatprep.subr.mxu0 0.0
      %3445 = vmatpush1.msra.mxu0 %v3428
      %3446 = vmatprep.subr.mxu0 0.0
      %3447 = vmatpush1.msra.mxu0 %v3429
      %3448 = vmatprep.subr.mxu0 0.0
      %3449 = vmatpush1.msra.mxu0 %v3430
      %3450 = vmatprep.subr.mxu0 0.0
      %3451 = vmatpush1.msra.mxu0 %v3431
      %3452 = vmatprep.subr.mxu0 0.0
      %3453 = vmatpush1.msra.mxu0 %v3432
      %3454 = vmatprep.subr.mxu0 0.0
      %3455 = vmatpush1.msra.mxu0 %v3433
      %3456 = vmatprep.subr.mxu0 0.0
      %3457 = vmatpush1.msra.mxu0 %v3434
      %3458 = vmatprep.subr.mxu0 0.0
      %3459 = vmatpush1.msra.mxu0 %v3435
      %3460 = vmatprep.subr.mxu0 0.0
      %3461 = vmatpush1.msra.mxu0 %v3436
      %3462 = vmatprep.subr.mxu0 0.0
      %3463 = vmatpush1.msra.mxu0 %v3437
      %3464 = vmatprep.subr.mxu0 0.0
      %3465 = vmatpush1.msra.mxu0 %v3438
      %3466 = vmatprep.subr.mxu0 0.0
      %3467 = vmatpush1.msra.mxu0 %v3439
      %3468 = vmatprep.subr.mxu0 0.0
      %3469 = vmatpush1.msra.mxu0 %v3440
      %3470 = vmatprep.subr.mxu0 0.0
      %3471 = vmatpush1.msra.mxu0 %v3441
      %3472 = vmatprep.subr.mxu0 0.0
      %3473 = vmatpush1.msra.mxu0 0.0
      %3474 = vmatprep.subr.mxu0 0.0
      %3475 = vmatpush1.msra.mxu0 0.0
      %3476 = vmatprep.subr.mxu0 0.0
      %3477 = vmatpush1.msra.mxu0 0.0
      %3478 = vmatprep.subr.mxu0 0.0
      %3479 = vmatpush1.msra.mxu0 0.0
      %3480 = vmatprep.subr.mxu0 0.0
      %3481 = vmatpush1.msra.mxu0 0.0
      %3482 = vmatprep.subr.mxu0 0.0
      %3483 = vmatpush1.msra.mxu0 0.0
      %3484 = vmatprep.subr.mxu0 0.0
      %3485 = vmatpush1.msra.mxu0 0.0
      %3486 = vmatprep.subr.mxu0 0.0
      %3487 = vmatpush1.msra.mxu0 0.0
      %3488 = vmatprep.subr.mxu0 0.0
      %3489 = vmatpush1.msra.mxu0 0.0
      %3490 = vmatprep.subr.mxu0 0.0
      %3491 = vmatpush1.msra.mxu0 0.0
      %3492 = vmatprep.subr.mxu0 0.0
      %3493 = vmatpush1.msra.mxu0 0.0
      %3494 = vmatprep.subr.mxu0 0.0
      %3495 = vmatpush1.msra.mxu0 0.0
      %3496 = vmatprep.subr.mxu0 0.0
      %3497 = vmatpush1.msra.mxu0 0.0
      %3498 = vmatprep.subr.mxu0 0.0
      %3499 = vmatpush1.msra.mxu0 0.0
      %3500 = vmatprep.subr.mxu0 0.0
      %3501 = vmatpush1.msra.mxu0 0.0
      %3502 = vmatprep.subr.mxu0 0.0
      %3503 = vmatpush1.msra.mxu0 0.0
      %3504 = vmatprep.subr.mxu0 0.0
      %3505 = vmatpush1.msra.mxu0 0.0
      %3506 = vmatprep.mubr.f32.mxu0 0.0
      %3507 = vmatmul.mubr.f32.gmra.mrb[0].mxu0 %v1461
      %v3508 = vpop.f32.mrb[0].mxu0
      %v3509 = vadd.f32 0.0, %v3508
      %v3510 = vpop.f32.mrb[0].mxu0
      %3511 = vdwg.mxu0
      %s3512 = scalar_lea.vmem %s9, 48
      %v3513 = vld [vmem:[%s3512] sm:$0xf]
      %v3515 = vsel %vm1360, %v3513, 0
      %v3518 = vsel %vm849, %v3509, 0
      %3520 = vmatprep.subr.mxu0 0.0
      %3521 = vmatpush1.msra.mxu0 %v3518
      %3522 = vmatprep.subr.mxu0 0.0
      %3523 = vmatpush1.msra.mxu0 0.0
      %3524 = vmatprep.subr.mxu0 0.0
      %3525 = vmatpush1.msra.mxu0 0.0
      %3526 = vmatprep.subr.mxu0 0.0
      %3527 = vmatpush1.msra.mxu0 0.0
      %3528 = vmatprep.subr.mxu0 0.0
      %3529 = vmatpush1.msra.mxu0 0.0
      %3530 = vmatprep.subr.mxu0 0.0
      %3531 = vmatpush1.msra.mxu0 0.0
      %3532 = vmatprep.subr.mxu0 0.0
      %3533 = vmatpush1.msra.mxu0 0.0
      %3534 = vmatprep.subr.mxu0 0.0
      %3535 = vmatpush1.msra.mxu0 0.0
      %3536 = vmatprep.subr.mxu0 0.0
      %3537 = vmatpush1.msra.mxu0 0.0
      %3538 = vmatprep.subr.mxu0 0.0
      %3539 = vmatpush1.msra.mxu0 0.0
      %3540 = vmatprep.subr.mxu0 0.0
      %3541 = vmatpush1.msra.mxu0 0.0
      %3542 = vmatprep.subr.mxu0 0.0
      %3543 = vmatpush1.msra.mxu0 0.0
      %3544 = vmatprep.subr.mxu0 0.0
      %3545 = vmatpush1.msra.mxu0 0.0
      %3546 = vmatprep.subr.mxu0 0.0
      %3547 = vmatpush1.msra.mxu0 0.0
      %3548 = vmatprep.subr.mxu0 0.0
      %3549 = vmatpush1.msra.mxu0 0.0
      %3550 = vmatprep.subr.mxu0 0.0
      %3551 = vmatpush1.msra.mxu0 0.0
      %3552 = vmatprep.subr.mxu0 0.0
      %3553 = vmatpush1.msra.mxu0 0.0
      %3554 = vmatprep.subr.mxu0 0.0
      %3555 = vmatpush1.msra.mxu0 0.0
      %3556 = vmatprep.subr.mxu0 0.0
      %3557 = vmatpush1.msra.mxu0 0.0
      %3558 = vmatprep.subr.mxu0 0.0
      %3559 = vmatpush1.msra.mxu0 0.0
      %3560 = vmatprep.subr.mxu0 0.0
      %3561 = vmatpush1.msra.mxu0 0.0
      %3562 = vmatprep.subr.mxu0 0.0
      %3563 = vmatpush1.msra.mxu0 0.0
      %3564 = vmatprep.subr.mxu0 0.0
      %3565 = vmatpush1.msra.mxu0 0.0
      %3566 = vmatprep.subr.mxu0 0.0
      %3567 = vmatpush1.msra.mxu0 0.0
      %3568 = vmatprep.subr.mxu0 0.0
      %3569 = vmatpush1.msra.mxu0 0.0
      %3570 = vmatprep.subr.mxu0 0.0
      %3571 = vmatpush1.msra.mxu0 0.0
      %3572 = vmatprep.subr.mxu0 0.0
      %3573 = vmatpush1.msra.mxu0 0.0
      %3574 = vmatprep.subr.mxu0 0.0
      %3575 = vmatpush1.msra.mxu0 0.0
      %3576 = vmatprep.subr.mxu0 0.0
      %3577 = vmatpush1.msra.mxu0 0.0
      %3578 = vmatprep.subr.mxu0 0.0
      %3579 = vmatpush1.msra.mxu0 0.0
      %3580 = vmatprep.subr.mxu0 0.0
      %3581 = vmatpush1.msra.mxu0 0.0
      %3582 = vmatprep.subr.mxu0 0.0
      %3583 = vmatpush1.msra.mxu0 0.0
      %3584 = vmatprep.mubr.f32.mxu0 0.0
      %3585 = vmatmul.mubr.f32.gmra.mrb[0].mxu0 %v3515
      %v3586 = vpop.f32.mrb[0].mxu0
      %v3587 = vadd.f32 0.0, %v3586
      %v3588 = vpop.f32.mrb[0].mxu0
      %3589 = vdwg.mxu0
      %v3590 = vadd.f32 %v3425, %v3587
      %s3591 = scalar_lea.vmem %s10, 1560
      %v3592 = vld [vmem:[%s3591] sm:$0xff]
      %v3593 = vld [vmem:[%s3591 + $0x8] sm:$0xff]
      %v3594 = vld [vmem:[%s3591 + $0x10] sm:$0xff]
      %v3595 = vld [vmem:[%s3591 + $0x18] sm:$0xff]
      %v3596 = vld [vmem:[%s3591 + $0x20] sm:$0xff]
      %v3597 = vld [vmem:[%s3591 + $0x28] sm:$0xff]
      %v3598 = vld [vmem:[%s3591 + $0x30] sm:$0xff]
      %v3599 = vld [vmem:[%s3591 + $0x38] sm:$0xff]
      %v3600 = vld [vmem:[%s3591 + $0x40] sm:$0xff]
      %v3601 = vld [vmem:[%s3591 + $0x48] sm:$0xff]
      %v3602 = vld [vmem:[%s3591 + $0x50] sm:$0xff]
      %v3603 = vld [vmem:[%s3591 + $0x58] sm:$0xff]
      %v3604 = vld [vmem:[%s3591 + $0x60] sm:$0xff]
      %v3605 = vld [vmem:[%s3591 + $0x68] sm:$0xff]
      %v3606 = vld [vmem:[%s3591 + $0x70] sm:$0xff]
      %3607 = vmatprep.subr.mxu0 0.0
      %3608 = vmatpush1.msra.mxu0 %v3592
      %3609 = vmatprep.subr.mxu0 0.0
      %3610 = vmatpush1.msra.mxu0 %v3593
      %3611 = vmatprep.subr.mxu0 0.0
      %3612 = vmatpush1.msra.mxu0 %v3594
      %3613 = vmatprep.subr.mxu0 0.0
      %3614 = vmatpush1.msra.mxu0 %v3595
      %3615 = vmatprep.subr.mxu0 0.0
      %3616 = vmatpush1.msra.mxu0 %v3596
      %3617 = vmatprep.subr.mxu0 0.0
      %3618 = vmatpush1.msra.mxu0 %v3597
      %3619 = vmatprep.subr.mxu0 0.0
      %3620 = vmatpush1.msra.mxu0 %v3598
      %3621 = vmatprep.subr.mxu0 0.0
      %3622 = vmatpush1.msra.mxu0 %v3599
      %3623 = vmatprep.subr.mxu0 0.0
      %3624 = vmatpush1.msra.mxu0 %v3600
      %3625 = vmatprep.subr.mxu0 0.0
      %3626 = vmatpush1.msra.mxu0 %v3601
      %3627 = vmatprep.subr.mxu0 0.0
      %3628 = vmatpush1.msra.mxu0 %v3602
      %3629 = vmatprep.subr.mxu0 0.0
      %3630 = vmatpush1.msra.mxu0 %v3603
      %3631 = vmatprep.subr.mxu0 0.0
      %3632 = vmatpush1.msra.mxu0 %v3604
      %3633 = vmatprep.subr.mxu0 0.0
      %3634 = vmatpush1.msra.mxu0 %v3605
      %3635 = vmatprep.subr.mxu0 0.0
      %3636 = vmatpush1.msra.mxu0 %v3606
      %3637 = vmatprep.subr.mxu0 0.0
      %3638 = vmatpush1.msra.mxu0 0.0
      %3639 = vmatprep.subr.mxu0 0.0
      %3640 = vmatpush1.msra.mxu0 0.0
      %3641 = vmatprep.subr.mxu0 0.0
      %3642 = vmatpush1.msra.mxu0 0.0
      %3643 = vmatprep.subr.mxu0 0.0
      %3644 = vmatpush1.msra.mxu0 0.0
      %3645 = vmatprep.subr.mxu0 0.0
      %3646 = vmatpush1.msra.mxu0 0.0
      %3647 = vmatprep.subr.mxu0 0.0
      %3648 = vmatpush1.msra.mxu0 0.0
      %3649 = vmatprep.subr.mxu0 0.0
      %3650 = vmatpush1.msra.mxu0 0.0
      %3651 = vmatprep.subr.mxu0 0.0
      %3652 = vmatpush1.msra.mxu0 0.0
      %3653 = vmatprep.subr.mxu0 0.0
      %3654 = vmatpush1.msra.mxu0 0.0
      %3655 = vmatprep.subr.mxu0 0.0
      %3656 = vmatpush1.msra.mxu0 0.0
      %3657 = vmatprep.subr.mxu0 0.0
      %3658 = vmatpush1.msra.mxu0 0.0
      %3659 = vmatprep.subr.mxu0 0.0
      %3660 = vmatpush1.msra.mxu0 0.0
      %3661 = vmatprep.subr.mxu0 0.0
      %3662 = vmatpush1.msra.mxu0 0.0
      %3663 = vmatprep.subr.mxu0 0.0
      %3664 = vmatpush1.msra.mxu0 0.0
      %3665 = vmatprep.subr.mxu0 0.0
      %3666 = vmatpush1.msra.mxu0 0.0
      %3667 = vmatprep.subr.mxu0 0.0
      %3668 = vmatpush1.msra.mxu0 0.0
      %3669 = vmatprep.subr.mxu0 0.0
      %3670 = vmatpush1.msra.mxu0 0.0
      %3671 = vmatprep.mubr.f32.mxu0 0.0
      %3672 = vmatmul.mubr.f32.gmra.mrb[0].mxu0 %v1461
      %v3673 = vpop.f32.mrb[0].mxu0
      %v3674 = vadd.f32 0.0, %v3673
      %v3675 = vpop.f32.mrb[0].mxu0
      %3676 = vdwg.mxu0
      %s3677 = scalar_lea.vmem %s9, 52
      %v3678 = vld [vmem:[%s3677] sm:$0xf]
      %v3680 = vsel %vm1360, %v3678, 0
      %v3683 = vsel %vm849, %v3674, 0
      %3685 = vmatprep.subr.mxu0 0.0
      %3686 = vmatpush1.msra.mxu0 %v3683
      %3687 = vmatprep.subr.mxu0 0.0
      %3688 = vmatpush1.msra.mxu0 0.0
      %3689 = vmatprep.subr.mxu0 0.0
      %3690 = vmatpush1.msra.mxu0 0.0
      %3691 = vmatprep.subr.mxu0 0.0
      %3692 = vmatpush1.msra.mxu0 0.0
      %3693 = vmatprep.subr.mxu0 0.0
      %3694 = vmatpush1.msra.mxu0 0.0
      %3695 = vmatprep.subr.mxu0 0.0
      %3696 = vmatpush1.msra.mxu0 0.0
      %3697 = vmatprep.subr.mxu0 0.0
      %3698 = vmatpush1.msra.mxu0 0.0
      %3699 = vmatprep.subr.mxu0 0.0
      %3700 = vmatpush1.msra.mxu0 0.0
      %3701 = vmatprep.subr.mxu0 0.0
      %3702 = vmatpush1.msra.mxu0 0.0
      %3703 = vmatprep.subr.mxu0 0.0
      %3704 = vmatpush1.msra.mxu0 0.0
      %3705 = vmatprep.subr.mxu0 0.0
      %3706 = vmatpush1.msra.mxu0 0.0
      %3707 = vmatprep.subr.mxu0 0.0
      %3708 = vmatpush1.msra.mxu0 0.0
      %3709 = vmatprep.subr.mxu0 0.0
      %3710 = vmatpush1.msra.mxu0 0.0
      %3711 = vmatprep.subr.mxu0 0.0
      %3712 = vmatpush1.msra.mxu0 0.0
      %3713 = vmatprep.subr.mxu0 0.0
      %3714 = vmatpush1.msra.mxu0 0.0
      %3715 = vmatprep.subr.mxu0 0.0
      %3716 = vmatpush1.msra.mxu0 0.0
      %3717 = vmatprep.subr.mxu0 0.0
      %3718 = vmatpush1.msra.mxu0 0.0
      %3719 = vmatprep.subr.mxu0 0.0
      %3720 = vmatpush1.msra.mxu0 0.0
      %3721 = vmatprep.subr.mxu0 0.0
      %3722 = vmatpush1.msra.mxu0 0.0
      %3723 = vmatprep.subr.mxu0 0.0
      %3724 = vmatpush1.msra.mxu0 0.0
      %3725 = vmatprep.subr.mxu0 0.0
      %3726 = vmatpush1.msra.mxu0 0.0
      %3727 = vmatprep.subr.mxu0 0.0
      %3728 = vmatpush1.msra.mxu0 0.0
      %3729 = vmatprep.subr.mxu0 0.0
      %3730 = vmatpush1.msra.mxu0 0.0
      %3731 = vmatprep.subr.mxu0 0.0
      %3732 = vmatpush1.msra.mxu0 0.0
      %3733 = vmatprep.subr.mxu0 0.0
      %3734 = vmatpush1.msra.mxu0 0.0
      %3735 = vmatprep.subr.mxu0 0.0
      %3736 = vmatpush1.msra.mxu0 0.0
      %3737 = vmatprep.subr.mxu0 0.0
      %3738 = vmatpush1.msra.mxu0 0.0
      %3739 = vmatprep.subr.mxu0 0.0
      %3740 = vmatpush1.msra.mxu0 0.0
      %3741 = vmatprep.subr.mxu0 0.0
      %3742 = vmatpush1.msra.mxu0 0.0
      %3743 = vmatprep.subr.mxu0 0.0
      %3744 = vmatpush1.msra.mxu0 0.0
      %3745 = vmatprep.subr.mxu0 0.0
      %3746 = vmatpush1.msra.mxu0 0.0
      %3747 = vmatprep.subr.mxu0 0.0
      %3748 = vmatpush1.msra.mxu0 0.0
      %3749 = vmatprep.mubr.f32.mxu0 0.0
      %3750 = vmatmul.mubr.f32.gmra.mrb[0].mxu0 %v3680
      %v3751 = vpop.f32.mrb[0].mxu0
      %v3752 = vadd.f32 0.0, %v3751
      %v3753 = vpop.f32.mrb[0].mxu0
      %3754 = vdwg.mxu0
      %v3755 = vadd.f32 %v3590, %v3752
      %s3756 = scalar_lea.vmem %s10, 1680
      %v3757 = vld [vmem:[%s3756] sm:$0xff]
      %v3758 = vld [vmem:[%s3756 + $0x8] sm:$0xff]
      %v3759 = vld [vmem:[%s3756 + $0x10] sm:$0xff]
      %v3760 = vld [vmem:[%s3756 + $0x18] sm:$0xff]
      %v3761 = vld [vmem:[%s3756 + $0x20] sm:$0xff]
      %v3762 = vld [vmem:[%s3756 + $0x28] sm:$0xff]
      %v3763 = vld [vmem:[%s3756 + $0x30] sm:$0xff]
      %v3764 = vld [vmem:[%s3756 + $0x38] sm:$0xff]
      %v3765 = vld [vmem:[%s3756 + $0x40] sm:$0xff]
      %v3766 = vld [vmem:[%s3756 + $0x48] sm:$0xff]
      %v3767 = vld [vmem:[%s3756 + $0x50] sm:$0xff]
      %v3768 = vld [vmem:[%s3756 + $0x58] sm:$0xff]
      %v3769 = vld [vmem:[%s3756 + $0x60] sm:$0xff]
      %v3770 = vld [vmem:[%s3756 + $0x68] sm:$0xff]
      %v3771 = vld [vmem:[%s3756 + $0x70] sm:$0xff]
      %3772 = vmatprep.subr.mxu0 0.0
      %3773 = vmatpush1.msra.mxu0 %v3757
      %3774 = vmatprep.subr.mxu0 0.0
      %3775 = vmatpush1.msra.mxu0 %v3758
      %3776 = vmatprep.subr.mxu0 0.0
      %3777 = vmatpush1.msra.mxu0 %v3759
      %3778 = vmatprep.subr.mxu0 0.0
      %3779 = vmatpush1.msra.mxu0 %v3760
      %3780 = vmatprep.subr.mxu0 0.0
      %3781 = vmatpush1.msra.mxu0 %v3761
      %3782 = vmatprep.subr.mxu0 0.0
      %3783 = vmatpush1.msra.mxu0 %v3762
      %3784 = vmatprep.subr.mxu0 0.0
      %3785 = vmatpush1.msra.mxu0 %v3763
      %3786 = vmatprep.subr.mxu0 0.0
      %3787 = vmatpush1.msra.mxu0 %v3764
      %3788 = vmatprep.subr.mxu0 0.0
      %3789 = vmatpush1.msra.mxu0 %v3765
      %3790 = vmatprep.subr.mxu0 0.0
      %3791 = vmatpush1.msra.mxu0 %v3766
      %3792 = vmatprep.subr.mxu0 0.0
      %3793 = vmatpush1.msra.mxu0 %v3767
      %3794 = vmatprep.subr.mxu0 0.0
      %3795 = vmatpush1.msra.mxu0 %v3768
      %3796 = vmatprep.subr.mxu0 0.0
      %3797 = vmatpush1.msra.mxu0 %v3769
      %3798 = vmatprep.subr.mxu0 0.0
      %3799 = vmatpush1.msra.mxu0 %v3770
      %3800 = vmatprep.subr.mxu0 0.0
      %3801 = vmatpush1.msra.mxu0 %v3771
      %3802 = vmatprep.subr.mxu0 0.0
      %3803 = vmatpush1.msra.mxu0 0.0
      %3804 = vmatprep.subr.mxu0 0.0
      %3805 = vmatpush1.msra.mxu0 0.0
      %3806 = vmatprep.subr.mxu0 0.0
      %3807 = vmatpush1.msra.mxu0 0.0
      %3808 = vmatprep.subr.mxu0 0.0
      %3809 = vmatpush1.msra.mxu0 0.0
      %3810 = vmatprep.subr.mxu0 0.0
      %3811 = vmatpush1.msra.mxu0 0.0
      %3812 = vmatprep.subr.mxu0 0.0
      %3813 = vmatpush1.msra.mxu0 0.0
      %3814 = vmatprep.subr.mxu0 0.0
      %3815 = vmatpush1.msra.mxu0 0.0
      %3816 = vmatprep.subr.mxu0 0.0
      %3817 = vmatpush1.msra.mxu0 0.0
      %3818 = vmatprep.subr.mxu0 0.0
      %3819 = vmatpush1.msra.mxu0 0.0
      %3820 = vmatprep.subr.mxu0 0.0
      %3821 = vmatpush1.msra.mxu0 0.0
      %3822 = vmatprep.subr.mxu0 0.0
      %3823 = vmatpush1.msra.mxu0 0.0
      %3824 = vmatprep.subr.mxu0 0.0
      %3825 = vmatpush1.msra.mxu0 0.0
      %3826 = vmatprep.subr.mxu0 0.0
      %3827 = vmatpush1.msra.mxu0 0.0
      %3828 = vmatprep.subr.mxu0 0.0
      %3829 = vmatpush1.msra.mxu0 0.0
      %3830 = vmatprep.subr.mxu0 0.0
      %3831 = vmatpush1.msra.mxu0 0.0
      %3832 = vmatprep.subr.mxu0 0.0
      %3833 = vmatpush1.msra.mxu0 0.0
      %3834 = vmatprep.subr.mxu0 0.0
      %3835 = vmatpush1.msra.mxu0 0.0
      %3836 = vmatprep.mubr.f32.mxu0 0.0
      %3837 = vmatmul.mubr.f32.gmra.mrb[0].mxu0 %v1461
      %v3838 = vpop.f32.mrb[0].mxu0
      %v3839 = vadd.f32 0.0, %v3838
      %v3840 = vpop.f32.mrb[0].mxu0
      %3841 = vdwg.mxu0
      %s3842 = scalar_lea.vmem %s9, 56
      %v3843 = vld [vmem:[%s3842] sm:$0xf]
      %v3845 = vsel %vm1360, %v3843, 0
      %v3848 = vsel %vm849, %v3839, 0
      %3850 = vmatprep.subr.mxu0 0.0
      %3851 = vmatpush1.msra.mxu0 %v3848
      %3852 = vmatprep.subr.mxu0 0.0
      %3853 = vmatpush1.msra.mxu0 0.0
      %3854 = vmatprep.subr.mxu0 0.0
      %3855 = vmatpush1.msra.mxu0 0.0
      %3856 = vmatprep.subr.mxu0 0.0
      %3857 = vmatpush1.msra.mxu0 0.0
      %3858 = vmatprep.subr.mxu0 0.0
      %3859 = vmatpush1.msra.mxu0 0.0
      %3860 = vmatprep.subr.mxu0 0.0
      %3861 = vmatpush1.msra.mxu0 0.0
      %3862 = vmatprep.subr.mxu0 0.0
      %3863 = vmatpush1.msra.mxu0 0.0
      %3864 = vmatprep.subr.mxu0 0.0
      %3865 = vmatpush1.msra.mxu0 0.0
      %3866 = vmatprep.subr.mxu0 0.0
      %3867 = vmatpush1.msra.mxu0 0.0
      %3868 = vmatprep.subr.mxu0 0.0
      %3869 = vmatpush1.msra.mxu0 0.0
      %3870 = vmatprep.subr.mxu0 0.0
      %3871 = vmatpush1.msra.mxu0 0.0
      %3872 = vmatprep.subr.mxu0 0.0
      %3873 = vmatpush1.msra.mxu0 0.0
      %3874 = vmatprep.subr.mxu0 0.0
      %3875 = vmatpush1.msra.mxu0 0.0
      %3876 = vmatprep.subr.mxu0 0.0
      %3877 = vmatpush1.msra.mxu0 0.0
      %3878 = vmatprep.subr.mxu0 0.0
      %3879 = vmatpush1.msra.mxu0 0.0
      %3880 = vmatprep.subr.mxu0 0.0
      %3881 = vmatpush1.msra.mxu0 0.0
      %3882 = vmatprep.subr.mxu0 0.0
      %3883 = vmatpush1.msra.mxu0 0.0
      %3884 = vmatprep.subr.mxu0 0.0
      %3885 = vmatpush1.msra.mxu0 0.0
      %3886 = vmatprep.subr.mxu0 0.0
      %3887 = vmatpush1.msra.mxu0 0.0
      %3888 = vmatprep.subr.mxu0 0.0
      %3889 = vmatpush1.msra.mxu0 0.0
      %3890 = vmatprep.subr.mxu0 0.0
      %3891 = vmatpush1.msra.mxu0 0.0
      %3892 = vmatprep.subr.mxu0 0.0
      %3893 = vmatpush1.msra.mxu0 0.0
      %3894 = vmatprep.subr.mxu0 0.0
      %3895 = vmatpush1.msra.mxu0 0.0
      %3896 = vmatprep.subr.mxu0 0.0
      %3897 = vmatpush1.msra.mxu0 0.0
      %3898 = vmatprep.subr.mxu0 0.0
      %3899 = vmatpush1.msra.mxu0 0.0
      %3900 = vmatprep.subr.mxu0 0.0
      %3901 = vmatpush1.msra.mxu0 0.0
      %3902 = vmatprep.subr.mxu0 0.0
      %3903 = vmatpush1.msra.mxu0 0.0
      %3904 = vmatprep.subr.mxu0 0.0
      %3905 = vmatpush1.msra.mxu0 0.0
      %3906 = vmatprep.subr.mxu0 0.0
      %3907 = vmatpush1.msra.mxu0 0.0
      %3908 = vmatprep.subr.mxu0 0.0
      %3909 = vmatpush1.msra.mxu0 0.0
      %3910 = vmatprep.subr.mxu0 0.0
      %3911 = vmatpush1.msra.mxu0 0.0
      %3912 = vmatprep.subr.mxu0 0.0
      %3913 = vmatpush1.msra.mxu0 0.0
      %3914 = vmatprep.mubr.f32.mxu0 0.0
      %3915 = vmatmul.mubr.f32.gmra.mrb[0].mxu0 %v3845
      %v3916 = vpop.f32.mrb[0].mxu0
      %v3917 = vadd.f32 0.0, %v3916
      %v3918 = vpop.f32.mrb[0].mxu0
      %3919 = vdwg.mxu0
      %v3920 = vadd.f32 %v3755, %v3917
      %s3921 = scalar_lea.vmem %s10, 1800
      %v3922 = vld [vmem:[%s3921] sm:$0xff]
      %v3923 = vld [vmem:[%s3921 + $0x8] sm:$0xff]
      %v3924 = vld [vmem:[%s3921 + $0x10] sm:$0xff]
      %v3925 = vld [vmem:[%s3921 + $0x18] sm:$0xff]
      %v3926 = vld [vmem:[%s3921 + $0x20] sm:$0xff]
      %v3927 = vld [vmem:[%s3921 + $0x28] sm:$0xff]
      %v3928 = vld [vmem:[%s3921 + $0x30] sm:$0xff]
      %v3929 = vld [vmem:[%s3921 + $0x38] sm:$0xff]
      %v3930 = vld [vmem:[%s3921 + $0x40] sm:$0xff]
      %v3931 = vld [vmem:[%s3921 + $0x48] sm:$0xff]
      %v3932 = vld [vmem:[%s3921 + $0x50] sm:$0xff]
      %v3933 = vld [vmem:[%s3921 + $0x58] sm:$0xff]
      %v3934 = vld [vmem:[%s3921 + $0x60] sm:$0xff]
      %v3935 = vld [vmem:[%s3921 + $0x68] sm:$0xff]
      %v3936 = vld [vmem:[%s3921 + $0x70] sm:$0xff]
      %3937 = vmatprep.subr.mxu0 0.0
      %3938 = vmatpush1.msra.mxu0 %v3922
      %3939 = vmatprep.subr.mxu0 0.0
      %3940 = vmatpush1.msra.mxu0 %v3923
      %3941 = vmatprep.subr.mxu0 0.0
      %3942 = vmatpush1.msra.mxu0 %v3924
      %3943 = vmatprep.subr.mxu0 0.0
      %3944 = vmatpush1.msra.mxu0 %v3925
      %3945 = vmatprep.subr.mxu0 0.0
      %3946 = vmatpush1.msra.mxu0 %v3926
      %3947 = vmatprep.subr.mxu0 0.0
      %3948 = vmatpush1.msra.mxu0 %v3927
      %3949 = vmatprep.subr.mxu0 0.0
      %3950 = vmatpush1.msra.mxu0 %v3928
      %3951 = vmatprep.subr.mxu0 0.0
      %3952 = vmatpush1.msra.mxu0 %v3929
      %3953 = vmatprep.subr.mxu0 0.0
      %3954 = vmatpush1.msra.mxu0 %v3930
      %3955 = vmatprep.subr.mxu0 0.0
      %3956 = vmatpush1.msra.mxu0 %v3931
      %3957 = vmatprep.subr.mxu0 0.0
      %3958 = vmatpush1.msra.mxu0 %v3932
      %3959 = vmatprep.subr.mxu0 0.0
      %3960 = vmatpush1.msra.mxu0 %v3933
      %3961 = vmatprep.subr.mxu0 0.0
      %3962 = vmatpush1.msra.mxu0 %v3934
      %3963 = vmatprep.subr.mxu0 0.0
      %3964 = vmatpush1.msra.mxu0 %v3935
      %3965 = vmatprep.subr.mxu0 0.0
      %3966 = vmatpush1.msra.mxu0 %v3936
      %3967 = vmatprep.subr.mxu0 0.0
      %3968 = vmatpush1.msra.mxu0 0.0
      %3969 = vmatprep.subr.mxu0 0.0
      %3970 = vmatpush1.msra.mxu0 0.0
      %3971 = vmatprep.subr.mxu0 0.0
      %3972 = vmatpush1.msra.mxu0 0.0
      %3973 = vmatprep.subr.mxu0 0.0
      %3974 = vmatpush1.msra.mxu0 0.0
      %3975 = vmatprep.subr.mxu0 0.0
      %3976 = vmatpush1.msra.mxu0 0.0
      %3977 = vmatprep.subr.mxu0 0.0
      %3978 = vmatpush1.msra.mxu0 0.0
      %3979 = vmatprep.subr.mxu0 0.0
      %3980 = vmatpush1.msra.mxu0 0.0
      %3981 = vmatprep.subr.mxu0 0.0
      %3982 = vmatpush1.msra.mxu0 0.0
      %3983 = vmatprep.subr.mxu0 0.0
      %3984 = vmatpush1.msra.mxu0 0.0
      %3985 = vmatprep.subr.mxu0 0.0
      %3986 = vmatpush1.msra.mxu0 0.0
      %3987 = vmatprep.subr.mxu0 0.0
      %3988 = vmatpush1.msra.mxu0 0.0
      %3989 = vmatprep.subr.mxu0 0.0
      %3990 = vmatpush1.msra.mxu0 0.0
      %3991 = vmatprep.subr.mxu0 0.0
      %3992 = vmatpush1.msra.mxu0 0.0
      %3993 = vmatprep.subr.mxu0 0.0
      %3994 = vmatpush1.msra.mxu0 0.0
      %3995 = vmatprep.subr.mxu0 0.0
      %3996 = vmatpush1.msra.mxu0 0.0
      %3997 = vmatprep.subr.mxu0 0.0
      %3998 = vmatpush1.msra.mxu0 0.0
      %3999 = vmatprep.subr.mxu0 0.0
      %4000 = vmatpush1.msra.mxu0 0.0
      %4001 = vmatprep.mubr.f32.mxu0 0.0
      %4002 = vmatmul.mubr.f32.gmra.mrb[0].mxu0 %v1461
      %v4003 = vpop.f32.mrb[0].mxu0
      %v4004 = vadd.f32 0.0, %v4003
      %v4005 = vpop.f32.mrb[0].mxu0
      %4006 = vdwg.mxu0
      %s4007 = scalar_lea.vmem %s9, 60
      %v4008 = vld [vmem:[%s4007] sm:$0xf]
      %v4010 = vsel %vm1360, %v4008, 0
      %v4013 = vsel %vm849, %v4004, 0
      %4015 = vmatprep.subr.mxu0 0.0
      %4016 = vmatpush1.msra.mxu0 %v4013
      %4017 = vmatprep.subr.mxu0 0.0
      %4018 = vmatpush1.msra.mxu0 0.0
      %4019 = vmatprep.subr.mxu0 0.0
      %4020 = vmatpush1.msra.mxu0 0.0
      %4021 = vmatprep.subr.mxu0 0.0
      %4022 = vmatpush1.msra.mxu0 0.0
      %4023 = vmatprep.subr.mxu0 0.0
      %4024 = vmatpush1.msra.mxu0 0.0
      %4025 = vmatprep.subr.mxu0 0.0
      %4026 = vmatpush1.msra.mxu0 0.0
      %4027 = vmatprep.subr.mxu0 0.0
      %4028 = vmatpush1.msra.mxu0 0.0
      %4029 = vmatprep.subr.mxu0 0.0
      %4030 = vmatpush1.msra.mxu0 0.0
      %4031 = vmatprep.subr.mxu0 0.0
      %4032 = vmatpush1.msra.mxu0 0.0
      %4033 = vmatprep.subr.mxu0 0.0
      %4034 = vmatpush1.msra.mxu0 0.0
      %4035 = vmatprep.subr.mxu0 0.0
      %4036 = vmatpush1.msra.mxu0 0.0
      %4037 = vmatprep.subr.mxu0 0.0
      %4038 = vmatpush1.msra.mxu0 0.0
      %4039 = vmatprep.subr.mxu0 0.0
      %4040 = vmatpush1.msra.mxu0 0.0
      %4041 = vmatprep.subr.mxu0 0.0
      %4042 = vmatpush1.msra.mxu0 0.0
      %4043 = vmatprep.subr.mxu0 0.0
      %4044 = vmatpush1.msra.mxu0 0.0
      %4045 = vmatprep.subr.mxu0 0.0
      %4046 = vmatpush1.msra.mxu0 0.0
      %4047 = vmatprep.subr.mxu0 0.0
      %4048 = vmatpush1.msra.mxu0 0.0
      %4049 = vmatprep.subr.mxu0 0.0
      %4050 = vmatpush1.msra.mxu0 0.0
      %4051 = vmatprep.subr.mxu0 0.0
      %4052 = vmatpush1.msra.mxu0 0.0
      %4053 = vmatprep.subr.mxu0 0.0
      %4054 = vmatpush1.msra.mxu0 0.0
      %4055 = vmatprep.subr.mxu0 0.0
      %4056 = vmatpush1.msra.mxu0 0.0
      %4057 = vmatprep.subr.mxu0 0.0
      %4058 = vmatpush1.msra.mxu0 0.0
      %4059 = vmatprep.subr.mxu0 0.0
      %4060 = vmatpush1.msra.mxu0 0.0
      %4061 = vmatprep.subr.mxu0 0.0
      %4062 = vmatpush1.msra.mxu0 0.0
      %4063 = vmatprep.subr.mxu0 0.0
      %4064 = vmatpush1.msra.mxu0 0.0
      %4065 = vmatprep.subr.mxu0 0.0
      %4066 = vmatpush1.msra.mxu0 0.0
      %4067 = vmatprep.subr.mxu0 0.0
      %4068 = vmatpush1.msra.mxu0 0.0
      %4069 = vmatprep.subr.mxu0 0.0
      %4070 = vmatpush1.msra.mxu0 0.0
      %4071 = vmatprep.subr.mxu0 0.0
      %4072 = vmatpush1.msra.mxu0 0.0
      %4073 = vmatprep.subr.mxu0 0.0
      %4074 = vmatpush1.msra.mxu0 0.0
      %4075 = vmatprep.subr.mxu0 0.0
      %4076 = vmatpush1.msra.mxu0 0.0
      %4077 = vmatprep.subr.mxu0 0.0
      %4078 = vmatpush1.msra.mxu0 0.0
      %4079 = vmatprep.mubr.f32.mxu0 0.0
      %4080 = vmatmul.mubr.f32.gmra.mrb[0].mxu0 %v4010
      %v4081 = vpop.f32.mrb[0].mxu0
      %v4082 = vadd.f32 0.0, %v4081
      %v4083 = vpop.f32.mrb[0].mxu0
      %4084 = vdwg.mxu0
      %v4085 = vadd.f32 %v3920, %v4082
      %s4086 = scalar_lea.vmem %s10, 1920
      %v4087 = vld [vmem:[%s4086] sm:$0xff]
      %v4088 = vld [vmem:[%s4086 + $0x8] sm:$0xff]
      %v4089 = vld [vmem:[%s4086 + $0x10] sm:$0xff]
      %v4090 = vld [vmem:[%s4086 + $0x18] sm:$0xff]
      %v4091 = vld [vmem:[%s4086 + $0x20] sm:$0xff]
      %v4092 = vld [vmem:[%s4086 + $0x28] sm:$0xff]
      %v4093 = vld [vmem:[%s4086 + $0x30] sm:$0xff]
      %v4094 = vld [vmem:[%s4086 + $0x38] sm:$0xff]
      %v4095 = vld [vmem:[%s4086 + $0x40] sm:$0xff]
      %v4096 = vld [vmem:[%s4086 + $0x48] sm:$0xff]
      %v4097 = vld [vmem:[%s4086 + $0x50] sm:$0xff]
      %v4098 = vld [vmem:[%s4086 + $0x58] sm:$0xff]
      %v4099 = vld [vmem:[%s4086 + $0x60] sm:$0xff]
      %v4100 = vld [vmem:[%s4086 + $0x68] sm:$0xff]
      %v4101 = vld [vmem:[%s4086 + $0x70] sm:$0xff]
      %4102 = vmatprep.subr.mxu0 0.0
      %4103 = vmatpush1.msra.mxu0 %v4087
      %4104 = vmatprep.subr.mxu0 0.0
      %4105 = vmatpush1.msra.mxu0 %v4088
      %4106 = vmatprep.subr.mxu0 0.0
      %4107 = vmatpush1.msra.mxu0 %v4089
      %4108 = vmatprep.subr.mxu0 0.0
      %4109 = vmatpush1.msra.mxu0 %v4090
      %4110 = vmatprep.subr.mxu0 0.0
      %4111 = vmatpush1.msra.mxu0 %v4091
      %4112 = vmatprep.subr.mxu0 0.0
      %4113 = vmatpush1.msra.mxu0 %v4092
      %4114 = vmatprep.subr.mxu0 0.0
      %4115 = vmatpush1.msra.mxu0 %v4093
      %4116 = vmatprep.subr.mxu0 0.0
      %4117 = vmatpush1.msra.mxu0 %v4094
      %4118 = vmatprep.subr.mxu0 0.0
      %4119 = vmatpush1.msra.mxu0 %v4095
      %4120 = vmatprep.subr.mxu0 0.0
      %4121 = vmatpush1.msra.mxu0 %v4096
      %4122 = vmatprep.subr.mxu0 0.0
      %4123 = vmatpush1.msra.mxu0 %v4097
      %4124 = vmatprep.subr.mxu0 0.0
      %4125 = vmatpush1.msra.mxu0 %v4098
      %4126 = vmatprep.subr.mxu0 0.0
      %4127 = vmatpush1.msra.mxu0 %v4099
      %4128 = vmatprep.subr.mxu0 0.0
      %4129 = vmatpush1.msra.mxu0 %v4100
      %4130 = vmatprep.subr.mxu0 0.0
      %4131 = vmatpush1.msra.mxu0 %v4101
      %4132 = vmatprep.subr.mxu0 0.0
      %4133 = vmatpush1.msra.mxu0 0.0
      %4134 = vmatprep.subr.mxu0 0.0
      %4135 = vmatpush1.msra.mxu0 0.0
      %4136 = vmatprep.subr.mxu0 0.0
      %4137 = vmatpush1.msra.mxu0 0.0
      %4138 = vmatprep.subr.mxu0 0.0
      %4139 = vmatpush1.msra.mxu0 0.0
      %4140 = vmatprep.subr.mxu0 0.0
      %4141 = vmatpush1.msra.mxu0 0.0
      %4142 = vmatprep.subr.mxu0 0.0
      %4143 = vmatpush1.msra.mxu0 0.0
      %4144 = vmatprep.subr.mxu0 0.0
      %4145 = vmatpush1.msra.mxu0 0.0
      %4146 = vmatprep.subr.mxu0 0.0
      %4147 = vmatpush1.msra.mxu0 0.0
      %4148 = vmatprep.subr.mxu0 0.0
      %4149 = vmatpush1.msra.mxu0 0.0
      %4150 = vmatprep.subr.mxu0 0.0
      %4151 = vmatpush1.msra.mxu0 0.0
      %4152 = vmatprep.subr.mxu0 0.0
      %4153 = vmatpush1.msra.mxu0 0.0
      %4154 = vmatprep.subr.mxu0 0.0
      %4155 = vmatpush1.msra.mxu0 0.0
      %4156 = vmatprep.subr.mxu0 0.0
      %4157 = vmatpush1.msra.mxu0 0.0
      %4158 = vmatprep.subr.mxu0 0.0
      %4159 = vmatpush1.msra.mxu0 0.0
      %4160 = vmatprep.subr.mxu0 0.0
      %4161 = vmatpush1.msra.mxu0 0.0
      %4162 = vmatprep.subr.mxu0 0.0
      %4163 = vmatpush1.msra.mxu0 0.0
      %4164 = vmatprep.subr.mxu0 0.0
      %4165 = vmatpush1.msra.mxu0 0.0
      %4166 = vmatprep.mubr.f32.mxu0 0.0
      %4167 = vmatmul.mubr.f32.gmra.mrb[0].mxu0 %v1461
      %v4168 = vpop.f32.mrb[0].mxu0
      %v4169 = vadd.f32 0.0, %v4168
      %v4170 = vpop.f32.mrb[0].mxu0
      %4171 = vdwg.mxu0
      %s4172 = scalar_lea.vmem %s9, 64
      %v4173 = vld [vmem:[%s4172] sm:$0xf]
      %v4175 = vsel %vm1360, %v4173, 0
      %v4178 = vsel %vm849, %v4169, 0
      %4180 = vmatprep.subr.mxu0 0.0
      %4181 = vmatpush1.msra.mxu0 %v4178
      %4182 = vmatprep.subr.mxu0 0.0
      %4183 = vmatpush1.msra.mxu0 0.0
      %4184 = vmatprep.subr.mxu0 0.0
      %4185 = vmatpush1.msra.mxu0 0.0
      %4186 = vmatprep.subr.mxu0 0.0
      %4187 = vmatpush1.msra.mxu0 0.0
      %4188 = vmatprep.subr.mxu0 0.0
      %4189 = vmatpush1.msra.mxu0 0.0
      %4190 = vmatprep.subr.mxu0 0.0
      %4191 = vmatpush1.msra.mxu0 0.0
      %4192 = vmatprep.subr.mxu0 0.0
      %4193 = vmatpush1.msra.mxu0 0.0
      %4194 = vmatprep.subr.mxu0 0.0
      %4195 = vmatpush1.msra.mxu0 0.0
      %4196 = vmatprep.subr.mxu0 0.0
      %4197 = vmatpush1.msra.mxu0 0.0
      %4198 = vmatprep.subr.mxu0 0.0
      %4199 = vmatpush1.msra.mxu0 0.0
      %4200 = vmatprep.subr.mxu0 0.0
      %4201 = vmatpush1.msra.mxu0 0.0
      %4202 = vmatprep.subr.mxu0 0.0
      %4203 = vmatpush1.msra.mxu0 0.0
      %4204 = vmatprep.subr.mxu0 0.0
      %4205 = vmatpush1.msra.mxu0 0.0
      %4206 = vmatprep.subr.mxu0 0.0
      %4207 = vmatpush1.msra.mxu0 0.0
      %4208 = vmatprep.subr.mxu0 0.0
      %4209 = vmatpush1.msra.mxu0 0.0
      %4210 = vmatprep.subr.mxu0 0.0
      %4211 = vmatpush1.msra.mxu0 0.0
      %4212 = vmatprep.subr.mxu0 0.0
      %4213 = vmatpush1.msra.mxu0 0.0
      %4214 = vmatprep.subr.mxu0 0.0
      %4215 = vmatpush1.msra.mxu0 0.0
      %4216 = vmatprep.subr.mxu0 0.0
      %4217 = vmatpush1.msra.mxu0 0.0
      %4218 = vmatprep.subr.mxu0 0.0
      %4219 = vmatpush1.msra.mxu0 0.0
      %4220 = vmatprep.subr.mxu0 0.0
      %4221 = vmatpush1.msra.mxu0 0.0
      %4222 = vmatprep.subr.mxu0 0.0
      %4223 = vmatpush1.msra.mxu0 0.0
      %4224 = vmatprep.subr.mxu0 0.0
      %4225 = vmatpush1.msra.mxu0 0.0
      %4226 = vmatprep.subr.mxu0 0.0
      %4227 = vmatpush1.msra.mxu0 0.0
      %4228 = vmatprep.subr.mxu0 0.0
      %4229 = vmatpush1.msra.mxu0 0.0
      %4230 = vmatprep.subr.mxu0 0.0
      %4231 = vmatpush1.msra.mxu0 0.0
      %4232 = vmatprep.subr.mxu0 0.0
      %4233 = vmatpush1.msra.mxu0 0.0
      %4234 = vmatprep.subr.mxu0 0.0
      %4235 = vmatpush1.msra.mxu0 0.0
      %4236 = vmatprep.subr.mxu0 0.0
      %4237 = vmatpush1.msra.mxu0 0.0
      %4238 = vmatprep.subr.mxu0 0.0
      %4239 = vmatpush1.msra.mxu0 0.0
      %4240 = vmatprep.subr.mxu0 0.0
      %4241 = vmatpush1.msra.mxu0 0.0
      %4242 = vmatprep.subr.mxu0 0.0
      %4243 = vmatpush1.msra.mxu0 0.0
      %4244 = vmatprep.mubr.f32.mxu0 0.0
      %4245 = vmatmul.mubr.f32.gmra.mrb[0].mxu0 %v4175
      %v4246 = vpop.f32.mrb[0].mxu0
      %v4247 = vadd.f32 0.0, %v4246
      %v4248 = vpop.f32.mrb[0].mxu0
      %4249 = vdwg.mxu0
      %v4250 = vadd.f32 %v4085, %v4247
      %s4251 = scalar_lea.vmem %s10, 2040
      %v4252 = vld [vmem:[%s4251] sm:$0xff]
      %v4253 = vld [vmem:[%s4251 + $0x8] sm:$0xff]
      %v4254 = vld [vmem:[%s4251 + $0x10] sm:$0xff]
      %v4255 = vld [vmem:[%s4251 + $0x18] sm:$0xff]
      %v4256 = vld [vmem:[%s4251 + $0x20] sm:$0xff]
      %v4257 = vld [vmem:[%s4251 + $0x28] sm:$0xff]
      %v4258 = vld [vmem:[%s4251 + $0x30] sm:$0xff]
      %v4259 = vld [vmem:[%s4251 + $0x38] sm:$0xff]
      %v4260 = vld [vmem:[%s4251 + $0x40] sm:$0xff]
      %v4261 = vld [vmem:[%s4251 + $0x48] sm:$0xff]
      %v4262 = vld [vmem:[%s4251 + $0x50] sm:$0xff]
      %v4263 = vld [vmem:[%s4251 + $0x58] sm:$0xff]
      %v4264 = vld [vmem:[%s4251 + $0x60] sm:$0xff]
      %v4265 = vld [vmem:[%s4251 + $0x68] sm:$0xff]
      %v4266 = vld [vmem:[%s4251 + $0x70] sm:$0xff]
      %4267 = vmatprep.subr.mxu0 0.0
      %4268 = vmatpush1.msra.mxu0 %v4252
      %4269 = vmatprep.subr.mxu0 0.0
      %4270 = vmatpush1.msra.mxu0 %v4253
      %4271 = vmatprep.subr.mxu0 0.0
      %4272 = vmatpush1.msra.mxu0 %v4254
      %4273 = vmatprep.subr.mxu0 0.0
      %4274 = vmatpush1.msra.mxu0 %v4255
      %4275 = vmatprep.subr.mxu0 0.0
      %4276 = vmatpush1.msra.mxu0 %v4256
      %4277 = vmatprep.subr.mxu0 0.0
      %4278 = vmatpush1.msra.mxu0 %v4257
      %4279 = vmatprep.subr.mxu0 0.0
      %4280 = vmatpush1.msra.mxu0 %v4258
      %4281 = vmatprep.subr.mxu0 0.0
      %4282 = vmatpush1.msra.mxu0 %v4259
      %4283 = vmatprep.subr.mxu0 0.0
      %4284 = vmatpush1.msra.mxu0 %v4260
      %4285 = vmatprep.subr.mxu0 0.0
      %4286 = vmatpush1.msra.mxu0 %v4261
      %4287 = vmatprep.subr.mxu0 0.0
      %4288 = vmatpush1.msra.mxu0 %v4262
      %4289 = vmatprep.subr.mxu0 0.0
      %4290 = vmatpush1.msra.mxu0 %v4263
      %4291 = vmatprep.subr.mxu0 0.0
      %4292 = vmatpush1.msra.mxu0 %v4264
      %4293 = vmatprep.subr.mxu0 0.0
      %4294 = vmatpush1.msra.mxu0 %v4265
      %4295 = vmatprep.subr.mxu0 0.0
      %4296 = vmatpush1.msra.mxu0 %v4266
      %4297 = vmatprep.subr.mxu0 0.0
      %4298 = vmatpush1.msra.mxu0 0.0
      %4299 = vmatprep.subr.mxu0 0.0
      %4300 = vmatpush1.msra.mxu0 0.0
      %4301 = vmatprep.subr.mxu0 0.0
      %4302 = vmatpush1.msra.mxu0 0.0
      %4303 = vmatprep.subr.mxu0 0.0
      %4304 = vmatpush1.msra.mxu0 0.0
      %4305 = vmatprep.subr.mxu0 0.0
      %4306 = vmatpush1.msra.mxu0 0.0
      %4307 = vmatprep.subr.mxu0 0.0
      %4308 = vmatpush1.msra.mxu0 0.0
      %4309 = vmatprep.subr.mxu0 0.0
      %4310 = vmatpush1.msra.mxu0 0.0
      %4311 = vmatprep.subr.mxu0 0.0
      %4312 = vmatpush1.msra.mxu0 0.0
      %4313 = vmatprep.subr.mxu0 0.0
      %4314 = vmatpush1.msra.mxu0 0.0
      %4315 = vmatprep.subr.mxu0 0.0
      %4316 = vmatpush1.msra.mxu0 0.0
      %4317 = vmatprep.subr.mxu0 0.0
      %4318 = vmatpush1.msra.mxu0 0.0
      %4319 = vmatprep.subr.mxu0 0.0
      %4320 = vmatpush1.msra.mxu0 0.0
      %4321 = vmatprep.subr.mxu0 0.0
      %4322 = vmatpush1.msra.mxu0 0.0
      %4323 = vmatprep.subr.mxu0 0.0
      %4324 = vmatpush1.msra.mxu0 0.0
      %4325 = vmatprep.subr.mxu0 0.0
      %4326 = vmatpush1.msra.mxu0 0.0
      %4327 = vmatprep.subr.mxu0 0.0
      %4328 = vmatpush1.msra.mxu0 0.0
      %4329 = vmatprep.subr.mxu0 0.0
      %4330 = vmatpush1.msra.mxu0 0.0
      %4331 = vmatprep.mubr.f32.mxu0 0.0
      %4332 = vmatmul.mubr.f32.gmra.mrb[0].mxu0 %v1461
      %v4333 = vpop.f32.mrb[0].mxu0
      %v4334 = vadd.f32 0.0, %v4333
      %v4335 = vpop.f32.mrb[0].mxu0
      %4336 = vdwg.mxu0
      %s4337 = scalar_lea.vmem %s9, 68
      %v4338 = vld [vmem:[%s4337] sm:$0xf]
      %v4340 = vsel %vm1360, %v4338, 0
      %v4343 = vsel %vm849, %v4334, 0
      %4345 = vmatprep.subr.mxu0 0.0
      %4346 = vmatpush1.msra.mxu0 %v4343
      %4347 = vmatprep.subr.mxu0 0.0
      %4348 = vmatpush1.msra.mxu0 0.0
      %4349 = vmatprep.subr.mxu0 0.0
      %4350 = vmatpush1.msra.mxu0 0.0
      %4351 = vmatprep.subr.mxu0 0.0
      %4352 = vmatpush1.msra.mxu0 0.0
      %4353 = vmatprep.subr.mxu0 0.0
      %4354 = vmatpush1.msra.mxu0 0.0
      %4355 = vmatprep.subr.mxu0 0.0
      %4356 = vmatpush1.msra.mxu0 0.0
      %4357 = vmatprep.subr.mxu0 0.0
      %4358 = vmatpush1.msra.mxu0 0.0
      %4359 = vmatprep.subr.mxu0 0.0
      %4360 = vmatpush1.msra.mxu0 0.0
      %4361 = vmatprep.subr.mxu0 0.0
      %4362 = vmatpush1.msra.mxu0 0.0
      %4363 = vmatprep.subr.mxu0 0.0
      %4364 = vmatpush1.msra.mxu0 0.0
      %4365 = vmatprep.subr.mxu0 0.0
      %4366 = vmatpush1.msra.mxu0 0.0
      %4367 = vmatprep.subr.mxu0 0.0
      %4368 = vmatpush1.msra.mxu0 0.0
      %4369 = vmatprep.subr.mxu0 0.0
      %4370 = vmatpush1.msra.mxu0 0.0
      %4371 = vmatprep.subr.mxu0 0.0
      %4372 = vmatpush1.msra.mxu0 0.0
      %4373 = vmatprep.subr.mxu0 0.0
      %4374 = vmatpush1.msra.mxu0 0.0
      %4375 = vmatprep.subr.mxu0 0.0
      %4376 = vmatpush1.msra.mxu0 0.0
      %4377 = vmatprep.subr.mxu0 0.0
      %4378 = vmatpush1.msra.mxu0 0.0
      %4379 = vmatprep.subr.mxu0 0.0
      %4380 = vmatpush1.msra.mxu0 0.0
      %4381 = vmatprep.subr.mxu0 0.0
      %4382 = vmatpush1.msra.mxu0 0.0
      %4383 = vmatprep.subr.mxu0 0.0
      %4384 = vmatpush1.msra.mxu0 0.0
      %4385 = vmatprep.subr.mxu0 0.0
      %4386 = vmatpush1.msra.mxu0 0.0
      %4387 = vmatprep.subr.mxu0 0.0
      %4388 = vmatpush1.msra.mxu0 0.0
      %4389 = vmatprep.subr.mxu0 0.0
      %4390 = vmatpush1.msra.mxu0 0.0
      %4391 = vmatprep.subr.mxu0 0.0
      %4392 = vmatpush1.msra.mxu0 0.0
      %4393 = vmatprep.subr.mxu0 0.0
      %4394 = vmatpush1.msra.mxu0 0.0
      %4395 = vmatprep.subr.mxu0 0.0
      %4396 = vmatpush1.msra.mxu0 0.0
      %4397 = vmatprep.subr.mxu0 0.0
      %4398 = vmatpush1.msra.mxu0 0.0
      %4399 = vmatprep.subr.mxu0 0.0
      %4400 = vmatpush1.msra.mxu0 0.0
      %4401 = vmatprep.subr.mxu0 0.0
      %4402 = vmatpush1.msra.mxu0 0.0
      %4403 = vmatprep.subr.mxu0 0.0
      %4404 = vmatpush1.msra.mxu0 0.0
      %4405 = vmatprep.subr.mxu0 0.0
      %4406 = vmatpush1.msra.mxu0 0.0
      %4407 = vmatprep.subr.mxu0 0.0
      %4408 = vmatpush1.msra.mxu0 0.0
      %4409 = vmatprep.mubr.f32.mxu0 0.0
      %4410 = vmatmul.mubr.f32.gmra.mrb[0].mxu0 %v4340
      %v4411 = vpop.f32.mrb[0].mxu0
      %v4412 = vadd.f32 0.0, %v4411
      %v4413 = vpop.f32.mrb[0].mxu0
      %4414 = vdwg.mxu0
      %v4415 = vadd.f32 %v4250, %v4412
      %s4416 = scalar_lea.vmem %s10, 2160
      %v4417 = vld [vmem:[%s4416] sm:$0xff]
      %v4418 = vld [vmem:[%s4416 + $0x8] sm:$0xff]
      %v4419 = vld [vmem:[%s4416 + $0x10] sm:$0xff]
      %v4420 = vld [vmem:[%s4416 + $0x18] sm:$0xff]
      %v4421 = vld [vmem:[%s4416 + $0x20] sm:$0xff]
      %v4422 = vld [vmem:[%s4416 + $0x28] sm:$0xff]
      %v4423 = vld [vmem:[%s4416 + $0x30] sm:$0xff]
      %v4424 = vld [vmem:[%s4416 + $0x38] sm:$0xff]
      %v4425 = vld [vmem:[%s4416 + $0x40] sm:$0xff]
      %v4426 = vld [vmem:[%s4416 + $0x48] sm:$0xff]
      %v4427 = vld [vmem:[%s4416 + $0x50] sm:$0xff]
      %v4428 = vld [vmem:[%s4416 + $0x58] sm:$0xff]
      %v4429 = vld [vmem:[%s4416 + $0x60] sm:$0xff]
      %v4430 = vld [vmem:[%s4416 + $0x68] sm:$0xff]
      %v4431 = vld [vmem:[%s4416 + $0x70] sm:$0xff]
      %4432 = vmatprep.subr.mxu0 0.0
      %4433 = vmatpush1.msra.mxu0 %v4417
      %4434 = vmatprep.subr.mxu0 0.0
      %4435 = vmatpush1.msra.mxu0 %v4418
      %4436 = vmatprep.subr.mxu0 0.0
      %4437 = vmatpush1.msra.mxu0 %v4419
      %4438 = vmatprep.subr.mxu0 0.0
      %4439 = vmatpush1.msra.mxu0 %v4420
      %4440 = vmatprep.subr.mxu0 0.0
      %4441 = vmatpush1.msra.mxu0 %v4421
      %4442 = vmatprep.subr.mxu0 0.0
      %4443 = vmatpush1.msra.mxu0 %v4422
      %4444 = vmatprep.subr.mxu0 0.0
      %4445 = vmatpush1.msra.mxu0 %v4423
      %4446 = vmatprep.subr.mxu0 0.0
      %4447 = vmatpush1.msra.mxu0 %v4424
      %4448 = vmatprep.subr.mxu0 0.0
      %4449 = vmatpush1.msra.mxu0 %v4425
      %4450 = vmatprep.subr.mxu0 0.0
      %4451 = vmatpush1.msra.mxu0 %v4426
      %4452 = vmatprep.subr.mxu0 0.0
      %4453 = vmatpush1.msra.mxu0 %v4427
      %4454 = vmatprep.subr.mxu0 0.0
      %4455 = vmatpush1.msra.mxu0 %v4428
      %4456 = vmatprep.subr.mxu0 0.0
      %4457 = vmatpush1.msra.mxu0 %v4429
      %4458 = vmatprep.subr.mxu0 0.0
      %4459 = vmatpush1.msra.mxu0 %v4430
      %4460 = vmatprep.subr.mxu0 0.0
      %4461 = vmatpush1.msra.mxu0 %v4431
      %4462 = vmatprep.subr.mxu0 0.0
      %4463 = vmatpush1.msra.mxu0 0.0
      %4464 = vmatprep.subr.mxu0 0.0
      %4465 = vmatpush1.msra.mxu0 0.0
      %4466 = vmatprep.subr.mxu0 0.0
      %4467 = vmatpush1.msra.mxu0 0.0
      %4468 = vmatprep.subr.mxu0 0.0
      %4469 = vmatpush1.msra.mxu0 0.0
      %4470 = vmatprep.subr.mxu0 0.0
      %4471 = vmatpush1.msra.mxu0 0.0
      %4472 = vmatprep.subr.mxu0 0.0
      %4473 = vmatpush1.msra.mxu0 0.0
      %4474 = vmatprep.subr.mxu0 0.0
      %4475 = vmatpush1.msra.mxu0 0.0
      %4476 = vmatprep.subr.mxu0 0.0
      %4477 = vmatpush1.msra.mxu0 0.0
      %4478 = vmatprep.subr.mxu0 0.0
      %4479 = vmatpush1.msra.mxu0 0.0
      %4480 = vmatprep.subr.mxu0 0.0
      %4481 = vmatpush1.msra.mxu0 0.0
      %4482 = vmatprep.subr.mxu0 0.0
      %4483 = vmatpush1.msra.mxu0 0.0
      %4484 = vmatprep.subr.mxu0 0.0
      %4485 = vmatpush1.msra.mxu0 0.0
      %4486 = vmatprep.subr.mxu0 0.0
      %4487 = vmatpush1.msra.mxu0 0.0
      %4488 = vmatprep.subr.mxu0 0.0
      %4489 = vmatpush1.msra.mxu0 0.0
      %4490 = vmatprep.subr.mxu0 0.0
      %4491 = vmatpush1.msra.mxu0 0.0
      %4492 = vmatprep.subr.mxu0 0.0
      %4493 = vmatpush1.msra.mxu0 0.0
      %4494 = vmatprep.subr.mxu0 0.0
      %4495 = vmatpush1.msra.mxu0 0.0
      %4496 = vmatprep.mubr.f32.mxu0 0.0
      %4497 = vmatmul.mubr.f32.gmra.mrb[0].mxu0 %v1461
      %v4498 = vpop.f32.mrb[0].mxu0
      %v4499 = vadd.f32 0.0, %v4498
      %v4500 = vpop.f32.mrb[0].mxu0
      %4501 = vdwg.mxu0
      %s4502 = scalar_lea.vmem %s9, 72
      %v4503 = vld [vmem:[%s4502] sm:$0xf]
      %v4505 = vsel %vm1360, %v4503, 0
      %v4508 = vsel %vm849, %v4499, 0
      %4510 = vmatprep.subr.mxu0 0.0
      %4511 = vmatpush1.msra.mxu0 %v4508
      %4512 = vmatprep.subr.mxu0 0.0
      %4513 = vmatpush1.msra.mxu0 0.0
      %4514 = vmatprep.subr.mxu0 0.0
      %4515 = vmatpush1.msra.mxu0 0.0
      %4516 = vmatprep.subr.mxu0 0.0
      %4517 = vmatpush1.msra.mxu0 0.0
      %4518 = vmatprep.subr.mxu0 0.0
      %4519 = vmatpush1.msra.mxu0 0.0
      %4520 = vmatprep.subr.mxu0 0.0
      %4521 = vmatpush1.msra.mxu0 0.0
      %4522 = vmatprep.subr.mxu0 0.0
      %4523 = vmatpush1.msra.mxu0 0.0
      %4524 = vmatprep.subr.mxu0 0.0
      %4525 = vmatpush1.msra.mxu0 0.0
      %4526 = vmatprep.subr.mxu0 0.0
      %4527 = vmatpush1.msra.mxu0 0.0
      %4528 = vmatprep.subr.mxu0 0.0
      %4529 = vmatpush1.msra.mxu0 0.0
      %4530 = vmatprep.subr.mxu0 0.0
      %4531 = vmatpush1.msra.mxu0 0.0
      %4532 = vmatprep.subr.mxu0 0.0
      %4533 = vmatpush1.msra.mxu0 0.0
      %4534 = vmatprep.subr.mxu0 0.0
      %4535 = vmatpush1.msra.mxu0 0.0
      %4536 = vmatprep.subr.mxu0 0.0
      %4537 = vmatpush1.msra.mxu0 0.0
      %4538 = vmatprep.subr.mxu0 0.0
      %4539 = vmatpush1.msra.mxu0 0.0
      %4540 = vmatprep.subr.mxu0 0.0
      %4541 = vmatpush1.msra.mxu0 0.0
      %4542 = vmatprep.subr.mxu0 0.0
      %4543 = vmatpush1.msra.mxu0 0.0
      %4544 = vmatprep.subr.mxu0 0.0
      %4545 = vmatpush1.msra.mxu0 0.0
      %4546 = vmatprep.subr.mxu0 0.0
      %4547 = vmatpush1.msra.mxu0 0.0
      %4548 = vmatprep.subr.mxu0 0.0
      %4549 = vmatpush1.msra.mxu0 0.0
      %4550 = vmatprep.subr.mxu0 0.0
      %4551 = vmatpush1.msra.mxu0 0.0
      %4552 = vmatprep.subr.mxu0 0.0
      %4553 = vmatpush1.msra.mxu0 0.0
      %4554 = vmatprep.subr.mxu0 0.0
      %4555 = vmatpush1.msra.mxu0 0.0
      %4556 = vmatprep.subr.mxu0 0.0
      %4557 = vmatpush1.msra.mxu0 0.0
      %4558 = vmatprep.subr.mxu0 0.0
      %4559 = vmatpush1.msra.mxu0 0.0
      %4560 = vmatprep.subr.mxu0 0.0
      %4561 = vmatpush1.msra.mxu0 0.0
      %4562 = vmatprep.subr.mxu0 0.0
      %4563 = vmatpush1.msra.mxu0 0.0
      %4564 = vmatprep.subr.mxu0 0.0
      %4565 = vmatpush1.msra.mxu0 0.0
      %4566 = vmatprep.subr.mxu0 0.0
      %4567 = vmatpush1.msra.mxu0 0.0
      %4568 = vmatprep.subr.mxu0 0.0
      %4569 = vmatpush1.msra.mxu0 0.0
      %4570 = vmatprep.subr.mxu0 0.0
      %4571 = vmatpush1.msra.mxu0 0.0
      %4572 = vmatprep.subr.mxu0 0.0
      %4573 = vmatpush1.msra.mxu0 0.0
      %4574 = vmatprep.mubr.f32.mxu0 0.0
      %4575 = vmatmul.mubr.f32.gmra.mrb[0].mxu0 %v4505
      %v4576 = vpop.f32.mrb[0].mxu0
      %v4577 = vadd.f32 0.0, %v4576
      %v4578 = vpop.f32.mrb[0].mxu0
      %4579 = vdwg.mxu0
      %v4580 = vadd.f32 %v4415, %v4577
      %s4581 = scalar_lea.vmem %s10, 2280
      %v4582 = vld [vmem:[%s4581] sm:$0xff]
      %v4583 = vld [vmem:[%s4581 + $0x8] sm:$0xff]
      %v4584 = vld [vmem:[%s4581 + $0x10] sm:$0xff]
      %v4585 = vld [vmem:[%s4581 + $0x18] sm:$0xff]
      %v4586 = vld [vmem:[%s4581 + $0x20] sm:$0xff]
      %v4587 = vld [vmem:[%s4581 + $0x28] sm:$0xff]
      %v4588 = vld [vmem:[%s4581 + $0x30] sm:$0xff]
      %v4589 = vld [vmem:[%s4581 + $0x38] sm:$0xff]
      %v4590 = vld [vmem:[%s4581 + $0x40] sm:$0xff]
      %v4591 = vld [vmem:[%s4581 + $0x48] sm:$0xff]
      %v4592 = vld [vmem:[%s4581 + $0x50] sm:$0xff]
      %v4593 = vld [vmem:[%s4581 + $0x58] sm:$0xff]
      %v4594 = vld [vmem:[%s4581 + $0x60] sm:$0xff]
      %v4595 = vld [vmem:[%s4581 + $0x68] sm:$0xff]
      %v4596 = vld [vmem:[%s4581 + $0x70] sm:$0xff]
      %4597 = vmatprep.subr.mxu0 0.0
      %4598 = vmatpush1.msra.mxu0 %v4582
      %4599 = vmatprep.subr.mxu0 0.0
      %4600 = vmatpush1.msra.mxu0 %v4583
      %4601 = vmatprep.subr.mxu0 0.0
      %4602 = vmatpush1.msra.mxu0 %v4584
      %4603 = vmatprep.subr.mxu0 0.0
      %4604 = vmatpush1.msra.mxu0 %v4585
      %4605 = vmatprep.subr.mxu0 0.0
      %4606 = vmatpush1.msra.mxu0 %v4586
      %4607 = vmatprep.subr.mxu0 0.0
      %4608 = vmatpush1.msra.mxu0 %v4587
      %4609 = vmatprep.subr.mxu0 0.0
      %4610 = vmatpush1.msra.mxu0 %v4588
      %4611 = vmatprep.subr.mxu0 0.0
      %4612 = vmatpush1.msra.mxu0 %v4589
      %4613 = vmatprep.subr.mxu0 0.0
      %4614 = vmatpush1.msra.mxu0 %v4590
      %4615 = vmatprep.subr.mxu0 0.0
      %4616 = vmatpush1.msra.mxu0 %v4591
      %4617 = vmatprep.subr.mxu0 0.0
      %4618 = vmatpush1.msra.mxu0 %v4592
      %4619 = vmatprep.subr.mxu0 0.0
      %4620 = vmatpush1.msra.mxu0 %v4593
      %4621 = vmatprep.subr.mxu0 0.0
      %4622 = vmatpush1.msra.mxu0 %v4594
      %4623 = vmatprep.subr.mxu0 0.0
      %4624 = vmatpush1.msra.mxu0 %v4595
      %4625 = vmatprep.subr.mxu0 0.0
      %4626 = vmatpush1.msra.mxu0 %v4596
      %4627 = vmatprep.subr.mxu0 0.0
      %4628 = vmatpush1.msra.mxu0 0.0
      %4629 = vmatprep.subr.mxu0 0.0
      %4630 = vmatpush1.msra.mxu0 0.0
      %4631 = vmatprep.subr.mxu0 0.0
      %4632 = vmatpush1.msra.mxu0 0.0
      %4633 = vmatprep.subr.mxu0 0.0
      %4634 = vmatpush1.msra.mxu0 0.0
      %4635 = vmatprep.subr.mxu0 0.0
      %4636 = vmatpush1.msra.mxu0 0.0
      %4637 = vmatprep.subr.mxu0 0.0
      %4638 = vmatpush1.msra.mxu0 0.0
      %4639 = vmatprep.subr.mxu0 0.0
      %4640 = vmatpush1.msra.mxu0 0.0
      %4641 = vmatprep.subr.mxu0 0.0
      %4642 = vmatpush1.msra.mxu0 0.0
      %4643 = vmatprep.subr.mxu0 0.0
      %4644 = vmatpush1.msra.mxu0 0.0
      %4645 = vmatprep.subr.mxu0 0.0
      %4646 = vmatpush1.msra.mxu0 0.0
      %4647 = vmatprep.subr.mxu0 0.0
      %4648 = vmatpush1.msra.mxu0 0.0
      %4649 = vmatprep.subr.mxu0 0.0
      %4650 = vmatpush1.msra.mxu0 0.0
      %4651 = vmatprep.subr.mxu0 0.0
      %4652 = vmatpush1.msra.mxu0 0.0
      %4653 = vmatprep.subr.mxu0 0.0
      %4654 = vmatpush1.msra.mxu0 0.0
      %4655 = vmatprep.subr.mxu0 0.0
      %4656 = vmatpush1.msra.mxu0 0.0
      %4657 = vmatprep.subr.mxu0 0.0
      %4658 = vmatpush1.msra.mxu0 0.0
      %4659 = vmatprep.subr.mxu0 0.0
      %4660 = vmatpush1.msra.mxu0 0.0
      %4661 = vmatprep.mubr.f32.mxu0 0.0
      %4662 = vmatmul.mubr.f32.gmra.mrb[0].mxu0 %v1461
      %v4663 = vpop.f32.mrb[0].mxu0
      %v4664 = vadd.f32 0.0, %v4663
      %v4665 = vpop.f32.mrb[0].mxu0
      %4666 = vdwg.mxu0
      %s4667 = scalar_lea.vmem %s9, 76
      %v4668 = vld [vmem:[%s4667] sm:$0xf]
      %v4670 = vsel %vm1360, %v4668, 0
      %v4673 = vsel %vm849, %v4664, 0
      %4675 = vmatprep.subr.mxu0 0.0
      %4676 = vmatpush1.msra.mxu0 %v4673
      %4677 = vmatprep.subr.mxu0 0.0
      %4678 = vmatpush1.msra.mxu0 0.0
      %4679 = vmatprep.subr.mxu0 0.0
      %4680 = vmatpush1.msra.mxu0 0.0
      %4681 = vmatprep.subr.mxu0 0.0
      %4682 = vmatpush1.msra.mxu0 0.0
      %4683 = vmatprep.subr.mxu0 0.0
      %4684 = vmatpush1.msra.mxu0 0.0
      %4685 = vmatprep.subr.mxu0 0.0
      %4686 = vmatpush1.msra.mxu0 0.0
      %4687 = vmatprep.subr.mxu0 0.0
      %4688 = vmatpush1.msra.mxu0 0.0
      %4689 = vmatprep.subr.mxu0 0.0
      %4690 = vmatpush1.msra.mxu0 0.0
      %4691 = vmatprep.subr.mxu0 0.0
      %4692 = vmatpush1.msra.mxu0 0.0
      %4693 = vmatprep.subr.mxu0 0.0
      %4694 = vmatpush1.msra.mxu0 0.0
      %4695 = vmatprep.subr.mxu0 0.0
      %4696 = vmatpush1.msra.mxu0 0.0
      %4697 = vmatprep.subr.mxu0 0.0
      %4698 = vmatpush1.msra.mxu0 0.0
      %4699 = vmatprep.subr.mxu0 0.0
      %4700 = vmatpush1.msra.mxu0 0.0
      %4701 = vmatprep.subr.mxu0 0.0
      %4702 = vmatpush1.msra.mxu0 0.0
      %4703 = vmatprep.subr.mxu0 0.0
      %4704 = vmatpush1.msra.mxu0 0.0
      %4705 = vmatprep.subr.mxu0 0.0
      %4706 = vmatpush1.msra.mxu0 0.0
      %4707 = vmatprep.subr.mxu0 0.0
      %4708 = vmatpush1.msra.mxu0 0.0
      %4709 = vmatprep.subr.mxu0 0.0
      %4710 = vmatpush1.msra.mxu0 0.0
      %4711 = vmatprep.subr.mxu0 0.0
      %4712 = vmatpush1.msra.mxu0 0.0
      %4713 = vmatprep.subr.mxu0 0.0
      %4714 = vmatpush1.msra.mxu0 0.0
      %4715 = vmatprep.subr.mxu0 0.0
      %4716 = vmatpush1.msra.mxu0 0.0
      %4717 = vmatprep.subr.mxu0 0.0
      %4718 = vmatpush1.msra.mxu0 0.0
      %4719 = vmatprep.subr.mxu0 0.0
      %4720 = vmatpush1.msra.mxu0 0.0
      %4721 = vmatprep.subr.mxu0 0.0
      %4722 = vmatpush1.msra.mxu0 0.0
      %4723 = vmatprep.subr.mxu0 0.0
      %4724 = vmatpush1.msra.mxu0 0.0
      %4725 = vmatprep.subr.mxu0 0.0
      %4726 = vmatpush1.msra.mxu0 0.0
      %4727 = vmatprep.subr.mxu0 0.0
      %4728 = vmatpush1.msra.mxu0 0.0
      %4729 = vmatprep.subr.mxu0 0.0
      %4730 = vmatpush1.msra.mxu0 0.0
      %4731 = vmatprep.subr.mxu0 0.0
      %4732 = vmatpush1.msra.mxu0 0.0
      %4733 = vmatprep.subr.mxu0 0.0
      %4734 = vmatpush1.msra.mxu0 0.0
      %4735 = vmatprep.subr.mxu0 0.0
      %4736 = vmatpush1.msra.mxu0 0.0
      %4737 = vmatprep.subr.mxu0 0.0
      %4738 = vmatpush1.msra.mxu0 0.0
      %4739 = vmatprep.mubr.f32.mxu0 0.0
      %4740 = vmatmul.mubr.f32.gmra.mrb[0].mxu0 %v4670
      %v4741 = vpop.f32.mrb[0].mxu0
      %v4742 = vadd.f32 0.0, %v4741
      %v4743 = vpop.f32.mrb[0].mxu0
      %4744 = vdwg.mxu0
      %v4745 = vadd.f32 %v4580, %v4742
      %s4746 = scalar_lea.vmem %s10, 2400
      %v4747 = vld [vmem:[%s4746] sm:$0xff]
      %v4748 = vld [vmem:[%s4746 + $0x8] sm:$0xff]
      %v4749 = vld [vmem:[%s4746 + $0x10] sm:$0xff]
      %v4750 = vld [vmem:[%s4746 + $0x18] sm:$0xff]
      %v4751 = vld [vmem:[%s4746 + $0x20] sm:$0xff]
      %v4752 = vld [vmem:[%s4746 + $0x28] sm:$0xff]
      %v4753 = vld [vmem:[%s4746 + $0x30] sm:$0xff]
      %v4754 = vld [vmem:[%s4746 + $0x38] sm:$0xff]
      %v4755 = vld [vmem:[%s4746 + $0x40] sm:$0xff]
      %v4756 = vld [vmem:[%s4746 + $0x48] sm:$0xff]
      %v4757 = vld [vmem:[%s4746 + $0x50] sm:$0xff]
      %v4758 = vld [vmem:[%s4746 + $0x58] sm:$0xff]
      %v4759 = vld [vmem:[%s4746 + $0x60] sm:$0xff]
      %v4760 = vld [vmem:[%s4746 + $0x68] sm:$0xff]
      %v4761 = vld [vmem:[%s4746 + $0x70] sm:$0xff]
      %4762 = vmatprep.subr.mxu0 0.0
      %4763 = vmatpush1.msra.mxu0 %v4747
      %4764 = vmatprep.subr.mxu0 0.0
      %4765 = vmatpush1.msra.mxu0 %v4748
      %4766 = vmatprep.subr.mxu0 0.0
      %4767 = vmatpush1.msra.mxu0 %v4749
      %4768 = vmatprep.subr.mxu0 0.0
      %4769 = vmatpush1.msra.mxu0 %v4750
      %4770 = vmatprep.subr.mxu0 0.0
      %4771 = vmatpush1.msra.mxu0 %v4751
      %4772 = vmatprep.subr.mxu0 0.0
      %4773 = vmatpush1.msra.mxu0 %v4752
      %4774 = vmatprep.subr.mxu0 0.0
      %4775 = vmatpush1.msra.mxu0 %v4753
      %4776 = vmatprep.subr.mxu0 0.0
      %4777 = vmatpush1.msra.mxu0 %v4754
      %4778 = vmatprep.subr.mxu0 0.0
      %4779 = vmatpush1.msra.mxu0 %v4755
      %4780 = vmatprep.subr.mxu0 0.0
      %4781 = vmatpush1.msra.mxu0 %v4756
      %4782 = vmatprep.subr.mxu0 0.0
      %4783 = vmatpush1.msra.mxu0 %v4757
      %4784 = vmatprep.subr.mxu0 0.0
      %4785 = vmatpush1.msra.mxu0 %v4758
      %4786 = vmatprep.subr.mxu0 0.0
      %4787 = vmatpush1.msra.mxu0 %v4759
      %4788 = vmatprep.subr.mxu0 0.0
      %4789 = vmatpush1.msra.mxu0 %v4760
      %4790 = vmatprep.subr.mxu0 0.0
      %4791 = vmatpush1.msra.mxu0 %v4761
      %4792 = vmatprep.subr.mxu0 0.0
      %4793 = vmatpush1.msra.mxu0 0.0
      %4794 = vmatprep.subr.mxu0 0.0
      %4795 = vmatpush1.msra.mxu0 0.0
      %4796 = vmatprep.subr.mxu0 0.0
      %4797 = vmatpush1.msra.mxu0 0.0
      %4798 = vmatprep.subr.mxu0 0.0
      %4799 = vmatpush1.msra.mxu0 0.0
      %4800 = vmatprep.subr.mxu0 0.0
      %4801 = vmatpush1.msra.mxu0 0.0
      %4802 = vmatprep.subr.mxu0 0.0
      %4803 = vmatpush1.msra.mxu0 0.0
      %4804 = vmatprep.subr.mxu0 0.0
      %4805 = vmatpush1.msra.mxu0 0.0
      %4806 = vmatprep.subr.mxu0 0.0
      %4807 = vmatpush1.msra.mxu0 0.0
      %4808 = vmatprep.subr.mxu0 0.0
      %4809 = vmatpush1.msra.mxu0 0.0
      %4810 = vmatprep.subr.mxu0 0.0
      %4811 = vmatpush1.msra.mxu0 0.0
      %4812 = vmatprep.subr.mxu0 0.0
      %4813 = vmatpush1.msra.mxu0 0.0
      %4814 = vmatprep.subr.mxu0 0.0
      %4815 = vmatpush1.msra.mxu0 0.0
      %4816 = vmatprep.subr.mxu0 0.0
      %4817 = vmatpush1.msra.mxu0 0.0
      %4818 = vmatprep.subr.mxu0 0.0
      %4819 = vmatpush1.msra.mxu0 0.0
      %4820 = vmatprep.subr.mxu0 0.0
      %4821 = vmatpush1.msra.mxu0 0.0
      %4822 = vmatprep.subr.mxu0 0.0
      %4823 = vmatpush1.msra.mxu0 0.0
      %4824 = vmatprep.subr.mxu0 0.0
      %4825 = vmatpush1.msra.mxu0 0.0
      %4826 = vmatprep.mubr.f32.mxu0 0.0
      %4827 = vmatmul.mubr.f32.gmra.mrb[0].mxu0 %v1461
      %v4828 = vpop.f32.mrb[0].mxu0
      %v4829 = vadd.f32 0.0, %v4828
      %v4830 = vpop.f32.mrb[0].mxu0
      %4831 = vdwg.mxu0
      %s4832 = scalar_lea.vmem %s9, 80
      %v4833 = vld [vmem:[%s4832] sm:$0xf]
      %v4835 = vsel %vm1360, %v4833, 0
      %v4838 = vsel %vm849, %v4829, 0
      %4840 = vmatprep.subr.mxu0 0.0
      %4841 = vmatpush1.msra.mxu0 %v4838
      %4842 = vmatprep.subr.mxu0 0.0
      %4843 = vmatpush1.msra.mxu0 0.0
      %4844 = vmatprep.subr.mxu0 0.0
      %4845 = vmatpush1.msra.mxu0 0.0
      %4846 = vmatprep.subr.mxu0 0.0
      %4847 = vmatpush1.msra.mxu0 0.0
      %4848 = vmatprep.subr.mxu0 0.0
      %4849 = vmatpush1.msra.mxu0 0.0
      %4850 = vmatprep.subr.mxu0 0.0
      %4851 = vmatpush1.msra.mxu0 0.0
      %4852 = vmatprep.subr.mxu0 0.0
      %4853 = vmatpush1.msra.mxu0 0.0
      %4854 = vmatprep.subr.mxu0 0.0
      %4855 = vmatpush1.msra.mxu0 0.0
      %4856 = vmatprep.subr.mxu0 0.0
      %4857 = vmatpush1.msra.mxu0 0.0
      %4858 = vmatprep.subr.mxu0 0.0
      %4859 = vmatpush1.msra.mxu0 0.0
      %4860 = vmatprep.subr.mxu0 0.0
      %4861 = vmatpush1.msra.mxu0 0.0
      %4862 = vmatprep.subr.mxu0 0.0
      %4863 = vmatpush1.msra.mxu0 0.0
      %4864 = vmatprep.subr.mxu0 0.0
      %4865 = vmatpush1.msra.mxu0 0.0
      %4866 = vmatprep.subr.mxu0 0.0
      %4867 = vmatpush1.msra.mxu0 0.0
      %4868 = vmatprep.subr.mxu0 0.0
      %4869 = vmatpush1.msra.mxu0 0.0
      %4870 = vmatprep.subr.mxu0 0.0
      %4871 = vmatpush1.msra.mxu0 0.0
      %4872 = vmatprep.subr.mxu0 0.0
      %4873 = vmatpush1.msra.mxu0 0.0
      %4874 = vmatprep.subr.mxu0 0.0
      %4875 = vmatpush1.msra.mxu0 0.0
      %4876 = vmatprep.subr.mxu0 0.0
      %4877 = vmatpush1.msra.mxu0 0.0
      %4878 = vmatprep.subr.mxu0 0.0
      %4879 = vmatpush1.msra.mxu0 0.0
      %4880 = vmatprep.subr.mxu0 0.0
      %4881 = vmatpush1.msra.mxu0 0.0
      %4882 = vmatprep.subr.mxu0 0.0
      %4883 = vmatpush1.msra.mxu0 0.0
      %4884 = vmatprep.subr.mxu0 0.0
      %4885 = vmatpush1.msra.mxu0 0.0
      %4886 = vmatprep.subr.mxu0 0.0
      %4887 = vmatpush1.msra.mxu0 0.0
      %4888 = vmatprep.subr.mxu0 0.0
      %4889 = vmatpush1.msra.mxu0 0.0
      %4890 = vmatprep.subr.mxu0 0.0
      %4891 = vmatpush1.msra.mxu0 0.0
      %4892 = vmatprep.subr.mxu0 0.0
      %4893 = vmatpush1.msra.mxu0 0.0
      %4894 = vmatprep.subr.mxu0 0.0
      %4895 = vmatpush1.msra.mxu0 0.0
      %4896 = vmatprep.subr.mxu0 0.0
      %4897 = vmatpush1.msra.mxu0 0.0
      %4898 = vmatprep.subr.mxu0 0.0
      %4899 = vmatpush1.msra.mxu0 0.0
      %4900 = vmatprep.subr.mxu0 0.0
      %4901 = vmatpush1.msra.mxu0 0.0
      %4902 = vmatprep.subr.mxu0 0.0
      %4903 = vmatpush1.msra.mxu0 0.0
      %4904 = vmatprep.mubr.f32.mxu0 0.0
      %4905 = vmatmul.mubr.f32.gmra.mrb[0].mxu0 %v4835
      %v4906 = vpop.f32.mrb[0].mxu0
      %v4907 = vadd.f32 0.0, %v4906
      %v4908 = vpop.f32.mrb[0].mxu0
      %4909 = vdwg.mxu0
      %v4910 = vadd.f32 %v4745, %v4907
      %s4911 = scalar_lea.vmem %s10, 2520
      %v4912 = vld [vmem:[%s4911] sm:$0xff]
      %v4913 = vld [vmem:[%s4911 + $0x8] sm:$0xff]
      %v4914 = vld [vmem:[%s4911 + $0x10] sm:$0xff]
      %v4915 = vld [vmem:[%s4911 + $0x18] sm:$0xff]
      %v4916 = vld [vmem:[%s4911 + $0x20] sm:$0xff]
      %v4917 = vld [vmem:[%s4911 + $0x28] sm:$0xff]
      %v4918 = vld [vmem:[%s4911 + $0x30] sm:$0xff]
      %v4919 = vld [vmem:[%s4911 + $0x38] sm:$0xff]
      %v4920 = vld [vmem:[%s4911 + $0x40] sm:$0xff]
      %v4921 = vld [vmem:[%s4911 + $0x48] sm:$0xff]
      %v4922 = vld [vmem:[%s4911 + $0x50] sm:$0xff]
      %v4923 = vld [vmem:[%s4911 + $0x58] sm:$0xff]
      %v4924 = vld [vmem:[%s4911 + $0x60] sm:$0xff]
      %v4925 = vld [vmem:[%s4911 + $0x68] sm:$0xff]
      %v4926 = vld [vmem:[%s4911 + $0x70] sm:$0xff]
      %4927 = vmatprep.subr.mxu0 0.0
      %4928 = vmatpush1.msra.mxu0 %v4912
      %4929 = vmatprep.subr.mxu0 0.0
      %4930 = vmatpush1.msra.mxu0 %v4913
      %4931 = vmatprep.subr.mxu0 0.0
      %4932 = vmatpush1.msra.mxu0 %v4914
      %4933 = vmatprep.subr.mxu0 0.0
      %4934 = vmatpush1.msra.mxu0 %v4915
      %4935 = vmatprep.subr.mxu0 0.0
      %4936 = vmatpush1.msra.mxu0 %v4916
      %4937 = vmatprep.subr.mxu0 0.0
      %4938 = vmatpush1.msra.mxu0 %v4917
      %4939 = vmatprep.subr.mxu0 0.0
      %4940 = vmatpush1.msra.mxu0 %v4918
      %4941 = vmatprep.subr.mxu0 0.0
      %4942 = vmatpush1.msra.mxu0 %v4919
      %4943 = vmatprep.subr.mxu0 0.0
      %4944 = vmatpush1.msra.mxu0 %v4920
      %4945 = vmatprep.subr.mxu0 0.0
      %4946 = vmatpush1.msra.mxu0 %v4921
      %4947 = vmatprep.subr.mxu0 0.0
      %4948 = vmatpush1.msra.mxu0 %v4922
      %4949 = vmatprep.subr.mxu0 0.0
      %4950 = vmatpush1.msra.mxu0 %v4923
      %4951 = vmatprep.subr.mxu0 0.0
      %4952 = vmatpush1.msra.mxu0 %v4924
      %4953 = vmatprep.subr.mxu0 0.0
      %4954 = vmatpush1.msra.mxu0 %v4925
      %4955 = vmatprep.subr.mxu0 0.0
      %4956 = vmatpush1.msra.mxu0 %v4926
      %4957 = vmatprep.subr.mxu0 0.0
      %4958 = vmatpush1.msra.mxu0 0.0
      %4959 = vmatprep.subr.mxu0 0.0
      %4960 = vmatpush1.msra.mxu0 0.0
      %4961 = vmatprep.subr.mxu0 0.0
      %4962 = vmatpush1.msra.mxu0 0.0
      %4963 = vmatprep.subr.mxu0 0.0
      %4964 = vmatpush1.msra.mxu0 0.0
      %4965 = vmatprep.subr.mxu0 0.0
      %4966 = vmatpush1.msra.mxu0 0.0
      %4967 = vmatprep.subr.mxu0 0.0
      %4968 = vmatpush1.msra.mxu0 0.0
      %4969 = vmatprep.subr.mxu0 0.0
      %4970 = vmatpush1.msra.mxu0 0.0
      %4971 = vmatprep.subr.mxu0 0.0
      %4972 = vmatpush1.msra.mxu0 0.0
      %4973 = vmatprep.subr.mxu0 0.0
      %4974 = vmatpush1.msra.mxu0 0.0
      %4975 = vmatprep.subr.mxu0 0.0
      %4976 = vmatpush1.msra.mxu0 0.0
      %4977 = vmatprep.subr.mxu0 0.0
      %4978 = vmatpush1.msra.mxu0 0.0
      %4979 = vmatprep.subr.mxu0 0.0
      %4980 = vmatpush1.msra.mxu0 0.0
      %4981 = vmatprep.subr.mxu0 0.0
      %4982 = vmatpush1.msra.mxu0 0.0
      %4983 = vmatprep.subr.mxu0 0.0
      %4984 = vmatpush1.msra.mxu0 0.0
      %4985 = vmatprep.subr.mxu0 0.0
      %4986 = vmatpush1.msra.mxu0 0.0
      %4987 = vmatprep.subr.mxu0 0.0
      %4988 = vmatpush1.msra.mxu0 0.0
      %4989 = vmatprep.subr.mxu0 0.0
      %4990 = vmatpush1.msra.mxu0 0.0
      %4991 = vmatprep.mubr.f32.mxu0 0.0
      %4992 = vmatmul.mubr.f32.gmra.mrb[0].mxu0 %v1461
      %v4993 = vpop.f32.mrb[0].mxu0
      %v4994 = vadd.f32 0.0, %v4993
      %v4995 = vpop.f32.mrb[0].mxu0
      %4996 = vdwg.mxu0
      %s4997 = scalar_lea.vmem %s9, 84
      %v4998 = vld [vmem:[%s4997] sm:$0xf]
      %v5000 = vsel %vm1360, %v4998, 0
      %v5003 = vsel %vm849, %v4994, 0
      %5005 = vmatprep.subr.mxu0 0.0
      %5006 = vmatpush1.msra.mxu0 %v5003
      %5007 = vmatprep.subr.mxu0 0.0
      %5008 = vmatpush1.msra.mxu0 0.0
      %5009 = vmatprep.subr.mxu0 0.0
      %5010 = vmatpush1.msra.mxu0 0.0
      %5011 = vmatprep.subr.mxu0 0.0
      %5012 = vmatpush1.msra.mxu0 0.0
      %5013 = vmatprep.subr.mxu0 0.0
      %5014 = vmatpush1.msra.mxu0 0.0
      %5015 = vmatprep.subr.mxu0 0.0
      %5016 = vmatpush1.msra.mxu0 0.0
      %5017 = vmatprep.subr.mxu0 0.0
      %5018 = vmatpush1.msra.mxu0 0.0
      %5019 = vmatprep.subr.mxu0 0.0
      %5020 = vmatpush1.msra.mxu0 0.0
      %5021 = vmatprep.subr.mxu0 0.0
      %5022 = vmatpush1.msra.mxu0 0.0
      %5023 = vmatprep.subr.mxu0 0.0
      %5024 = vmatpush1.msra.mxu0 0.0
      %5025 = vmatprep.subr.mxu0 0.0
      %5026 = vmatpush1.msra.mxu0 0.0
      %5027 = vmatprep.subr.mxu0 0.0
      %5028 = vmatpush1.msra.mxu0 0.0
      %5029 = vmatprep.subr.mxu0 0.0
      %5030 = vmatpush1.msra.mxu0 0.0
      %5031 = vmatprep.subr.mxu0 0.0
      %5032 = vmatpush1.msra.mxu0 0.0
      %5033 = vmatprep.subr.mxu0 0.0
      %5034 = vmatpush1.msra.mxu0 0.0
      %5035 = vmatprep.subr.mxu0 0.0
      %5036 = vmatpush1.msra.mxu0 0.0
      %5037 = vmatprep.subr.mxu0 0.0
      %5038 = vmatpush1.msra.mxu0 0.0
      %5039 = vmatprep.subr.mxu0 0.0
      %5040 = vmatpush1.msra.mxu0 0.0
      %5041 = vmatprep.subr.mxu0 0.0
      %5042 = vmatpush1.msra.mxu0 0.0
      %5043 = vmatprep.subr.mxu0 0.0
      %5044 = vmatpush1.msra.mxu0 0.0
      %5045 = vmatprep.subr.mxu0 0.0
      %5046 = vmatpush1.msra.mxu0 0.0
      %5047 = vmatprep.subr.mxu0 0.0
      %5048 = vmatpush1.msra.mxu0 0.0
      %5049 = vmatprep.subr.mxu0 0.0
      %5050 = vmatpush1.msra.mxu0 0.0
      %5051 = vmatprep.subr.mxu0 0.0
      %5052 = vmatpush1.msra.mxu0 0.0
      %5053 = vmatprep.subr.mxu0 0.0
      %5054 = vmatpush1.msra.mxu0 0.0
      %5055 = vmatprep.subr.mxu0 0.0
      %5056 = vmatpush1.msra.mxu0 0.0
      %5057 = vmatprep.subr.mxu0 0.0
      %5058 = vmatpush1.msra.mxu0 0.0
      %5059 = vmatprep.subr.mxu0 0.0
      %5060 = vmatpush1.msra.mxu0 0.0
      %5061 = vmatprep.subr.mxu0 0.0
      %5062 = vmatpush1.msra.mxu0 0.0
      %5063 = vmatprep.subr.mxu0 0.0
      %5064 = vmatpush1.msra.mxu0 0.0
      %5065 = vmatprep.subr.mxu0 0.0
      %5066 = vmatpush1.msra.mxu0 0.0
      %5067 = vmatprep.subr.mxu0 0.0
      %5068 = vmatpush1.msra.mxu0 0.0
      %5069 = vmatprep.mubr.f32.mxu0 0.0
      %5070 = vmatmul.mubr.f32.gmra.mrb[0].mxu0 %v5000
      %v5071 = vpop.f32.mrb[0].mxu0
      %v5072 = vadd.f32 0.0, %v5071
      %v5073 = vpop.f32.mrb[0].mxu0
      %5074 = vdwg.mxu0
      %v5075 = vadd.f32 %v4910, %v5072
      %s5076 = scalar_lea.vmem %s10, 2640
      %v5077 = vld [vmem:[%s5076] sm:$0xff]
      %v5078 = vld [vmem:[%s5076 + $0x8] sm:$0xff]
      %v5079 = vld [vmem:[%s5076 + $0x10] sm:$0xff]
      %v5080 = vld [vmem:[%s5076 + $0x18] sm:$0xff]
      %v5081 = vld [vmem:[%s5076 + $0x20] sm:$0xff]
      %v5082 = vld [vmem:[%s5076 + $0x28] sm:$0xff]
      %v5083 = vld [vmem:[%s5076 + $0x30] sm:$0xff]
      %v5084 = vld [vmem:[%s5076 + $0x38] sm:$0xff]
      %v5085 = vld [vmem:[%s5076 + $0x40] sm:$0xff]
      %v5086 = vld [vmem:[%s5076 + $0x48] sm:$0xff]
      %v5087 = vld [vmem:[%s5076 + $0x50] sm:$0xff]
      %v5088 = vld [vmem:[%s5076 + $0x58] sm:$0xff]
      %v5089 = vld [vmem:[%s5076 + $0x60] sm:$0xff]
      %v5090 = vld [vmem:[%s5076 + $0x68] sm:$0xff]
      %v5091 = vld [vmem:[%s5076 + $0x70] sm:$0xff]
      %5092 = vmatprep.subr.mxu0 0.0
      %5093 = vmatpush1.msra.mxu0 %v5077
      %5094 = vmatprep.subr.mxu0 0.0
      %5095 = vmatpush1.msra.mxu0 %v5078
      %5096 = vmatprep.subr.mxu0 0.0
      %5097 = vmatpush1.msra.mxu0 %v5079
      %5098 = vmatprep.subr.mxu0 0.0
      %5099 = vmatpush1.msra.mxu0 %v5080
      %5100 = vmatprep.subr.mxu0 0.0
      %5101 = vmatpush1.msra.mxu0 %v5081
      %5102 = vmatprep.subr.mxu0 0.0
      %5103 = vmatpush1.msra.mxu0 %v5082
      %5104 = vmatprep.subr.mxu0 0.0
      %5105 = vmatpush1.msra.mxu0 %v5083
      %5106 = vmatprep.subr.mxu0 0.0
      %5107 = vmatpush1.msra.mxu0 %v5084
      %5108 = vmatprep.subr.mxu0 0.0
      %5109 = vmatpush1.msra.mxu0 %v5085
      %5110 = vmatprep.subr.mxu0 0.0
      %5111 = vmatpush1.msra.mxu0 %v5086
      %5112 = vmatprep.subr.mxu0 0.0
      %5113 = vmatpush1.msra.mxu0 %v5087
      %5114 = vmatprep.subr.mxu0 0.0
      %5115 = vmatpush1.msra.mxu0 %v5088
      %5116 = vmatprep.subr.mxu0 0.0
      %5117 = vmatpush1.msra.mxu0 %v5089
      %5118 = vmatprep.subr.mxu0 0.0
      %5119 = vmatpush1.msra.mxu0 %v5090
      %5120 = vmatprep.subr.mxu0 0.0
      %5121 = vmatpush1.msra.mxu0 %v5091
      %5122 = vmatprep.subr.mxu0 0.0
      %5123 = vmatpush1.msra.mxu0 0.0
      %5124 = vmatprep.subr.mxu0 0.0
      %5125 = vmatpush1.msra.mxu0 0.0
      %5126 = vmatprep.subr.mxu0 0.0
      %5127 = vmatpush1.msra.mxu0 0.0
      %5128 = vmatprep.subr.mxu0 0.0
      %5129 = vmatpush1.msra.mxu0 0.0
      %5130 = vmatprep.subr.mxu0 0.0
      %5131 = vmatpush1.msra.mxu0 0.0
      %5132 = vmatprep.subr.mxu0 0.0
      %5133 = vmatpush1.msra.mxu0 0.0
      %5134 = vmatprep.subr.mxu0 0.0
      %5135 = vmatpush1.msra.mxu0 0.0
      %5136 = vmatprep.subr.mxu0 0.0
      %5137 = vmatpush1.msra.mxu0 0.0
      %5138 = vmatprep.subr.mxu0 0.0
      %5139 = vmatpush1.msra.mxu0 0.0
      %5140 = vmatprep.subr.mxu0 0.0
      %5141 = vmatpush1.msra.mxu0 0.0
      %5142 = vmatprep.subr.mxu0 0.0
      %5143 = vmatpush1.msra.mxu0 0.0
      %5144 = vmatprep.subr.mxu0 0.0
      %5145 = vmatpush1.msra.mxu0 0.0
      %5146 = vmatprep.subr.mxu0 0.0
      %5147 = vmatpush1.msra.mxu0 0.0
      %5148 = vmatprep.subr.mxu0 0.0
      %5149 = vmatpush1.msra.mxu0 0.0
      %5150 = vmatprep.subr.mxu0 0.0
      %5151 = vmatpush1.msra.mxu0 0.0
      %5152 = vmatprep.subr.mxu0 0.0
      %5153 = vmatpush1.msra.mxu0 0.0
      %5154 = vmatprep.subr.mxu0 0.0
      %5155 = vmatpush1.msra.mxu0 0.0
      %5156 = vmatprep.mubr.f32.mxu0 0.0
      %5157 = vmatmul.mubr.f32.gmra.mrb[0].mxu0 %v1461
      %v5158 = vpop.f32.mrb[0].mxu0
      %v5159 = vadd.f32 0.0, %v5158
      %v5160 = vpop.f32.mrb[0].mxu0
      %5161 = vdwg.mxu0
      %s5162 = scalar_lea.vmem %s9, 88
      %v5163 = vld [vmem:[%s5162] sm:$0xf]
      %v5165 = vsel %vm1360, %v5163, 0
      %v5168 = vsel %vm849, %v5159, 0
      %5170 = vmatprep.subr.mxu0 0.0
      %5171 = vmatpush1.msra.mxu0 %v5168
      %5172 = vmatprep.subr.mxu0 0.0
      %5173 = vmatpush1.msra.mxu0 0.0
      %5174 = vmatprep.subr.mxu0 0.0
      %5175 = vmatpush1.msra.mxu0 0.0
      %5176 = vmatprep.subr.mxu0 0.0
      %5177 = vmatpush1.msra.mxu0 0.0
      %5178 = vmatprep.subr.mxu0 0.0
      %5179 = vmatpush1.msra.mxu0 0.0
      %5180 = vmatprep.subr.mxu0 0.0
      %5181 = vmatpush1.msra.mxu0 0.0
      %5182 = vmatprep.subr.mxu0 0.0
      %5183 = vmatpush1.msra.mxu0 0.0
      %5184 = vmatprep.subr.mxu0 0.0
      %5185 = vmatpush1.msra.mxu0 0.0
      %5186 = vmatprep.subr.mxu0 0.0
      %5187 = vmatpush1.msra.mxu0 0.0
      %5188 = vmatprep.subr.mxu0 0.0
      %5189 = vmatpush1.msra.mxu0 0.0
      %5190 = vmatprep.subr.mxu0 0.0
      %5191 = vmatpush1.msra.mxu0 0.0
      %5192 = vmatprep.subr.mxu0 0.0
      %5193 = vmatpush1.msra.mxu0 0.0
      %5194 = vmatprep.subr.mxu0 0.0
      %5195 = vmatpush1.msra.mxu0 0.0
      %5196 = vmatprep.subr.mxu0 0.0
      %5197 = vmatpush1.msra.mxu0 0.0
      %5198 = vmatprep.subr.mxu0 0.0
      %5199 = vmatpush1.msra.mxu0 0.0
      %5200 = vmatprep.subr.mxu0 0.0
      %5201 = vmatpush1.msra.mxu0 0.0
      %5202 = vmatprep.subr.mxu0 0.0
      %5203 = vmatpush1.msra.mxu0 0.0
      %5204 = vmatprep.subr.mxu0 0.0
      %5205 = vmatpush1.msra.mxu0 0.0
      %5206 = vmatprep.subr.mxu0 0.0
      %5207 = vmatpush1.msra.mxu0 0.0
      %5208 = vmatprep.subr.mxu0 0.0
      %5209 = vmatpush1.msra.mxu0 0.0
      %5210 = vmatprep.subr.mxu0 0.0
      %5211 = vmatpush1.msra.mxu0 0.0
      %5212 = vmatprep.subr.mxu0 0.0
      %5213 = vmatpush1.msra.mxu0 0.0
      %5214 = vmatprep.subr.mxu0 0.0
      %5215 = vmatpush1.msra.mxu0 0.0
      %5216 = vmatprep.subr.mxu0 0.0
      %5217 = vmatpush1.msra.mxu0 0.0
      %5218 = vmatprep.subr.mxu0 0.0
      %5219 = vmatpush1.msra.mxu0 0.0
      %5220 = vmatprep.subr.mxu0 0.0
      %5221 = vmatpush1.msra.mxu0 0.0
      %5222 = vmatprep.subr.mxu0 0.0
      %5223 = vmatpush1.msra.mxu0 0.0
      %5224 = vmatprep.subr.mxu0 0.0
      %5225 = vmatpush1.msra.mxu0 0.0
      %5226 = vmatprep.subr.mxu0 0.0
      %5227 = vmatpush1.msra.mxu0 0.0
      %5228 = vmatprep.subr.mxu0 0.0
      %5229 = vmatpush1.msra.mxu0 0.0
      %5230 = vmatprep.subr.mxu0 0.0
      %5231 = vmatpush1.msra.mxu0 0.0
      %5232 = vmatprep.subr.mxu0 0.0
      %5233 = vmatpush1.msra.mxu0 0.0
      %5234 = vmatprep.mubr.f32.mxu0 0.0
      %5235 = vmatmul.mubr.f32.gmra.mrb[0].mxu0 %v5165
      %v5236 = vpop.f32.mrb[0].mxu0
      %v5237 = vadd.f32 0.0, %v5236
      %v5238 = vpop.f32.mrb[0].mxu0
      %5239 = vdwg.mxu0
      %v5240 = vadd.f32 %v5075, %v5237
      %s5241 = scalar_lea.vmem %s10, 2760
      %v5242 = vld [vmem:[%s5241] sm:$0xff]
      %v5243 = vld [vmem:[%s5241 + $0x8] sm:$0xff]
      %v5244 = vld [vmem:[%s5241 + $0x10] sm:$0xff]
      %v5245 = vld [vmem:[%s5241 + $0x18] sm:$0xff]
      %v5246 = vld [vmem:[%s5241 + $0x20] sm:$0xff]
      %v5247 = vld [vmem:[%s5241 + $0x28] sm:$0xff]
      %v5248 = vld [vmem:[%s5241 + $0x30] sm:$0xff]
      %v5249 = vld [vmem:[%s5241 + $0x38] sm:$0xff]
      %v5250 = vld [vmem:[%s5241 + $0x40] sm:$0xff]
      %v5251 = vld [vmem:[%s5241 + $0x48] sm:$0xff]
      %v5252 = vld [vmem:[%s5241 + $0x50] sm:$0xff]
      %v5253 = vld [vmem:[%s5241 + $0x58] sm:$0xff]
      %v5254 = vld [vmem:[%s5241 + $0x60] sm:$0xff]
      %v5255 = vld [vmem:[%s5241 + $0x68] sm:$0xff]
      %v5256 = vld [vmem:[%s5241 + $0x70] sm:$0xff]
      %5257 = vmatprep.subr.mxu0 0.0
      %5258 = vmatpush1.msra.mxu0 %v5242
      %5259 = vmatprep.subr.mxu0 0.0
      %5260 = vmatpush1.msra.mxu0 %v5243
      %5261 = vmatprep.subr.mxu0 0.0
      %5262 = vmatpush1.msra.mxu0 %v5244
      %5263 = vmatprep.subr.mxu0 0.0
      %5264 = vmatpush1.msra.mxu0 %v5245
      %5265 = vmatprep.subr.mxu0 0.0
      %5266 = vmatpush1.msra.mxu0 %v5246
      %5267 = vmatprep.subr.mxu0 0.0
      %5268 = vmatpush1.msra.mxu0 %v5247
      %5269 = vmatprep.subr.mxu0 0.0
      %5270 = vmatpush1.msra.mxu0 %v5248
      %5271 = vmatprep.subr.mxu0 0.0
      %5272 = vmatpush1.msra.mxu0 %v5249
      %5273 = vmatprep.subr.mxu0 0.0
      %5274 = vmatpush1.msra.mxu0 %v5250
      %5275 = vmatprep.subr.mxu0 0.0
      %5276 = vmatpush1.msra.mxu0 %v5251
      %5277 = vmatprep.subr.mxu0 0.0
      %5278 = vmatpush1.msra.mxu0 %v5252
      %5279 = vmatprep.subr.mxu0 0.0
      %5280 = vmatpush1.msra.mxu0 %v5253
      %5281 = vmatprep.subr.mxu0 0.0
      %5282 = vmatpush1.msra.mxu0 %v5254
      %5283 = vmatprep.subr.mxu0 0.0
      %5284 = vmatpush1.msra.mxu0 %v5255
      %5285 = vmatprep.subr.mxu0 0.0
      %5286 = vmatpush1.msra.mxu0 %v5256
      %5287 = vmatprep.subr.mxu0 0.0
      %5288 = vmatpush1.msra.mxu0 0.0
      %5289 = vmatprep.subr.mxu0 0.0
      %5290 = vmatpush1.msra.mxu0 0.0
      %5291 = vmatprep.subr.mxu0 0.0
      %5292 = vmatpush1.msra.mxu0 0.0
      %5293 = vmatprep.subr.mxu0 0.0
      %5294 = vmatpush1.msra.mxu0 0.0
      %5295 = vmatprep.subr.mxu0 0.0
      %5296 = vmatpush1.msra.mxu0 0.0
      %5297 = vmatprep.subr.mxu0 0.0
      %5298 = vmatpush1.msra.mxu0 0.0
      %5299 = vmatprep.subr.mxu0 0.0
      %5300 = vmatpush1.msra.mxu0 0.0
      %5301 = vmatprep.subr.mxu0 0.0
      %5302 = vmatpush1.msra.mxu0 0.0
      %5303 = vmatprep.subr.mxu0 0.0
      %5304 = vmatpush1.msra.mxu0 0.0
      %5305 = vmatprep.subr.mxu0 0.0
      %5306 = vmatpush1.msra.mxu0 0.0
      %5307 = vmatprep.subr.mxu0 0.0
      %5308 = vmatpush1.msra.mxu0 0.0
      %5309 = vmatprep.subr.mxu0 0.0
      %5310 = vmatpush1.msra.mxu0 0.0
      %5311 = vmatprep.subr.mxu0 0.0
      %5312 = vmatpush1.msra.mxu0 0.0
      %5313 = vmatprep.subr.mxu0 0.0
      %5314 = vmatpush1.msra.mxu0 0.0
      %5315 = vmatprep.subr.mxu0 0.0
      %5316 = vmatpush1.msra.mxu0 0.0
      %5317 = vmatprep.subr.mxu0 0.0
      %5318 = vmatpush1.msra.mxu0 0.0
      %5319 = vmatprep.subr.mxu0 0.0
      %5320 = vmatpush1.msra.mxu0 0.0
      %5321 = vmatprep.mubr.f32.mxu0 0.0
      %5322 = vmatmul.mubr.f32.gmra.mrb[0].mxu0 %v1461
      %v5323 = vpop.f32.mrb[0].mxu0
      %v5324 = vadd.f32 0.0, %v5323
      %v5325 = vpop.f32.mrb[0].mxu0
      %5326 = vdwg.mxu0
      %s5327 = scalar_lea.vmem %s9, 92
      %v5328 = vld [vmem:[%s5327] sm:$0xf]
      %v5330 = vsel %vm1360, %v5328, 0
      %v5333 = vsel %vm849, %v5324, 0
      %5335 = vmatprep.subr.mxu0 0.0
      %5336 = vmatpush1.msra.mxu0 %v5333
      %5337 = vmatprep.subr.mxu0 0.0
      %5338 = vmatpush1.msra.mxu0 0.0
      %5339 = vmatprep.subr.mxu0 0.0
      %5340 = vmatpush1.msra.mxu0 0.0
      %5341 = vmatprep.subr.mxu0 0.0
      %5342 = vmatpush1.msra.mxu0 0.0
      %5343 = vmatprep.subr.mxu0 0.0
      %5344 = vmatpush1.msra.mxu0 0.0
      %5345 = vmatprep.subr.mxu0 0.0
      %5346 = vmatpush1.msra.mxu0 0.0
      %5347 = vmatprep.subr.mxu0 0.0
      %5348 = vmatpush1.msra.mxu0 0.0
      %5349 = vmatprep.subr.mxu0 0.0
      %5350 = vmatpush1.msra.mxu0 0.0
      %5351 = vmatprep.subr.mxu0 0.0
      %5352 = vmatpush1.msra.mxu0 0.0
      %5353 = vmatprep.subr.mxu0 0.0
      %5354 = vmatpush1.msra.mxu0 0.0
      %5355 = vmatprep.subr.mxu0 0.0
      %5356 = vmatpush1.msra.mxu0 0.0
      %5357 = vmatprep.subr.mxu0 0.0
      %5358 = vmatpush1.msra.mxu0 0.0
      %5359 = vmatprep.subr.mxu0 0.0
      %5360 = vmatpush1.msra.mxu0 0.0
      %5361 = vmatprep.subr.mxu0 0.0
      %5362 = vmatpush1.msra.mxu0 0.0
      %5363 = vmatprep.subr.mxu0 0.0
      %5364 = vmatpush1.msra.mxu0 0.0
      %5365 = vmatprep.subr.mxu0 0.0
      %5366 = vmatpush1.msra.mxu0 0.0
      %5367 = vmatprep.subr.mxu0 0.0
      %5368 = vmatpush1.msra.mxu0 0.0
      %5369 = vmatprep.subr.mxu0 0.0
      %5370 = vmatpush1.msra.mxu0 0.0
      %5371 = vmatprep.subr.mxu0 0.0
      %5372 = vmatpush1.msra.mxu0 0.0
      %5373 = vmatprep.subr.mxu0 0.0
      %5374 = vmatpush1.msra.mxu0 0.0
      %5375 = vmatprep.subr.mxu0 0.0
      %5376 = vmatpush1.msra.mxu0 0.0
      %5377 = vmatprep.subr.mxu0 0.0
      %5378 = vmatpush1.msra.mxu0 0.0
      %5379 = vmatprep.subr.mxu0 0.0
      %5380 = vmatpush1.msra.mxu0 0.0
      %5381 = vmatprep.subr.mxu0 0.0
      %5382 = vmatpush1.msra.mxu0 0.0
      %5383 = vmatprep.subr.mxu0 0.0
      %5384 = vmatpush1.msra.mxu0 0.0
      %5385 = vmatprep.subr.mxu0 0.0
      %5386 = vmatpush1.msra.mxu0 0.0
      %5387 = vmatprep.subr.mxu0 0.0
      %5388 = vmatpush1.msra.mxu0 0.0
      %5389 = vmatprep.subr.mxu0 0.0
      %5390 = vmatpush1.msra.mxu0 0.0
      %5391 = vmatprep.subr.mxu0 0.0
      %5392 = vmatpush1.msra.mxu0 0.0
      %5393 = vmatprep.subr.mxu0 0.0
      %5394 = vmatpush1.msra.mxu0 0.0
      %5395 = vmatprep.subr.mxu0 0.0
      %5396 = vmatpush1.msra.mxu0 0.0
      %5397 = vmatprep.subr.mxu0 0.0
      %5398 = vmatpush1.msra.mxu0 0.0
      %5399 = vmatprep.mubr.f32.mxu0 0.0
      %5400 = vmatmul.mubr.f32.gmra.mrb[0].mxu0 %v5330
      %v5401 = vpop.f32.mrb[0].mxu0
      %v5402 = vadd.f32 0.0, %v5401
      %v5403 = vpop.f32.mrb[0].mxu0
      %5404 = vdwg.mxu0
      %v5405 = vadd.f32 %v5240, %v5402
      %s5406 = scalar_lea.vmem %s10, 2880
      %v5407 = vld [vmem:[%s5406] sm:$0xff]
      %v5408 = vld [vmem:[%s5406 + $0x8] sm:$0xff]
      %v5409 = vld [vmem:[%s5406 + $0x10] sm:$0xff]
      %v5410 = vld [vmem:[%s5406 + $0x18] sm:$0xff]
      %v5411 = vld [vmem:[%s5406 + $0x20] sm:$0xff]
      %v5412 = vld [vmem:[%s5406 + $0x28] sm:$0xff]
      %v5413 = vld [vmem:[%s5406 + $0x30] sm:$0xff]
      %v5414 = vld [vmem:[%s5406 + $0x38] sm:$0xff]
      %v5415 = vld [vmem:[%s5406 + $0x40] sm:$0xff]
      %v5416 = vld [vmem:[%s5406 + $0x48] sm:$0xff]
      %v5417 = vld [vmem:[%s5406 + $0x50] sm:$0xff]
      %v5418 = vld [vmem:[%s5406 + $0x58] sm:$0xff]
      %v5419 = vld [vmem:[%s5406 + $0x60] sm:$0xff]
      %v5420 = vld [vmem:[%s5406 + $0x68] sm:$0xff]
      %v5421 = vld [vmem:[%s5406 + $0x70] sm:$0xff]
      %5422 = vmatprep.subr.mxu0 0.0
      %5423 = vmatpush1.msra.mxu0 %v5407
      %5424 = vmatprep.subr.mxu0 0.0
      %5425 = vmatpush1.msra.mxu0 %v5408
      %5426 = vmatprep.subr.mxu0 0.0
      %5427 = vmatpush1.msra.mxu0 %v5409
      %5428 = vmatprep.subr.mxu0 0.0
      %5429 = vmatpush1.msra.mxu0 %v5410
      %5430 = vmatprep.subr.mxu0 0.0
      %5431 = vmatpush1.msra.mxu0 %v5411
      %5432 = vmatprep.subr.mxu0 0.0
      %5433 = vmatpush1.msra.mxu0 %v5412
      %5434 = vmatprep.subr.mxu0 0.0
      %5435 = vmatpush1.msra.mxu0 %v5413
      %5436 = vmatprep.subr.mxu0 0.0
      %5437 = vmatpush1.msra.mxu0 %v5414
      %5438 = vmatprep.subr.mxu0 0.0
      %5439 = vmatpush1.msra.mxu0 %v5415
      %5440 = vmatprep.subr.mxu0 0.0
      %5441 = vmatpush1.msra.mxu0 %v5416
      %5442 = vmatprep.subr.mxu0 0.0
      %5443 = vmatpush1.msra.mxu0 %v5417
      %5444 = vmatprep.subr.mxu0 0.0
      %5445 = vmatpush1.msra.mxu0 %v5418
      %5446 = vmatprep.subr.mxu0 0.0
      %5447 = vmatpush1.msra.mxu0 %v5419
      %5448 = vmatprep.subr.mxu0 0.0
      %5449 = vmatpush1.msra.mxu0 %v5420
      %5450 = vmatprep.subr.mxu0 0.0
      %5451 = vmatpush1.msra.mxu0 %v5421
      %5452 = vmatprep.subr.mxu0 0.0
      %5453 = vmatpush1.msra.mxu0 0.0
      %5454 = vmatprep.subr.mxu0 0.0
      %5455 = vmatpush1.msra.mxu0 0.0
      %5456 = vmatprep.subr.mxu0 0.0
      %5457 = vmatpush1.msra.mxu0 0.0
      %5458 = vmatprep.subr.mxu0 0.0
      %5459 = vmatpush1.msra.mxu0 0.0
      %5460 = vmatprep.subr.mxu0 0.0
      %5461 = vmatpush1.msra.mxu0 0.0
      %5462 = vmatprep.subr.mxu0 0.0
      %5463 = vmatpush1.msra.mxu0 0.0
      %5464 = vmatprep.subr.mxu0 0.0
      %5465 = vmatpush1.msra.mxu0 0.0
      %5466 = vmatprep.subr.mxu0 0.0
      %5467 = vmatpush1.msra.mxu0 0.0
      %5468 = vmatprep.subr.mxu0 0.0
      %5469 = vmatpush1.msra.mxu0 0.0
      %5470 = vmatprep.subr.mxu0 0.0
      %5471 = vmatpush1.msra.mxu0 0.0
      %5472 = vmatprep.subr.mxu0 0.0
      %5473 = vmatpush1.msra.mxu0 0.0
      %5474 = vmatprep.subr.mxu0 0.0
      %5475 = vmatpush1.msra.mxu0 0.0
      %5476 = vmatprep.subr.mxu0 0.0
      %5477 = vmatpush1.msra.mxu0 0.0
      %5478 = vmatprep.subr.mxu0 0.0
      %5479 = vmatpush1.msra.mxu0 0.0
      %5480 = vmatprep.subr.mxu0 0.0
      %5481 = vmatpush1.msra.mxu0 0.0
      %5482 = vmatprep.subr.mxu0 0.0
      %5483 = vmatpush1.msra.mxu0 0.0
      %5484 = vmatprep.subr.mxu0 0.0
      %5485 = vmatpush1.msra.mxu0 0.0
      %5486 = vmatprep.mubr.f32.mxu0 0.0
      %5487 = vmatmul.mubr.f32.gmra.mrb[0].mxu0 %v1461
      %v5488 = vpop.f32.mrb[0].mxu0
      %v5489 = vadd.f32 0.0, %v5488
      %v5490 = vpop.f32.mrb[0].mxu0
      %5491 = vdwg.mxu0
      %s5492 = scalar_lea.vmem %s9, 96
      %v5493 = vld [vmem:[%s5492] sm:$0xf]
      %v5495 = vsel %vm1360, %v5493, 0
      %v5498 = vsel %vm849, %v5489, 0
      %5500 = vmatprep.subr.mxu0 0.0
      %5501 = vmatpush1.msra.mxu0 %v5498
      %5502 = vmatprep.subr.mxu0 0.0
      %5503 = vmatpush1.msra.mxu0 0.0
      %5504 = vmatprep.subr.mxu0 0.0
      %5505 = vmatpush1.msra.mxu0 0.0
      %5506 = vmatprep.subr.mxu0 0.0
      %5507 = vmatpush1.msra.mxu0 0.0
      %5508 = vmatprep.subr.mxu0 0.0
      %5509 = vmatpush1.msra.mxu0 0.0
      %5510 = vmatprep.subr.mxu0 0.0
      %5511 = vmatpush1.msra.mxu0 0.0
      %5512 = vmatprep.subr.mxu0 0.0
      %5513 = vmatpush1.msra.mxu0 0.0
      %5514 = vmatprep.subr.mxu0 0.0
      %5515 = vmatpush1.msra.mxu0 0.0
      %5516 = vmatprep.subr.mxu0 0.0
      %5517 = vmatpush1.msra.mxu0 0.0
      %5518 = vmatprep.subr.mxu0 0.0
      %5519 = vmatpush1.msra.mxu0 0.0
      %5520 = vmatprep.subr.mxu0 0.0
      %5521 = vmatpush1.msra.mxu0 0.0
      %5522 = vmatprep.subr.mxu0 0.0
      %5523 = vmatpush1.msra.mxu0 0.0
      %5524 = vmatprep.subr.mxu0 0.0
      %5525 = vmatpush1.msra.mxu0 0.0
      %5526 = vmatprep.subr.mxu0 0.0
      %5527 = vmatpush1.msra.mxu0 0.0
      %5528 = vmatprep.subr.mxu0 0.0
      %5529 = vmatpush1.msra.mxu0 0.0
      %5530 = vmatprep.subr.mxu0 0.0
      %5531 = vmatpush1.msra.mxu0 0.0
      %5532 = vmatprep.subr.mxu0 0.0
      %5533 = vmatpush1.msra.mxu0 0.0
      %5534 = vmatprep.subr.mxu0 0.0
      %5535 = vmatpush1.msra.mxu0 0.0
      %5536 = vmatprep.subr.mxu0 0.0
      %5537 = vmatpush1.msra.mxu0 0.0
      %5538 = vmatprep.subr.mxu0 0.0
      %5539 = vmatpush1.msra.mxu0 0.0
      %5540 = vmatprep.subr.mxu0 0.0
      %5541 = vmatpush1.msra.mxu0 0.0
      %5542 = vmatprep.subr.mxu0 0.0
      %5543 = vmatpush1.msra.mxu0 0.0
      %5544 = vmatprep.subr.mxu0 0.0
      %5545 = vmatpush1.msra.mxu0 0.0
      %5546 = vmatprep.subr.mxu0 0.0
      %5547 = vmatpush1.msra.mxu0 0.0
      %5548 = vmatprep.subr.mxu0 0.0
      %5549 = vmatpush1.msra.mxu0 0.0
      %5550 = vmatprep.subr.mxu0 0.0
      %5551 = vmatpush1.msra.mxu0 0.0
      %5552 = vmatprep.subr.mxu0 0.0
      %5553 = vmatpush1.msra.mxu0 0.0
      %5554 = vmatprep.subr.mxu0 0.0
      %5555 = vmatpush1.msra.mxu0 0.0
      %5556 = vmatprep.subr.mxu0 0.0
      %5557 = vmatpush1.msra.mxu0 0.0
      %5558 = vmatprep.subr.mxu0 0.0
      %5559 = vmatpush1.msra.mxu0 0.0
      %5560 = vmatprep.subr.mxu0 0.0
      %5561 = vmatpush1.msra.mxu0 0.0
      %5562 = vmatprep.subr.mxu0 0.0
      %5563 = vmatpush1.msra.mxu0 0.0
      %5564 = vmatprep.mubr.f32.mxu0 0.0
      %5565 = vmatmul.mubr.f32.gmra.mrb[0].mxu0 %v5495
      %v5566 = vpop.f32.mrb[0].mxu0
      %v5567 = vadd.f32 0.0, %v5566
      %v5568 = vpop.f32.mrb[0].mxu0
      %5569 = vdwg.mxu0
      %v5570 = vadd.f32 %v5405, %v5567
      %s5571 = scalar_lea.vmem %s10, 3000
      %v5572 = vld [vmem:[%s5571] sm:$0xff]
      %v5573 = vld [vmem:[%s5571 + $0x8] sm:$0xff]
      %v5574 = vld [vmem:[%s5571 + $0x10] sm:$0xff]
      %v5575 = vld [vmem:[%s5571 + $0x18] sm:$0xff]
      %v5576 = vld [vmem:[%s5571 + $0x20] sm:$0xff]
      %v5577 = vld [vmem:[%s5571 + $0x28] sm:$0xff]
      %v5578 = vld [vmem:[%s5571 + $0x30] sm:$0xff]
      %v5579 = vld [vmem:[%s5571 + $0x38] sm:$0xff]
      %v5580 = vld [vmem:[%s5571 + $0x40] sm:$0xff]
      %v5581 = vld [vmem:[%s5571 + $0x48] sm:$0xff]
      %v5582 = vld [vmem:[%s5571 + $0x50] sm:$0xff]
      %v5583 = vld [vmem:[%s5571 + $0x58] sm:$0xff]
      %v5584 = vld [vmem:[%s5571 + $0x60] sm:$0xff]
      %v5585 = vld [vmem:[%s5571 + $0x68] sm:$0xff]
      %v5586 = vld [vmem:[%s5571 + $0x70] sm:$0xff]
      %5587 = vmatprep.subr.mxu0 0.0
      %5588 = vmatpush1.msra.mxu0 %v5572
      %5589 = vmatprep.subr.mxu0 0.0
      %5590 = vmatpush1.msra.mxu0 %v5573
      %5591 = vmatprep.subr.mxu0 0.0
      %5592 = vmatpush1.msra.mxu0 %v5574
      %5593 = vmatprep.subr.mxu0 0.0
      %5594 = vmatpush1.msra.mxu0 %v5575
      %5595 = vmatprep.subr.mxu0 0.0
      %5596 = vmatpush1.msra.mxu0 %v5576
      %5597 = vmatprep.subr.mxu0 0.0
      %5598 = vmatpush1.msra.mxu0 %v5577
      %5599 = vmatprep.subr.mxu0 0.0
      %5600 = vmatpush1.msra.mxu0 %v5578
      %5601 = vmatprep.subr.mxu0 0.0
      %5602 = vmatpush1.msra.mxu0 %v5579
      %5603 = vmatprep.subr.mxu0 0.0
      %5604 = vmatpush1.msra.mxu0 %v5580
      %5605 = vmatprep.subr.mxu0 0.0
      %5606 = vmatpush1.msra.mxu0 %v5581
      %5607 = vmatprep.subr.mxu0 0.0
      %5608 = vmatpush1.msra.mxu0 %v5582
      %5609 = vmatprep.subr.mxu0 0.0
      %5610 = vmatpush1.msra.mxu0 %v5583
      %5611 = vmatprep.subr.mxu0 0.0
      %5612 = vmatpush1.msra.mxu0 %v5584
      %5613 = vmatprep.subr.mxu0 0.0
      %5614 = vmatpush1.msra.mxu0 %v5585
      %5615 = vmatprep.subr.mxu0 0.0
      %5616 = vmatpush1.msra.mxu0 %v5586
      %5617 = vmatprep.subr.mxu0 0.0
      %5618 = vmatpush1.msra.mxu0 0.0
      %5619 = vmatprep.subr.mxu0 0.0
      %5620 = vmatpush1.msra.mxu0 0.0
      %5621 = vmatprep.subr.mxu0 0.0
      %5622 = vmatpush1.msra.mxu0 0.0
      %5623 = vmatprep.subr.mxu0 0.0
      %5624 = vmatpush1.msra.mxu0 0.0
      %5625 = vmatprep.subr.mxu0 0.0
      %5626 = vmatpush1.msra.mxu0 0.0
      %5627 = vmatprep.subr.mxu0 0.0
      %5628 = vmatpush1.msra.mxu0 0.0
      %5629 = vmatprep.subr.mxu0 0.0
      %5630 = vmatpush1.msra.mxu0 0.0
      %5631 = vmatprep.subr.mxu0 0.0
      %5632 = vmatpush1.msra.mxu0 0.0
      %5633 = vmatprep.subr.mxu0 0.0
      %5634 = vmatpush1.msra.mxu0 0.0
      %5635 = vmatprep.subr.mxu0 0.0
      %5636 = vmatpush1.msra.mxu0 0.0
      %5637 = vmatprep.subr.mxu0 0.0
      %5638 = vmatpush1.msra.mxu0 0.0
      %5639 = vmatprep.subr.mxu0 0.0
      %5640 = vmatpush1.msra.mxu0 0.0
      %5641 = vmatprep.subr.mxu0 0.0
      %5642 = vmatpush1.msra.mxu0 0.0
      %5643 = vmatprep.subr.mxu0 0.0
      %5644 = vmatpush1.msra.mxu0 0.0
      %5645 = vmatprep.subr.mxu0 0.0
      %5646 = vmatpush1.msra.mxu0 0.0
      %5647 = vmatprep.subr.mxu0 0.0
      %5648 = vmatpush1.msra.mxu0 0.0
      %5649 = vmatprep.subr.mxu0 0.0
      %5650 = vmatpush1.msra.mxu0 0.0
      %5651 = vmatprep.mubr.f32.mxu0 0.0
      %5652 = vmatmul.mubr.f32.gmra.mrb[0].mxu0 %v1461
      %v5653 = vpop.f32.mrb[0].mxu0
      %v5654 = vadd.f32 0.0, %v5653
      %v5655 = vpop.f32.mrb[0].mxu0
      %5656 = vdwg.mxu0
      %s5657 = scalar_lea.vmem %s9, 100
      %v5658 = vld [vmem:[%s5657] sm:$0xf]
      %v5660 = vsel %vm1360, %v5658, 0
      %v5663 = vsel %vm849, %v5654, 0
      %5665 = vmatprep.subr.mxu0 0.0
      %5666 = vmatpush1.msra.mxu0 %v5663
      %5667 = vmatprep.subr.mxu0 0.0
      %5668 = vmatpush1.msra.mxu0 0.0
      %5669 = vmatprep.subr.mxu0 0.0
      %5670 = vmatpush1.msra.mxu0 0.0
      %5671 = vmatprep.subr.mxu0 0.0
      %5672 = vmatpush1.msra.mxu0 0.0
      %5673 = vmatprep.subr.mxu0 0.0
      %5674 = vmatpush1.msra.mxu0 0.0
      %5675 = vmatprep.subr.mxu0 0.0
      %5676 = vmatpush1.msra.mxu0 0.0
      %5677 = vmatprep.subr.mxu0 0.0
      %5678 = vmatpush1.msra.mxu0 0.0
      %5679 = vmatprep.subr.mxu0 0.0
      %5680 = vmatpush1.msra.mxu0 0.0
      %5681 = vmatprep.subr.mxu0 0.0
      %5682 = vmatpush1.msra.mxu0 0.0
      %5683 = vmatprep.subr.mxu0 0.0
      %5684 = vmatpush1.msra.mxu0 0.0
      %5685 = vmatprep.subr.mxu0 0.0
      %5686 = vmatpush1.msra.mxu0 0.0
      %5687 = vmatprep.subr.mxu0 0.0
      %5688 = vmatpush1.msra.mxu0 0.0
      %5689 = vmatprep.subr.mxu0 0.0
      %5690 = vmatpush1.msra.mxu0 0.0
      %5691 = vmatprep.subr.mxu0 0.0
      %5692 = vmatpush1.msra.mxu0 0.0
      %5693 = vmatprep.subr.mxu0 0.0
      %5694 = vmatpush1.msra.mxu0 0.0
      %5695 = vmatprep.subr.mxu0 0.0
      %5696 = vmatpush1.msra.mxu0 0.0
      %5697 = vmatprep.subr.mxu0 0.0
      %5698 = vmatpush1.msra.mxu0 0.0
      %5699 = vmatprep.subr.mxu0 0.0
      %5700 = vmatpush1.msra.mxu0 0.0
      %5701 = vmatprep.subr.mxu0 0.0
      %5702 = vmatpush1.msra.mxu0 0.0
      %5703 = vmatprep.subr.mxu0 0.0
      %5704 = vmatpush1.msra.mxu0 0.0
      %5705 = vmatprep.subr.mxu0 0.0
      %5706 = vmatpush1.msra.mxu0 0.0
      %5707 = vmatprep.subr.mxu0 0.0
      %5708 = vmatpush1.msra.mxu0 0.0
      %5709 = vmatprep.subr.mxu0 0.0
      %5710 = vmatpush1.msra.mxu0 0.0
      %5711 = vmatprep.subr.mxu0 0.0
      %5712 = vmatpush1.msra.mxu0 0.0
      %5713 = vmatprep.subr.mxu0 0.0
      %5714 = vmatpush1.msra.mxu0 0.0
      %5715 = vmatprep.subr.mxu0 0.0
      %5716 = vmatpush1.msra.mxu0 0.0
      %5717 = vmatprep.subr.mxu0 0.0
      %5718 = vmatpush1.msra.mxu0 0.0
      %5719 = vmatprep.subr.mxu0 0.0
      %5720 = vmatpush1.msra.mxu0 0.0
      %5721 = vmatprep.subr.mxu0 0.0
      %5722 = vmatpush1.msra.mxu0 0.0
      %5723 = vmatprep.subr.mxu0 0.0
      %5724 = vmatpush1.msra.mxu0 0.0
      %5725 = vmatprep.subr.mxu0 0.0
      %5726 = vmatpush1.msra.mxu0 0.0
      %5727 = vmatprep.subr.mxu0 0.0
      %5728 = vmatpush1.msra.mxu0 0.0
      %5729 = vmatprep.mubr.f32.mxu0 0.0
      %5730 = vmatmul.mubr.f32.gmra.mrb[0].mxu0 %v5660
      %v5731 = vpop.f32.mrb[0].mxu0
      %v5732 = vadd.f32 0.0, %v5731
      %v5733 = vpop.f32.mrb[0].mxu0
      %5734 = vdwg.mxu0
      %v5735 = vadd.f32 %v5570, %v5732
      %s5736 = scalar_lea.vmem %s10, 3120
      %v5737 = vld [vmem:[%s5736] sm:$0xff]
      %v5738 = vld [vmem:[%s5736 + $0x8] sm:$0xff]
      %v5739 = vld [vmem:[%s5736 + $0x10] sm:$0xff]
      %v5740 = vld [vmem:[%s5736 + $0x18] sm:$0xff]
      %v5741 = vld [vmem:[%s5736 + $0x20] sm:$0xff]
      %v5742 = vld [vmem:[%s5736 + $0x28] sm:$0xff]
      %v5743 = vld [vmem:[%s5736 + $0x30] sm:$0xff]
      %v5744 = vld [vmem:[%s5736 + $0x38] sm:$0xff]
      %v5745 = vld [vmem:[%s5736 + $0x40] sm:$0xff]
      %v5746 = vld [vmem:[%s5736 + $0x48] sm:$0xff]
      %v5747 = vld [vmem:[%s5736 + $0x50] sm:$0xff]
      %v5748 = vld [vmem:[%s5736 + $0x58] sm:$0xff]
      %v5749 = vld [vmem:[%s5736 + $0x60] sm:$0xff]
      %v5750 = vld [vmem:[%s5736 + $0x68] sm:$0xff]
      %v5751 = vld [vmem:[%s5736 + $0x70] sm:$0xff]
      %5752 = vmatprep.subr.mxu0 0.0
      %5753 = vmatpush1.msra.mxu0 %v5737
      %5754 = vmatprep.subr.mxu0 0.0
      %5755 = vmatpush1.msra.mxu0 %v5738
      %5756 = vmatprep.subr.mxu0 0.0
      %5757 = vmatpush1.msra.mxu0 %v5739
      %5758 = vmatprep.subr.mxu0 0.0
      %5759 = vmatpush1.msra.mxu0 %v5740
      %5760 = vmatprep.subr.mxu0 0.0
      %5761 = vmatpush1.msra.mxu0 %v5741
      %5762 = vmatprep.subr.mxu0 0.0
      %5763 = vmatpush1.msra.mxu0 %v5742
      %5764 = vmatprep.subr.mxu0 0.0
      %5765 = vmatpush1.msra.mxu0 %v5743
      %5766 = vmatprep.subr.mxu0 0.0
      %5767 = vmatpush1.msra.mxu0 %v5744
      %5768 = vmatprep.subr.mxu0 0.0
      %5769 = vmatpush1.msra.mxu0 %v5745
      %5770 = vmatprep.subr.mxu0 0.0
      %5771 = vmatpush1.msra.mxu0 %v5746
      %5772 = vmatprep.subr.mxu0 0.0
      %5773 = vmatpush1.msra.mxu0 %v5747
      %5774 = vmatprep.subr.mxu0 0.0
      %5775 = vmatpush1.msra.mxu0 %v5748
      %5776 = vmatprep.subr.mxu0 0.0
      %5777 = vmatpush1.msra.mxu0 %v5749
      %5778 = vmatprep.subr.mxu0 0.0
      %5779 = vmatpush1.msra.mxu0 %v5750
      %5780 = vmatprep.subr.mxu0 0.0
      %5781 = vmatpush1.msra.mxu0 %v5751
      %5782 = vmatprep.subr.mxu0 0.0
      %5783 = vmatpush1.msra.mxu0 0.0
      %5784 = vmatprep.subr.mxu0 0.0
      %5785 = vmatpush1.msra.mxu0 0.0
      %5786 = vmatprep.subr.mxu0 0.0
      %5787 = vmatpush1.msra.mxu0 0.0
      %5788 = vmatprep.subr.mxu0 0.0
      %5789 = vmatpush1.msra.mxu0 0.0
      %5790 = vmatprep.subr.mxu0 0.0
      %5791 = vmatpush1.msra.mxu0 0.0
      %5792 = vmatprep.subr.mxu0 0.0
      %5793 = vmatpush1.msra.mxu0 0.0
      %5794 = vmatprep.subr.mxu0 0.0
      %5795 = vmatpush1.msra.mxu0 0.0
      %5796 = vmatprep.subr.mxu0 0.0
      %5797 = vmatpush1.msra.mxu0 0.0
      %5798 = vmatprep.subr.mxu0 0.0
      %5799 = vmatpush1.msra.mxu0 0.0
      %5800 = vmatprep.subr.mxu0 0.0
      %5801 = vmatpush1.msra.mxu0 0.0
      %5802 = vmatprep.subr.mxu0 0.0
      %5803 = vmatpush1.msra.mxu0 0.0
      %5804 = vmatprep.subr.mxu0 0.0
      %5805 = vmatpush1.msra.mxu0 0.0
      %5806 = vmatprep.subr.mxu0 0.0
      %5807 = vmatpush1.msra.mxu0 0.0
      %5808 = vmatprep.subr.mxu0 0.0
      %5809 = vmatpush1.msra.mxu0 0.0
      %5810 = vmatprep.subr.mxu0 0.0
      %5811 = vmatpush1.msra.mxu0 0.0
      %5812 = vmatprep.subr.mxu0 0.0
      %5813 = vmatpush1.msra.mxu0 0.0
      %5814 = vmatprep.subr.mxu0 0.0
      %5815 = vmatpush1.msra.mxu0 0.0
      %5816 = vmatprep.mubr.f32.mxu0 0.0
      %5817 = vmatmul.mubr.f32.gmra.mrb[0].mxu0 %v1461
      %v5818 = vpop.f32.mrb[0].mxu0
      %v5819 = vadd.f32 0.0, %v5818
      %v5820 = vpop.f32.mrb[0].mxu0
      %5821 = vdwg.mxu0
      %s5822 = scalar_lea.vmem %s9, 104
      %v5823 = vld [vmem:[%s5822] sm:$0xf]
      %v5825 = vsel %vm1360, %v5823, 0
      %v5828 = vsel %vm849, %v5819, 0
      %5830 = vmatprep.subr.mxu0 0.0
      %5831 = vmatpush1.msra.mxu0 %v5828
      %5832 = vmatprep.subr.mxu0 0.0
      %5833 = vmatpush1.msra.mxu0 0.0
      %5834 = vmatprep.subr.mxu0 0.0
      %5835 = vmatpush1.msra.mxu0 0.0
      %5836 = vmatprep.subr.mxu0 0.0
      %5837 = vmatpush1.msra.mxu0 0.0
      %5838 = vmatprep.subr.mxu0 0.0
      %5839 = vmatpush1.msra.mxu0 0.0
      %5840 = vmatprep.subr.mxu0 0.0
      %5841 = vmatpush1.msra.mxu0 0.0
      %5842 = vmatprep.subr.mxu0 0.0
      %5843 = vmatpush1.msra.mxu0 0.0
      %5844 = vmatprep.subr.mxu0 0.0
      %5845 = vmatpush1.msra.mxu0 0.0
      %5846 = vmatprep.subr.mxu0 0.0
      %5847 = vmatpush1.msra.mxu0 0.0
      %5848 = vmatprep.subr.mxu0 0.0
      %5849 = vmatpush1.msra.mxu0 0.0
      %5850 = vmatprep.subr.mxu0 0.0
      %5851 = vmatpush1.msra.mxu0 0.0
      %5852 = vmatprep.subr.mxu0 0.0
      %5853 = vmatpush1.msra.mxu0 0.0
      %5854 = vmatprep.subr.mxu0 0.0
      %5855 = vmatpush1.msra.mxu0 0.0
      %5856 = vmatprep.subr.mxu0 0.0
      %5857 = vmatpush1.msra.mxu0 0.0
      %5858 = vmatprep.subr.mxu0 0.0
      %5859 = vmatpush1.msra.mxu0 0.0
      %5860 = vmatprep.subr.mxu0 0.0
      %5861 = vmatpush1.msra.mxu0 0.0
      %5862 = vmatprep.subr.mxu0 0.0
      %5863 = vmatpush1.msra.mxu0 0.0
      %5864 = vmatprep.subr.mxu0 0.0
      %5865 = vmatpush1.msra.mxu0 0.0
      %5866 = vmatprep.subr.mxu0 0.0
      %5867 = vmatpush1.msra.mxu0 0.0
      %5868 = vmatprep.subr.mxu0 0.0
      %5869 = vmatpush1.msra.mxu0 0.0
      %5870 = vmatprep.subr.mxu0 0.0
      %5871 = vmatpush1.msra.mxu0 0.0
      %5872 = vmatprep.subr.mxu0 0.0
      %5873 = vmatpush1.msra.mxu0 0.0
      %5874 = vmatprep.subr.mxu0 0.0
      %5875 = vmatpush1.msra.mxu0 0.0
      %5876 = vmatprep.subr.mxu0 0.0
      %5877 = vmatpush1.msra.mxu0 0.0
      %5878 = vmatprep.subr.mxu0 0.0
      %5879 = vmatpush1.msra.mxu0 0.0
      %5880 = vmatprep.subr.mxu0 0.0
      %5881 = vmatpush1.msra.mxu0 0.0
      %5882 = vmatprep.subr.mxu0 0.0
      %5883 = vmatpush1.msra.mxu0 0.0
      %5884 = vmatprep.subr.mxu0 0.0
      %5885 = vmatpush1.msra.mxu0 0.0
      %5886 = vmatprep.subr.mxu0 0.0
      %5887 = vmatpush1.msra.mxu0 0.0
      %5888 = vmatprep.subr.mxu0 0.0
      %5889 = vmatpush1.msra.mxu0 0.0
      %5890 = vmatprep.subr.mxu0 0.0
      %5891 = vmatpush1.msra.mxu0 0.0
      %5892 = vmatprep.subr.mxu0 0.0
      %5893 = vmatpush1.msra.mxu0 0.0
      %5894 = vmatprep.mubr.f32.mxu0 0.0
      %5895 = vmatmul.mubr.f32.gmra.mrb[0].mxu0 %v5825
      %v5896 = vpop.f32.mrb[0].mxu0
      %v5897 = vadd.f32 0.0, %v5896
      %v5898 = vpop.f32.mrb[0].mxu0
      %5899 = vdwg.mxu0
      %v5900 = vadd.f32 %v5735, %v5897
      %v5901 = vld [vmem:[%s12] sm:$0xf]
      %v5902 = vld [vmem:[%s13] sm:$0xf]
      %vm5903 = vcmask 977920
      %v5904 = vsel %vm5903, %v5900, 0.0
      %5905 = vadd.xlane.f32.xlu0 %v5904
      %v5906 = vpop.xlane.xlu0 %5905
      %v5907 = vmul.f32 %v5906, 0.008333334
      %v5908 = vmul.f32 %v5900, %v5900
      %v5909 = vsel %vm5903, %v5908, 0.0
      %5910 = vadd.xlane.f32.xlu0 %v5909
      %v5911 = vpop.xlane.xlu0 %5910
      %v5912 = vmul.f32 %v5911, 0.008333334
      %v5913 = vmul.f32 %v5907, %v5907
      %v5914 = vsub.f32 %v5912, %v5913
      %v5915 = vadd.f32 %v5914, 1e-05
      %v5916 = vrsqrt.pop %v5915
      %v5917 = vsub.f32 %v5900, %v5907
      %v5918 = vmul.f32 %v5917, %v5916
      %5920 = vset.pattern.permute.xlu0 0
      %5921 = vperm.xlu0 %5920, %v5901
      %v5922 = vpop.permute.xlu0 %5921
      %v5924 = vmul.f32 %v5918, %v5922
      %5926 = vset.pattern.permute.xlu0 0
      %5927 = vperm.xlu0 %5926, %v5902
      %v5928 = vpop.permute.xlu0 %5927
      %v5930 = vadd.f32 %v5924, %v5928
      %v5931 = vmax.f32 %v5930, 0.0
      %v5932 = vld [vmem:[%s14] sm:$0x1]
      %v5933 = vld [vmem:[#allocation2] sm:$0x1]
      %5935 = vset.pattern.permute.xlu0 0
      %5936 = vperm.xlu0 %5935, %v5933
      %v5937 = vpop.permute.xlu0 %5936
      %v5939 = vlaneseq
      %v5940 = vshrl.u32 %v5939, 7
      %v5941 = vsub.s32 0, %v5940
      %v5942 = vrot.slane %v5937, %v5941
      %v5944 = vsel %vm1360, %v5932, 0
      %v5947 = vsel %vm849, %v5931, 0
      %5949 = vmatprep.subr.mxu0 0.0
      %5950 = vmatpush1.msra.mxu0 %v5947
      %5951 = vmatprep.subr.mxu0 0.0
      %5952 = vmatpush1.msra.mxu0 0.0
      %5953 = vmatprep.subr.mxu0 0.0
      %5954 = vmatpush1.msra.mxu0 0.0
      %5955 = vmatprep.subr.mxu0 0.0
      %5956 = vmatpush1.msra.mxu0 0.0
      %5957 = vmatprep.subr.mxu0 0.0
      %5958 = vmatpush1.msra.mxu0 0.0
      %5959 = vmatprep.subr.mxu0 0.0
      %5960 = vmatpush1.msra.mxu0 0.0
      %5961 = vmatprep.subr.mxu0 0.0
      %5962 = vmatpush1.msra.mxu0 0.0
      %5963 = vmatprep.subr.mxu0 0.0
      %5964 = vmatpush1.msra.mxu0 0.0
      %5965 = vmatprep.subr.mxu0 0.0
      %5966 = vmatpush1.msra.mxu0 0.0
      %5967 = vmatprep.subr.mxu0 0.0
      %5968 = vmatpush1.msra.mxu0 0.0
      %5969 = vmatprep.subr.mxu0 0.0
      %5970 = vmatpush1.msra.mxu0 0.0
      %5971 = vmatprep.subr.mxu0 0.0
      %5972 = vmatpush1.msra.mxu0 0.0
      %5973 = vmatprep.subr.mxu0 0.0
      %5974 = vmatpush1.msra.mxu0 0.0
      %5975 = vmatprep.subr.mxu0 0.0
      %5976 = vmatpush1.msra.mxu0 0.0
      %5977 = vmatprep.subr.mxu0 0.0
      %5978 = vmatpush1.msra.mxu0 0.0
      %5979 = vmatprep.subr.mxu0 0.0
      %5980 = vmatpush1.msra.mxu0 0.0
      %5981 = vmatprep.subr.mxu0 0.0
      %5982 = vmatpush1.msra.mxu0 0.0
      %5983 = vmatprep.subr.mxu0 0.0
      %5984 = vmatpush1.msra.mxu0 0.0
      %5985 = vmatprep.subr.mxu0 0.0
      %5986 = vmatpush1.msra.mxu0 0.0
      %5987 = vmatprep.subr.mxu0 0.0
      %5988 = vmatpush1.msra.mxu0 0.0
      %5989 = vmatprep.subr.mxu0 0.0
      %5990 = vmatpush1.msra.mxu0 0.0
      %5991 = vmatprep.subr.mxu0 0.0
      %5992 = vmatpush1.msra.mxu0 0.0
      %5993 = vmatprep.subr.mxu0 0.0
      %5994 = vmatpush1.msra.mxu0 0.0
      %5995 = vmatprep.subr.mxu0 0.0
      %5996 = vmatpush1.msra.mxu0 0.0
      %5997 = vmatprep.subr.mxu0 0.0
      %5998 = vmatpush1.msra.mxu0 0.0
      %5999 = vmatprep.subr.mxu0 0.0
      %6000 = vmatpush1.msra.mxu0 0.0
      %6001 = vmatprep.subr.mxu0 0.0
      %6002 = vmatpush1.msra.mxu0 0.0
      %6003 = vmatprep.subr.mxu0 0.0
      %6004 = vmatpush1.msra.mxu0 0.0
      %6005 = vmatprep.subr.mxu0 0.0
      %6006 = vmatpush1.msra.mxu0 0.0
      %6007 = vmatprep.subr.mxu0 0.0
      %6008 = vmatpush1.msra.mxu0 0.0
      %6009 = vmatprep.subr.mxu0 0.0
      %6010 = vmatpush1.msra.mxu0 0.0
      %6011 = vmatprep.subr.mxu0 0.0
      %6012 = vmatpush1.msra.mxu0 0.0
      %6013 = vmatprep.mubr.f32.mxu0 0.0
      %6014 = vmatmul.mubr.f32.gmra.mrb[0].mxu0 %v5944
      %v6015 = vpop.f32.mrb[0].mxu0
      %v6016 = vadd.f32 %v5942, %v6015
      %v6017 = vpop.f32.mrb[0].mxu0
      %6018 = vdwg.mxu0
      %vm6019 = vcmask 974848
      %6020 = vst.msk [vmem:[%s519] sm:$0x1] %vm6019, %v6016
      %p6021 = scmp.lt.s32.totalorder %s29, 3
      %s6022 = scalar_select %p6021, %s29, 3
      %s6023 = scalar_lea.vmem %s16, %s6022
      // Predicated region
      $region85: #{mini_backbone_forward.1} parent=83 // pred_check
        %p6024 = pneg %p388
      $region86: #{mini_backbone_forward.1} parent=83 // pred_check_branch
        %6026 = sbr.rel (%p6024) target = $region88
      $region87: #{mini_backbone_forward.1} parent=83 // pred_region
        _
      $region88: #{mini_backbone_forward.1} parent=83 // pred_fallthru
        _
    $region84: #{mini_backbone_forward.1} parent=5 // pred_fallthru
      _
    %p6027 = scmp.le.s32.totalorder 2, %s24
    // Predicated region
    $region89: #{mini_backbone_forward.1} parent=5 // pred_check
      %p6028 = pneg %p6027
    $region90: #{mini_backbone_forward.1} parent=5 // pred_check_branch
      %6030 = sbr.rel (%p6028) target = $region92
    $region91: #{mini_backbone_forward.1} parent=5 // pred_region
      %s6031 = ssub.s32 %s24, 2
      // Predicated region
      $region93: #{mini_backbone_forward.1} parent=91 // pred_check
        %p6032 = pneg %p394
      $region94: #{mini_backbone_forward.1} parent=91 // pred_check_branch
        %6034 = sbr.rel (%p6032) target = $region96
      $region95: #{mini_backbone_forward.1} parent=91 // pred_region
        %p6035 = scmp.lt.s32.totalorder %s30, 3
        %s6036 = scalar_select %p6035, %s30, 3
        %s6037 = scalar_lea.vmem %s16, %s6036
      $region96: #{mini_backbone_forward.1} parent=91 // pred_fallthru
        _
    $region92: #{mini_backbone_forward.1} parent=5 // pred_fallthru
      _
  $region6: #{mini_backbone_forward.1} parent=0 // loop_footer
    %s28 = sadd.s32 1, %s24
  $region7: #{mini_backbone_forward.1} parent=0 // loop_footer_branch
    %23 = sbr.rel target = $region3
  $region8: #{mini_backbone_forward.1} parent=0 // loop_exit
    _

</llo_original>
